<compile_context>
chip_gen: v7x
topology: tpu7x:2x2x1
jax: 0.10.0
libtpu: 0.0.40
codegen_flags: <defaults>
</compile_context>

<pallas_src>
import functools

import jax
import jax.numpy as jnp
from jax import lax
from jax.experimental import pallas as pl
from jax.experimental.pallas import tpu as pltpu


# ---------------------------------------------------------------------------
# Fused inception4d kernel (one image per grid step)
# ---------------------------------------------------------------------------
def _inception4d_kernel(x_ref,
                        w1_ref, b1_ref,
                        w2a_ref, b2a_ref, w2b_ref, b2b_ref,
                        w3a_ref, b3a_ref, w3b_ref, b3b_ref,
                        w4_ref, b4_ref,
                        o1_ref, o2_ref, o3_ref, o4_ref,
                        xpad, t2pad, t3pad,
                        *, H, W):
    # x_ref:  (1, H, W, 512)  bf16
    # w*_ref: bf16 conv weights with the BN scale already folded in
    # b*_ref: (1, Cout) f32 folded BN biases
    # o*_ref: per-branch f32 outputs (NHWC blocks)
    # xpad:   (H+2, W+2, 512) f32 scratch  (-inf halo, for the maxpool)
    # t2pad:  (H+2, W+2, 144) f32 scratch  (zero halo, branch2 3x3 input)
    # t3pad:  (H+2, W+2, 32)  f32 scratch  (zero halo, branch3 3x3 input)
    Cin = x_ref.shape[-1]           # 512
    C2a = w2a_ref.shape[-1]         # 144
    C3a = w3a_ref.shape[-1]         # 32
    C1 = o1_ref.shape[-1]           # 112
    C2 = o2_ref.shape[-1]           # 288
    C3 = o3_ref.shape[-1]           # 64
    C4 = o4_ref.shape[-1]           # 64

    x = x_ref[0]                    # (H, W, Cin) bf16, VMEM-resident
    xm = x.reshape(H * W, Cin)      # shared by all 1x1 matmuls

    # ---- pointwise stage: 1x1 conv (+ folded BN bias) + ReLU ----
    # All three 1x1 convs share the single HBM read of x.
    t2 = jnp.maximum(
        jnp.dot(xm, w2a_ref[...], preferred_element_type=jnp.float32)
        + b2a_ref[...], 0.0)                              # (H*W, 144) f32
    t2pad[...] = jnp.zeros(t2pad.shape, t2pad.dtype)
    t2pad[1:H + 1, 1:W + 1, :] = t2.reshape(H, W, C2a)

    t3 = jnp.maximum(
        jnp.dot(xm, w3a_ref[...], preferred_element_type=jnp.float32)
        + b3a_ref[...], 0.0)                              # (H*W, 32) f32
    t3pad[...] = jnp.zeros(t3pad.shape, t3pad.dtype)
    t3pad[1:H + 1, 1:W + 1, :] = t3.reshape(H, W, C3a)

    br1 = jnp.maximum(
        jnp.dot(xm, w1_ref[...], preferred_element_type=jnp.float32)
        + b1_ref[...], 0.0)                               # (H*W, 112) f32
    o1_ref[0] = br1.reshape(H, W, C1)

    # ---- branch4: 3x3/s1/p1 maxpool (on -inf halo) then 1x1 conv ----
    xpad[...] = jnp.full(xpad.shape, -jnp.inf, xpad.dtype)
    xpad[1:H + 1, 1:W + 1, :] = x.astype(jnp.float32)
    xp = xpad[...]                                        # (H+2, W+2, Cin)
    m = xp[1:H + 1, 1:W + 1, :]
    for dy in range(3):
        for dx in range(3):
            if dy == 1 and dx == 1:
                continue
            m = jnp.maximum(m, xp[dy:dy + H, dx:dx + W, :])
    br4 = jnp.maximum(
        jnp.dot(m.reshape(H * W, Cin).astype(jnp.bfloat16), w4_ref[...],
                preferred_element_type=jnp.float32) + b4_ref[...], 0.0)
    o4_ref[0] = br4.reshape(H, W, C4)

    # ---- branch2: 3x3 conv 144->288 on the VMEM-resident intermediate ----
    t2p = t2pad[...]                                      # (H+2, W+2, 144)
    acc2 = jnp.zeros((H * W, C2), jnp.float32)
    for k in range(9):
        dy, dx = divmod(k, 3)
        patch = t2p[dy:dy + H, dx:dx + W, :].reshape(H * W, C2a)
        acc2 = acc2 + jnp.dot(patch.astype(jnp.bfloat16), w2b_ref[k],
                              preferred_element_type=jnp.float32)
    o2_ref[0] = jnp.maximum(acc2 + b2b_ref[...], 0.0).reshape(H, W, C2)

    # ---- branch3: 3x3 conv 32->64 on the VMEM-resident intermediate ----
    t3p = t3pad[...]                                      # (H+2, W+2, 32)
    acc3 = jnp.zeros((H * W, C3), jnp.float32)
    for k in range(9):
        dy, dx = divmod(k, 3)
        patch = t3p[dy:dy + H, dx:dx + W, :].reshape(H * W, C3a)
        acc3 = acc3 + jnp.dot(patch.astype(jnp.bfloat16), w3b_ref[k],
                              preferred_element_type=jnp.float32)
    o3_ref[0] = jnp.maximum(acc3 + b3b_ref[...], 0.0).reshape(H, W, C3)


def _const_spec(shape):
    zeros = (0,) * len(shape)
    return pl.BlockSpec(shape, lambda n, _z=zeros: _z)


def inception4d_pallas(x_nchw, p):
    x = jnp.transpose(x_nchw, (0, 2, 3, 1)).astype(jnp.bfloat16)  # NCHW->NHWC
    N, H, W, Cin = x.shape
    C2a = p["w2a"].shape[-1]
    C3a = p["w3a"].shape[-1]

    weight_args = [p["w1"], p["b1"], p["w2a"], p["b2a"], p["w2b"], p["b2b"],
                   p["w3a"], p["b3a"], p["w3b"], p["b3b"], p["w4"], p["b4"]]

    in_specs = [pl.BlockSpec((1, H, W, Cin), lambda n: (n, 0, 0, 0))]
    in_specs += [_const_spec(a.shape) for a in weight_args]

    branch_c = (112, 288, 64, 64)
    out_shape = tuple(jax.ShapeDtypeStruct((N, H, W, c), jnp.float32)
                      for c in branch_c)
    out_specs = tuple(pl.BlockSpec((1, H, W, c), lambda n: (n, 0, 0, 0))
                      for c in branch_c)

    kern = functools.partial(_inception4d_kernel, H=H, W=W)
    br1, br2, br3, br4 = pl.pallas_call(
        kern,
        out_shape=out_shape,
        grid=(N,),
        in_specs=in_specs,
        out_specs=out_specs,
        scratch_shapes=[
            pltpu.VMEM((H + 2, W + 2, Cin), jnp.float32),   # maxpool halo
            pltpu.VMEM((H + 2, W + 2, C2a), jnp.float32),   # branch2 halo
            pltpu.VMEM((H + 2, W + 2, C3a), jnp.float32),   # branch3 halo
        ],
        compiler_params=pltpu.CompilerParams(
            dimension_semantics=("parallel",)),
    )(x, *weight_args)

    out = jnp.concatenate([br1, br2, br3, br4], axis=-1)
    return jnp.transpose(out, (0, 3, 1, 2))                 # NHWC -> NCHW


# ---------------------------------------------------------------------------
# Parameter construction: deterministic init, BN (eps=1e-3) folded into the
# conv weights (scale) and a per-channel bias.  Weights cast to bf16.
# ---------------------------------------------------------------------------
def _conv_bn_folded(key, kh, kw, cin, cout, eps=1e-3):
    k1, k2, k3, k4, k5 = jax.random.split(key, 5)
    w = jax.random.normal(k1, (kh, kw, cin, cout), jnp.float32) * 0.05
    gamma = 1.0 + 0.1 * jax.random.normal(k2, (cout,), jnp.float32)
    beta = 0.1 * jax.random.normal(k3, (cout,), jnp.float32)
    mean = 0.1 * jax.random.normal(k4, (cout,), jnp.float32)
    var = jnp.abs(jax.random.normal(k5, (cout,), jnp.float32)) + 0.5
    scale = gamma / jnp.sqrt(var + eps)
    bias = beta - mean * scale
    w_folded = (w * scale).astype(jnp.bfloat16)   # BN scale folded into conv
    return w_folded, bias


def make_params(key):
    ks = jax.random.split(key, 6)
    w1, b1 = _conv_bn_folded(ks[0], 1, 1, 512, 112)
    w2a, b2a = _conv_bn_folded(ks[1], 1, 1, 512, 144)
    w2b, b2b = _conv_bn_folded(ks[2], 3, 3, 144, 288)
    w3a, b3a = _conv_bn_folded(ks[3], 1, 1, 512, 32)
    w3b, b3b = _conv_bn_folded(ks[4], 3, 3, 32, 64)
    w4, b4 = _conv_bn_folded(ks[5], 1, 1, 512, 64)
    return {
        "w1": w1[0, 0], "b1": b1.reshape(1, -1),
        "w2a": w2a[0, 0], "b2a": b2a.reshape(1, -1),
        "w2b": w2b.reshape(9, 144, 288), "b2b": b2b.reshape(1, -1),
        "w3a": w3a[0, 0], "b3a": b3a.reshape(1, -1),
        "w3b": w3b.reshape(9, 32, 64), "b3b": b3b.reshape(1, -1),
        "w4": w4[0, 0], "b4": b4.reshape(1, -1),
    }


# ---------------------------------------------------------------------------
# Pure-JAX reference (same folded bf16 weights, f32 accumulation)
# ---------------------------------------------------------------------------
def inception4d_ref(x_nchw, p):
    x = jnp.transpose(x_nchw, (0, 2, 3, 1)).astype(jnp.bfloat16)

    def conv(v, w, pad):
        return lax.conv_general_dilated(
            v, w, (1, 1), pad,
            dimension_numbers=("NHWC", "HWIO", "NHWC"),
            preferred_element_type=jnp.float32)

    def cbr(v, w, b, pad):
        return jnp.maximum(conv(v, w, pad) + b.reshape(-1), 0.0)

    same = [(1, 1), (1, 1)]
    br1 = cbr(x, p["w1"].reshape(1, 1, 512, 112), p["b1"], "VALID")

    t2 = cbr(x, p["w2a"].reshape(1, 1, 512, 144), p["b2a"], "VALID")
    br2 = cbr(t2.astype(jnp.bfloat16),
              p["w2b"].reshape(3, 3, 144, 288), p["b2b"], same)

    t3 = cbr(x, p["w3a"].reshape(1, 1, 512, 32), p["b3a"], "VALID")
    br3 = cbr(t3.astype(jnp.bfloat16),
              p["w3b"].reshape(3, 3, 32, 64), p["b3b"], same)

    m = lax.reduce_window(x.astype(jnp.float32), -jnp.inf, lax.max,
                          (1, 3, 3, 1), (1, 1, 1, 1),
                          [(0, 0), (1, 1), (1, 1), (0, 0)])
    br4 = cbr(m.astype(jnp.bfloat16), p["w4"].reshape(1, 1, 512, 64),
              p["b4"], "VALID")

    out = jnp.concatenate([br1, br2, br3, br4], axis=-1)
    return jnp.transpose(out, (0, 3, 1, 2))


if __name__ == "__main__":
    key = jax.random.PRNGKey(0)
    kx, kp = jax.random.split(key)

    N, C, H, W = 2, 512, 8, 8   # inception4d requires 512 input channels
    x = jax.random.normal(kx, (N, C, H, W), jnp.float32)
    params = make_params(kp)

    out = jax.block_until_ready(jax.jit(inception4d_pallas)(x, params))
    ref = jax.block_until_ready(jax.jit(inception4d_ref)(x, params))

    assert out.shape == (N, 112 + 288 + 64 + 64, H, W), out.shape
    assert bool(jnp.all(jnp.isfinite(out)))
    max_err = float(jnp.max(jnp.abs(out - ref)))
    assert jnp.allclose(out, ref, rtol=1e-2, atol=1e-2), max_err

    print("KERNEL_OK")
</pallas_src>

<mosaic_0001>
module attributes {stable_mosaic.version = 11 : i64} {
  func.func @_inception4d_kernel(%arg0: i32, %arg1: memref<1x8x8x512xbf16, #tpu.memory_space<vmem>>, %arg2: memref<512x112xbf16, #tpu.memory_space<vmem>>, %arg3: memref<1x112xf32, #tpu.memory_space<vmem>>, %arg4: memref<512x144xbf16, #tpu.memory_space<vmem>>, %arg5: memref<1x144xf32, #tpu.memory_space<vmem>>, %arg6: memref<9x144x288xbf16, #tpu.memory_space<vmem>>, %arg7: memref<1x288xf32, #tpu.memory_space<vmem>>, %arg8: memref<512x32xbf16, #tpu.memory_space<vmem>>, %arg9: memref<1x32xf32, #tpu.memory_space<vmem>>, %arg10: memref<9x32x64xbf16, #tpu.memory_space<vmem>>, %arg11: memref<1x64xf32, #tpu.memory_space<vmem>>, %arg12: memref<512x64xbf16, #tpu.memory_space<vmem>>, %arg13: memref<1x64xf32, #tpu.memory_space<vmem>>, %arg14: memref<1x8x8x112xf32, #tpu.memory_space<vmem>>, %arg15: memref<1x8x8x288xf32, #tpu.memory_space<vmem>>, %arg16: memref<1x8x8x64xf32, #tpu.memory_space<vmem>>, %arg17: memref<1x8x8x64xf32, #tpu.memory_space<vmem>>, %arg18: memref<10x10x512xf32, #tpu.memory_space<vmem>>, %arg19: memref<10x10x144xf32, #tpu.memory_space<vmem>>, %arg20: memref<10x10x32xf32, #tpu.memory_space<vmem>>) attributes {dimension_semantics = [#tpu.dimension_semantics<parallel>], iteration_bounds = array<i64: 2>, scalar_prefetch = 0 : i64, scratch_operands = 3 : i64, tpu.core_type = #tpu.core_type<tc>, window_params = [{transform_indices = @transform_0, window_bounds = array<i64: 1, 8, 8, 512>}, {pipeline_mode = #tpu.pipeline_mode<synchronous>, transform_indices = @transform_1, window_bounds = array<i64: 512, 112>}, {pipeline_mode = #tpu.pipeline_mode<synchronous>, transform_indices = @transform_2, window_bounds = array<i64: 1, 112>}, {pipeline_mode = #tpu.pipeline_mode<synchronous>, transform_indices = @transform_3, window_bounds = array<i64: 512, 144>}, {pipeline_mode = #tpu.pipeline_mode<synchronous>, transform_indices = @transform_4, window_bounds = array<i64: 1, 144>}, {pipeline_mode = #tpu.pipeline_mode<synchronous>, transform_indices = @transform_5, window_bounds = array<i64: 9, 144, 288>}, {pipeline_mode = #tpu.pipeline_mode<synchronous>, transform_indices = @transform_6, window_bounds = array<i64: 1, 288>}, {pipeline_mode = #tpu.pipeline_mode<synchronous>, transform_indices = @transform_7, window_bounds = array<i64: 512, 32>}, {pipeline_mode = #tpu.pipeline_mode<synchronous>, transform_indices = @transform_8, window_bounds = array<i64: 1, 32>}, {pipeline_mode = #tpu.pipeline_mode<synchronous>, transform_indices = @transform_9, window_bounds = array<i64: 9, 32, 64>}, {pipeline_mode = #tpu.pipeline_mode<synchronous>, transform_indices = @transform_10, window_bounds = array<i64: 1, 64>}, {pipeline_mode = #tpu.pipeline_mode<synchronous>, transform_indices = @transform_11, window_bounds = array<i64: 512, 64>}, {pipeline_mode = #tpu.pipeline_mode<synchronous>, transform_indices = @transform_12, window_bounds = array<i64: 1, 64>}, {transform_indices = @transform_13, window_bounds = array<i64: 1, 8, 8, 112>}, {transform_indices = @transform_14, window_bounds = array<i64: 1, 8, 8, 288>}, {transform_indices = @transform_15, window_bounds = array<i64: 1, 8, 8, 64>}, {transform_indices = @transform_16, window_bounds = array<i64: 1, 8, 8, 64>}]} {
    %c0 = arith.constant 0 : index
    %c0_0 = arith.constant 0 : index
    %c0_1 = arith.constant 0 : index
    %c0_2 = arith.constant 0 : index
    %0 = vector.load %arg1[%c0, %c0_0, %c0_1, %c0_2] : memref<1x8x8x512xbf16, #tpu.memory_space<vmem>>, vector<1x8x8x512xbf16>
    %1 = vector.shape_cast %0 : vector<1x8x8x512xbf16> to vector<8x8x512xbf16>
    %2 = vector.shape_cast %1 : vector<8x8x512xbf16> to vector<64x512xbf16>
    %c0_3 = arith.constant 0 : index
    %c0_4 = arith.constant 0 : index
    %3 = vector.load %arg4[%c0_3, %c0_4] : memref<512x144xbf16, #tpu.memory_space<vmem>>, vector<512x144xbf16>
    %cst = arith.constant dense<0.000000e+00> : vector<64x144xf32>
    %4 = tpu.matmul %2, %3, %cst {dimension_numbers = #tpu.dot_dimension_numbers<[1], [0], [0], [1], [0, 0, 1, 1], [], []>} : vector<64x512xbf16>, vector<512x144xbf16>, vector<64x144xf32> -> vector<64x144xf32>
    %c0_5 = arith.constant 0 : index
    %c0_6 = arith.constant 0 : index
    %5 = vector.load %arg5[%c0_5, %c0_6] : memref<1x144xf32, #tpu.memory_space<vmem>>, vector<1x144xf32>
    %6 = vector.broadcast %5 : vector<1x144xf32> to vector<64x144xf32>
    %7 = arith.addf %4, %6 : vector<64x144xf32>
    %cst_7 = arith.constant 0.000000e+00 : f32
    %8 = vector.broadcast %cst_7 : f32 to vector<64x144xf32>
    %9 = arith.maximumf %7, %8 : vector<64x144xf32>
    %cst_8 = arith.constant 0.000000e+00 : f32
    %10 = vector.broadcast %cst_8 : f32 to vector<10x10x144xf32>
    %c0_9 = arith.constant 0 : index
    %c0_10 = arith.constant 0 : index
    %c0_11 = arith.constant 0 : index
    %11 = vector.load %arg19[%c0_9, %c0_10, %c0_11] : memref<10x10x144xf32, #tpu.memory_space<vmem>>, vector<10x10x144xf32>
    tpu.vector_store %arg19[%c0_9, %c0_10, %c0_11], %10 {strides = array<i32>} : memref<10x10x144xf32, #tpu.memory_space<vmem>>, vector<10x10x144xf32>,
    %12 = vector.shape_cast %9 : vector<64x144xf32> to vector<8x8x144xf32>
    %c1 = arith.constant 1 : index
    %c1_12 = arith.constant 1 : index
    %c0_13 = arith.constant 0 : index
    %13 = vector.load %arg19[%c1, %c1_12, %c0_13] : memref<10x10x144xf32, #tpu.memory_space<vmem>>, vector<8x8x144xf32>
    tpu.vector_store %arg19[%c1, %c1_12, %c0_13], %12 {strides = array<i32>} : memref<10x10x144xf32, #tpu.memory_space<vmem>>, vector<8x8x144xf32>,
    %c0_14 = arith.constant 0 : index
    %c0_15 = arith.constant 0 : index
    %14 = vector.load %arg8[%c0_14, %c0_15] : memref<512x32xbf16, #tpu.memory_space<vmem>>, vector<512x32xbf16>
    %cst_16 = arith.constant dense<0.000000e+00> : vector<64x32xf32>
    %15 = tpu.matmul %2, %14, %cst_16 {dimension_numbers = #tpu.dot_dimension_numbers<[1], [0], [0], [1], [0, 0, 1, 1], [], []>} : vector<64x512xbf16>, vector<512x32xbf16>, vector<64x32xf32> -> vector<64x32xf32>
    %c0_17 = arith.constant 0 : index
    %c0_18 = arith.constant 0 : index
    %16 = vector.load %arg9[%c0_17, %c0_18] : memref<1x32xf32, #tpu.memory_space<vmem>>, vector<1x32xf32>
    %17 = vector.broadcast %16 : vector<1x32xf32> to vector<64x32xf32>
    %18 = arith.addf %15, %17 : vector<64x32xf32>
    %cst_19 = arith.constant 0.000000e+00 : f32
    %19 = vector.broadcast %cst_19 : f32 to vector<64x32xf32>
    %20 = arith.maximumf %18, %19 : vector<64x32xf32>
    %cst_20 = arith.constant 0.000000e+00 : f32
    %21 = vector.broadcast %cst_20 : f32 to vector<10x10x32xf32>
    %c0_21 = arith.constant 0 : index
    %c0_22 = arith.constant 0 : index
    %c0_23 = arith.constant 0 : index
    %22 = vector.load %arg20[%c0_21, %c0_22, %c0_23] : memref<10x10x32xf32, #tpu.memory_space<vmem>>, vector<10x10x32xf32>
    tpu.vector_store %arg20[%c0_21, %c0_22, %c0_23], %21 {strides = array<i32>} : memref<10x10x32xf32, #tpu.memory_space<vmem>>, vector<10x10x32xf32>,
    %23 = vector.shape_cast %20 : vector<64x32xf32> to vector<8x8x32xf32>
    %c1_24 = arith.constant 1 : index
    %c1_25 = arith.constant 1 : index
    %c0_26 = arith.constant 0 : index
    %24 = vector.load %arg20[%c1_24, %c1_25, %c0_26] : memref<10x10x32xf32, #tpu.memory_space<vmem>>, vector<8x8x32xf32>
    tpu.vector_store %arg20[%c1_24, %c1_25, %c0_26], %23 {strides = array<i32>} : memref<10x10x32xf32, #tpu.memory_space<vmem>>, vector<8x8x32xf32>,
    %c0_27 = arith.constant 0 : index
    %c0_28 = arith.constant 0 : index
    %25 = vector.load %arg2[%c0_27, %c0_28] : memref<512x112xbf16, #tpu.memory_space<vmem>>, vector<512x112xbf16>
    %cst_29 = arith.constant dense<0.000000e+00> : vector<64x112xf32>
    %26 = tpu.matmul %2, %25, %cst_29 {dimension_numbers = #tpu.dot_dimension_numbers<[1], [0], [0], [1], [0, 0, 1, 1], [], []>} : vector<64x512xbf16>, vector<512x112xbf16>, vector<64x112xf32> -> vector<64x112xf32>
    %c0_30 = arith.constant 0 : index
    %c0_31 = arith.constant 0 : index
    %27 = vector.load %arg3[%c0_30, %c0_31] : memref<1x112xf32, #tpu.memory_space<vmem>>, vector<1x112xf32>
    %28 = vector.broadcast %27 : vector<1x112xf32> to vector<64x112xf32>
    %29 = arith.addf %26, %28 : vector<64x112xf32>
    %cst_32 = arith.constant 0.000000e+00 : f32
    %30 = vector.broadcast %cst_32 : f32 to vector<64x112xf32>
    %31 = arith.maximumf %29, %30 : vector<64x112xf32>
    %32 = vector.shape_cast %31 : vector<64x112xf32> to vector<8x8x112xf32>
    %c0_33 = arith.constant 0 : index
    %c0_34 = arith.constant 0 : index
    %c0_35 = arith.constant 0 : index
    %c0_36 = arith.constant 0 : index
    %33 = vector.load %arg14[%c0_33, %c0_34, %c0_35, %c0_36] : memref<1x8x8x112xf32, #tpu.memory_space<vmem>>, vector<1x8x8x112xf32>
    %34 = vector.shape_cast %33 : vector<1x8x8x112xf32> to vector<8x8x112xf32>
    %35 = vector.shape_cast %32 : vector<8x8x112xf32> to vector<1x8x8x112xf32>
    tpu.vector_store %arg14[%c0_33, %c0_34, %c0_35, %c0_36], %35 {strides = array<i32>} : memref<1x8x8x112xf32, #tpu.memory_space<vmem>>, vector<1x8x8x112xf32>,
    %cst_37 = arith.constant 0xFF800000 : f32
    %36 = vector.broadcast %cst_37 : f32 to vector<10x10x512xf32>
    %c0_38 = arith.constant 0 : index
    %c0_39 = arith.constant 0 : index
    %c0_40 = arith.constant 0 : index
    %37 = vector.load %arg18[%c0_38, %c0_39, %c0_40] : memref<10x10x512xf32, #tpu.memory_space<vmem>>, vector<10x10x512xf32>
    tpu.vector_store %arg18[%c0_38, %c0_39, %c0_40], %36 {strides = array<i32>} : memref<10x10x512xf32, #tpu.memory_space<vmem>>, vector<10x10x512xf32>,
    %38 = arith.extf %1 : vector<8x8x512xbf16> to vector<8x8x512xf32>
    %c1_41 = arith.constant 1 : index
    %c1_42 = arith.constant 1 : index
    %c0_43 = arith.constant 0 : index
    %39 = vector.load %arg18[%c1_41, %c1_42, %c0_43] : memref<10x10x512xf32, #tpu.memory_space<vmem>>, vector<8x8x512xf32>
    tpu.vector_store %arg18[%c1_41, %c1_42, %c0_43], %38 {strides = array<i32>} : memref<10x10x512xf32, #tpu.memory_space<vmem>>, vector<8x8x512xf32>,
    %c0_44 = arith.constant 0 : index
    %c0_45 = arith.constant 0 : index
    %c0_46 = arith.constant 0 : index
    %40 = vector.load %arg18[%c0_44, %c0_45, %c0_46] : memref<10x10x512xf32, #tpu.memory_space<vmem>>, vector<10x10x512xf32>
    %41 = vector.extract_strided_slice %40 {offsets = [1, 1, 0], sizes = [8, 8, 512], strides = [1, 1, 1]} : vector<10x10x512xf32> to vector<8x8x512xf32>
    %42 = vector.extract_strided_slice %40 {offsets = [0, 0, 0], sizes = [8, 8, 512], strides = [1, 1, 1]} : vector<10x10x512xf32> to vector<8x8x512xf32>
    %43 = arith.maximumf %41, %42 : vector<8x8x512xf32>
    %44 = vector.extract_strided_slice %40 {offsets = [0, 1, 0], sizes = [8, 8, 512], strides = [1, 1, 1]} : vector<10x10x512xf32> to vector<8x8x512xf32>
    %45 = arith.maximumf %43, %44 : vector<8x8x512xf32>
    %46 = vector.extract_strided_slice %40 {offsets = [0, 2, 0], sizes = [8, 8, 512], strides = [1, 1, 1]} : vector<10x10x512xf32> to vector<8x8x512xf32>
    %47 = arith.maximumf %45, %46 : vector<8x8x512xf32>
    %48 = vector.extract_strided_slice %40 {offsets = [1, 0, 0], sizes = [8, 8, 512], strides = [1, 1, 1]} : vector<10x10x512xf32> to vector<8x8x512xf32>
    %49 = arith.maximumf %47, %48 : vector<8x8x512xf32>
    %50 = vector.extract_strided_slice %40 {offsets = [1, 2, 0], sizes = [8, 8, 512], strides = [1, 1, 1]} : vector<10x10x512xf32> to vector<8x8x512xf32>
    %51 = arith.maximumf %49, %50 : vector<8x8x512xf32>
    %52 = vector.extract_strided_slice %40 {offsets = [2, 0, 0], sizes = [8, 8, 512], strides = [1, 1, 1]} : vector<10x10x512xf32> to vector<8x8x512xf32>
    %53 = arith.maximumf %51, %52 : vector<8x8x512xf32>
    %54 = vector.extract_strided_slice %40 {offsets = [2, 1, 0], sizes = [8, 8, 512], strides = [1, 1, 1]} : vector<10x10x512xf32> to vector<8x8x512xf32>
    %55 = arith.maximumf %53, %54 : vector<8x8x512xf32>
    %56 = vector.extract_strided_slice %40 {offsets = [2, 2, 0], sizes = [8, 8, 512], strides = [1, 1, 1]} : vector<10x10x512xf32> to vector<8x8x512xf32>
    %57 = arith.maximumf %55, %56 : vector<8x8x512xf32>
    %58 = vector.shape_cast %57 : vector<8x8x512xf32> to vector<64x512xf32>
    %59 = arith.truncf %58 : vector<64x512xf32> to vector<64x512xbf16>
    %c0_47 = arith.constant 0 : index
    %c0_48 = arith.constant 0 : index
    %60 = vector.load %arg12[%c0_47, %c0_48] : memref<512x64xbf16, #tpu.memory_space<vmem>>, vector<512x64xbf16>
    %cst_49 = arith.constant dense<0.000000e+00> : vector<64x64xf32>
    %61 = tpu.matmul %59, %60, %cst_49 {dimension_numbers = #tpu.dot_dimension_numbers<[1], [0], [0], [1], [0, 0, 1, 1], [], []>} : vector<64x512xbf16>, vector<512x64xbf16>, vector<64x64xf32> -> vector<64x64xf32>
    %c0_50 = arith.constant 0 : index
    %c0_51 = arith.constant 0 : index
    %62 = vector.load %arg13[%c0_50, %c0_51] : memref<1x64xf32, #tpu.memory_space<vmem>>, vector<1x64xf32>
    %63 = vector.broadcast %62 : vector<1x64xf32> to vector<64x64xf32>
    %64 = arith.addf %61, %63 : vector<64x64xf32>
    %cst_52 = arith.constant 0.000000e+00 : f32
    %65 = vector.broadcast %cst_52 : f32 to vector<64x64xf32>
    %66 = arith.maximumf %64, %65 : vector<64x64xf32>
    %67 = vector.shape_cast %66 : vector<64x64xf32> to vector<8x8x64xf32>
    %c0_53 = arith.constant 0 : index
    %c0_54 = arith.constant 0 : index
    %c0_55 = arith.constant 0 : index
    %c0_56 = arith.constant 0 : index
    %68 = vector.load %arg17[%c0_53, %c0_54, %c0_55, %c0_56] : memref<1x8x8x64xf32, #tpu.memory_space<vmem>>, vector<1x8x8x64xf32>
    %69 = vector.shape_cast %68 : vector<1x8x8x64xf32> to vector<8x8x64xf32>
    %70 = vector.shape_cast %67 : vector<8x8x64xf32> to vector<1x8x8x64xf32>
    tpu.vector_store %arg17[%c0_53, %c0_54, %c0_55, %c0_56], %70 {strides = array<i32>} : memref<1x8x8x64xf32, #tpu.memory_space<vmem>>, vector<1x8x8x64xf32>,
    %c0_57 = arith.constant 0 : index
    %c0_58 = arith.constant 0 : index
    %c0_59 = arith.constant 0 : index
    %71 = vector.load %arg19[%c0_57, %c0_58, %c0_59] : memref<10x10x144xf32, #tpu.memory_space<vmem>>, vector<10x10x144xf32>
    %cst_60 = arith.constant 0.000000e+00 : f32
    %72 = vector.broadcast %cst_60 : f32 to vector<64x288xf32>
    %73 = vector.extract_strided_slice %71 {offsets = [0, 0, 0], sizes = [8, 8, 144], strides = [1, 1, 1]} : vector<10x10x144xf32> to vector<8x8x144xf32>
    %74 = vector.shape_cast %73 : vector<8x8x144xf32> to vector<64x144xf32>
    %75 = arith.truncf %74 : vector<64x144xf32> to vector<64x144xbf16>
    %c0_61 = arith.constant 0 : index
    %c0_62 = arith.constant 0 : index
    %c0_63 = arith.constant 0 : index
    %76 = vector.load %arg6[%c0_61, %c0_62, %c0_63] : memref<9x144x288xbf16, #tpu.memory_space<vmem>>, vector<1x144x288xbf16>
    %77 = vector.shape_cast %76 : vector<1x144x288xbf16> to vector<144x288xbf16>
    %cst_64 = arith.constant dense<0.000000e+00> : vector<64x288xf32>
    %78 = tpu.matmul %75, %77, %cst_64 {dimension_numbers = #tpu.dot_dimension_numbers<[1], [0], [0], [1], [0, 0, 1, 1], [], []>} : vector<64x144xbf16>, vector<144x288xbf16>, vector<64x288xf32> -> vector<64x288xf32>
    %79 = arith.addf %72, %78 : vector<64x288xf32>
    %80 = vector.extract_strided_slice %71 {offsets = [0, 1, 0], sizes = [8, 8, 144], strides = [1, 1, 1]} : vector<10x10x144xf32> to vector<8x8x144xf32>
    %81 = vector.shape_cast %80 : vector<8x8x144xf32> to vector<64x144xf32>
    %82 = arith.truncf %81 : vector<64x144xf32> to vector<64x144xbf16>
    %c1_65 = arith.constant 1 : index
    %c0_66 = arith.constant 0 : index
    %c0_67 = arith.constant 0 : index
    %83 = vector.load %arg6[%c1_65, %c0_66, %c0_67] : memref<9x144x288xbf16, #tpu.memory_space<vmem>>, vector<1x144x288xbf16>
    %84 = vector.shape_cast %83 : vector<1x144x288xbf16> to vector<144x288xbf16>
    %cst_68 = arith.constant dense<0.000000e+00> : vector<64x288xf32>
    %85 = tpu.matmul %82, %84, %cst_68 {dimension_numbers = #tpu.dot_dimension_numbers<[1], [0], [0], [1], [0, 0, 1, 1], [], []>} : vector<64x144xbf16>, vector<144x288xbf16>, vector<64x288xf32> -> vector<64x288xf32>
    %86 = arith.addf %79, %85 : vector<64x288xf32>
    %87 = vector.extract_strided_slice %71 {offsets = [0, 2, 0], sizes = [8, 8, 144], strides = [1, 1, 1]} : vector<10x10x144xf32> to vector<8x8x144xf32>
    %88 = vector.shape_cast %87 : vector<8x8x144xf32> to vector<64x144xf32>
    %89 = arith.truncf %88 : vector<64x144xf32> to vector<64x144xbf16>
    %c2 = arith.constant 2 : index
    %c0_69 = arith.constant 0 : index
    %c0_70 = arith.constant 0 : index
    %90 = vector.load %arg6[%c2, %c0_69, %c0_70] : memref<9x144x288xbf16, #tpu.memory_space<vmem>>, vector<1x144x288xbf16>
    %91 = vector.shape_cast %90 : vector<1x144x288xbf16> to vector<144x288xbf16>
    %cst_71 = arith.constant dense<0.000000e+00> : vector<64x288xf32>
    %92 = tpu.matmul %89, %91, %cst_71 {dimension_numbers = #tpu.dot_dimension_numbers<[1], [0], [0], [1], [0, 0, 1, 1], [], []>} : vector<64x144xbf16>, vector<144x288xbf16>, vector<64x288xf32> -> vector<64x288xf32>
    %93 = arith.addf %86, %92 : vector<64x288xf32>
    %94 = vector.extract_strided_slice %71 {offsets = [1, 0, 0], sizes = [8, 8, 144], strides = [1, 1, 1]} : vector<10x10x144xf32> to vector<8x8x144xf32>
    %95 = vector.shape_cast %94 : vector<8x8x144xf32> to vector<64x144xf32>
    %96 = arith.truncf %95 : vector<64x144xf32> to vector<64x144xbf16>
    %c3 = arith.constant 3 : index
    %c0_72 = arith.constant 0 : index
    %c0_73 = arith.constant 0 : index
    %97 = vector.load %arg6[%c3, %c0_72, %c0_73] : memref<9x144x288xbf16, #tpu.memory_space<vmem>>, vector<1x144x288xbf16>
    %98 = vector.shape_cast %97 : vector<1x144x288xbf16> to vector<144x288xbf16>
    %cst_74 = arith.constant dense<0.000000e+00> : vector<64x288xf32>
    %99 = tpu.matmul %96, %98, %cst_74 {dimension_numbers = #tpu.dot_dimension_numbers<[1], [0], [0], [1], [0, 0, 1, 1], [], []>} : vector<64x144xbf16>, vector<144x288xbf16>, vector<64x288xf32> -> vector<64x288xf32>
    %100 = arith.addf %93, %99 : vector<64x288xf32>
    %101 = vector.extract_strided_slice %71 {offsets = [1, 1, 0], sizes = [8, 8, 144], strides = [1, 1, 1]} : vector<10x10x144xf32> to vector<8x8x144xf32>
    %102 = vector.shape_cast %101 : vector<8x8x144xf32> to vector<64x144xf32>
    %103 = arith.truncf %102 : vector<64x144xf32> to vector<64x144xbf16>
    %c4 = arith.constant 4 : index
    %c0_75 = arith.constant 0 : index
    %c0_76 = arith.constant 0 : index
    %104 = vector.load %arg6[%c4, %c0_75, %c0_76] : memref<9x144x288xbf16, #tpu.memory_space<vmem>>, vector<1x144x288xbf16>
    %105 = vector.shape_cast %104 : vector<1x144x288xbf16> to vector<144x288xbf16>
    %cst_77 = arith.constant dense<0.000000e+00> : vector<64x288xf32>
    %106 = tpu.matmul %103, %105, %cst_77 {dimension_numbers = #tpu.dot_dimension_numbers<[1], [0], [0], [1], [0, 0, 1, 1], [], []>} : vector<64x144xbf16>, vector<144x288xbf16>, vector<64x288xf32> -> vector<64x288xf32>
    %107 = arith.addf %100, %106 : vector<64x288xf32>
    %108 = vector.extract_strided_slice %71 {offsets = [1, 2, 0], sizes = [8, 8, 144], strides = [1, 1, 1]} : vector<10x10x144xf32> to vector<8x8x144xf32>
    %109 = vector.shape_cast %108 : vector<8x8x144xf32> to vector<64x144xf32>
    %110 = arith.truncf %109 : vector<64x144xf32> to vector<64x144xbf16>
    %c5 = arith.constant 5 : index
    %c0_78 = arith.constant 0 : index
    %c0_79 = arith.constant 0 : index
    %111 = vector.load %arg6[%c5, %c0_78, %c0_79] : memref<9x144x288xbf16, #tpu.memory_space<vmem>>, vector<1x144x288xbf16>
    %112 = vector.shape_cast %111 : vector<1x144x288xbf16> to vector<144x288xbf16>
    %cst_80 = arith.constant dense<0.000000e+00> : vector<64x288xf32>
    %113 = tpu.matmul %110, %112, %cst_80 {dimension_numbers = #tpu.dot_dimension_numbers<[1], [0], [0], [1], [0, 0, 1, 1], [], []>} : vector<64x144xbf16>, vector<144x288xbf16>, vector<64x288xf32> -> vector<64x288xf32>
    %114 = arith.addf %107, %113 : vector<64x288xf32>
    %115 = vector.extract_strided_slice %71 {offsets = [2, 0, 0], sizes = [8, 8, 144], strides = [1, 1, 1]} : vector<10x10x144xf32> to vector<8x8x144xf32>
    %116 = vector.shape_cast %115 : vector<8x8x144xf32> to vector<64x144xf32>
    %117 = arith.truncf %116 : vector<64x144xf32> to vector<64x144xbf16>
    %c6 = arith.constant 6 : index
    %c0_81 = arith.constant 0 : index
    %c0_82 = arith.constant 0 : index
    %118 = vector.load %arg6[%c6, %c0_81, %c0_82] : memref<9x144x288xbf16, #tpu.memory_space<vmem>>, vector<1x144x288xbf16>
    %119 = vector.shape_cast %118 : vector<1x144x288xbf16> to vector<144x288xbf16>
    %cst_83 = arith.constant dense<0.000000e+00> : vector<64x288xf32>
    %120 = tpu.matmul %117, %119, %cst_83 {dimension_numbers = #tpu.dot_dimension_numbers<[1], [0], [0], [1], [0, 0, 1, 1], [], []>} : vector<64x144xbf16>, vector<144x288xbf16>, vector<64x288xf32> -> vector<64x288xf32>
    %121 = arith.addf %114, %120 : vector<64x288xf32>
    %122 = vector.extract_strided_slice %71 {offsets = [2, 1, 0], sizes = [8, 8, 144], strides = [1, 1, 1]} : vector<10x10x144xf32> to vector<8x8x144xf32>
    %123 = vector.shape_cast %122 : vector<8x8x144xf32> to vector<64x144xf32>
    %124 = arith.truncf %123 : vector<64x144xf32> to vector<64x144xbf16>
    %c7 = arith.constant 7 : index
    %c0_84 = arith.constant 0 : index
    %c0_85 = arith.constant 0 : index
    %125 = vector.load %arg6[%c7, %c0_84, %c0_85] : memref<9x144x288xbf16, #tpu.memory_space<vmem>>, vector<1x144x288xbf16>
    %126 = vector.shape_cast %125 : vector<1x144x288xbf16> to vector<144x288xbf16>
    %cst_86 = arith.constant dense<0.000000e+00> : vector<64x288xf32>
    %127 = tpu.matmul %124, %126, %cst_86 {dimension_numbers = #tpu.dot_dimension_numbers<[1], [0], [0], [1], [0, 0, 1, 1], [], []>} : vector<64x144xbf16>, vector<144x288xbf16>, vector<64x288xf32> -> vector<64x288xf32>
    %128 = arith.addf %121, %127 : vector<64x288xf32>
    %129 = vector.extract_strided_slice %71 {offsets = [2, 2, 0], sizes = [8, 8, 144], strides = [1, 1, 1]} : vector<10x10x144xf32> to vector<8x8x144xf32>
    %130 = vector.shape_cast %129 : vector<8x8x144xf32> to vector<64x144xf32>
    %131 = arith.truncf %130 : vector<64x144xf32> to vector<64x144xbf16>
    %c8 = arith.constant 8 : index
    %c0_87 = arith.constant 0 : index
    %c0_88 = arith.constant 0 : index
    %132 = vector.load %arg6[%c8, %c0_87, %c0_88] : memref<9x144x288xbf16, #tpu.memory_space<vmem>>, vector<1x144x288xbf16>
    %133 = vector.shape_cast %132 : vector<1x144x288xbf16> to vector<144x288xbf16>
    %cst_89 = arith.constant dense<0.000000e+00> : vector<64x288xf32>
    %134 = tpu.matmul %131, %133, %cst_89 {dimension_numbers = #tpu.dot_dimension_numbers<[1], [0], [0], [1], [0, 0, 1, 1], [], []>} : vector<64x144xbf16>, vector<144x288xbf16>, vector<64x288xf32> -> vector<64x288xf32>
    %135 = arith.addf %128, %134 : vector<64x288xf32>
    %c0_90 = arith.constant 0 : index
    %c0_91 = arith.constant 0 : index
    %136 = vector.load %arg7[%c0_90, %c0_91] : memref<1x288xf32, #tpu.memory_space<vmem>>, vector<1x288xf32>
    %137 = vector.broadcast %136 : vector<1x288xf32> to vector<64x288xf32>
    %138 = arith.addf %135, %137 : vector<64x288xf32>
    %cst_92 = arith.constant 0.000000e+00 : f32
    %139 = vector.broadcast %cst_92 : f32 to vector<64x288xf32>
    %140 = arith.maximumf %138, %139 : vector<64x288xf32>
    %141 = vector.shape_cast %140 : vector<64x288xf32> to vector<8x8x288xf32>
    %c0_93 = arith.constant 0 : index
    %c0_94 = arith.constant 0 : index
    %c0_95 = arith.constant 0 : index
    %c0_96 = arith.constant 0 : index
    %142 = vector.load %arg15[%c0_93, %c0_94, %c0_95, %c0_96] : memref<1x8x8x288xf32, #tpu.memory_space<vmem>>, vector<1x8x8x288xf32>
    %143 = vector.shape_cast %142 : vector<1x8x8x288xf32> to vector<8x8x288xf32>
    %144 = vector.shape_cast %141 : vector<8x8x288xf32> to vector<1x8x8x288xf32>
    tpu.vector_store %arg15[%c0_93, %c0_94, %c0_95, %c0_96], %144 {strides = array<i32>} : memref<1x8x8x288xf32, #tpu.memory_space<vmem>>, vector<1x8x8x288xf32>,
    %c0_97 = arith.constant 0 : index
    %c0_98 = arith.constant 0 : index
    %c0_99 = arith.constant 0 : index
    %145 = vector.load %arg20[%c0_97, %c0_98, %c0_99] : memref<10x10x32xf32, #tpu.memory_space<vmem>>, vector<10x10x32xf32>
    %cst_100 = arith.constant 0.000000e+00 : f32
    %146 = vector.broadcast %cst_100 : f32 to vector<64x64xf32>
    %147 = vector.extract_strided_slice %145 {offsets = [0, 0, 0], sizes = [8, 8, 32], strides = [1, 1, 1]} : vector<10x10x32xf32> to vector<8x8x32xf32>
    %148 = vector.shape_cast %147 : vector<8x8x32xf32> to vector<64x32xf32>
    %149 = arith.truncf %148 : vector<64x32xf32> to vector<64x32xbf16>
    %c0_101 = arith.constant 0 : index
    %c0_102 = arith.constant 0 : index
    %c0_103 = arith.constant 0 : index
    %150 = vector.load %arg10[%c0_101, %c0_102, %c0_103] : memref<9x32x64xbf16, #tpu.memory_space<vmem>>, vector<1x32x64xbf16>
    %151 = vector.shape_cast %150 : vector<1x32x64xbf16> to vector<32x64xbf16>
    %cst_104 = arith.constant dense<0.000000e+00> : vector<64x64xf32>
    %152 = tpu.matmul %149, %151, %cst_104 {dimension_numbers = #tpu.dot_dimension_numbers<[1], [0], [0], [1], [0, 0, 1, 1], [], []>} : vector<64x32xbf16>, vector<32x64xbf16>, vector<64x64xf32> -> vector<64x64xf32>
    %153 = arith.addf %146, %152 : vector<64x64xf32>
    %154 = vector.extract_strided_slice %145 {offsets = [0, 1, 0], sizes = [8, 8, 32], strides = [1, 1, 1]} : vector<10x10x32xf32> to vector<8x8x32xf32>
    %155 = vector.shape_cast %154 : vector<8x8x32xf32> to vector<64x32xf32>
    %156 = arith.truncf %155 : vector<64x32xf32> to vector<64x32xbf16>
    %c1_105 = arith.constant 1 : index
    %c0_106 = arith.constant 0 : index
    %c0_107 = arith.constant 0 : index
    %157 = vector.load %arg10[%c1_105, %c0_106, %c0_107] : memref<9x32x64xbf16, #tpu.memory_space<vmem>>, vector<1x32x64xbf16>
    %158 = vector.shape_cast %157 : vector<1x32x64xbf16> to vector<32x64xbf16>
    %cst_108 = arith.constant dense<0.000000e+00> : vector<64x64xf32>
    %159 = tpu.matmul %156, %158, %cst_108 {dimension_numbers = #tpu.dot_dimension_numbers<[1], [0], [0], [1], [0, 0, 1, 1], [], []>} : vector<64x32xbf16>, vector<32x64xbf16>, vector<64x64xf32> -> vector<64x64xf32>
    %160 = arith.addf %153, %159 : vector<64x64xf32>
    %161 = vector.extract_strided_slice %145 {offsets = [0, 2, 0], sizes = [8, 8, 32], strides = [1, 1, 1]} : vector<10x10x32xf32> to vector<8x8x32xf32>
    %162 = vector.shape_cast %161 : vector<8x8x32xf32> to vector<64x32xf32>
    %163 = arith.truncf %162 : vector<64x32xf32> to vector<64x32xbf16>
    %c2_109 = arith.constant 2 : index
    %c0_110 = arith.constant 0 : index
    %c0_111 = arith.constant 0 : index
    %164 = vector.load %arg10[%c2_109, %c0_110, %c0_111] : memref<9x32x64xbf16, #tpu.memory_space<vmem>>, vector<1x32x64xbf16>
    %165 = vector.shape_cast %164 : vector<1x32x64xbf16> to vector<32x64xbf16>
    %cst_112 = arith.constant dense<0.000000e+00> : vector<64x64xf32>
    %166 = tpu.matmul %163, %165, %cst_112 {dimension_numbers = #tpu.dot_dimension_numbers<[1], [0], [0], [1], [0, 0, 1, 1], [], []>} : vector<64x32xbf16>, vector<32x64xbf16>, vector<64x64xf32> -> vector<64x64xf32>
    %167 = arith.addf %160, %166 : vector<64x64xf32>
    %168 = vector.extract_strided_slice %145 {offsets = [1, 0, 0], sizes = [8, 8, 32], strides = [1, 1, 1]} : vector<10x10x32xf32> to vector<8x8x32xf32>
    %169 = vector.shape_cast %168 : vector<8x8x32xf32> to vector<64x32xf32>
    %170 = arith.truncf %169 : vector<64x32xf32> to vector<64x32xbf16>
    %c3_113 = arith.constant 3 : index
    %c0_114 = arith.constant 0 : index
    %c0_115 = arith.constant 0 : index
    %171 = vector.load %arg10[%c3_113, %c0_114, %c0_115] : memref<9x32x64xbf16, #tpu.memory_space<vmem>>, vector<1x32x64xbf16>
    %172 = vector.shape_cast %171 : vector<1x32x64xbf16> to vector<32x64xbf16>
    %cst_116 = arith.constant dense<0.000000e+00> : vector<64x64xf32>
    %173 = tpu.matmul %170, %172, %cst_116 {dimension_numbers = #tpu.dot_dimension_numbers<[1], [0], [0], [1], [0, 0, 1, 1], [], []>} : vector<64x32xbf16>, vector<32x64xbf16>, vector<64x64xf32> -> vector<64x64xf32>
    %174 = arith.addf %167, %173 : vector<64x64xf32>
    %175 = vector.extract_strided_slice %145 {offsets = [1, 1, 0], sizes = [8, 8, 32], strides = [1, 1, 1]} : vector<10x10x32xf32> to vector<8x8x32xf32>
    %176 = vector.shape_cast %175 : vector<8x8x32xf32> to vector<64x32xf32>
    %177 = arith.truncf %176 : vector<64x32xf32> to vector<64x32xbf16>
    %c4_117 = arith.constant 4 : index
    %c0_118 = arith.constant 0 : index
    %c0_119 = arith.constant 0 : index
    %178 = vector.load %arg10[%c4_117, %c0_118, %c0_119] : memref<9x32x64xbf16, #tpu.memory_space<vmem>>, vector<1x32x64xbf16>
    %179 = vector.shape_cast %178 : vector<1x32x64xbf16> to vector<32x64xbf16>
    %cst_120 = arith.constant dense<0.000000e+00> : vector<64x64xf32>
    %180 = tpu.matmul %177, %179, %cst_120 {dimension_numbers = #tpu.dot_dimension_numbers<[1], [0], [0], [1], [0, 0, 1, 1], [], []>} : vector<64x32xbf16>, vector<32x64xbf16>, vector<64x64xf32> -> vector<64x64xf32>
    %181 = arith.addf %174, %180 : vector<64x64xf32>
    %182 = vector.extract_strided_slice %145 {offsets = [1, 2, 0], sizes = [8, 8, 32], strides = [1, 1, 1]} : vector<10x10x32xf32> to vector<8x8x32xf32>
    %183 = vector.shape_cast %182 : vector<8x8x32xf32> to vector<64x32xf32>
    %184 = arith.truncf %183 : vector<64x32xf32> to vector<64x32xbf16>
    %c5_121 = arith.constant 5 : index
    %c0_122 = arith.constant 0 : index
    %c0_123 = arith.constant 0 : index
    %185 = vector.load %arg10[%c5_121, %c0_122, %c0_123] : memref<9x32x64xbf16, #tpu.memory_space<vmem>>, vector<1x32x64xbf16>
    %186 = vector.shape_cast %185 : vector<1x32x64xbf16> to vector<32x64xbf16>
    %cst_124 = arith.constant dense<0.000000e+00> : vector<64x64xf32>
    %187 = tpu.matmul %184, %186, %cst_124 {dimension_numbers = #tpu.dot_dimension_numbers<[1], [0], [0], [1], [0, 0, 1, 1], [], []>} : vector<64x32xbf16>, vector<32x64xbf16>, vector<64x64xf32> -> vector<64x64xf32>
    %188 = arith.addf %181, %187 : vector<64x64xf32>
    %189 = vector.extract_strided_slice %145 {offsets = [2, 0, 0], sizes = [8, 8, 32], strides = [1, 1, 1]} : vector<10x10x32xf32> to vector<8x8x32xf32>
    %190 = vector.shape_cast %189 : vector<8x8x32xf32> to vector<64x32xf32>
    %191 = arith.truncf %190 : vector<64x32xf32> to vector<64x32xbf16>
    %c6_125 = arith.constant 6 : index
    %c0_126 = arith.constant 0 : index
    %c0_127 = arith.constant 0 : index
    %192 = vector.load %arg10[%c6_125, %c0_126, %c0_127] : memref<9x32x64xbf16, #tpu.memory_space<vmem>>, vector<1x32x64xbf16>
    %193 = vector.shape_cast %192 : vector<1x32x64xbf16> to vector<32x64xbf16>
    %cst_128 = arith.constant dense<0.000000e+00> : vector<64x64xf32>
    %194 = tpu.matmul %191, %193, %cst_128 {dimension_numbers = #tpu.dot_dimension_numbers<[1], [0], [0], [1], [0, 0, 1, 1], [], []>} : vector<64x32xbf16>, vector<32x64xbf16>, vector<64x64xf32> -> vector<64x64xf32>
    %195 = arith.addf %188, %194 : vector<64x64xf32>
    %196 = vector.extract_strided_slice %145 {offsets = [2, 1, 0], sizes = [8, 8, 32], strides = [1, 1, 1]} : vector<10x10x32xf32> to vector<8x8x32xf32>
    %197 = vector.shape_cast %196 : vector<8x8x32xf32> to vector<64x32xf32>
    %198 = arith.truncf %197 : vector<64x32xf32> to vector<64x32xbf16>
    %c7_129 = arith.constant 7 : index
    %c0_130 = arith.constant 0 : index
    %c0_131 = arith.constant 0 : index
    %199 = vector.load %arg10[%c7_129, %c0_130, %c0_131] : memref<9x32x64xbf16, #tpu.memory_space<vmem>>, vector<1x32x64xbf16>
    %200 = vector.shape_cast %199 : vector<1x32x64xbf16> to vector<32x64xbf16>
    %cst_132 = arith.constant dense<0.000000e+00> : vector<64x64xf32>
    %201 = tpu.matmul %198, %200, %cst_132 {dimension_numbers = #tpu.dot_dimension_numbers<[1], [0], [0], [1], [0, 0, 1, 1], [], []>} : vector<64x32xbf16>, vector<32x64xbf16>, vector<64x64xf32> -> vector<64x64xf32>
    %202 = arith.addf %195, %201 : vector<64x64xf32>
    %203 = vector.extract_strided_slice %145 {offsets = [2, 2, 0], sizes = [8, 8, 32], strides = [1, 1, 1]} : vector<10x10x32xf32> to vector<8x8x32xf32>
    %204 = vector.shape_cast %203 : vector<8x8x32xf32> to vector<64x32xf32>
    %205 = arith.truncf %204 : vector<64x32xf32> to vector<64x32xbf16>
    %c8_133 = arith.constant 8 : index
    %c0_134 = arith.constant 0 : index
    %c0_135 = arith.constant 0 : index
    %206 = vector.load %arg10[%c8_133, %c0_134, %c0_135] : memref<9x32x64xbf16, #tpu.memory_space<vmem>>, vector<1x32x64xbf16>
    %207 = vector.shape_cast %206 : vector<1x32x64xbf16> to vector<32x64xbf16>
    %cst_136 = arith.constant dense<0.000000e+00> : vector<64x64xf32>
    %208 = tpu.matmul %205, %207, %cst_136 {dimension_numbers = #tpu.dot_dimension_numbers<[1], [0], [0], [1], [0, 0, 1, 1], [], []>} : vector<64x32xbf16>, vector<32x64xbf16>, vector<64x64xf32> -> vector<64x64xf32>
    %209 = arith.addf %202, %208 : vector<64x64xf32>
    %c0_137 = arith.constant 0 : index
    %c0_138 = arith.constant 0 : index
    %210 = vector.load %arg11[%c0_137, %c0_138] : memref<1x64xf32, #tpu.memory_space<vmem>>, vector<1x64xf32>
    %211 = vector.broadcast %210 : vector<1x64xf32> to vector<64x64xf32>
    %212 = arith.addf %209, %211 : vector<64x64xf32>
    %cst_139 = arith.constant 0.000000e+00 : f32
    %213 = vector.broadcast %cst_139 : f32 to vector<64x64xf32>
    %214 = arith.maximumf %212, %213 : vector<64x64xf32>
    %215 = vector.shape_cast %214 : vector<64x64xf32> to vector<8x8x64xf32>
    %c0_140 = arith.constant 0 : index
    %c0_141 = arith.constant 0 : index
    %c0_142 = arith.constant 0 : index
    %c0_143 = arith.constant 0 : index
    %216 = vector.load %arg16[%c0_140, %c0_141, %c0_142, %c0_143] : memref<1x8x8x64xf32, #tpu.memory_space<vmem>>, vector<1x8x8x64xf32>
    %217 = vector.shape_cast %216 : vector<1x8x8x64xf32> to vector<8x8x64xf32>
    %218 = vector.shape_cast %215 : vector<8x8x64xf32> to vector<1x8x8x64xf32>
    tpu.vector_store %arg16[%c0_140, %c0_141, %c0_142, %c0_143], %218 {strides = array<i32>} : memref<1x8x8x64xf32, #tpu.memory_space<vmem>>, vector<1x8x8x64xf32>,
    return
  }
  func.func @transform_0(%arg0: i32) -> (i32, i32, i32, i32) {
    %c0_i32 = arith.constant 0 : i32
    %c0_i32_0 = arith.constant 0 : i32
    %c0_i32_1 = arith.constant 0 : i32
    %c0_i32_2 = arith.constant 0 : i32
    return %arg0, %c0_i32, %c0_i32_0, %c0_i32_1 : i32, i32, i32, i32
  }
  func.func @transform_1(%arg0: i32) -> (i32, i32) {
    %c0_i32 = arith.constant 0 : i32
    %c0_i32_0 = arith.constant 0 : i32
    %c0_i32_1 = arith.constant 0 : i32
    return %c0_i32, %c0_i32_0 : i32, i32
  }
  func.func @transform_2(%arg0: i32) -> (i32, i32) {
    %c0_i32 = arith.constant 0 : i32
    %c0_i32_0 = arith.constant 0 : i32
    %c0_i32_1 = arith.constant 0 : i32
    return %c0_i32, %c0_i32_0 : i32, i32
  }
  func.func @transform_3(%arg0: i32) -> (i32, i32) {
    %c0_i32 = arith.constant 0 : i32
    %c0_i32_0 = arith.constant 0 : i32
    %c0_i32_1 = arith.constant 0 : i32
    return %c0_i32, %c0_i32_0 : i32, i32
  }
  func.func @transform_4(%arg0: i32) -> (i32, i32) {
    %c0_i32 = arith.constant 0 : i32
    %c0_i32_0 = arith.constant 0 : i32
    %c0_i32_1 = arith.constant 0 : i32
    return %c0_i32, %c0_i32_0 : i32, i32
  }
  func.func @transform_5(%arg0: i32) -> (i32, i32, i32) {
    %c0_i32 = arith.constant 0 : i32
    %c0_i32_0 = arith.constant 0 : i32
    %c0_i32_1 = arith.constant 0 : i32
    %c0_i32_2 = arith.constant 0 : i32
    return %c0_i32, %c0_i32_0, %c0_i32_1 : i32, i32, i32
  }
  func.func @transform_6(%arg0: i32) -> (i32, i32) {
    %c0_i32 = arith.constant 0 : i32
    %c0_i32_0 = arith.constant 0 : i32
    %c0_i32_1 = arith.constant 0 : i32
    return %c0_i32, %c0_i32_0 : i32, i32
  }
  func.func @transform_7(%arg0: i32) -> (i32, i32) {
    %c0_i32 = arith.constant 0 : i32
    %c0_i32_0 = arith.constant 0 : i32
    %c0_i32_1 = arith.constant 0 : i32
    return %c0_i32, %c0_i32_0 : i32, i32
  }
  func.func @transform_8(%arg0: i32) -> (i32, i32) {
    %c0_i32 = arith.constant 0 : i32
    %c0_i32_0 = arith.constant 0 : i32
    %c0_i32_1 = arith.constant 0 : i32
    return %c0_i32, %c0_i32_0 : i32, i32
  }
  func.func @transform_9(%arg0: i32) -> (i32, i32, i32) {
    %c0_i32 = arith.constant 0 : i32
    %c0_i32_0 = arith.constant 0 : i32
    %c0_i32_1 = arith.constant 0 : i32
    %c0_i32_2 = arith.constant 0 : i32
    return %c0_i32, %c0_i32_0, %c0_i32_1 : i32, i32, i32
  }
  func.func @transform_10(%arg0: i32) -> (i32, i32) {
    %c0_i32 = arith.constant 0 : i32
    %c0_i32_0 = arith.constant 0 : i32
    %c0_i32_1 = arith.constant 0 : i32
    return %c0_i32, %c0_i32_0 : i32, i32
  }
  func.func @transform_11(%arg0: i32) -> (i32, i32) {
    %c0_i32 = arith.constant 0 : i32
    %c0_i32_0 = arith.constant 0 : i32
    %c0_i32_1 = arith.constant 0 : i32
    return %c0_i32, %c0_i32_0 : i32, i32
  }
  func.func @transform_12(%arg0: i32) -> (i32, i32) {
    %c0_i32 = arith.constant 0 : i32
    %c0_i32_0 = arith.constant 0 : i32
    %c0_i32_1 = arith.constant 0 : i32
    return %c0_i32, %c0_i32_0 : i32, i32
  }
  func.func @transform_13(%arg0: i32) -> (i32, i32, i32, i32) {
    %c0_i32 = arith.constant 0 : i32
    %c0_i32_0 = arith.constant 0 : i32
    %c0_i32_1 = arith.constant 0 : i32
    %c0_i32_2 = arith.constant 0 : i32
    return %arg0, %c0_i32, %c0_i32_0, %c0_i32_1 : i32, i32, i32, i32
  }
  func.func @transform_14(%arg0: i32) -> (i32, i32, i32, i32) {
    %c0_i32 = arith.constant 0 : i32
    %c0_i32_0 = arith.constant 0 : i32
    %c0_i32_1 = arith.constant 0 : i32
    %c0_i32_2 = arith.constant 0 : i32
    return %arg0, %c0_i32, %c0_i32_0, %c0_i32_1 : i32, i32, i32, i32
  }
  func.func @transform_15(%arg0: i32) -> (i32, i32, i32, i32) {
    %c0_i32 = arith.constant 0 : i32
    %c0_i32_0 = arith.constant 0 : i32
    %c0_i32_1 = arith.constant 0 : i32
    %c0_i32_2 = arith.constant 0 : i32
    return %arg0, %c0_i32, %c0_i32_0, %c0_i32_1 : i32, i32, i32, i32
  }
  func.func @transform_16(%arg0: i32) -> (i32, i32, i32, i32) {
    %c0_i32 = arith.constant 0 : i32
    %c0_i32_0 = arith.constant 0 : i32
    %c0_i32_1 = arith.constant 0 : i32
    %c0_i32_2 = arith.constant 0 : i32
    return %arg0, %c0_i32, %c0_i32_0, %c0_i32_1 : i32, i32, i32, i32
  }
}

</mosaic_0001>

<llo_original>
// kernel: inception4d_pallas.1
$region0: #{inception4d_pallas.1}
  #allocation0 [shape = 'u32[]', space=smem, size = 0x4, offset = 0x4, fixed_abs, tag = 'smem constant byte address 0x4 - core index']
  #allocation1 [shape = 'u32[144,128]{1,0:T(1,128)}', space=vmem, size = 0x12000, scoped, tag = 'internal scratch']
  #allocation2 [shape = 'f32[10,10,512]{2,1,0:T(8,128)}', space=vmem, size = 0x50000, scoped, tag = 'scratch operand']
  #allocation3 [shape = 'f32[10,10,144]{2,1,0:T(8,128)}', space=vmem, size = 0x28000, scoped, tag = 'scratch operand']
  #allocation4 [shape = 'f32[10,10,32]{2,1,0:T(8,128)}', space=vmem, size = 0x14000, scoped, tag = 'scratch operand']
  %s0 = inlined_call_operand.vmem [shape: bf16[2,8,8,512], index: 0, kind: input, shape index: {}]
  %s1 = inlined_call_operand.vmem [shape: bf16[512,112], index: 1, kind: input, shape index: {}]
  %s2 = inlined_call_operand.vmem [shape: f32[1,112], index: 2, kind: input, shape index: {}]
  %s3 = inlined_call_operand.vmem [shape: bf16[512,144], index: 3, kind: input, shape index: {}]
  %s4 = inlined_call_operand.vmem [shape: f32[1,144], index: 4, kind: input, shape index: {}]
  %s5 = inlined_call_operand.vmem [shape: bf16[9,144,288], index: 5, kind: input, shape index: {}]
  %s6 = inlined_call_operand.vmem [shape: f32[1,288], index: 6, kind: input, shape index: {}]
  %s7 = inlined_call_operand.vmem [shape: bf16[512,32], index: 7, kind: input, shape index: {}]
  %s8 = inlined_call_operand.vmem [shape: f32[1,32], index: 8, kind: input, shape index: {}]
  %s9 = inlined_call_operand.vmem [shape: bf16[9,32,64], index: 9, kind: input, shape index: {}]
  %s10 = inlined_call_operand.vmem [shape: f32[1,64], index: 10, kind: input, shape index: {}]
  %s11 = inlined_call_operand.vmem [shape: bf16[512,64], index: 11, kind: input, shape index: {}]
  %s12 = inlined_call_operand.vmem [shape: f32[1,64], index: 12, kind: input, shape index: {}]
  %s13 = inlined_call_operand.vmem [shape: f32[2,8,8,112], index: 13, kind: output, shape index: {0}]
  %s14 = inlined_call_operand.vmem [shape: f32[2,8,8,288], index: 14, kind: output, shape index: {1}]
  %s15 = inlined_call_operand.vmem [shape: f32[2,8,8,64], index: 15, kind: output, shape index: {2}]
  %s16 = inlined_call_operand.vmem [shape: f32[2,8,8,64], index: 16, kind: output, shape index: {3}]
  %17 = xla_tuple %s13, %s14, %s15, %s16
  %s18 = sld [smem:[#allocation0]]
  $region109: #{inception4d_pallas.1} parent=0
    _
  %s20 = ssub.s32 1, %s18
  %s21 = scalar_select 0, %s20, %s18
  loop: start=0, step=1, limit=4
  $region2: #{inception4d_pallas.1} parent=0 // loop_pre_header
    _
  $region3: #{inception4d_pallas.1} parent=0 // loop_header
    %s23 = sphi 0, %s27
    %p24 = scmp.ge.s32.totalorder %s23, 4
    %s33 = sphi 0, %s35
    %s36 = sphi 0, %s33
    %s37 = sphi 0, %s36
    %s53 = sphi 0, %s37
    %s57 = sphi 0, %s57
    %s59 = sphi 0, %s57
    %s60 = sphi 0, %s59
    %s74 = sphi 0, %s60
    %s78 = sphi 0, %s78
    %s80 = sphi 0, %s78
    %s81 = sphi 0, %s80
    %s95 = sphi 0, %s81
    %s99 = sphi 0, %s99
    %s101 = sphi 0, %s99
    %s102 = sphi 0, %s101
    %s116 = sphi 0, %s102
    %s120 = sphi 0, %s120
    %s122 = sphi 0, %s120
    %s123 = sphi 0, %s122
    %s137 = sphi 0, %s123
    %s141 = sphi 0, %s141
    %s143 = sphi 0, %s141
    %s144 = sphi 0, %s143
    %s158 = sphi 0, %s144
    %s162 = sphi 0, %s162
    %s164 = sphi 0, %s162
    %s165 = sphi 0, %s164
    %s179 = sphi 0, %s165
    %s183 = sphi 0, %s183
    %s185 = sphi 0, %s183
    %s186 = sphi 0, %s185
    %s200 = sphi 0, %s186
    %s204 = sphi 0, %s204
    %s206 = sphi 0, %s204
    %s207 = sphi 0, %s206
    %s221 = sphi 0, %s207
    %s225 = sphi 0, %s225
    %s227 = sphi 0, %s225
    %s228 = sphi 0, %s227
    %s242 = sphi 0, %s228
    %s246 = sphi 0, %s246
    %s248 = sphi 0, %s246
    %s249 = sphi 0, %s248
    %s263 = sphi 0, %s249
    %s267 = sphi 0, %s267
    %s269 = sphi 0, %s267
    %s270 = sphi 0, %s269
    %s284 = sphi 0, %s270
    %s288 = sphi 0, %s288
    %s290 = sphi 0, %s288
    %s291 = sphi 0, %s290
    %s305 = sphi 0, %s291
    %s311 = sphi 0, %s313
    %s314 = sphi 0, %s311
    %s315 = sphi 0, %s314
    %s331 = sphi 0, %s315
    %s337 = sphi 0, %s339
    %s340 = sphi 0, %s337
    %s341 = sphi 0, %s340
    %s357 = sphi 0, %s341
    %s363 = sphi 0, %s365
    %s366 = sphi 0, %s363
    %s367 = sphi 0, %s366
    %s383 = sphi 0, %s367
    %s389 = sphi 0, %s391
    %s392 = sphi 0, %s389
    %s393 = sphi 0, %s392
    %s409 = sphi 0, %s393
  $region4: #{inception4d_pallas.1} parent=0 // loop_header_branch
    %26 = sbr.rel (%p24) target = $region8
  $region5: #{inception4d_pallas.1} parent=0 // loop_body
    %s28 = ssub.s32 %s23, 1
    %s29 = ssub.s32 %s23, 2
    %s30 = sadd.s32 %s23, 1
    %s31 = ssub.s32 %s23, %s30
    %p32 = scmp.eq.s32.totalorder %s31, 0
    %s34 = sadd.s32 %s33, 1
    %s35 = scalar_select %p32, %s33, %s34
    %p38 = pneg %p32
    %p39 = scmp.eq.s32.totalorder %s23, 1
    %p40 = por %p38, %p39
    %p41 = scmp.ne.s32.totalorder %s33, %s36
    %p42 = scmp.eq.s32.totalorder %s23, 0
    %p43 = por %p41, %p42
    %p44 = scmp.ne.s32.totalorder %s33, %s36
    %p45 = scmp.eq.s32.totalorder %s28, 1
    %p46 = por %p44, %p45
    %p47 = scmp.ne.s32.totalorder %s36, %s37
    %p48 = scmp.eq.s32.totalorder %s28, 0
    %p49 = por %p47, %p48
    %p50 = scmp.ne.s32.totalorder %s36, %s37
    %p51 = scmp.eq.s32.totalorder %s29, 1
    %p52 = por %p50, %p51
    %p54 = scmp.ne.s32.totalorder %s37, %s53
    %p55 = scmp.eq.s32.totalorder %s29, 0
    %p56 = por %p54, %p55
    %s58 = sadd.s32 %s57, 1
    %p61 = scmp.eq.s32.totalorder %s23, 1
    %p62 = scmp.ne.s32.totalorder %s57, %s59
    %p63 = scmp.eq.s32.totalorder %s23, 0
    %p64 = por %p62, %p63
    %p65 = scmp.ne.s32.totalorder %s57, %s59
    %p66 = scmp.eq.s32.totalorder %s28, 1
    %p67 = por %p65, %p66
    %p68 = scmp.ne.s32.totalorder %s59, %s60
    %p69 = scmp.eq.s32.totalorder %s28, 0
    %p70 = por %p68, %p69
    %p71 = scmp.ne.s32.totalorder %s59, %s60
    %p72 = scmp.eq.s32.totalorder %s29, 1
    %p73 = por %p71, %p72
    %p75 = scmp.ne.s32.totalorder %s60, %s74
    %p76 = scmp.eq.s32.totalorder %s29, 0
    %p77 = por %p75, %p76
    %s79 = sadd.s32 %s78, 1
    %p82 = scmp.eq.s32.totalorder %s23, 1
    %p83 = scmp.ne.s32.totalorder %s78, %s80
    %p84 = scmp.eq.s32.totalorder %s23, 0
    %p85 = por %p83, %p84
    %p86 = scmp.ne.s32.totalorder %s78, %s80
    %p87 = scmp.eq.s32.totalorder %s28, 1
    %p88 = por %p86, %p87
    %p89 = scmp.ne.s32.totalorder %s80, %s81
    %p90 = scmp.eq.s32.totalorder %s28, 0
    %p91 = por %p89, %p90
    %p92 = scmp.ne.s32.totalorder %s80, %s81
    %p93 = scmp.eq.s32.totalorder %s29, 1
    %p94 = por %p92, %p93
    %p96 = scmp.ne.s32.totalorder %s81, %s95
    %p97 = scmp.eq.s32.totalorder %s29, 0
    %p98 = por %p96, %p97
    %s100 = sadd.s32 %s99, 1
    %p103 = scmp.eq.s32.totalorder %s23, 1
    %p104 = scmp.ne.s32.totalorder %s99, %s101
    %p105 = scmp.eq.s32.totalorder %s23, 0
    %p106 = por %p104, %p105
    %p107 = scmp.ne.s32.totalorder %s99, %s101
    %p108 = scmp.eq.s32.totalorder %s28, 1
    %p109 = por %p107, %p108
    %p110 = scmp.ne.s32.totalorder %s101, %s102
    %p111 = scmp.eq.s32.totalorder %s28, 0
    %p112 = por %p110, %p111
    %p113 = scmp.ne.s32.totalorder %s101, %s102
    %p114 = scmp.eq.s32.totalorder %s29, 1
    %p115 = por %p113, %p114
    %p117 = scmp.ne.s32.totalorder %s102, %s116
    %p118 = scmp.eq.s32.totalorder %s29, 0
    %p119 = por %p117, %p118
    %s121 = sadd.s32 %s120, 1
    %p124 = scmp.eq.s32.totalorder %s23, 1
    %p125 = scmp.ne.s32.totalorder %s120, %s122
    %p126 = scmp.eq.s32.totalorder %s23, 0
    %p127 = por %p125, %p126
    %p128 = scmp.ne.s32.totalorder %s120, %s122
    %p129 = scmp.eq.s32.totalorder %s28, 1
    %p130 = por %p128, %p129
    %p131 = scmp.ne.s32.totalorder %s122, %s123
    %p132 = scmp.eq.s32.totalorder %s28, 0
    %p133 = por %p131, %p132
    %p134 = scmp.ne.s32.totalorder %s122, %s123
    %p135 = scmp.eq.s32.totalorder %s29, 1
    %p136 = por %p134, %p135
    %p138 = scmp.ne.s32.totalorder %s123, %s137
    %p139 = scmp.eq.s32.totalorder %s29, 0
    %p140 = por %p138, %p139
    %s142 = sadd.s32 %s141, 1
    %p145 = scmp.eq.s32.totalorder %s23, 1
    %p146 = scmp.ne.s32.totalorder %s141, %s143
    %p147 = scmp.eq.s32.totalorder %s23, 0
    %p148 = por %p146, %p147
    %p149 = scmp.ne.s32.totalorder %s141, %s143
    %p150 = scmp.eq.s32.totalorder %s28, 1
    %p151 = por %p149, %p150
    %p152 = scmp.ne.s32.totalorder %s143, %s144
    %p153 = scmp.eq.s32.totalorder %s28, 0
    %p154 = por %p152, %p153
    %p155 = scmp.ne.s32.totalorder %s143, %s144
    %p156 = scmp.eq.s32.totalorder %s29, 1
    %p157 = por %p155, %p156
    %p159 = scmp.ne.s32.totalorder %s144, %s158
    %p160 = scmp.eq.s32.totalorder %s29, 0
    %p161 = por %p159, %p160
    %s163 = sadd.s32 %s162, 1
    %p166 = scmp.eq.s32.totalorder %s23, 1
    %p167 = scmp.ne.s32.totalorder %s162, %s164
    %p168 = scmp.eq.s32.totalorder %s23, 0
    %p169 = por %p167, %p168
    %p170 = scmp.ne.s32.totalorder %s162, %s164
    %p171 = scmp.eq.s32.totalorder %s28, 1
    %p172 = por %p170, %p171
    %p173 = scmp.ne.s32.totalorder %s164, %s165
    %p174 = scmp.eq.s32.totalorder %s28, 0
    %p175 = por %p173, %p174
    %p176 = scmp.ne.s32.totalorder %s164, %s165
    %p177 = scmp.eq.s32.totalorder %s29, 1
    %p178 = por %p176, %p177
    %p180 = scmp.ne.s32.totalorder %s165, %s179
    %p181 = scmp.eq.s32.totalorder %s29, 0
    %p182 = por %p180, %p181
    %s184 = sadd.s32 %s183, 1
    %p187 = scmp.eq.s32.totalorder %s23, 1
    %p188 = scmp.ne.s32.totalorder %s183, %s185
    %p189 = scmp.eq.s32.totalorder %s23, 0
    %p190 = por %p188, %p189
    %p191 = scmp.ne.s32.totalorder %s183, %s185
    %p192 = scmp.eq.s32.totalorder %s28, 1
    %p193 = por %p191, %p192
    %p194 = scmp.ne.s32.totalorder %s185, %s186
    %p195 = scmp.eq.s32.totalorder %s28, 0
    %p196 = por %p194, %p195
    %p197 = scmp.ne.s32.totalorder %s185, %s186
    %p198 = scmp.eq.s32.totalorder %s29, 1
    %p199 = por %p197, %p198
    %p201 = scmp.ne.s32.totalorder %s186, %s200
    %p202 = scmp.eq.s32.totalorder %s29, 0
    %p203 = por %p201, %p202
    %s205 = sadd.s32 %s204, 1
    %p208 = scmp.eq.s32.totalorder %s23, 1
    %p209 = scmp.ne.s32.totalorder %s204, %s206
    %p210 = scmp.eq.s32.totalorder %s23, 0
    %p211 = por %p209, %p210
    %p212 = scmp.ne.s32.totalorder %s204, %s206
    %p213 = scmp.eq.s32.totalorder %s28, 1
    %p214 = por %p212, %p213
    %p215 = scmp.ne.s32.totalorder %s206, %s207
    %p216 = scmp.eq.s32.totalorder %s28, 0
    %p217 = por %p215, %p216
    %p218 = scmp.ne.s32.totalorder %s206, %s207
    %p219 = scmp.eq.s32.totalorder %s29, 1
    %p220 = por %p218, %p219
    %p222 = scmp.ne.s32.totalorder %s207, %s221
    %p223 = scmp.eq.s32.totalorder %s29, 0
    %p224 = por %p222, %p223
    %s226 = sadd.s32 %s225, 1
    %p229 = scmp.eq.s32.totalorder %s23, 1
    %p230 = scmp.ne.s32.totalorder %s225, %s227
    %p231 = scmp.eq.s32.totalorder %s23, 0
    %p232 = por %p230, %p231
    %p233 = scmp.ne.s32.totalorder %s225, %s227
    %p234 = scmp.eq.s32.totalorder %s28, 1
    %p235 = por %p233, %p234
    %p236 = scmp.ne.s32.totalorder %s227, %s228
    %p237 = scmp.eq.s32.totalorder %s28, 0
    %p238 = por %p236, %p237
    %p239 = scmp.ne.s32.totalorder %s227, %s228
    %p240 = scmp.eq.s32.totalorder %s29, 1
    %p241 = por %p239, %p240
    %p243 = scmp.ne.s32.totalorder %s228, %s242
    %p244 = scmp.eq.s32.totalorder %s29, 0
    %p245 = por %p243, %p244
    %s247 = sadd.s32 %s246, 1
    %p250 = scmp.eq.s32.totalorder %s23, 1
    %p251 = scmp.ne.s32.totalorder %s246, %s248
    %p252 = scmp.eq.s32.totalorder %s23, 0
    %p253 = por %p251, %p252
    %p254 = scmp.ne.s32.totalorder %s246, %s248
    %p255 = scmp.eq.s32.totalorder %s28, 1
    %p256 = por %p254, %p255
    %p257 = scmp.ne.s32.totalorder %s248, %s249
    %p258 = scmp.eq.s32.totalorder %s28, 0
    %p259 = por %p257, %p258
    %p260 = scmp.ne.s32.totalorder %s248, %s249
    %p261 = scmp.eq.s32.totalorder %s29, 1
    %p262 = por %p260, %p261
    %p264 = scmp.ne.s32.totalorder %s249, %s263
    %p265 = scmp.eq.s32.totalorder %s29, 0
    %p266 = por %p264, %p265
    %s268 = sadd.s32 %s267, 1
    %p271 = scmp.eq.s32.totalorder %s23, 1
    %p272 = scmp.ne.s32.totalorder %s267, %s269
    %p273 = scmp.eq.s32.totalorder %s23, 0
    %p274 = por %p272, %p273
    %p275 = scmp.ne.s32.totalorder %s267, %s269
    %p276 = scmp.eq.s32.totalorder %s28, 1
    %p277 = por %p275, %p276
    %p278 = scmp.ne.s32.totalorder %s269, %s270
    %p279 = scmp.eq.s32.totalorder %s28, 0
    %p280 = por %p278, %p279
    %p281 = scmp.ne.s32.totalorder %s269, %s270
    %p282 = scmp.eq.s32.totalorder %s29, 1
    %p283 = por %p281, %p282
    %p285 = scmp.ne.s32.totalorder %s270, %s284
    %p286 = scmp.eq.s32.totalorder %s29, 0
    %p287 = por %p285, %p286
    %s289 = sadd.s32 %s288, 1
    %p292 = scmp.eq.s32.totalorder %s23, 1
    %p293 = scmp.ne.s32.totalorder %s288, %s290
    %p294 = scmp.eq.s32.totalorder %s23, 0
    %p295 = por %p293, %p294
    %p296 = scmp.ne.s32.totalorder %s288, %s290
    %p297 = scmp.eq.s32.totalorder %s28, 1
    %p298 = por %p296, %p297
    %p299 = scmp.ne.s32.totalorder %s290, %s291
    %p300 = scmp.eq.s32.totalorder %s28, 0
    %p301 = por %p299, %p300
    %p302 = scmp.ne.s32.totalorder %s290, %s291
    %p303 = scmp.eq.s32.totalorder %s29, 1
    %p304 = por %p302, %p303
    %p306 = scmp.ne.s32.totalorder %s291, %s305
    %p307 = scmp.eq.s32.totalorder %s29, 0
    %p308 = por %p306, %p307
    %s309 = ssub.s32 %s23, %s30
    %p310 = scmp.eq.s32.totalorder %s309, 0
    %s312 = sadd.s32 %s311, 1
    %s313 = scalar_select %p310, %s311, %s312
    %p316 = pneg %p310
    %p317 = scmp.eq.s32.totalorder %s23, 1
    %p318 = por %p316, %p317
    %p319 = scmp.ne.s32.totalorder %s311, %s314
    %p320 = scmp.eq.s32.totalorder %s23, 0
    %p321 = por %p319, %p320
    %p322 = scmp.ne.s32.totalorder %s311, %s314
    %p323 = scmp.eq.s32.totalorder %s28, 1
    %p324 = por %p322, %p323
    %p325 = scmp.ne.s32.totalorder %s314, %s315
    %p326 = scmp.eq.s32.totalorder %s28, 0
    %p327 = por %p325, %p326
    %p328 = scmp.ne.s32.totalorder %s314, %s315
    %p329 = scmp.eq.s32.totalorder %s29, 1
    %p330 = por %p328, %p329
    %p332 = scmp.ne.s32.totalorder %s315, %s331
    %p333 = scmp.eq.s32.totalorder %s29, 0
    %p334 = por %p332, %p333
    %s335 = ssub.s32 %s23, %s30
    %p336 = scmp.eq.s32.totalorder %s335, 0
    %s338 = sadd.s32 %s337, 1
    %s339 = scalar_select %p336, %s337, %s338
    %p342 = pneg %p336
    %p343 = scmp.eq.s32.totalorder %s23, 1
    %p344 = por %p342, %p343
    %p345 = scmp.ne.s32.totalorder %s337, %s340
    %p346 = scmp.eq.s32.totalorder %s23, 0
    %p347 = por %p345, %p346
    %p348 = scmp.ne.s32.totalorder %s337, %s340
    %p349 = scmp.eq.s32.totalorder %s28, 1
    %p350 = por %p348, %p349
    %p351 = scmp.ne.s32.totalorder %s340, %s341
    %p352 = scmp.eq.s32.totalorder %s28, 0
    %p353 = por %p351, %p352
    %p354 = scmp.ne.s32.totalorder %s340, %s341
    %p355 = scmp.eq.s32.totalorder %s29, 1
    %p356 = por %p354, %p355
    %p358 = scmp.ne.s32.totalorder %s341, %s357
    %p359 = scmp.eq.s32.totalorder %s29, 0
    %p360 = por %p358, %p359
    %s361 = ssub.s32 %s23, %s30
    %p362 = scmp.eq.s32.totalorder %s361, 0
    %s364 = sadd.s32 %s363, 1
    %s365 = scalar_select %p362, %s363, %s364
    %p368 = pneg %p362
    %p369 = scmp.eq.s32.totalorder %s23, 1
    %p370 = por %p368, %p369
    %p371 = scmp.ne.s32.totalorder %s363, %s366
    %p372 = scmp.eq.s32.totalorder %s23, 0
    %p373 = por %p371, %p372
    %p374 = scmp.ne.s32.totalorder %s363, %s366
    %p375 = scmp.eq.s32.totalorder %s28, 1
    %p376 = por %p374, %p375
    %p377 = scmp.ne.s32.totalorder %s366, %s367
    %p378 = scmp.eq.s32.totalorder %s28, 0
    %p379 = por %p377, %p378
    %p380 = scmp.ne.s32.totalorder %s366, %s367
    %p381 = scmp.eq.s32.totalorder %s29, 1
    %p382 = por %p380, %p381
    %p384 = scmp.ne.s32.totalorder %s367, %s383
    %p385 = scmp.eq.s32.totalorder %s29, 0
    %p386 = por %p384, %p385
    %s387 = ssub.s32 %s23, %s30
    %p388 = scmp.eq.s32.totalorder %s387, 0
    %s390 = sadd.s32 %s389, 1
    %s391 = scalar_select %p388, %s389, %s390
    %p394 = pneg %p388
    %p395 = scmp.eq.s32.totalorder %s23, 1
    %p396 = por %p394, %p395
    %p397 = scmp.ne.s32.totalorder %s389, %s392
    %p398 = scmp.eq.s32.totalorder %s23, 0
    %p399 = por %p397, %p398
    %p400 = scmp.ne.s32.totalorder %s389, %s392
    %p401 = scmp.eq.s32.totalorder %s28, 1
    %p402 = por %p400, %p401
    %p403 = scmp.ne.s32.totalorder %s392, %s393
    %p404 = scmp.eq.s32.totalorder %s28, 0
    %p405 = por %p403, %p404
    %p406 = scmp.ne.s32.totalorder %s392, %s393
    %p407 = scmp.eq.s32.totalorder %s29, 1
    %p408 = por %p406, %p407
    %p410 = scmp.ne.s32.totalorder %s393, %s409
    %p411 = scmp.eq.s32.totalorder %s29, 0
    %p412 = por %p410, %p411
    %p413 = scmp.le.s32.totalorder 1, %s23
    %p414 = scmp.lt.s32.totalorder %s23, 3
    %p415 = pnand %p413, %p414
    %p416 = pneg %p415
    // Predicated region
    $region9: #{inception4d_pallas.1} parent=5 // pred_check
      _
    $region10: #{inception4d_pallas.1} parent=5 // pred_check_branch
      %418 = sbr.rel (%p415) target = $region12
    $region11: #{inception4d_pallas.1} parent=5 // pred_region
      %s419 = ssub.s32 %s23, 1
      // Predicated region
      $region13: #{inception4d_pallas.1} parent=11 // pred_check
        %p420 = pneg %p70
      $region14: #{inception4d_pallas.1} parent=11 // pred_check_branch
        %422 = sbr.rel (%p420) target = $region16
      $region15: #{inception4d_pallas.1} parent=11 // pred_region
        _
      $region16: #{inception4d_pallas.1} parent=11 // pred_fallthru
        _
      // Predicated region
      $region17: #{inception4d_pallas.1} parent=11 // pred_check
        %p423 = pneg %p91
      $region18: #{inception4d_pallas.1} parent=11 // pred_check_branch
        %425 = sbr.rel (%p423) target = $region20
      $region19: #{inception4d_pallas.1} parent=11 // pred_region
        _
      $region20: #{inception4d_pallas.1} parent=11 // pred_fallthru
        _
      // Predicated region
      $region21: #{inception4d_pallas.1} parent=11 // pred_check
        %p426 = pneg %p112
      $region22: #{inception4d_pallas.1} parent=11 // pred_check_branch
        %428 = sbr.rel (%p426) target = $region24
      $region23: #{inception4d_pallas.1} parent=11 // pred_region
        _
      $region24: #{inception4d_pallas.1} parent=11 // pred_fallthru
        _
      // Predicated region
      $region25: #{inception4d_pallas.1} parent=11 // pred_check
        %p429 = pneg %p133
      $region26: #{inception4d_pallas.1} parent=11 // pred_check_branch
        %431 = sbr.rel (%p429) target = $region28
      $region27: #{inception4d_pallas.1} parent=11 // pred_region
        _
      $region28: #{inception4d_pallas.1} parent=11 // pred_fallthru
        _
      // Predicated region
      $region29: #{inception4d_pallas.1} parent=11 // pred_check
        %p432 = pneg %p154
      $region30: #{inception4d_pallas.1} parent=11 // pred_check_branch
        %434 = sbr.rel (%p432) target = $region32
      $region31: #{inception4d_pallas.1} parent=11 // pred_region
        _
      $region32: #{inception4d_pallas.1} parent=11 // pred_fallthru
        _
      // Predicated region
      $region33: #{inception4d_pallas.1} parent=11 // pred_check
        %p435 = pneg %p175
      $region34: #{inception4d_pallas.1} parent=11 // pred_check_branch
        %437 = sbr.rel (%p435) target = $region36
      $region35: #{inception4d_pallas.1} parent=11 // pred_region
        _
      $region36: #{inception4d_pallas.1} parent=11 // pred_fallthru
        _
      // Predicated region
      $region37: #{inception4d_pallas.1} parent=11 // pred_check
        %p438 = pneg %p196
      $region38: #{inception4d_pallas.1} parent=11 // pred_check_branch
        %440 = sbr.rel (%p438) target = $region40
      $region39: #{inception4d_pallas.1} parent=11 // pred_region
        _
      $region40: #{inception4d_pallas.1} parent=11 // pred_fallthru
        _
      // Predicated region
      $region41: #{inception4d_pallas.1} parent=11 // pred_check
        %p441 = pneg %p217
      $region42: #{inception4d_pallas.1} parent=11 // pred_check_branch
        %443 = sbr.rel (%p441) target = $region44
      $region43: #{inception4d_pallas.1} parent=11 // pred_region
        _
      $region44: #{inception4d_pallas.1} parent=11 // pred_fallthru
        _
      // Predicated region
      $region45: #{inception4d_pallas.1} parent=11 // pred_check
        %p444 = pneg %p238
      $region46: #{inception4d_pallas.1} parent=11 // pred_check_branch
        %446 = sbr.rel (%p444) target = $region48
      $region47: #{inception4d_pallas.1} parent=11 // pred_region
        _
      $region48: #{inception4d_pallas.1} parent=11 // pred_fallthru
        _
      // Predicated region
      $region49: #{inception4d_pallas.1} parent=11 // pred_check
        %p447 = pneg %p259
      $region50: #{inception4d_pallas.1} parent=11 // pred_check_branch
        %449 = sbr.rel (%p447) target = $region52
      $region51: #{inception4d_pallas.1} parent=11 // pred_region
        _
      $region52: #{inception4d_pallas.1} parent=11 // pred_fallthru
        _
      // Predicated region
      $region53: #{inception4d_pallas.1} parent=11 // pred_check
        %p450 = pneg %p280
      $region54: #{inception4d_pallas.1} parent=11 // pred_check_branch
        %452 = sbr.rel (%p450) target = $region56
      $region55: #{inception4d_pallas.1} parent=11 // pred_region
        _
      $region56: #{inception4d_pallas.1} parent=11 // pred_fallthru
        _
      // Predicated region
      $region57: #{inception4d_pallas.1} parent=11 // pred_check
        %p453 = pneg %p301
      $region58: #{inception4d_pallas.1} parent=11 // pred_check_branch
        %455 = sbr.rel (%p453) target = $region60
      $region59: #{inception4d_pallas.1} parent=11 // pred_region
        _
      $region60: #{inception4d_pallas.1} parent=11 // pred_fallthru
        _
    $region12: #{inception4d_pallas.1} parent=5 // pred_fallthru
      _
    %p456 = scmp.lt.s32.totalorder %s23, 2
    // Predicated region
    $region61: #{inception4d_pallas.1} parent=5 // pred_check
      %p457 = pneg %p456
    $region62: #{inception4d_pallas.1} parent=5 // pred_check_branch
      %459 = sbr.rel (%p457) target = $region64
    $region63: #{inception4d_pallas.1} parent=5 // pred_region
      // Predicated region
      $region65: #{inception4d_pallas.1} parent=63 // pred_check
        %p460 = pneg %p43
      $region66: #{inception4d_pallas.1} parent=63 // pred_check_branch
        %462 = sbr.rel (%p460) target = $region68
      $region67: #{inception4d_pallas.1} parent=63 // pred_region
        %p463 = scmp.lt.s32.totalorder %s23, 1
        %s464 = scalar_select %p463, %s23, 1
        %s465 = smul.addr %s464, 32
        %s466 = smul.addr %s465, 4
        %s467 = scalar_lea.vmem %s0, %s466
      $region68: #{inception4d_pallas.1} parent=63 // pred_fallthru
        _
    $region64: #{inception4d_pallas.1} parent=5 // pred_fallthru
      _
    %p468 = scmp.le.s32.totalorder 1, %s23
    %p469 = scmp.lt.s32.totalorder %s23, 3
    %p470 = pnand %p468, %p469
    %p471 = pneg %p470
    // Predicated region
    $region69: #{inception4d_pallas.1} parent=5 // pred_check
      _
    $region70: #{inception4d_pallas.1} parent=5 // pred_check_branch
      %473 = sbr.rel (%p470) target = $region72
    $region71: #{inception4d_pallas.1} parent=5 // pred_region
      %s474 = ssub.s32 %s23, 1
      %p475 = scmp.lt.s32.totalorder %s28, 1
      %s476 = scalar_select %p475, %s28, 1
      %s477 = smul.addr %s476, 32
      %s478 = smul.addr %s477, 4
      %s479 = scalar_lea.vmem %s0, %s478
      %p480 = pneg %p49
      %p481 = pneg %p46
      %p482 = pneg %p70
      %p483 = pneg %p67
      %p484 = pneg %p91
      %p485 = pneg %p88
      %p486 = pneg %p112
      %p487 = pneg %p109
      %p488 = pneg %p133
      %p489 = pneg %p130
      %p490 = pneg %p154
      %p491 = pneg %p151
      %p492 = pneg %p175
      %p493 = pneg %p172
      %p494 = pneg %p196
      %p495 = pneg %p193
      %p496 = pneg %p217
      %p497 = pneg %p214
      %p498 = pneg %p238
      %p499 = pneg %p235
      %p500 = pneg %p259
      %p501 = pneg %p256
      %p502 = pneg %p280
      %p503 = pneg %p277
      %p504 = pneg %p301
      %p505 = pneg %p298
      %p506 = pneg %p327
      %p507 = pneg %p324
      %p508 = scmp.lt.s32.totalorder %s28, 1
      %s509 = scalar_select %p508, %s28, 1
      %s510 = smul.addr %s509, 8
      %s511 = smul.addr %s510, 8
      %s512 = scalar_lea.vmem %s13, %s511
      %p513 = pneg %p353
      %p514 = pneg %p350
      %p515 = scmp.lt.s32.totalorder %s28, 1
      %s516 = scalar_select %p515, %s28, 1
      %s517 = smul.addr %s516, 24
      %s518 = smul.addr %s517, 8
      %s519 = scalar_lea.vmem %s14, %s518
      %p520 = pneg %p379
      %p521 = pneg %p376
      %p522 = scmp.lt.s32.totalorder %s28, 1
      %s523 = scalar_select %p522, %s28, 1
      %s524 = smul.addr %s523, 8
      %s525 = smul.addr %s524, 8
      %s526 = scalar_lea.vmem %s15, %s525
      %p527 = pneg %p405
      %p528 = pneg %p402
      %p529 = scmp.lt.s32.totalorder %s28, 1
      %s530 = scalar_select %p529, %s28, 1
      %s531 = smul.addr %s530, 8
      %s532 = smul.addr %s531, 8
      %s533 = scalar_lea.vmem %s16, %s532
      %p534 = scmp.lt.s32.totalorder %s28, 1
      %s535 = scalar_select %p534, %s28, 1
      %s536 = smul.addr %s535, 32
      %s537 = smul.addr %s536, 4
      %s538 = scalar_lea.vmem %s0, %s537
      %p539 = scmp.lt.s32.totalorder %s28, 1
      %s540 = scalar_select %p539, %s28, 1
      %s541 = smul.addr %s540, 8
      %s542 = smul.addr %s541, 8
      %s543 = scalar_lea.vmem %s13, %s542
      %p544 = scmp.lt.s32.totalorder %s28, 1
      %s545 = scalar_select %p544, %s28, 1
      %s546 = smul.addr %s545, 24
      %s547 = smul.addr %s546, 8
      %s548 = scalar_lea.vmem %s14, %s547
      %p549 = scmp.lt.s32.totalorder %s28, 1
      %s550 = scalar_select %p549, %s28, 1
      %s551 = smul.addr %s550, 8
      %s552 = smul.addr %s551, 8
      %s553 = scalar_lea.vmem %s15, %s552
      %p554 = scmp.lt.s32.totalorder %s28, 1
      %s555 = scalar_select %p554, %s28, 1
      %s556 = smul.addr %s555, 8
      %s557 = smul.addr %s556, 8
      %s558 = scalar_lea.vmem %s16, %s557
      %v560 = vld [vmem:[%s538] sm:$0xff]
      %v561 = vld [vmem:[%s538 + $0x8] sm:$0xff]
      %v562 = vld [vmem:[%s538 + $0x10] sm:$0xff]
      %v563 = vld [vmem:[%s538 + $0x18] sm:$0xff]
      %v564 = vld [vmem:[%s538 + $0x20] sm:$0xff]
      %v565 = vld [vmem:[%s538 + $0x28] sm:$0xff]
      %v566 = vld [vmem:[%s538 + $0x30] sm:$0xff]
      %v567 = vld [vmem:[%s538 + $0x38] sm:$0xff]
      %v568 = vld [vmem:[%s538 + $0x40] sm:$0xff]
      %v569 = vld [vmem:[%s538 + $0x48] sm:$0xff]
      %v570 = vld [vmem:[%s538 + $0x50] sm:$0xff]
      %v571 = vld [vmem:[%s538 + $0x58] sm:$0xff]
      %v572 = vld [vmem:[%s538 + $0x60] sm:$0xff]
      %v573 = vld [vmem:[%s538 + $0x68] sm:$0xff]
      %v574 = vld [vmem:[%s538 + $0x70] sm:$0xff]
      %v575 = vld [vmem:[%s538 + $0x78] sm:$0xff]
      %v576 = vld [vmem:[%s3] sm:$0xff]
      %v577 = vld [vmem:[%s3 + $0x8] sm:$0xff]
      %v578 = vld [vmem:[%s3 + $0x10] sm:$0xff]
      %v579 = vld [vmem:[%s3 + $0x18] sm:$0xff]
      %v580 = vld [vmem:[%s3 + $0x20] sm:$0xff]
      %v581 = vld [vmem:[%s3 + $0x28] sm:$0xff]
      %v582 = vld [vmem:[%s3 + $0x30] sm:$0xff]
      %v583 = vld [vmem:[%s3 + $0x38] sm:$0xff]
      %v584 = vld [vmem:[%s3 + $0x40] sm:$0xff]
      %v585 = vld [vmem:[%s3 + $0x48] sm:$0xff]
      %v586 = vld [vmem:[%s3 + $0x50] sm:$0xff]
      %v587 = vld [vmem:[%s3 + $0x58] sm:$0xff]
      %v588 = vld [vmem:[%s3 + $0x60] sm:$0xff]
      %v589 = vld [vmem:[%s3 + $0x68] sm:$0xff]
      %v590 = vld [vmem:[%s3 + $0x70] sm:$0xff]
      %v591 = vld [vmem:[%s3 + $0x78] sm:$0xff]
      %v592 = vld [vmem:[%s3 + $0x80] sm:$0xff]
      %v593 = vld [vmem:[%s3 + $0x88] sm:$0xff]
      %v594 = vld [vmem:[%s3 + $0x90] sm:$0xff]
      %v595 = vld [vmem:[%s3 + $0x98] sm:$0xff]
      %v596 = vld [vmem:[%s3 + $0xa0] sm:$0xff]
      %v597 = vld [vmem:[%s3 + $0xa8] sm:$0xff]
      %v598 = vld [vmem:[%s3 + $0xb0] sm:$0xff]
      %v599 = vld [vmem:[%s3 + $0xb8] sm:$0xff]
      %v600 = vld [vmem:[%s3 + $0xc0] sm:$0xff]
      %v601 = vld [vmem:[%s3 + $0xc8] sm:$0xff]
      %v602 = vld [vmem:[%s3 + $0xd0] sm:$0xff]
      %v603 = vld [vmem:[%s3 + $0xd8] sm:$0xff]
      %v604 = vld [vmem:[%s3 + $0xe0] sm:$0xff]
      %v605 = vld [vmem:[%s3 + $0xe8] sm:$0xff]
      %v606 = vld [vmem:[%s3 + $0xf0] sm:$0xff]
      %v607 = vld [vmem:[%s3 + $0xf8] sm:$0xff]
      %v608 = vld [vmem:[%s3 + $0x100] sm:$0xff]
      %v609 = vld [vmem:[%s3 + $0x108] sm:$0xff]
      %v610 = vld [vmem:[%s3 + $0x110] sm:$0xff]
      %v611 = vld [vmem:[%s3 + $0x118] sm:$0xff]
      %v612 = vld [vmem:[%s3 + $0x120] sm:$0xff]
      %v613 = vld [vmem:[%s3 + $0x128] sm:$0xff]
      %v614 = vld [vmem:[%s3 + $0x130] sm:$0xff]
      %v615 = vld [vmem:[%s3 + $0x138] sm:$0xff]
      %v616 = vld [vmem:[%s3 + $0x140] sm:$0xff]
      %v617 = vld [vmem:[%s3 + $0x148] sm:$0xff]
      %v618 = vld [vmem:[%s3 + $0x150] sm:$0xff]
      %v619 = vld [vmem:[%s3 + $0x158] sm:$0xff]
      %v620 = vld [vmem:[%s3 + $0x160] sm:$0xff]
      %v621 = vld [vmem:[%s3 + $0x168] sm:$0xff]
      %v622 = vld [vmem:[%s3 + $0x170] sm:$0xff]
      %v623 = vld [vmem:[%s3 + $0x178] sm:$0xff]
      %v624 = vld [vmem:[%s3 + $0x180] sm:$0xff]
      %v625 = vld [vmem:[%s3 + $0x188] sm:$0xff]
      %v626 = vld [vmem:[%s3 + $0x190] sm:$0xff]
      %v627 = vld [vmem:[%s3 + $0x198] sm:$0xff]
      %v628 = vld [vmem:[%s3 + $0x1a0] sm:$0xff]
      %v629 = vld [vmem:[%s3 + $0x1a8] sm:$0xff]
      %v630 = vld [vmem:[%s3 + $0x1b0] sm:$0xff]
      %v631 = vld [vmem:[%s3 + $0x1b8] sm:$0xff]
      %v632 = vld [vmem:[%s3 + $0x1c0] sm:$0xff]
      %v633 = vld [vmem:[%s3 + $0x1c8] sm:$0xff]
      %v634 = vld [vmem:[%s3 + $0x1d0] sm:$0xff]
      %v635 = vld [vmem:[%s3 + $0x1d8] sm:$0xff]
      %v636 = vld [vmem:[%s3 + $0x1e0] sm:$0xff]
      %v637 = vld [vmem:[%s3 + $0x1e8] sm:$0xff]
      %v638 = vld [vmem:[%s3 + $0x1f0] sm:$0xff]
      %v639 = vld [vmem:[%s3 + $0x1f8] sm:$0xff]
      %v640 = vld [vmem:[%s4] sm:$0x3]
      %v642 = vlaneseq
      %v643 = vshrl.u32 %v642, 7
      %v644 = vsub.s32 0, %v643
      %v645 = vrot.slane %v640, %v644
      %v646 = vlaneseq
      %v647 = vshrl.u32 %v646, 7
      %v648 = vsub.s32 1, %v647
      %v649 = vrot.slane %v640, %v648
      %v668 = vunpack.c.l.b16 %v560
      %v669 = vunpack.c.h.b16 %v560
      %v670 = vunpack.c.l.b16 %v561
      %v671 = vunpack.c.h.b16 %v561
      %v672 = vunpack.c.l.b16 %v562
      %v673 = vunpack.c.h.b16 %v562
      %v674 = vunpack.c.l.b16 %v563
      %v675 = vunpack.c.h.b16 %v563
      %v676 = vunpack.c.l.b16 %v564
      %v677 = vunpack.c.h.b16 %v564
      %v678 = vunpack.c.l.b16 %v565
      %v679 = vunpack.c.h.b16 %v565
      %v680 = vunpack.c.l.b16 %v566
      %v681 = vunpack.c.h.b16 %v566
      %v682 = vunpack.c.l.b16 %v567
      %v683 = vunpack.c.h.b16 %v567
      %v684 = vunpack.c.l.b16 %v568
      %v685 = vunpack.c.h.b16 %v568
      %v686 = vunpack.c.l.b16 %v569
      %v687 = vunpack.c.h.b16 %v569
      %v688 = vunpack.c.l.b16 %v570
      %v689 = vunpack.c.h.b16 %v570
      %v690 = vunpack.c.l.b16 %v571
      %v691 = vunpack.c.h.b16 %v571
      %v692 = vunpack.c.l.b16 %v572
      %v693 = vunpack.c.h.b16 %v572
      %v694 = vunpack.c.l.b16 %v573
      %v695 = vunpack.c.h.b16 %v573
      %v696 = vunpack.c.l.b16 %v574
      %v697 = vunpack.c.h.b16 %v574
      %v698 = vunpack.c.l.b16 %v575
      %v699 = vunpack.c.h.b16 %v575
      %v700 = vpack.c.b16 %v672, %v668
      %v701 = vpack.c.b16 %v673, %v669
      %v702 = vpack.c.b16 %v674, %v670
      %v703 = vpack.c.b16 %v675, %v671
      %v704 = vpack.c.b16 %v680, %v676
      %v705 = vpack.c.b16 %v681, %v677
      %v706 = vpack.c.b16 %v682, %v678
      %v707 = vpack.c.b16 %v683, %v679
      %v708 = vpack.c.b16 %v688, %v684
      %v709 = vpack.c.b16 %v689, %v685
      %v710 = vpack.c.b16 %v690, %v686
      %v711 = vpack.c.b16 %v691, %v687
      %v712 = vpack.c.b16 %v696, %v692
      %v713 = vpack.c.b16 %v697, %v693
      %v714 = vpack.c.b16 %v698, %v694
      %v715 = vpack.c.b16 %v699, %v695
      %v796 = vunpack.c.l.b16 %v576
      %v797 = vunpack.c.h.b16 %v576
      %v798 = vunpack.c.l.b16 %v577
      %v799 = vunpack.c.h.b16 %v577
      %v800 = vunpack.c.l.b16 %v578
      %v801 = vunpack.c.h.b16 %v578
      %v802 = vunpack.c.l.b16 %v579
      %v803 = vunpack.c.h.b16 %v579
      %v804 = vunpack.c.l.b16 %v580
      %v805 = vunpack.c.h.b16 %v580
      %v806 = vunpack.c.l.b16 %v581
      %v807 = vunpack.c.h.b16 %v581
      %v808 = vunpack.c.l.b16 %v582
      %v809 = vunpack.c.h.b16 %v582
      %v810 = vunpack.c.l.b16 %v583
      %v811 = vunpack.c.h.b16 %v583
      %v812 = vunpack.c.l.b16 %v584
      %v813 = vunpack.c.h.b16 %v584
      %v814 = vunpack.c.l.b16 %v585
      %v815 = vunpack.c.h.b16 %v585
      %v816 = vunpack.c.l.b16 %v586
      %v817 = vunpack.c.h.b16 %v586
      %v818 = vunpack.c.l.b16 %v587
      %v819 = vunpack.c.h.b16 %v587
      %v820 = vunpack.c.l.b16 %v588
      %v821 = vunpack.c.h.b16 %v588
      %v822 = vunpack.c.l.b16 %v589
      %v823 = vunpack.c.h.b16 %v589
      %v824 = vunpack.c.l.b16 %v590
      %v825 = vunpack.c.h.b16 %v590
      %v826 = vunpack.c.l.b16 %v591
      %v827 = vunpack.c.h.b16 %v591
      %v828 = vunpack.c.l.b16 %v592
      %v829 = vunpack.c.h.b16 %v592
      %v830 = vunpack.c.l.b16 %v593
      %v831 = vunpack.c.h.b16 %v593
      %v832 = vunpack.c.l.b16 %v594
      %v833 = vunpack.c.h.b16 %v594
      %v834 = vunpack.c.l.b16 %v595
      %v835 = vunpack.c.h.b16 %v595
      %v836 = vunpack.c.l.b16 %v596
      %v837 = vunpack.c.h.b16 %v596
      %v838 = vunpack.c.l.b16 %v597
      %v839 = vunpack.c.h.b16 %v597
      %v840 = vunpack.c.l.b16 %v598
      %v841 = vunpack.c.h.b16 %v598
      %v842 = vunpack.c.l.b16 %v599
      %v843 = vunpack.c.h.b16 %v599
      %v844 = vunpack.c.l.b16 %v600
      %v845 = vunpack.c.h.b16 %v600
      %v846 = vunpack.c.l.b16 %v601
      %v847 = vunpack.c.h.b16 %v601
      %v848 = vunpack.c.l.b16 %v602
      %v849 = vunpack.c.h.b16 %v602
      %v850 = vunpack.c.l.b16 %v603
      %v851 = vunpack.c.h.b16 %v603
      %v852 = vunpack.c.l.b16 %v604
      %v853 = vunpack.c.h.b16 %v604
      %v854 = vunpack.c.l.b16 %v605
      %v855 = vunpack.c.h.b16 %v605
      %v856 = vunpack.c.l.b16 %v606
      %v857 = vunpack.c.h.b16 %v606
      %v858 = vunpack.c.l.b16 %v607
      %v859 = vunpack.c.h.b16 %v607
      %v860 = vunpack.c.l.b16 %v608
      %v861 = vunpack.c.h.b16 %v608
      %v862 = vunpack.c.l.b16 %v609
      %v863 = vunpack.c.h.b16 %v609
      %v864 = vunpack.c.l.b16 %v610
      %v865 = vunpack.c.h.b16 %v610
      %v866 = vunpack.c.l.b16 %v611
      %v867 = vunpack.c.h.b16 %v611
      %v868 = vunpack.c.l.b16 %v612
      %v869 = vunpack.c.h.b16 %v612
      %v870 = vunpack.c.l.b16 %v613
      %v871 = vunpack.c.h.b16 %v613
      %v872 = vunpack.c.l.b16 %v614
      %v873 = vunpack.c.h.b16 %v614
      %v874 = vunpack.c.l.b16 %v615
      %v875 = vunpack.c.h.b16 %v615
      %v876 = vunpack.c.l.b16 %v616
      %v877 = vunpack.c.h.b16 %v616
      %v878 = vunpack.c.l.b16 %v617
      %v879 = vunpack.c.h.b16 %v617
      %v880 = vunpack.c.l.b16 %v618
      %v881 = vunpack.c.h.b16 %v618
      %v882 = vunpack.c.l.b16 %v619
      %v883 = vunpack.c.h.b16 %v619
      %v884 = vunpack.c.l.b16 %v620
      %v885 = vunpack.c.h.b16 %v620
      %v886 = vunpack.c.l.b16 %v621
      %v887 = vunpack.c.h.b16 %v621
      %v888 = vunpack.c.l.b16 %v622
      %v889 = vunpack.c.h.b16 %v622
      %v890 = vunpack.c.l.b16 %v623
      %v891 = vunpack.c.h.b16 %v623
      %v892 = vunpack.c.l.b16 %v624
      %v893 = vunpack.c.h.b16 %v624
      %v894 = vunpack.c.l.b16 %v625
      %v895 = vunpack.c.h.b16 %v625
      %v896 = vunpack.c.l.b16 %v626
      %v897 = vunpack.c.h.b16 %v626
      %v898 = vunpack.c.l.b16 %v627
      %v899 = vunpack.c.h.b16 %v627
      %v900 = vunpack.c.l.b16 %v628
      %v901 = vunpack.c.h.b16 %v628
      %v902 = vunpack.c.l.b16 %v629
      %v903 = vunpack.c.h.b16 %v629
      %v904 = vunpack.c.l.b16 %v630
      %v905 = vunpack.c.h.b16 %v630
      %v906 = vunpack.c.l.b16 %v631
      %v907 = vunpack.c.h.b16 %v631
      %v908 = vunpack.c.l.b16 %v632
      %v909 = vunpack.c.h.b16 %v632
      %v910 = vunpack.c.l.b16 %v633
      %v911 = vunpack.c.h.b16 %v633
      %v912 = vunpack.c.l.b16 %v634
      %v913 = vunpack.c.h.b16 %v634
      %v914 = vunpack.c.l.b16 %v635
      %v915 = vunpack.c.h.b16 %v635
      %v916 = vunpack.c.l.b16 %v636
      %v917 = vunpack.c.h.b16 %v636
      %v918 = vunpack.c.l.b16 %v637
      %v919 = vunpack.c.h.b16 %v637
      %v920 = vunpack.c.l.b16 %v638
      %v921 = vunpack.c.h.b16 %v638
      %v922 = vunpack.c.l.b16 %v639
      %v923 = vunpack.c.h.b16 %v639
      %v924 = vpack.c.b16 %v798, %v796
      %v925 = vpack.c.b16 %v799, %v797
      %v926 = vpack.c.b16 %v802, %v800
      %v927 = vpack.c.b16 %v803, %v801
      %v928 = vpack.c.b16 %v806, %v804
      %v929 = vpack.c.b16 %v807, %v805
      %v930 = vpack.c.b16 %v810, %v808
      %v931 = vpack.c.b16 %v811, %v809
      %v932 = vpack.c.b16 %v814, %v812
      %v933 = vpack.c.b16 %v815, %v813
      %v934 = vpack.c.b16 %v818, %v816
      %v935 = vpack.c.b16 %v819, %v817
      %v936 = vpack.c.b16 %v822, %v820
      %v937 = vpack.c.b16 %v823, %v821
      %v938 = vpack.c.b16 %v826, %v824
      %v939 = vpack.c.b16 %v827, %v825
      %v940 = vpack.c.b16 %v830, %v828
      %v941 = vpack.c.b16 %v831, %v829
      %v942 = vpack.c.b16 %v834, %v832
      %v943 = vpack.c.b16 %v835, %v833
      %v944 = vpack.c.b16 %v838, %v836
      %v945 = vpack.c.b16 %v839, %v837
      %v946 = vpack.c.b16 %v842, %v840
      %v947 = vpack.c.b16 %v843, %v841
      %v948 = vpack.c.b16 %v846, %v844
      %v949 = vpack.c.b16 %v847, %v845
      %v950 = vpack.c.b16 %v850, %v848
      %v951 = vpack.c.b16 %v851, %v849
      %v952 = vpack.c.b16 %v854, %v852
      %v953 = vpack.c.b16 %v855, %v853
      %v954 = vpack.c.b16 %v858, %v856
      %v955 = vpack.c.b16 %v859, %v857
      %v956 = vpack.c.b16 %v862, %v860
      %v957 = vpack.c.b16 %v863, %v861
      %v958 = vpack.c.b16 %v866, %v864
      %v959 = vpack.c.b16 %v867, %v865
      %v960 = vpack.c.b16 %v870, %v868
      %v961 = vpack.c.b16 %v871, %v869
      %v962 = vpack.c.b16 %v874, %v872
      %v963 = vpack.c.b16 %v875, %v873
      %v964 = vpack.c.b16 %v878, %v876
      %v965 = vpack.c.b16 %v879, %v877
      %v966 = vpack.c.b16 %v882, %v880
      %v967 = vpack.c.b16 %v883, %v881
      %v968 = vpack.c.b16 %v886, %v884
      %v969 = vpack.c.b16 %v887, %v885
      %v970 = vpack.c.b16 %v890, %v888
      %v971 = vpack.c.b16 %v891, %v889
      %v972 = vpack.c.b16 %v894, %v892
      %v973 = vpack.c.b16 %v895, %v893
      %v974 = vpack.c.b16 %v898, %v896
      %v975 = vpack.c.b16 %v899, %v897
      %v976 = vpack.c.b16 %v902, %v900
      %v977 = vpack.c.b16 %v903, %v901
      %v978 = vpack.c.b16 %v906, %v904
      %v979 = vpack.c.b16 %v907, %v905
      %v980 = vpack.c.b16 %v910, %v908
      %v981 = vpack.c.b16 %v911, %v909
      %v982 = vpack.c.b16 %v914, %v912
      %v983 = vpack.c.b16 %v915, %v913
      %v984 = vpack.c.b16 %v918, %v916
      %v985 = vpack.c.b16 %v919, %v917
      %v986 = vpack.c.b16 %v922, %v920
      %v987 = vpack.c.b16 %v923, %v921
      %1052 = vmatprep.subr.bf16.mxu0 %v925
      %1053 = vmatpush1.bf16.msra.mxu0 %v924
      %1054 = vmatprep.subr.bf16.mxu0 %v927
      %1055 = vmatpush1.bf16.msra.mxu0 %v926
      %1056 = vmatprep.subr.bf16.mxu0 %v929
      %1057 = vmatpush1.bf16.msra.mxu0 %v928
      %1058 = vmatprep.subr.bf16.mxu0 %v931
      %1059 = vmatpush1.bf16.msra.mxu0 %v930
      %1060 = vmatprep.subr.bf16.mxu0 %v933
      %1061 = vmatpush1.bf16.msra.mxu0 %v932
      %1062 = vmatprep.subr.bf16.mxu0 %v935
      %1063 = vmatpush1.bf16.msra.mxu0 %v934
      %1064 = vmatprep.subr.bf16.mxu0 %v937
      %1065 = vmatpush1.bf16.msra.mxu0 %v936
      %1066 = vmatprep.subr.bf16.mxu0 %v939
      %1067 = vmatpush1.bf16.msra.mxu0 %v938
      %1068 = vmatprep.subr.bf16.mxu0 %v941
      %1069 = vmatpush1.bf16.msra.mxu0 %v940
      %1070 = vmatprep.subr.bf16.mxu0 %v943
      %1071 = vmatpush1.bf16.msra.mxu0 %v942
      %1072 = vmatprep.subr.bf16.mxu0 %v945
      %1073 = vmatpush1.bf16.msra.mxu0 %v944
      %1074 = vmatprep.subr.bf16.mxu0 %v947
      %1075 = vmatpush1.bf16.msra.mxu0 %v946
      %1076 = vmatprep.subr.bf16.mxu0 %v949
      %1077 = vmatpush1.bf16.msra.mxu0 %v948
      %1078 = vmatprep.subr.bf16.mxu0 %v951
      %1079 = vmatpush1.bf16.msra.mxu0 %v950
      %1080 = vmatprep.subr.bf16.mxu0 %v953
      %1081 = vmatpush1.bf16.msra.mxu0 %v952
      %1082 = vmatprep.subr.bf16.mxu0 %v955
      %1083 = vmatpush1.bf16.msra.mxu0 %v954
      %1084 = vmatprep.mubr.bf16.mxu0 %v701
      %1085 = vmatmul.mubr.bf16.gmra.mrb[0].mxu0 %v700
      %v1086 = vpop.f32.mrb[0].mxu0
      %v1087 = vadd.f32 %v645, %v1086
      %v1088 = vpop.f32.mrb[0].mxu0
      %v1089 = vadd.f32 %v649, %v1088
      %v1090 = vpop.f32.mrb[0].mxu0
      %v1091 = vadd.f32 %v645, %v1090
      %v1092 = vpop.f32.mrb[0].mxu0
      %v1093 = vadd.f32 %v649, %v1092
      %1094 = vmatprep.mubr.bf16.mxu0 %v705
      %1095 = vmatmul.mubr.bf16.gmra.mrb[0].mxu0 %v704
      %v1096 = vpop.f32.mrb[0].mxu0
      %v1097 = vadd.f32 %v645, %v1096
      %v1098 = vpop.f32.mrb[0].mxu0
      %v1099 = vadd.f32 %v649, %v1098
      %v1100 = vpop.f32.mrb[0].mxu0
      %v1101 = vadd.f32 %v645, %v1100
      %v1102 = vpop.f32.mrb[0].mxu0
      %v1103 = vadd.f32 %v649, %v1102
      %1104 = vmatprep.mubr.bf16.mxu0 %v709
      %1105 = vmatmul.mubr.bf16.gmra.mrb[0].mxu0 %v708
      %v1106 = vpop.f32.mrb[0].mxu0
      %v1107 = vadd.f32 %v645, %v1106
      %v1108 = vpop.f32.mrb[0].mxu0
      %v1109 = vadd.f32 %v649, %v1108
      %v1110 = vpop.f32.mrb[0].mxu0
      %v1111 = vadd.f32 %v645, %v1110
      %v1112 = vpop.f32.mrb[0].mxu0
      %v1113 = vadd.f32 %v649, %v1112
      %1114 = vmatprep.mubr.bf16.mxu0 %v713
      %1115 = vmatmul.mubr.bf16.gmra.mrb[0].mxu0 %v712
      %v1116 = vpop.f32.mrb[0].mxu0
      %v1117 = vadd.f32 %v645, %v1116
      %v1118 = vpop.f32.mrb[0].mxu0
      %v1119 = vadd.f32 %v649, %v1118
      %v1120 = vpop.f32.mrb[0].mxu0
      %v1121 = vadd.f32 %v645, %v1120
      %v1122 = vpop.f32.mrb[0].mxu0
      %v1123 = vadd.f32 %v649, %v1122
      %1124 = vdwg.mxu0
      %1125 = vmatprep.subr.bf16.mxu0 %v957
      %1126 = vmatpush1.bf16.msra.mxu0 %v956
      %1127 = vmatprep.subr.bf16.mxu0 %v959
      %1128 = vmatpush1.bf16.msra.mxu0 %v958
      %1129 = vmatprep.subr.bf16.mxu0 %v961
      %1130 = vmatpush1.bf16.msra.mxu0 %v960
      %1131 = vmatprep.subr.bf16.mxu0 %v963
      %1132 = vmatpush1.bf16.msra.mxu0 %v962
      %1133 = vmatprep.subr.bf16.mxu0 %v965
      %1134 = vmatpush1.bf16.msra.mxu0 %v964
      %1135 = vmatprep.subr.bf16.mxu0 %v967
      %1136 = vmatpush1.bf16.msra.mxu0 %v966
      %1137 = vmatprep.subr.bf16.mxu0 %v969
      %1138 = vmatpush1.bf16.msra.mxu0 %v968
      %1139 = vmatprep.subr.bf16.mxu0 %v971
      %1140 = vmatpush1.bf16.msra.mxu0 %v970
      %1141 = vmatprep.subr.bf16.mxu0 %v973
      %1142 = vmatpush1.bf16.msra.mxu0 %v972
      %1143 = vmatprep.subr.bf16.mxu0 %v975
      %1144 = vmatpush1.bf16.msra.mxu0 %v974
      %1145 = vmatprep.subr.bf16.mxu0 %v977
      %1146 = vmatpush1.bf16.msra.mxu0 %v976
      %1147 = vmatprep.subr.bf16.mxu0 %v979
      %1148 = vmatpush1.bf16.msra.mxu0 %v978
      %1149 = vmatprep.subr.bf16.mxu0 %v981
      %1150 = vmatpush1.bf16.msra.mxu0 %v980
      %1151 = vmatprep.subr.bf16.mxu0 %v983
      %1152 = vmatpush1.bf16.msra.mxu0 %v982
      %1153 = vmatprep.subr.bf16.mxu0 %v985
      %1154 = vmatpush1.bf16.msra.mxu0 %v984
      %1155 = vmatprep.subr.bf16.mxu0 %v987
      %1156 = vmatpush1.bf16.msra.mxu0 %v986
      %1157 = vmatprep.mubr.bf16.mxu0 %v703
      %1158 = vmatmul.mubr.bf16.gmra.mrb[0].mxu0 %v702
      %v1159 = vpop.f32.mrb[0].mxu0
      %v1160 = vadd.f32 %v1087, %v1159
      %v1161 = vpop.f32.mrb[0].mxu0
      %v1162 = vadd.f32 %v1089, %v1161
      %v1163 = vpop.f32.mrb[0].mxu0
      %v1164 = vadd.f32 %v1091, %v1163
      %v1165 = vpop.f32.mrb[0].mxu0
      %v1166 = vadd.f32 %v1093, %v1165
      %1167 = vmatprep.mubr.bf16.mxu0 %v707
      %1168 = vmatmul.mubr.bf16.gmra.mrb[0].mxu0 %v706
      %v1169 = vpop.f32.mrb[0].mxu0
      %v1170 = vadd.f32 %v1097, %v1169
      %v1171 = vpop.f32.mrb[0].mxu0
      %v1172 = vadd.f32 %v1099, %v1171
      %v1173 = vpop.f32.mrb[0].mxu0
      %v1174 = vadd.f32 %v1101, %v1173
      %v1175 = vpop.f32.mrb[0].mxu0
      %v1176 = vadd.f32 %v1103, %v1175
      %1177 = vmatprep.mubr.bf16.mxu0 %v711
      %1178 = vmatmul.mubr.bf16.gmra.mrb[0].mxu0 %v710
      %v1179 = vpop.f32.mrb[0].mxu0
      %v1180 = vadd.f32 %v1107, %v1179
      %v1181 = vpop.f32.mrb[0].mxu0
      %v1182 = vadd.f32 %v1109, %v1181
      %v1183 = vpop.f32.mrb[0].mxu0
      %v1184 = vadd.f32 %v1111, %v1183
      %v1185 = vpop.f32.mrb[0].mxu0
      %v1186 = vadd.f32 %v1113, %v1185
      %1187 = vmatprep.mubr.bf16.mxu0 %v715
      %1188 = vmatmul.mubr.bf16.gmra.mrb[0].mxu0 %v714
      %v1189 = vpop.f32.mrb[0].mxu0
      %v1190 = vadd.f32 %v1117, %v1189
      %v1191 = vpop.f32.mrb[0].mxu0
      %v1192 = vadd.f32 %v1119, %v1191
      %v1193 = vpop.f32.mrb[0].mxu0
      %v1194 = vadd.f32 %v1121, %v1193
      %v1195 = vpop.f32.mrb[0].mxu0
      %v1196 = vadd.f32 %v1123, %v1195
      %1197 = vdwg.mxu0
      %v1198 = vmax.f32 %v1160, 0.0
      %v1199 = vmax.f32 %v1162, 0.0
      %v1200 = vmax.f32 %v1164, 0.0
      %v1201 = vmax.f32 %v1166, 0.0
      %v1202 = vmax.f32 %v1170, 0.0
      %v1203 = vmax.f32 %v1172, 0.0
      %v1204 = vmax.f32 %v1174, 0.0
      %v1205 = vmax.f32 %v1176, 0.0
      %v1206 = vmax.f32 %v1180, 0.0
      %v1207 = vmax.f32 %v1182, 0.0
      %v1208 = vmax.f32 %v1184, 0.0
      %v1209 = vmax.f32 %v1186, 0.0
      %v1210 = vmax.f32 %v1190, 0.0
      %v1211 = vmax.f32 %v1192, 0.0
      %v1212 = vmax.f32 %v1194, 0.0
      %v1213 = vmax.f32 %v1196, 0.0
      %1214 = vst [vmem:[#allocation3] sm:$0xff] 0.0
      %vm1215 = vcmask 130048
      %1216 = vst.msk [vmem:[#allocation3 + $0x8] sm:$0xff] %vm1215, 0.0
      %1217 = vst [vmem:[#allocation3 + $0x10] sm:$0x3] 0.0
      %vm1218 = vcmask 123904
      %1219 = vst.msk [vmem:[#allocation3 + $0x18] sm:$0x3] %vm1218, 0.0
      %1220 = vst [vmem:[#allocation3 + $0x20] sm:$0xff] 0.0
      %1221 = vst.msk [vmem:[#allocation3 + $0x28] sm:$0xff] %vm1215, 0.0
      %1222 = vst [vmem:[#allocation3 + $0x30] sm:$0x3] 0.0
      %1223 = vst.msk [vmem:[#allocation3 + $0x38] sm:$0x3] %vm1218, 0.0
      %1224 = vst [vmem:[#allocation3 + $0x40] sm:$0xff] 0.0
      %1225 = vst.msk [vmem:[#allocation3 + $0x48] sm:$0xff] %vm1215, 0.0
      %1226 = vst [vmem:[#allocation3 + $0x50] sm:$0x3] 0.0
      %1227 = vst.msk [vmem:[#allocation3 + $0x58] sm:$0x3] %vm1218, 0.0
      %1228 = vst [vmem:[#allocation3 + $0x60] sm:$0xff] 0.0
      %1229 = vst.msk [vmem:[#allocation3 + $0x68] sm:$0xff] %vm1215, 0.0
      %1230 = vst [vmem:[#allocation3 + $0x70] sm:$0x3] 0.0
      %1231 = vst.msk [vmem:[#allocation3 + $0x78] sm:$0x3] %vm1218, 0.0
      %1232 = vst [vmem:[#allocation3 + $0x80] sm:$0xff] 0.0
      %1233 = vst.msk [vmem:[#allocation3 + $0x88] sm:$0xff] %vm1215, 0.0
      %1234 = vst [vmem:[#allocation3 + $0x90] sm:$0x3] 0.0
      %1235 = vst.msk [vmem:[#allocation3 + $0x98] sm:$0x3] %vm1218, 0.0
      %1236 = vst [vmem:[#allocation3 + $0xa0] sm:$0xff] 0.0
      %1237 = vst.msk [vmem:[#allocation3 + $0xa8] sm:$0xff] %vm1215, 0.0
      %1238 = vst [vmem:[#allocation3 + $0xb0] sm:$0x3] 0.0
      %1239 = vst.msk [vmem:[#allocation3 + $0xb8] sm:$0x3] %vm1218, 0.0
      %1240 = vst [vmem:[#allocation3 + $0xc0] sm:$0xff] 0.0
      %1241 = vst.msk [vmem:[#allocation3 + $0xc8] sm:$0xff] %vm1215, 0.0
      %1242 = vst [vmem:[#allocation3 + $0xd0] sm:$0x3] 0.0
      %1243 = vst.msk [vmem:[#allocation3 + $0xd8] sm:$0x3] %vm1218, 0.0
      %1244 = vst [vmem:[#allocation3 + $0xe0] sm:$0xff] 0.0
      %1245 = vst.msk [vmem:[#allocation3 + $0xe8] sm:$0xff] %vm1215, 0.0
      %1246 = vst [vmem:[#allocation3 + $0xf0] sm:$0x3] 0.0
      %1247 = vst.msk [vmem:[#allocation3 + $0xf8] sm:$0x3] %vm1218, 0.0
      %1248 = vst [vmem:[#allocation3 + $0x100] sm:$0xff] 0.0
      %1249 = vst.msk [vmem:[#allocation3 + $0x108] sm:$0xff] %vm1215, 0.0
      %1250 = vst [vmem:[#allocation3 + $0x110] sm:$0x3] 0.0
      %1251 = vst.msk [vmem:[#allocation3 + $0x118] sm:$0x3] %vm1218, 0.0
      %1252 = vst [vmem:[#allocation3 + $0x120] sm:$0xff] 0.0
      %1253 = vst.msk [vmem:[#allocation3 + $0x128] sm:$0xff] %vm1215, 0.0
      %1254 = vst [vmem:[#allocation3 + $0x130] sm:$0x3] 0.0
      %1255 = vst.msk [vmem:[#allocation3 + $0x138] sm:$0x3] %vm1218, 0.0
      %v1272 = vrot.slane %v1198, 7
      %v1273 = vrot.slane %v1199, 7
      %v1274 = vrot.slane %v1200, 7
      %v1275 = vrot.slane %v1201, 7
      %v1276 = vrot.slane %v1202, 7
      %v1277 = vrot.slane %v1203, 7
      %v1278 = vrot.slane %v1204, 7
      %v1279 = vrot.slane %v1205, 7
      %v1280 = vrot.slane %v1206, 7
      %v1281 = vrot.slane %v1207, 7
      %v1282 = vrot.slane %v1208, 7
      %v1283 = vrot.slane %v1209, 7
      %v1284 = vrot.slane %v1210, 7
      %v1285 = vrot.slane %v1211, 7
      %v1286 = vrot.slane %v1212, 7
      %v1287 = vrot.slane %v1213, 7
      %s1304 = scalar_lea.vmem [#allocation3], 32
      %1305 = vst [vmem:[%s1304] sm:$0xfe] %v1272
      %vm1306 = vcmask 130049
      %1307 = vst.msk [vmem:[%s1304 + $0x8] sm:$0xfe] %vm1306, %v1273
      %1308 = vst [vmem:[%s1304 + $0x10] sm:$0x1] %v1272
      %vm1309 = vcmask 122880
      %1310 = vst.msk [vmem:[%s1304 + $0x18] sm:$0x1] %vm1309, %v1273
      %1311 = vst [vmem:[%s1304 + $0x20] sm:$0xfe] %v1274
      %1312 = vst.msk [vmem:[%s1304 + $0x28] sm:$0xfe] %vm1306, %v1275
      %1313 = vst [vmem:[%s1304 + $0x30] sm:$0x1] %v1274
      %1314 = vst.msk [vmem:[%s1304 + $0x38] sm:$0x1] %vm1309, %v1275
      %1315 = vst [vmem:[%s1304 + $0x40] sm:$0xfe] %v1276
      %1316 = vst.msk [vmem:[%s1304 + $0x48] sm:$0xfe] %vm1306, %v1277
      %1317 = vst [vmem:[%s1304 + $0x50] sm:$0x1] %v1276
      %1318 = vst.msk [vmem:[%s1304 + $0x58] sm:$0x1] %vm1309, %v1277
      %1319 = vst [vmem:[%s1304 + $0x60] sm:$0xfe] %v1278
      %1320 = vst.msk [vmem:[%s1304 + $0x68] sm:$0xfe] %vm1306, %v1279
      %1321 = vst [vmem:[%s1304 + $0x70] sm:$0x1] %v1278
      %1322 = vst.msk [vmem:[%s1304 + $0x78] sm:$0x1] %vm1309, %v1279
      %1323 = vst [vmem:[%s1304 + $0x80] sm:$0xfe] %v1280
      %1324 = vst.msk [vmem:[%s1304 + $0x88] sm:$0xfe] %vm1306, %v1281
      %1325 = vst [vmem:[%s1304 + $0x90] sm:$0x1] %v1280
      %1326 = vst.msk [vmem:[%s1304 + $0x98] sm:$0x1] %vm1309, %v1281
      %1327 = vst [vmem:[%s1304 + $0xa0] sm:$0xfe] %v1282
      %1328 = vst.msk [vmem:[%s1304 + $0xa8] sm:$0xfe] %vm1306, %v1283
      %1329 = vst [vmem:[%s1304 + $0xb0] sm:$0x1] %v1282
      %1330 = vst.msk [vmem:[%s1304 + $0xb8] sm:$0x1] %vm1309, %v1283
      %1331 = vst [vmem:[%s1304 + $0xc0] sm:$0xfe] %v1284
      %1332 = vst.msk [vmem:[%s1304 + $0xc8] sm:$0xfe] %vm1306, %v1285
      %1333 = vst [vmem:[%s1304 + $0xd0] sm:$0x1] %v1284
      %1334 = vst.msk [vmem:[%s1304 + $0xd8] sm:$0x1] %vm1309, %v1285
      %1335 = vst [vmem:[%s1304 + $0xe0] sm:$0xfe] %v1286
      %1336 = vst.msk [vmem:[%s1304 + $0xe8] sm:$0xfe] %vm1306, %v1287
      %1337 = vst [vmem:[%s1304 + $0xf0] sm:$0x1] %v1286
      %1338 = vst.msk [vmem:[%s1304 + $0xf8] sm:$0x1] %vm1309, %v1287
      %v1339 = vld [vmem:[%s7] sm:$0xf]
      %v1340 = vld [vmem:[%s7 + $0x4] sm:$0xf]
      %v1341 = vld [vmem:[%s7 + $0x8] sm:$0xf]
      %v1342 = vld [vmem:[%s7 + $0xc] sm:$0xf]
      %v1343 = vld [vmem:[%s7 + $0x10] sm:$0xf]
      %v1344 = vld [vmem:[%s7 + $0x14] sm:$0xf]
      %v1345 = vld [vmem:[%s7 + $0x18] sm:$0xf]
      %v1346 = vld [vmem:[%s7 + $0x1c] sm:$0xf]
      %v1347 = vld [vmem:[%s7 + $0x20] sm:$0xf]
      %v1348 = vld [vmem:[%s7 + $0x24] sm:$0xf]
      %v1349 = vld [vmem:[%s7 + $0x28] sm:$0xf]
      %v1350 = vld [vmem:[%s7 + $0x2c] sm:$0xf]
      %v1351 = vld [vmem:[%s7 + $0x30] sm:$0xf]
      %v1352 = vld [vmem:[%s7 + $0x34] sm:$0xf]
      %v1353 = vld [vmem:[%s7 + $0x38] sm:$0xf]
      %v1354 = vld [vmem:[%s7 + $0x3c] sm:$0xf]
      %v1355 = vld [vmem:[%s7 + $0x40] sm:$0xf]
      %v1356 = vld [vmem:[%s7 + $0x44] sm:$0xf]
      %v1357 = vld [vmem:[%s7 + $0x48] sm:$0xf]
      %v1358 = vld [vmem:[%s7 + $0x4c] sm:$0xf]
      %v1359 = vld [vmem:[%s7 + $0x50] sm:$0xf]
      %v1360 = vld [vmem:[%s7 + $0x54] sm:$0xf]
      %v1361 = vld [vmem:[%s7 + $0x58] sm:$0xf]
      %v1362 = vld [vmem:[%s7 + $0x5c] sm:$0xf]
      %v1363 = vld [vmem:[%s7 + $0x60] sm:$0xf]
      %v1364 = vld [vmem:[%s7 + $0x64] sm:$0xf]
      %v1365 = vld [vmem:[%s7 + $0x68] sm:$0xf]
      %v1366 = vld [vmem:[%s7 + $0x6c] sm:$0xf]
      %v1367 = vld [vmem:[%s7 + $0x70] sm:$0xf]
      %v1368 = vld [vmem:[%s7 + $0x74] sm:$0xf]
      %v1369 = vld [vmem:[%s7 + $0x78] sm:$0xf]
      %v1370 = vld [vmem:[%s7 + $0x7c] sm:$0xf]
      %v1371 = vld [vmem:[%s7 + $0x80] sm:$0xf]
      %v1372 = vld [vmem:[%s7 + $0x84] sm:$0xf]
      %v1373 = vld [vmem:[%s7 + $0x88] sm:$0xf]
      %v1374 = vld [vmem:[%s7 + $0x8c] sm:$0xf]
      %v1375 = vld [vmem:[%s7 + $0x90] sm:$0xf]
      %v1376 = vld [vmem:[%s7 + $0x94] sm:$0xf]
      %v1377 = vld [vmem:[%s7 + $0x98] sm:$0xf]
      %v1378 = vld [vmem:[%s7 + $0x9c] sm:$0xf]
      %v1379 = vld [vmem:[%s7 + $0xa0] sm:$0xf]
      %v1380 = vld [vmem:[%s7 + $0xa4] sm:$0xf]
      %v1381 = vld [vmem:[%s7 + $0xa8] sm:$0xf]
      %v1382 = vld [vmem:[%s7 + $0xac] sm:$0xf]
      %v1383 = vld [vmem:[%s7 + $0xb0] sm:$0xf]
      %v1384 = vld [vmem:[%s7 + $0xb4] sm:$0xf]
      %v1385 = vld [vmem:[%s7 + $0xb8] sm:$0xf]
      %v1386 = vld [vmem:[%s7 + $0xbc] sm:$0xf]
      %v1387 = vld [vmem:[%s7 + $0xc0] sm:$0xf]
      %v1388 = vld [vmem:[%s7 + $0xc4] sm:$0xf]
      %v1389 = vld [vmem:[%s7 + $0xc8] sm:$0xf]
      %v1390 = vld [vmem:[%s7 + $0xcc] sm:$0xf]
      %v1391 = vld [vmem:[%s7 + $0xd0] sm:$0xf]
      %v1392 = vld [vmem:[%s7 + $0xd4] sm:$0xf]
      %v1393 = vld [vmem:[%s7 + $0xd8] sm:$0xf]
      %v1394 = vld [vmem:[%s7 + $0xdc] sm:$0xf]
      %v1395 = vld [vmem:[%s7 + $0xe0] sm:$0xf]
      %v1396 = vld [vmem:[%s7 + $0xe4] sm:$0xf]
      %v1397 = vld [vmem:[%s7 + $0xe8] sm:$0xf]
      %v1398 = vld [vmem:[%s7 + $0xec] sm:$0xf]
      %v1399 = vld [vmem:[%s7 + $0xf0] sm:$0xf]
      %v1400 = vld [vmem:[%s7 + $0xf4] sm:$0xf]
      %v1401 = vld [vmem:[%s7 + $0xf8] sm:$0xf]
      %v1402 = vld [vmem:[%s7 + $0xfc] sm:$0xf]
      %v1403 = vld [vmem:[%s8] sm:$0x1]
      %v1405 = vlaneseq
      %v1406 = vshrl.u32 %v1405, 7
      %v1407 = vsub.s32 0, %v1406
      %v1408 = vrot.slane %v1403, %v1407
      %v1474 = vunpack.c.l.b16 %v1339
      %v1475 = vunpack.c.l.b16 %v1340
      %v1476 = vunpack.c.l.b16 %v1341
      %v1477 = vunpack.c.l.b16 %v1342
      %v1478 = vunpack.c.l.b16 %v1343
      %v1479 = vunpack.c.l.b16 %v1344
      %v1480 = vunpack.c.l.b16 %v1345
      %v1481 = vunpack.c.l.b16 %v1346
      %v1482 = vunpack.c.l.b16 %v1347
      %v1483 = vunpack.c.l.b16 %v1348
      %v1484 = vunpack.c.l.b16 %v1349
      %v1485 = vunpack.c.l.b16 %v1350
      %v1486 = vunpack.c.l.b16 %v1351
      %v1487 = vunpack.c.l.b16 %v1352
      %v1488 = vunpack.c.l.b16 %v1353
      %v1489 = vunpack.c.l.b16 %v1354
      %v1490 = vunpack.c.l.b16 %v1355
      %v1491 = vunpack.c.l.b16 %v1356
      %v1492 = vunpack.c.l.b16 %v1357
      %v1493 = vunpack.c.l.b16 %v1358
      %v1494 = vunpack.c.l.b16 %v1359
      %v1495 = vunpack.c.l.b16 %v1360
      %v1496 = vunpack.c.l.b16 %v1361
      %v1497 = vunpack.c.l.b16 %v1362
      %v1498 = vunpack.c.l.b16 %v1363
      %v1499 = vunpack.c.l.b16 %v1364
      %v1500 = vunpack.c.l.b16 %v1365
      %v1501 = vunpack.c.l.b16 %v1366
      %v1502 = vunpack.c.l.b16 %v1367
      %v1503 = vunpack.c.l.b16 %v1368
      %v1504 = vunpack.c.l.b16 %v1369
      %v1505 = vunpack.c.l.b16 %v1370
      %v1506 = vunpack.c.l.b16 %v1371
      %v1507 = vunpack.c.l.b16 %v1372
      %v1508 = vunpack.c.l.b16 %v1373
      %v1509 = vunpack.c.l.b16 %v1374
      %v1510 = vunpack.c.l.b16 %v1375
      %v1511 = vunpack.c.l.b16 %v1376
      %v1512 = vunpack.c.l.b16 %v1377
      %v1513 = vunpack.c.l.b16 %v1378
      %v1514 = vunpack.c.l.b16 %v1379
      %v1515 = vunpack.c.l.b16 %v1380
      %v1516 = vunpack.c.l.b16 %v1381
      %v1517 = vunpack.c.l.b16 %v1382
      %v1518 = vunpack.c.l.b16 %v1383
      %v1519 = vunpack.c.l.b16 %v1384
      %v1520 = vunpack.c.l.b16 %v1385
      %v1521 = vunpack.c.l.b16 %v1386
      %v1522 = vunpack.c.l.b16 %v1387
      %v1523 = vunpack.c.l.b16 %v1388
      %v1524 = vunpack.c.l.b16 %v1389
      %v1525 = vunpack.c.l.b16 %v1390
      %v1526 = vunpack.c.l.b16 %v1391
      %v1527 = vunpack.c.l.b16 %v1392
      %v1528 = vunpack.c.l.b16 %v1393
      %v1529 = vunpack.c.l.b16 %v1394
      %v1530 = vunpack.c.l.b16 %v1395
      %v1531 = vunpack.c.l.b16 %v1396
      %v1532 = vunpack.c.l.b16 %v1397
      %v1533 = vunpack.c.l.b16 %v1398
      %v1534 = vunpack.c.l.b16 %v1399
      %v1535 = vunpack.c.l.b16 %v1400
      %v1536 = vunpack.c.l.b16 %v1401
      %v1537 = vunpack.c.l.b16 %v1402
      %v1538 = vpack.c.b16 %v1475, %v1474
      %v1539 = vpack.c.b16 %v1477, %v1476
      %v1540 = vpack.c.b16 %v1479, %v1478
      %v1541 = vpack.c.b16 %v1481, %v1480
      %v1542 = vpack.c.b16 %v1483, %v1482
      %v1543 = vpack.c.b16 %v1485, %v1484
      %v1544 = vpack.c.b16 %v1487, %v1486
      %v1545 = vpack.c.b16 %v1489, %v1488
      %v1546 = vpack.c.b16 %v1491, %v1490
      %v1547 = vpack.c.b16 %v1493, %v1492
      %v1548 = vpack.c.b16 %v1495, %v1494
      %v1549 = vpack.c.b16 %v1497, %v1496
      %v1550 = vpack.c.b16 %v1499, %v1498
      %v1551 = vpack.c.b16 %v1501, %v1500
      %v1552 = vpack.c.b16 %v1503, %v1502
      %v1553 = vpack.c.b16 %v1505, %v1504
      %v1554 = vpack.c.b16 %v1507, %v1506
      %v1555 = vpack.c.b16 %v1509, %v1508
      %v1556 = vpack.c.b16 %v1511, %v1510
      %v1557 = vpack.c.b16 %v1513, %v1512
      %v1558 = vpack.c.b16 %v1515, %v1514
      %v1559 = vpack.c.b16 %v1517, %v1516
      %v1560 = vpack.c.b16 %v1519, %v1518
      %v1561 = vpack.c.b16 %v1521, %v1520
      %v1562 = vpack.c.b16 %v1523, %v1522
      %v1563 = vpack.c.b16 %v1525, %v1524
      %v1564 = vpack.c.b16 %v1527, %v1526
      %v1565 = vpack.c.b16 %v1529, %v1528
      %v1566 = vpack.c.b16 %v1531, %v1530
      %v1567 = vpack.c.b16 %v1533, %v1532
      %v1568 = vpack.c.b16 %v1535, %v1534
      %v1569 = vpack.c.b16 %v1537, %v1536
      %1602 = vmatprep.subr.bf16.mxu0 0
      %1603 = vmatpush1.bf16.msra.mxu0 %v1538
      %1604 = vmatprep.subr.bf16.mxu0 0
      %1605 = vmatpush1.bf16.msra.mxu0 %v1539
      %1606 = vmatprep.subr.bf16.mxu0 0
      %1607 = vmatpush1.bf16.msra.mxu0 %v1540
      %1608 = vmatprep.subr.bf16.mxu0 0
      %1609 = vmatpush1.bf16.msra.mxu0 %v1541
      %1610 = vmatprep.subr.bf16.mxu0 0
      %1611 = vmatpush1.bf16.msra.mxu0 %v1542
      %1612 = vmatprep.subr.bf16.mxu0 0
      %1613 = vmatpush1.bf16.msra.mxu0 %v1543
      %1614 = vmatprep.subr.bf16.mxu0 0
      %1615 = vmatpush1.bf16.msra.mxu0 %v1544
      %1616 = vmatprep.subr.bf16.mxu0 0
      %1617 = vmatpush1.bf16.msra.mxu0 %v1545
      %1618 = vmatprep.subr.bf16.mxu0 0
      %1619 = vmatpush1.bf16.msra.mxu0 %v1546
      %1620 = vmatprep.subr.bf16.mxu0 0
      %1621 = vmatpush1.bf16.msra.mxu0 %v1547
      %1622 = vmatprep.subr.bf16.mxu0 0
      %1623 = vmatpush1.bf16.msra.mxu0 %v1548
      %1624 = vmatprep.subr.bf16.mxu0 0
      %1625 = vmatpush1.bf16.msra.mxu0 %v1549
      %1626 = vmatprep.subr.bf16.mxu0 0
      %1627 = vmatpush1.bf16.msra.mxu0 %v1550
      %1628 = vmatprep.subr.bf16.mxu0 0
      %1629 = vmatpush1.bf16.msra.mxu0 %v1551
      %1630 = vmatprep.subr.bf16.mxu0 0
      %1631 = vmatpush1.bf16.msra.mxu0 %v1552
      %1632 = vmatprep.subr.bf16.mxu0 0
      %1633 = vmatpush1.bf16.msra.mxu0 %v1553
      %1634 = vmatprep.mubr.bf16.mxu0 %v701
      %1635 = vmatmul.mubr.bf16.gmra.mrb[0].mxu0 %v700
      %v1636 = vpop.f32.mrb[0].mxu0
      %v1637 = vadd.f32 %v1408, %v1636
      %v1638 = vpop.f32.mrb[0].mxu0
      %v1639 = vpop.f32.mrb[0].mxu0
      %v1640 = vadd.f32 %v1408, %v1639
      %v1641 = vpop.f32.mrb[0].mxu0
      %1642 = vmatprep.mubr.bf16.mxu0 %v705
      %1643 = vmatmul.mubr.bf16.gmra.mrb[0].mxu0 %v704
      %v1644 = vpop.f32.mrb[0].mxu0
      %v1645 = vadd.f32 %v1408, %v1644
      %v1646 = vpop.f32.mrb[0].mxu0
      %v1647 = vpop.f32.mrb[0].mxu0
      %v1648 = vadd.f32 %v1408, %v1647
      %v1649 = vpop.f32.mrb[0].mxu0
      %1650 = vmatprep.mubr.bf16.mxu0 %v709
      %1651 = vmatmul.mubr.bf16.gmra.mrb[0].mxu0 %v708
      %v1652 = vpop.f32.mrb[0].mxu0
      %v1653 = vadd.f32 %v1408, %v1652
      %v1654 = vpop.f32.mrb[0].mxu0
      %v1655 = vpop.f32.mrb[0].mxu0
      %v1656 = vadd.f32 %v1408, %v1655
      %v1657 = vpop.f32.mrb[0].mxu0
      %1658 = vmatprep.mubr.bf16.mxu0 %v713
      %1659 = vmatmul.mubr.bf16.gmra.mrb[0].mxu0 %v712
      %v1660 = vpop.f32.mrb[0].mxu0
      %v1661 = vadd.f32 %v1408, %v1660
      %v1662 = vpop.f32.mrb[0].mxu0
      %v1663 = vpop.f32.mrb[0].mxu0
      %v1664 = vadd.f32 %v1408, %v1663
      %v1665 = vpop.f32.mrb[0].mxu0
      %1666 = vdwg.mxu0
      %1667 = vmatprep.subr.bf16.mxu0 0
      %1668 = vmatpush1.bf16.msra.mxu0 %v1554
      %1669 = vmatprep.subr.bf16.mxu0 0
      %1670 = vmatpush1.bf16.msra.mxu0 %v1555
      %1671 = vmatprep.subr.bf16.mxu0 0
      %1672 = vmatpush1.bf16.msra.mxu0 %v1556
      %1673 = vmatprep.subr.bf16.mxu0 0
      %1674 = vmatpush1.bf16.msra.mxu0 %v1557
      %1675 = vmatprep.subr.bf16.mxu0 0
      %1676 = vmatpush1.bf16.msra.mxu0 %v1558
      %1677 = vmatprep.subr.bf16.mxu0 0
      %1678 = vmatpush1.bf16.msra.mxu0 %v1559
      %1679 = vmatprep.subr.bf16.mxu0 0
      %1680 = vmatpush1.bf16.msra.mxu0 %v1560
      %1681 = vmatprep.subr.bf16.mxu0 0
      %1682 = vmatpush1.bf16.msra.mxu0 %v1561
      %1683 = vmatprep.subr.bf16.mxu0 0
      %1684 = vmatpush1.bf16.msra.mxu0 %v1562
      %1685 = vmatprep.subr.bf16.mxu0 0
      %1686 = vmatpush1.bf16.msra.mxu0 %v1563
      %1687 = vmatprep.subr.bf16.mxu0 0
      %1688 = vmatpush1.bf16.msra.mxu0 %v1564
      %1689 = vmatprep.subr.bf16.mxu0 0
      %1690 = vmatpush1.bf16.msra.mxu0 %v1565
      %1691 = vmatprep.subr.bf16.mxu0 0
      %1692 = vmatpush1.bf16.msra.mxu0 %v1566
      %1693 = vmatprep.subr.bf16.mxu0 0
      %1694 = vmatpush1.bf16.msra.mxu0 %v1567
      %1695 = vmatprep.subr.bf16.mxu0 0
      %1696 = vmatpush1.bf16.msra.mxu0 %v1568
      %1697 = vmatprep.subr.bf16.mxu0 0
      %1698 = vmatpush1.bf16.msra.mxu0 %v1569
      %1699 = vmatprep.mubr.bf16.mxu0 %v703
      %1700 = vmatmul.mubr.bf16.gmra.mrb[0].mxu0 %v702
      %v1701 = vpop.f32.mrb[0].mxu0
      %v1702 = vadd.f32 %v1637, %v1701
      %v1703 = vpop.f32.mrb[0].mxu0
      %v1704 = vpop.f32.mrb[0].mxu0
      %v1705 = vadd.f32 %v1640, %v1704
      %v1706 = vpop.f32.mrb[0].mxu0
      %1707 = vmatprep.mubr.bf16.mxu0 %v707
      %1708 = vmatmul.mubr.bf16.gmra.mrb[0].mxu0 %v706
      %v1709 = vpop.f32.mrb[0].mxu0
      %v1710 = vadd.f32 %v1645, %v1709
      %v1711 = vpop.f32.mrb[0].mxu0
      %v1712 = vpop.f32.mrb[0].mxu0
      %v1713 = vadd.f32 %v1648, %v1712
      %v1714 = vpop.f32.mrb[0].mxu0
      %1715 = vmatprep.mubr.bf16.mxu0 %v711
      %1716 = vmatmul.mubr.bf16.gmra.mrb[0].mxu0 %v710
      %v1717 = vpop.f32.mrb[0].mxu0
      %v1718 = vadd.f32 %v1653, %v1717
      %v1719 = vpop.f32.mrb[0].mxu0
      %v1720 = vpop.f32.mrb[0].mxu0
      %v1721 = vadd.f32 %v1656, %v1720
      %v1722 = vpop.f32.mrb[0].mxu0
      %1723 = vmatprep.mubr.bf16.mxu0 %v715
      %1724 = vmatmul.mubr.bf16.gmra.mrb[0].mxu0 %v714
      %v1725 = vpop.f32.mrb[0].mxu0
      %v1726 = vadd.f32 %v1661, %v1725
      %v1727 = vpop.f32.mrb[0].mxu0
      %v1728 = vpop.f32.mrb[0].mxu0
      %v1729 = vadd.f32 %v1664, %v1728
      %v1730 = vpop.f32.mrb[0].mxu0
      %1731 = vdwg.mxu0
      %v1732 = vmax.f32 %v1702, 0.0
      %v1733 = vmax.f32 %v1705, 0.0
      %v1734 = vmax.f32 %v1710, 0.0
      %v1735 = vmax.f32 %v1713, 0.0
      %v1736 = vmax.f32 %v1718, 0.0
      %v1737 = vmax.f32 %v1721, 0.0
      %v1738 = vmax.f32 %v1726, 0.0
      %v1739 = vmax.f32 %v1729, 0.0
      %vm1740 = vcmask 261120
      %1741 = vst.msk [vmem:[#allocation4] sm:$0xff] %vm1740, 0.0
      %vm1742 = vcmask 254976
      %1743 = vst.msk [vmem:[#allocation4 + $0x8] sm:$0x3] %vm1742, 0.0
      %1744 = vst.msk [vmem:[#allocation4 + $0x10] sm:$0xff] %vm1740, 0.0
      %1745 = vst.msk [vmem:[#allocation4 + $0x18] sm:$0x3] %vm1742, 0.0
      %1746 = vst.msk [vmem:[#allocation4 + $0x20] sm:$0xff] %vm1740, 0.0
      %1747 = vst.msk [vmem:[#allocation4 + $0x28] sm:$0x3] %vm1742, 0.0
      %1748 = vst.msk [vmem:[#allocation4 + $0x30] sm:$0xff] %vm1740, 0.0
      %1749 = vst.msk [vmem:[#allocation4 + $0x38] sm:$0x3] %vm1742, 0.0
      %1750 = vst.msk [vmem:[#allocation4 + $0x40] sm:$0xff] %vm1740, 0.0
      %1751 = vst.msk [vmem:[#allocation4 + $0x48] sm:$0x3] %vm1742, 0.0
      %1752 = vst.msk [vmem:[#allocation4 + $0x50] sm:$0xff] %vm1740, 0.0
      %1753 = vst.msk [vmem:[#allocation4 + $0x58] sm:$0x3] %vm1742, 0.0
      %1754 = vst.msk [vmem:[#allocation4 + $0x60] sm:$0xff] %vm1740, 0.0
      %1755 = vst.msk [vmem:[#allocation4 + $0x68] sm:$0x3] %vm1742, 0.0
      %1756 = vst.msk [vmem:[#allocation4 + $0x70] sm:$0xff] %vm1740, 0.0
      %1757 = vst.msk [vmem:[#allocation4 + $0x78] sm:$0x3] %vm1742, 0.0
      %1758 = vst.msk [vmem:[#allocation4 + $0x80] sm:$0xff] %vm1740, 0.0
      %1759 = vst.msk [vmem:[#allocation4 + $0x88] sm:$0x3] %vm1742, 0.0
      %1760 = vst.msk [vmem:[#allocation4 + $0x90] sm:$0xff] %vm1740, 0.0
      %1761 = vst.msk [vmem:[#allocation4 + $0x98] sm:$0x3] %vm1742, 0.0
      %s1762 = scalar_lea.vmem [#allocation4], 16
      %1763 = vst.msk [vmem:[%s1762 + $0x1] sm:$0xff] %vm1740, %v1732
      %1764 = vst.msk [vmem:[%s1762 + $0x11] sm:$0xff] %vm1740, %v1733
      %1765 = vst.msk [vmem:[%s1762 + $0x21] sm:$0xff] %vm1740, %v1734
      %1766 = vst.msk [vmem:[%s1762 + $0x31] sm:$0xff] %vm1740, %v1735
      %1767 = vst.msk [vmem:[%s1762 + $0x41] sm:$0xff] %vm1740, %v1736
      %1768 = vst.msk [vmem:[%s1762 + $0x51] sm:$0xff] %vm1740, %v1737
      %1769 = vst.msk [vmem:[%s1762 + $0x61] sm:$0xff] %vm1740, %v1738
      %1770 = vst.msk [vmem:[%s1762 + $0x71] sm:$0xff] %vm1740, %v1739
      %v1771 = vld [vmem:[%s1] sm:$0xf]
      %v1772 = vld [vmem:[%s1 + $0x4] sm:$0xf]
      %v1773 = vld [vmem:[%s1 + $0x8] sm:$0xf]
      %v1774 = vld [vmem:[%s1 + $0xc] sm:$0xf]
      %v1775 = vld [vmem:[%s1 + $0x10] sm:$0xf]
      %v1776 = vld [vmem:[%s1 + $0x14] sm:$0xf]
      %v1777 = vld [vmem:[%s1 + $0x18] sm:$0xf]
      %v1778 = vld [vmem:[%s1 + $0x1c] sm:$0xf]
      %v1779 = vld [vmem:[%s1 + $0x20] sm:$0xf]
      %v1780 = vld [vmem:[%s1 + $0x24] sm:$0xf]
      %v1781 = vld [vmem:[%s1 + $0x28] sm:$0xf]
      %v1782 = vld [vmem:[%s1 + $0x2c] sm:$0xf]
      %v1783 = vld [vmem:[%s1 + $0x30] sm:$0xf]
      %v1784 = vld [vmem:[%s1 + $0x34] sm:$0xf]
      %v1785 = vld [vmem:[%s1 + $0x38] sm:$0xf]
      %v1786 = vld [vmem:[%s1 + $0x3c] sm:$0xf]
      %v1787 = vld [vmem:[%s1 + $0x40] sm:$0xf]
      %v1788 = vld [vmem:[%s1 + $0x44] sm:$0xf]
      %v1789 = vld [vmem:[%s1 + $0x48] sm:$0xf]
      %v1790 = vld [vmem:[%s1 + $0x4c] sm:$0xf]
      %v1791 = vld [vmem:[%s1 + $0x50] sm:$0xf]
      %v1792 = vld [vmem:[%s1 + $0x54] sm:$0xf]
      %v1793 = vld [vmem:[%s1 + $0x58] sm:$0xf]
      %v1794 = vld [vmem:[%s1 + $0x5c] sm:$0xf]
      %v1795 = vld [vmem:[%s1 + $0x60] sm:$0xf]
      %v1796 = vld [vmem:[%s1 + $0x64] sm:$0xf]
      %v1797 = vld [vmem:[%s1 + $0x68] sm:$0xf]
      %v1798 = vld [vmem:[%s1 + $0x6c] sm:$0xf]
      %v1799 = vld [vmem:[%s1 + $0x70] sm:$0xf]
      %v1800 = vld [vmem:[%s1 + $0x74] sm:$0xf]
      %v1801 = vld [vmem:[%s1 + $0x78] sm:$0xf]
      %v1802 = vld [vmem:[%s1 + $0x7c] sm:$0xf]
      %v1803 = vld [vmem:[%s1 + $0x80] sm:$0xf]
      %v1804 = vld [vmem:[%s1 + $0x84] sm:$0xf]
      %v1805 = vld [vmem:[%s1 + $0x88] sm:$0xf]
      %v1806 = vld [vmem:[%s1 + $0x8c] sm:$0xf]
      %v1807 = vld [vmem:[%s1 + $0x90] sm:$0xf]
      %v1808 = vld [vmem:[%s1 + $0x94] sm:$0xf]
      %v1809 = vld [vmem:[%s1 + $0x98] sm:$0xf]
      %v1810 = vld [vmem:[%s1 + $0x9c] sm:$0xf]
      %v1811 = vld [vmem:[%s1 + $0xa0] sm:$0xf]
      %v1812 = vld [vmem:[%s1 + $0xa4] sm:$0xf]
      %v1813 = vld [vmem:[%s1 + $0xa8] sm:$0xf]
      %v1814 = vld [vmem:[%s1 + $0xac] sm:$0xf]
      %v1815 = vld [vmem:[%s1 + $0xb0] sm:$0xf]
      %v1816 = vld [vmem:[%s1 + $0xb4] sm:$0xf]
      %v1817 = vld [vmem:[%s1 + $0xb8] sm:$0xf]
      %v1818 = vld [vmem:[%s1 + $0xbc] sm:$0xf]
      %v1819 = vld [vmem:[%s1 + $0xc0] sm:$0xf]
      %v1820 = vld [vmem:[%s1 + $0xc4] sm:$0xf]
      %v1821 = vld [vmem:[%s1 + $0xc8] sm:$0xf]
      %v1822 = vld [vmem:[%s1 + $0xcc] sm:$0xf]
      %v1823 = vld [vmem:[%s1 + $0xd0] sm:$0xf]
      %v1824 = vld [vmem:[%s1 + $0xd4] sm:$0xf]
      %v1825 = vld [vmem:[%s1 + $0xd8] sm:$0xf]
      %v1826 = vld [vmem:[%s1 + $0xdc] sm:$0xf]
      %v1827 = vld [vmem:[%s1 + $0xe0] sm:$0xf]
      %v1828 = vld [vmem:[%s1 + $0xe4] sm:$0xf]
      %v1829 = vld [vmem:[%s1 + $0xe8] sm:$0xf]
      %v1830 = vld [vmem:[%s1 + $0xec] sm:$0xf]
      %v1831 = vld [vmem:[%s1 + $0xf0] sm:$0xf]
      %v1832 = vld [vmem:[%s1 + $0xf4] sm:$0xf]
      %v1833 = vld [vmem:[%s1 + $0xf8] sm:$0xf]
      %v1834 = vld [vmem:[%s1 + $0xfc] sm:$0xf]
      %v1835 = vld [vmem:[%s2] sm:$0x1]
      %v1837 = vlaneseq
      %v1838 = vshrl.u32 %v1837, 7
      %v1839 = vsub.s32 0, %v1838
      %v1840 = vrot.slane %v1835, %v1839
      %v1906 = vunpack.c.l.b16 %v1771
      %v1907 = vunpack.c.l.b16 %v1772
      %v1908 = vunpack.c.l.b16 %v1773
      %v1909 = vunpack.c.l.b16 %v1774
      %v1910 = vunpack.c.l.b16 %v1775
      %v1911 = vunpack.c.l.b16 %v1776
      %v1912 = vunpack.c.l.b16 %v1777
      %v1913 = vunpack.c.l.b16 %v1778
      %v1914 = vunpack.c.l.b16 %v1779
      %v1915 = vunpack.c.l.b16 %v1780
      %v1916 = vunpack.c.l.b16 %v1781
      %v1917 = vunpack.c.l.b16 %v1782
      %v1918 = vunpack.c.l.b16 %v1783
      %v1919 = vunpack.c.l.b16 %v1784
      %v1920 = vunpack.c.l.b16 %v1785
      %v1921 = vunpack.c.l.b16 %v1786
      %v1922 = vunpack.c.l.b16 %v1787
      %v1923 = vunpack.c.l.b16 %v1788
      %v1924 = vunpack.c.l.b16 %v1789
      %v1925 = vunpack.c.l.b16 %v1790
      %v1926 = vunpack.c.l.b16 %v1791
      %v1927 = vunpack.c.l.b16 %v1792
      %v1928 = vunpack.c.l.b16 %v1793
      %v1929 = vunpack.c.l.b16 %v1794
      %v1930 = vunpack.c.l.b16 %v1795
      %v1931 = vunpack.c.l.b16 %v1796
      %v1932 = vunpack.c.l.b16 %v1797
      %v1933 = vunpack.c.l.b16 %v1798
      %v1934 = vunpack.c.l.b16 %v1799
      %v1935 = vunpack.c.l.b16 %v1800
      %v1936 = vunpack.c.l.b16 %v1801
      %v1937 = vunpack.c.l.b16 %v1802
      %v1938 = vunpack.c.l.b16 %v1803
      %v1939 = vunpack.c.l.b16 %v1804
      %v1940 = vunpack.c.l.b16 %v1805
      %v1941 = vunpack.c.l.b16 %v1806
      %v1942 = vunpack.c.l.b16 %v1807
      %v1943 = vunpack.c.l.b16 %v1808
      %v1944 = vunpack.c.l.b16 %v1809
      %v1945 = vunpack.c.l.b16 %v1810
      %v1946 = vunpack.c.l.b16 %v1811
      %v1947 = vunpack.c.l.b16 %v1812
      %v1948 = vunpack.c.l.b16 %v1813
      %v1949 = vunpack.c.l.b16 %v1814
      %v1950 = vunpack.c.l.b16 %v1815
      %v1951 = vunpack.c.l.b16 %v1816
      %v1952 = vunpack.c.l.b16 %v1817
      %v1953 = vunpack.c.l.b16 %v1818
      %v1954 = vunpack.c.l.b16 %v1819
      %v1955 = vunpack.c.l.b16 %v1820
      %v1956 = vunpack.c.l.b16 %v1821
      %v1957 = vunpack.c.l.b16 %v1822
      %v1958 = vunpack.c.l.b16 %v1823
      %v1959 = vunpack.c.l.b16 %v1824
      %v1960 = vunpack.c.l.b16 %v1825
      %v1961 = vunpack.c.l.b16 %v1826
      %v1962 = vunpack.c.l.b16 %v1827
      %v1963 = vunpack.c.l.b16 %v1828
      %v1964 = vunpack.c.l.b16 %v1829
      %v1965 = vunpack.c.l.b16 %v1830
      %v1966 = vunpack.c.l.b16 %v1831
      %v1967 = vunpack.c.l.b16 %v1832
      %v1968 = vunpack.c.l.b16 %v1833
      %v1969 = vunpack.c.l.b16 %v1834
      %v1970 = vpack.c.b16 %v1907, %v1906
      %v1971 = vpack.c.b16 %v1909, %v1908
      %v1972 = vpack.c.b16 %v1911, %v1910
      %v1973 = vpack.c.b16 %v1913, %v1912
      %v1974 = vpack.c.b16 %v1915, %v1914
      %v1975 = vpack.c.b16 %v1917, %v1916
      %v1976 = vpack.c.b16 %v1919, %v1918
      %v1977 = vpack.c.b16 %v1921, %v1920
      %v1978 = vpack.c.b16 %v1923, %v1922
      %v1979 = vpack.c.b16 %v1925, %v1924
      %v1980 = vpack.c.b16 %v1927, %v1926
      %v1981 = vpack.c.b16 %v1929, %v1928
      %v1982 = vpack.c.b16 %v1931, %v1930
      %v1983 = vpack.c.b16 %v1933, %v1932
      %v1984 = vpack.c.b16 %v1935, %v1934
      %v1985 = vpack.c.b16 %v1937, %v1936
      %v1986 = vpack.c.b16 %v1939, %v1938
      %v1987 = vpack.c.b16 %v1941, %v1940
      %v1988 = vpack.c.b16 %v1943, %v1942
      %v1989 = vpack.c.b16 %v1945, %v1944
      %v1990 = vpack.c.b16 %v1947, %v1946
      %v1991 = vpack.c.b16 %v1949, %v1948
      %v1992 = vpack.c.b16 %v1951, %v1950
      %v1993 = vpack.c.b16 %v1953, %v1952
      %v1994 = vpack.c.b16 %v1955, %v1954
      %v1995 = vpack.c.b16 %v1957, %v1956
      %v1996 = vpack.c.b16 %v1959, %v1958
      %v1997 = vpack.c.b16 %v1961, %v1960
      %v1998 = vpack.c.b16 %v1963, %v1962
      %v1999 = vpack.c.b16 %v1965, %v1964
      %v2000 = vpack.c.b16 %v1967, %v1966
      %v2001 = vpack.c.b16 %v1969, %v1968
      %2034 = vmatprep.subr.bf16.mxu0 0
      %2035 = vmatpush1.bf16.msra.mxu0 %v1970
      %2036 = vmatprep.subr.bf16.mxu0 0
      %2037 = vmatpush1.bf16.msra.mxu0 %v1971
      %2038 = vmatprep.subr.bf16.mxu0 0
      %2039 = vmatpush1.bf16.msra.mxu0 %v1972
      %2040 = vmatprep.subr.bf16.mxu0 0
      %2041 = vmatpush1.bf16.msra.mxu0 %v1973
      %2042 = vmatprep.subr.bf16.mxu0 0
      %2043 = vmatpush1.bf16.msra.mxu0 %v1974
      %2044 = vmatprep.subr.bf16.mxu0 0
      %2045 = vmatpush1.bf16.msra.mxu0 %v1975
      %2046 = vmatprep.subr.bf16.mxu0 0
      %2047 = vmatpush1.bf16.msra.mxu0 %v1976
      %2048 = vmatprep.subr.bf16.mxu0 0
      %2049 = vmatpush1.bf16.msra.mxu0 %v1977
      %2050 = vmatprep.subr.bf16.mxu0 0
      %2051 = vmatpush1.bf16.msra.mxu0 %v1978
      %2052 = vmatprep.subr.bf16.mxu0 0
      %2053 = vmatpush1.bf16.msra.mxu0 %v1979
      %2054 = vmatprep.subr.bf16.mxu0 0
      %2055 = vmatpush1.bf16.msra.mxu0 %v1980
      %2056 = vmatprep.subr.bf16.mxu0 0
      %2057 = vmatpush1.bf16.msra.mxu0 %v1981
      %2058 = vmatprep.subr.bf16.mxu0 0
      %2059 = vmatpush1.bf16.msra.mxu0 %v1982
      %2060 = vmatprep.subr.bf16.mxu0 0
      %2061 = vmatpush1.bf16.msra.mxu0 %v1983
      %2062 = vmatprep.subr.bf16.mxu0 0
      %2063 = vmatpush1.bf16.msra.mxu0 %v1984
      %2064 = vmatprep.subr.bf16.mxu0 0
      %2065 = vmatpush1.bf16.msra.mxu0 %v1985
      %2066 = vmatprep.mubr.bf16.mxu0 %v701
      %2067 = vmatmul.mubr.bf16.gmra.mrb[0].mxu0 %v700
      %v2068 = vpop.f32.mrb[0].mxu0
      %v2069 = vadd.f32 %v1840, %v2068
      %v2070 = vpop.f32.mrb[0].mxu0
      %v2071 = vpop.f32.mrb[0].mxu0
      %v2072 = vadd.f32 %v1840, %v2071
      %v2073 = vpop.f32.mrb[0].mxu0
      %2074 = vmatprep.mubr.bf16.mxu0 %v705
      %2075 = vmatmul.mubr.bf16.gmra.mrb[0].mxu0 %v704
      %v2076 = vpop.f32.mrb[0].mxu0
      %v2077 = vadd.f32 %v1840, %v2076
      %v2078 = vpop.f32.mrb[0].mxu0
      %v2079 = vpop.f32.mrb[0].mxu0
      %v2080 = vadd.f32 %v1840, %v2079
      %v2081 = vpop.f32.mrb[0].mxu0
      %2082 = vmatprep.mubr.bf16.mxu0 %v709
      %2083 = vmatmul.mubr.bf16.gmra.mrb[0].mxu0 %v708
      %v2084 = vpop.f32.mrb[0].mxu0
      %v2085 = vadd.f32 %v1840, %v2084
      %v2086 = vpop.f32.mrb[0].mxu0
      %v2087 = vpop.f32.mrb[0].mxu0
      %v2088 = vadd.f32 %v1840, %v2087
      %v2089 = vpop.f32.mrb[0].mxu0
      %2090 = vmatprep.mubr.bf16.mxu0 %v713
      %2091 = vmatmul.mubr.bf16.gmra.mrb[0].mxu0 %v712
      %v2092 = vpop.f32.mrb[0].mxu0
      %v2093 = vadd.f32 %v1840, %v2092
      %v2094 = vpop.f32.mrb[0].mxu0
      %v2095 = vpop.f32.mrb[0].mxu0
      %v2096 = vadd.f32 %v1840, %v2095
      %v2097 = vpop.f32.mrb[0].mxu0
      %2098 = vdwg.mxu0
      %2099 = vmatprep.subr.bf16.mxu0 0
      %2100 = vmatpush1.bf16.msra.mxu0 %v1986
      %2101 = vmatprep.subr.bf16.mxu0 0
      %2102 = vmatpush1.bf16.msra.mxu0 %v1987
      %2103 = vmatprep.subr.bf16.mxu0 0
      %2104 = vmatpush1.bf16.msra.mxu0 %v1988
      %2105 = vmatprep.subr.bf16.mxu0 0
      %2106 = vmatpush1.bf16.msra.mxu0 %v1989
      %2107 = vmatprep.subr.bf16.mxu0 0
      %2108 = vmatpush1.bf16.msra.mxu0 %v1990
      %2109 = vmatprep.subr.bf16.mxu0 0
      %2110 = vmatpush1.bf16.msra.mxu0 %v1991
      %2111 = vmatprep.subr.bf16.mxu0 0
      %2112 = vmatpush1.bf16.msra.mxu0 %v1992
      %2113 = vmatprep.subr.bf16.mxu0 0
      %2114 = vmatpush1.bf16.msra.mxu0 %v1993
      %2115 = vmatprep.subr.bf16.mxu0 0
      %2116 = vmatpush1.bf16.msra.mxu0 %v1994
      %2117 = vmatprep.subr.bf16.mxu0 0
      %2118 = vmatpush1.bf16.msra.mxu0 %v1995
      %2119 = vmatprep.subr.bf16.mxu0 0
      %2120 = vmatpush1.bf16.msra.mxu0 %v1996
      %2121 = vmatprep.subr.bf16.mxu0 0
      %2122 = vmatpush1.bf16.msra.mxu0 %v1997
      %2123 = vmatprep.subr.bf16.mxu0 0
      %2124 = vmatpush1.bf16.msra.mxu0 %v1998
      %2125 = vmatprep.subr.bf16.mxu0 0
      %2126 = vmatpush1.bf16.msra.mxu0 %v1999
      %2127 = vmatprep.subr.bf16.mxu0 0
      %2128 = vmatpush1.bf16.msra.mxu0 %v2000
      %2129 = vmatprep.subr.bf16.mxu0 0
      %2130 = vmatpush1.bf16.msra.mxu0 %v2001
      %2131 = vmatprep.mubr.bf16.mxu0 %v703
      %2132 = vmatmul.mubr.bf16.gmra.mrb[0].mxu0 %v702
      %v2133 = vpop.f32.mrb[0].mxu0
      %v2134 = vadd.f32 %v2069, %v2133
      %v2135 = vpop.f32.mrb[0].mxu0
      %v2136 = vpop.f32.mrb[0].mxu0
      %v2137 = vadd.f32 %v2072, %v2136
      %v2138 = vpop.f32.mrb[0].mxu0
      %2139 = vmatprep.mubr.bf16.mxu0 %v707
      %2140 = vmatmul.mubr.bf16.gmra.mrb[0].mxu0 %v706
      %v2141 = vpop.f32.mrb[0].mxu0
      %v2142 = vadd.f32 %v2077, %v2141
      %v2143 = vpop.f32.mrb[0].mxu0
      %v2144 = vpop.f32.mrb[0].mxu0
      %v2145 = vadd.f32 %v2080, %v2144
      %v2146 = vpop.f32.mrb[0].mxu0
      %2147 = vmatprep.mubr.bf16.mxu0 %v711
      %2148 = vmatmul.mubr.bf16.gmra.mrb[0].mxu0 %v710
      %v2149 = vpop.f32.mrb[0].mxu0
      %v2150 = vadd.f32 %v2085, %v2149
      %v2151 = vpop.f32.mrb[0].mxu0
      %v2152 = vpop.f32.mrb[0].mxu0
      %v2153 = vadd.f32 %v2088, %v2152
      %v2154 = vpop.f32.mrb[0].mxu0
      %2155 = vmatprep.mubr.bf16.mxu0 %v715
      %2156 = vmatmul.mubr.bf16.gmra.mrb[0].mxu0 %v714
      %v2157 = vpop.f32.mrb[0].mxu0
      %v2158 = vadd.f32 %v2093, %v2157
      %v2159 = vpop.f32.mrb[0].mxu0
      %v2160 = vpop.f32.mrb[0].mxu0
      %v2161 = vadd.f32 %v2096, %v2160
      %v2162 = vpop.f32.mrb[0].mxu0
      %2163 = vdwg.mxu0
      %v2164 = vmax.f32 %v2134, 0.0
      %v2165 = vmax.f32 %v2137, 0.0
      %v2166 = vmax.f32 %v2142, 0.0
      %v2167 = vmax.f32 %v2145, 0.0
      %v2168 = vmax.f32 %v2150, 0.0
      %v2169 = vmax.f32 %v2153, 0.0
      %v2170 = vmax.f32 %v2158, 0.0
      %v2171 = vmax.f32 %v2161, 0.0
      %vm2172 = vcmask 916480
      %2173 = vst.msk [vmem:[%s543] sm:$0xff] %vm2172, %v2164
      %2174 = vst.msk [vmem:[%s543 + $0x8] sm:$0xff] %vm2172, %v2165
      %2175 = vst.msk [vmem:[%s543 + $0x10] sm:$0xff] %vm2172, %v2166
      %2176 = vst.msk [vmem:[%s543 + $0x18] sm:$0xff] %vm2172, %v2167
      %2177 = vst.msk [vmem:[%s543 + $0x20] sm:$0xff] %vm2172, %v2168
      %2178 = vst.msk [vmem:[%s543 + $0x28] sm:$0xff] %vm2172, %v2169
      %2179 = vst.msk [vmem:[%s543 + $0x30] sm:$0xff] %vm2172, %v2170
      %2180 = vst.msk [vmem:[%s543 + $0x38] sm:$0xff] %vm2172, %v2171
      %2181 = vst [vmem:[#allocation2] sm:$0xff] -inf
      %2182 = vst [vmem:[#allocation2 + $0x8] sm:$0xff] -inf
      %2183 = vst [vmem:[#allocation2 + $0x10] sm:$0xff] -inf
      %2184 = vst [vmem:[#allocation2 + $0x18] sm:$0xff] -inf
      %2185 = vst [vmem:[#allocation2 + $0x20] sm:$0x3] -inf
      %2186 = vst [vmem:[#allocation2 + $0x28] sm:$0x3] -inf
      %2187 = vst [vmem:[#allocation2 + $0x30] sm:$0x3] -inf
      %2188 = vst [vmem:[#allocation2 + $0x38] sm:$0x3] -inf
      %2189 = vst [vmem:[#allocation2 + $0x40] sm:$0xff] -inf
      %2190 = vst [vmem:[#allocation2 + $0x48] sm:$0xff] -inf
      %2191 = vst [vmem:[#allocation2 + $0x50] sm:$0xff] -inf
      %2192 = vst [vmem:[#allocation2 + $0x58] sm:$0xff] -inf
      %2193 = vst [vmem:[#allocation2 + $0x60] sm:$0x3] -inf
      %2194 = vst [vmem:[#allocation2 + $0x68] sm:$0x3] -inf
      %2195 = vst [vmem:[#allocation2 + $0x70] sm:$0x3] -inf
      %2196 = vst [vmem:[#allocation2 + $0x78] sm:$0x3] -inf
      %2197 = vst [vmem:[#allocation2 + $0x80] sm:$0xff] -inf
      %2198 = vst [vmem:[#allocation2 + $0x88] sm:$0xff] -inf
      %2199 = vst [vmem:[#allocation2 + $0x90] sm:$0xff] -inf
      %2200 = vst [vmem:[#allocation2 + $0x98] sm:$0xff] -inf
      %2201 = vst [vmem:[#allocation2 + $0xa0] sm:$0x3] -inf
      %2202 = vst [vmem:[#allocation2 + $0xa8] sm:$0x3] -inf
      %2203 = vst [vmem:[#allocation2 + $0xb0] sm:$0x3] -inf
      %2204 = vst [vmem:[#allocation2 + $0xb8] sm:$0x3] -inf
      %2205 = vst [vmem:[#allocation2 + $0xc0] sm:$0xff] -inf
      %2206 = vst [vmem:[#allocation2 + $0xc8] sm:$0xff] -inf
      %2207 = vst [vmem:[#allocation2 + $0xd0] sm:$0xff] -inf
      %2208 = vst [vmem:[#allocation2 + $0xd8] sm:$0xff] -inf
      %2209 = vst [vmem:[#allocation2 + $0xe0] sm:$0x3] -inf
      %2210 = vst [vmem:[#allocation2 + $0xe8] sm:$0x3] -inf
      %2211 = vst [vmem:[#allocation2 + $0xf0] sm:$0x3] -inf
      %2212 = vst [vmem:[#allocation2 + $0xf8] sm:$0x3] -inf
      %2213 = vst [vmem:[#allocation2 + $0x100] sm:$0xff] -inf
      %2214 = vst [vmem:[#allocation2 + $0x108] sm:$0xff] -inf
      %2215 = vst [vmem:[#allocation2 + $0x110] sm:$0xff] -inf
      %2216 = vst [vmem:[#allocation2 + $0x118] sm:$0xff] -inf
      %2217 = vst [vmem:[#allocation2 + $0x120] sm:$0x3] -inf
      %2218 = vst [vmem:[#allocation2 + $0x128] sm:$0x3] -inf
      %2219 = vst [vmem:[#allocation2 + $0x130] sm:$0x3] -inf
      %2220 = vst [vmem:[#allocation2 + $0x138] sm:$0x3] -inf
      %2221 = vst [vmem:[#allocation2 + $0x140] sm:$0xff] -inf
      %2222 = vst [vmem:[#allocation2 + $0x148] sm:$0xff] -inf
      %2223 = vst [vmem:[#allocation2 + $0x150] sm:$0xff] -inf
      %2224 = vst [vmem:[#allocation2 + $0x158] sm:$0xff] -inf
      %2225 = vst [vmem:[#allocation2 + $0x160] sm:$0x3] -inf
      %2226 = vst [vmem:[#allocation2 + $0x168] sm:$0x3] -inf
      %2227 = vst [vmem:[#allocation2 + $0x170] sm:$0x3] -inf
      %2228 = vst [vmem:[#allocation2 + $0x178] sm:$0x3] -inf
      %2229 = vst [vmem:[#allocation2 + $0x180] sm:$0xff] -inf
      %2230 = vst [vmem:[#allocation2 + $0x188] sm:$0xff] -inf
      %2231 = vst [vmem:[#allocation2 + $0x190] sm:$0xff] -inf
      %2232 = vst [vmem:[#allocation2 + $0x198] sm:$0xff] -inf
      %2233 = vst [vmem:[#allocation2 + $0x1a0] sm:$0x3] -inf
      %2234 = vst [vmem:[#allocation2 + $0x1a8] sm:$0x3] -inf
      %2235 = vst [vmem:[#allocation2 + $0x1b0] sm:$0x3] -inf
      %2236 = vst [vmem:[#allocation2 + $0x1b8] sm:$0x3] -inf
      %2237 = vst [vmem:[#allocation2 + $0x1c0] sm:$0xff] -inf
      %2238 = vst [vmem:[#allocation2 + $0x1c8] sm:$0xff] -inf
      %2239 = vst [vmem:[#allocation2 + $0x1d0] sm:$0xff] -inf
      %2240 = vst [vmem:[#allocation2 + $0x1d8] sm:$0xff] -inf
      %2241 = vst [vmem:[#allocation2 + $0x1e0] sm:$0x3] -inf
      %2242 = vst [vmem:[#allocation2 + $0x1e8] sm:$0x3] -inf
      %2243 = vst [vmem:[#allocation2 + $0x1f0] sm:$0x3] -inf
      %2244 = vst [vmem:[#allocation2 + $0x1f8] sm:$0x3] -inf
      %2245 = vst [vmem:[#allocation2 + $0x200] sm:$0xff] -inf
      %2246 = vst [vmem:[#allocation2 + $0x208] sm:$0xff] -inf
      %2247 = vst [vmem:[#allocation2 + $0x210] sm:$0xff] -inf
      %2248 = vst [vmem:[#allocation2 + $0x218] sm:$0xff] -inf
      %2249 = vst [vmem:[#allocation2 + $0x220] sm:$0x3] -inf
      %2250 = vst [vmem:[#allocation2 + $0x228] sm:$0x3] -inf
      %2251 = vst [vmem:[#allocation2 + $0x230] sm:$0x3] -inf
      %2252 = vst [vmem:[#allocation2 + $0x238] sm:$0x3] -inf
      %2253 = vst [vmem:[#allocation2 + $0x240] sm:$0xff] -inf
      %2254 = vst [vmem:[#allocation2 + $0x248] sm:$0xff] -inf
      %2255 = vst [vmem:[#allocation2 + $0x250] sm:$0xff] -inf
      %2256 = vst [vmem:[#allocation2 + $0x258] sm:$0xff] -inf
      %2257 = vst [vmem:[#allocation2 + $0x260] sm:$0x3] -inf
      %2258 = vst [vmem:[#allocation2 + $0x268] sm:$0x3] -inf
      %2259 = vst [vmem:[#allocation2 + $0x270] sm:$0x3] -inf
      %2260 = vst [vmem:[#allocation2 + $0x278] sm:$0x3] -inf
      %v2261 = vunpack.c.l.bf16 %v560
      %v2262 = vunpack.c.h.bf16 %v560
      %v2263 = vunpack.c.l.bf16 %v561
      %v2264 = vunpack.c.h.bf16 %v561
      %v2265 = vunpack.c.l.bf16 %v562
      %v2266 = vunpack.c.h.bf16 %v562
      %v2267 = vunpack.c.l.bf16 %v563
      %v2268 = vunpack.c.h.bf16 %v563
      %v2269 = vunpack.c.l.bf16 %v564
      %v2270 = vunpack.c.h.bf16 %v564
      %v2271 = vunpack.c.l.bf16 %v565
      %v2272 = vunpack.c.h.bf16 %v565
      %v2273 = vunpack.c.l.bf16 %v566
      %v2274 = vunpack.c.h.bf16 %v566
      %v2275 = vunpack.c.l.bf16 %v567
      %v2276 = vunpack.c.h.bf16 %v567
      %v2277 = vunpack.c.l.bf16 %v568
      %v2278 = vunpack.c.h.bf16 %v568
      %v2279 = vunpack.c.l.bf16 %v569
      %v2280 = vunpack.c.h.bf16 %v569
      %v2281 = vunpack.c.l.bf16 %v570
      %v2282 = vunpack.c.h.bf16 %v570
      %v2283 = vunpack.c.l.bf16 %v571
      %v2284 = vunpack.c.h.bf16 %v571
      %v2285 = vunpack.c.l.bf16 %v572
      %v2286 = vunpack.c.h.bf16 %v572
      %v2287 = vunpack.c.l.bf16 %v573
      %v2288 = vunpack.c.h.bf16 %v573
      %v2289 = vunpack.c.l.bf16 %v574
      %v2290 = vunpack.c.h.bf16 %v574
      %v2291 = vunpack.c.l.bf16 %v575
      %v2292 = vunpack.c.h.bf16 %v575
      %v2325 = vrot.slane %v2261, 7
      %v2326 = vrot.slane %v2262, 7
      %v2327 = vrot.slane %v2263, 7
      %v2328 = vrot.slane %v2264, 7
      %v2329 = vrot.slane %v2265, 7
      %v2330 = vrot.slane %v2266, 7
      %v2331 = vrot.slane %v2267, 7
      %v2332 = vrot.slane %v2268, 7
      %v2333 = vrot.slane %v2269, 7
      %v2334 = vrot.slane %v2270, 7
      %v2335 = vrot.slane %v2271, 7
      %v2336 = vrot.slane %v2272, 7
      %v2337 = vrot.slane %v2273, 7
      %v2338 = vrot.slane %v2274, 7
      %v2339 = vrot.slane %v2275, 7
      %v2340 = vrot.slane %v2276, 7
      %v2341 = vrot.slane %v2277, 7
      %v2342 = vrot.slane %v2278, 7
      %v2343 = vrot.slane %v2279, 7
      %v2344 = vrot.slane %v2280, 7
      %v2345 = vrot.slane %v2281, 7
      %v2346 = vrot.slane %v2282, 7
      %v2347 = vrot.slane %v2283, 7
      %v2348 = vrot.slane %v2284, 7
      %v2349 = vrot.slane %v2285, 7
      %v2350 = vrot.slane %v2286, 7
      %v2351 = vrot.slane %v2287, 7
      %v2352 = vrot.slane %v2288, 7
      %v2353 = vrot.slane %v2289, 7
      %v2354 = vrot.slane %v2290, 7
      %v2355 = vrot.slane %v2291, 7
      %v2356 = vrot.slane %v2292, 7
      %s2389 = scalar_lea.vmem [#allocation2], 64
      %2390 = vst [vmem:[%s2389] sm:$0xfe] %v2325
      %2391 = vst [vmem:[%s2389 + $0x8] sm:$0xfe] %v2326
      %2392 = vst [vmem:[%s2389 + $0x10] sm:$0xfe] %v2327
      %2393 = vst [vmem:[%s2389 + $0x18] sm:$0xfe] %v2328
      %2394 = vst [vmem:[%s2389 + $0x20] sm:$0x1] %v2325
      %2395 = vst [vmem:[%s2389 + $0x28] sm:$0x1] %v2326
      %2396 = vst [vmem:[%s2389 + $0x30] sm:$0x1] %v2327
      %2397 = vst [vmem:[%s2389 + $0x38] sm:$0x1] %v2328
      %2398 = vst [vmem:[%s2389 + $0x40] sm:$0xfe] %v2329
      %2399 = vst [vmem:[%s2389 + $0x48] sm:$0xfe] %v2330
      %2400 = vst [vmem:[%s2389 + $0x50] sm:$0xfe] %v2331
      %2401 = vst [vmem:[%s2389 + $0x58] sm:$0xfe] %v2332
      %2402 = vst [vmem:[%s2389 + $0x60] sm:$0x1] %v2329
      %2403 = vst [vmem:[%s2389 + $0x68] sm:$0x1] %v2330
      %2404 = vst [vmem:[%s2389 + $0x70] sm:$0x1] %v2331
      %2405 = vst [vmem:[%s2389 + $0x78] sm:$0x1] %v2332
      %2406 = vst [vmem:[%s2389 + $0x80] sm:$0xfe] %v2333
      %2407 = vst [vmem:[%s2389 + $0x88] sm:$0xfe] %v2334
      %2408 = vst [vmem:[%s2389 + $0x90] sm:$0xfe] %v2335
      %2409 = vst [vmem:[%s2389 + $0x98] sm:$0xfe] %v2336
      %2410 = vst [vmem:[%s2389 + $0xa0] sm:$0x1] %v2333
      %2411 = vst [vmem:[%s2389 + $0xa8] sm:$0x1] %v2334
      %2412 = vst [vmem:[%s2389 + $0xb0] sm:$0x1] %v2335
      %2413 = vst [vmem:[%s2389 + $0xb8] sm:$0x1] %v2336
      %2414 = vst [vmem:[%s2389 + $0xc0] sm:$0xfe] %v2337
      %2415 = vst [vmem:[%s2389 + $0xc8] sm:$0xfe] %v2338
      %2416 = vst [vmem:[%s2389 + $0xd0] sm:$0xfe] %v2339
      %2417 = vst [vmem:[%s2389 + $0xd8] sm:$0xfe] %v2340
      %2418 = vst [vmem:[%s2389 + $0xe0] sm:$0x1] %v2337
      %2419 = vst [vmem:[%s2389 + $0xe8] sm:$0x1] %v2338
      %2420 = vst [vmem:[%s2389 + $0xf0] sm:$0x1] %v2339
      %2421 = vst [vmem:[%s2389 + $0xf8] sm:$0x1] %v2340
      %2422 = vst [vmem:[%s2389 + $0x100] sm:$0xfe] %v2341
      %2423 = vst [vmem:[%s2389 + $0x108] sm:$0xfe] %v2342
      %2424 = vst [vmem:[%s2389 + $0x110] sm:$0xfe] %v2343
      %2425 = vst [vmem:[%s2389 + $0x118] sm:$0xfe] %v2344
      %2426 = vst [vmem:[%s2389 + $0x120] sm:$0x1] %v2341
      %2427 = vst [vmem:[%s2389 + $0x128] sm:$0x1] %v2342
      %2428 = vst [vmem:[%s2389 + $0x130] sm:$0x1] %v2343
      %2429 = vst [vmem:[%s2389 + $0x138] sm:$0x1] %v2344
      %2430 = vst [vmem:[%s2389 + $0x140] sm:$0xfe] %v2345
      %2431 = vst [vmem:[%s2389 + $0x148] sm:$0xfe] %v2346
      %2432 = vst [vmem:[%s2389 + $0x150] sm:$0xfe] %v2347
      %2433 = vst [vmem:[%s2389 + $0x158] sm:$0xfe] %v2348
      %2434 = vst [vmem:[%s2389 + $0x160] sm:$0x1] %v2345
      %2435 = vst [vmem:[%s2389 + $0x168] sm:$0x1] %v2346
      %2436 = vst [vmem:[%s2389 + $0x170] sm:$0x1] %v2347
      %2437 = vst [vmem:[%s2389 + $0x178] sm:$0x1] %v2348
      %2438 = vst [vmem:[%s2389 + $0x180] sm:$0xfe] %v2349
      %2439 = vst [vmem:[%s2389 + $0x188] sm:$0xfe] %v2350
      %2440 = vst [vmem:[%s2389 + $0x190] sm:$0xfe] %v2351
      %2441 = vst [vmem:[%s2389 + $0x198] sm:$0xfe] %v2352
      %2442 = vst [vmem:[%s2389 + $0x1a0] sm:$0x1] %v2349
      %2443 = vst [vmem:[%s2389 + $0x1a8] sm:$0x1] %v2350
      %2444 = vst [vmem:[%s2389 + $0x1b0] sm:$0x1] %v2351
      %2445 = vst [vmem:[%s2389 + $0x1b8] sm:$0x1] %v2352
      %2446 = vst [vmem:[%s2389 + $0x1c0] sm:$0xfe] %v2353
      %2447 = vst [vmem:[%s2389 + $0x1c8] sm:$0xfe] %v2354
      %2448 = vst [vmem:[%s2389 + $0x1d0] sm:$0xfe] %v2355
      %2449 = vst [vmem:[%s2389 + $0x1d8] sm:$0xfe] %v2356
      %2450 = vst [vmem:[%s2389 + $0x1e0] sm:$0x1] %v2353
      %2451 = vst [vmem:[%s2389 + $0x1e8] sm:$0x1] %v2354
      %2452 = vst [vmem:[%s2389 + $0x1f0] sm:$0x1] %v2355
      %2453 = vst [vmem:[%s2389 + $0x1f8] sm:$0x1] %v2356
      %v2454 = vld [vmem:[#allocation2] sm:$0xff]
      %v2455 = vld [vmem:[#allocation2 + $0x8] sm:$0xff]
      %v2456 = vld [vmem:[#allocation2 + $0x10] sm:$0xff]
      %v2457 = vld [vmem:[#allocation2 + $0x18] sm:$0xff]
      %v2458 = vld [vmem:[#allocation2 + $0x20] sm:$0x3]
      %v2459 = vld [vmem:[#allocation2 + $0x28] sm:$0x3]
      %v2460 = vld [vmem:[#allocation2 + $0x30] sm:$0x3]
      %v2461 = vld [vmem:[#allocation2 + $0x38] sm:$0x3]
      %v2462 = vld [vmem:[#allocation2 + $0x40] sm:$0xff]
      %v2463 = vld [vmem:[#allocation2 + $0x48] sm:$0xff]
      %v2464 = vld [vmem:[#allocation2 + $0x50] sm:$0xff]
      %v2465 = vld [vmem:[#allocation2 + $0x58] sm:$0xff]
      %v2466 = vld [vmem:[#allocation2 + $0x60] sm:$0x3]
      %v2467 = vld [vmem:[#allocation2 + $0x68] sm:$0x3]
      %v2468 = vld [vmem:[#allocation2 + $0x70] sm:$0x3]
      %v2469 = vld [vmem:[#allocation2 + $0x78] sm:$0x3]
      %v2470 = vld [vmem:[#allocation2 + $0x80] sm:$0xff]
      %v2471 = vld [vmem:[#allocation2 + $0x88] sm:$0xff]
      %v2472 = vld [vmem:[#allocation2 + $0x90] sm:$0xff]
      %v2473 = vld [vmem:[#allocation2 + $0x98] sm:$0xff]
      %v2474 = vld [vmem:[#allocation2 + $0xa0] sm:$0x3]
      %v2475 = vld [vmem:[#allocation2 + $0xa8] sm:$0x3]
      %v2476 = vld [vmem:[#allocation2 + $0xb0] sm:$0x3]
      %v2477 = vld [vmem:[#allocation2 + $0xb8] sm:$0x3]
      %v2478 = vld [vmem:[#allocation2 + $0xc0] sm:$0xff]
      %v2479 = vld [vmem:[#allocation2 + $0xc8] sm:$0xff]
      %v2480 = vld [vmem:[#allocation2 + $0xd0] sm:$0xff]
      %v2481 = vld [vmem:[#allocation2 + $0xd8] sm:$0xff]
      %v2482 = vld [vmem:[#allocation2 + $0xe0] sm:$0x3]
      %v2483 = vld [vmem:[#allocation2 + $0xe8] sm:$0x3]
      %v2484 = vld [vmem:[#allocation2 + $0xf0] sm:$0x3]
      %v2485 = vld [vmem:[#allocation2 + $0xf8] sm:$0x3]
      %v2486 = vld [vmem:[#allocation2 + $0x100] sm:$0xff]
      %v2487 = vld [vmem:[#allocation2 + $0x108] sm:$0xff]
      %v2488 = vld [vmem:[#allocation2 + $0x110] sm:$0xff]
      %v2489 = vld [vmem:[#allocation2 + $0x118] sm:$0xff]
      %v2490 = vld [vmem:[#allocation2 + $0x120] sm:$0x3]
      %v2491 = vld [vmem:[#allocation2 + $0x128] sm:$0x3]
      %v2492 = vld [vmem:[#allocation2 + $0x130] sm:$0x3]
      %v2493 = vld [vmem:[#allocation2 + $0x138] sm:$0x3]
      %v2494 = vld [vmem:[#allocation2 + $0x140] sm:$0xff]
      %v2495 = vld [vmem:[#allocation2 + $0x148] sm:$0xff]
      %v2496 = vld [vmem:[#allocation2 + $0x150] sm:$0xff]
      %v2497 = vld [vmem:[#allocation2 + $0x158] sm:$0xff]
      %v2498 = vld [vmem:[#allocation2 + $0x160] sm:$0x3]
      %v2499 = vld [vmem:[#allocation2 + $0x168] sm:$0x3]
      %v2500 = vld [vmem:[#allocation2 + $0x170] sm:$0x3]
      %v2501 = vld [vmem:[#allocation2 + $0x178] sm:$0x3]
      %v2502 = vld [vmem:[#allocation2 + $0x180] sm:$0xff]
      %v2503 = vld [vmem:[#allocation2 + $0x188] sm:$0xff]
      %v2504 = vld [vmem:[#allocation2 + $0x190] sm:$0xff]
      %v2505 = vld [vmem:[#allocation2 + $0x198] sm:$0xff]
      %v2506 = vld [vmem:[#allocation2 + $0x1a0] sm:$0x3]
      %v2507 = vld [vmem:[#allocation2 + $0x1a8] sm:$0x3]
      %v2508 = vld [vmem:[#allocation2 + $0x1b0] sm:$0x3]
      %v2509 = vld [vmem:[#allocation2 + $0x1b8] sm:$0x3]
      %v2510 = vld [vmem:[#allocation2 + $0x1c0] sm:$0xff]
      %v2511 = vld [vmem:[#allocation2 + $0x1c8] sm:$0xff]
      %v2512 = vld [vmem:[#allocation2 + $0x1d0] sm:$0xff]
      %v2513 = vld [vmem:[#allocation2 + $0x1d8] sm:$0xff]
      %v2514 = vld [vmem:[#allocation2 + $0x1e0] sm:$0x3]
      %v2515 = vld [vmem:[#allocation2 + $0x1e8] sm:$0x3]
      %v2516 = vld [vmem:[#allocation2 + $0x1f0] sm:$0x3]
      %v2517 = vld [vmem:[#allocation2 + $0x1f8] sm:$0x3]
      %v2518 = vld [vmem:[#allocation2 + $0x200] sm:$0xff]
      %v2519 = vld [vmem:[#allocation2 + $0x208] sm:$0xff]
      %v2520 = vld [vmem:[#allocation2 + $0x210] sm:$0xff]
      %v2521 = vld [vmem:[#allocation2 + $0x218] sm:$0xff]
      %v2522 = vld [vmem:[#allocation2 + $0x220] sm:$0x3]
      %v2523 = vld [vmem:[#allocation2 + $0x228] sm:$0x3]
      %v2524 = vld [vmem:[#allocation2 + $0x230] sm:$0x3]
      %v2525 = vld [vmem:[#allocation2 + $0x238] sm:$0x3]
      %v2526 = vld [vmem:[#allocation2 + $0x240] sm:$0xff]
      %v2527 = vld [vmem:[#allocation2 + $0x248] sm:$0xff]
      %v2528 = vld [vmem:[#allocation2 + $0x250] sm:$0xff]
      %v2529 = vld [vmem:[#allocation2 + $0x258] sm:$0xff]
      %v2530 = vld [vmem:[#allocation2 + $0x260] sm:$0x3]
      %v2531 = vld [vmem:[#allocation2 + $0x268] sm:$0x3]
      %v2532 = vld [vmem:[#allocation2 + $0x270] sm:$0x3]
      %v2533 = vld [vmem:[#allocation2 + $0x278] sm:$0x3]
      %v2566 = vrot.slane %v2454, 7
      %v2567 = vrot.slane %v2455, 7
      %v2568 = vrot.slane %v2456, 7
      %v2569 = vrot.slane %v2457, 7
      %v2570 = vrot.slane %v2462, 7
      %v2571 = vrot.slane %v2463, 7
      %v2572 = vrot.slane %v2464, 7
      %v2573 = vrot.slane %v2465, 7
      %v2574 = vrot.slane %v2470, 7
      %v2575 = vrot.slane %v2471, 7
      %v2576 = vrot.slane %v2472, 7
      %v2577 = vrot.slane %v2473, 7
      %v2578 = vrot.slane %v2478, 7
      %v2579 = vrot.slane %v2479, 7
      %v2580 = vrot.slane %v2480, 7
      %v2581 = vrot.slane %v2481, 7
      %v2582 = vrot.slane %v2486, 7
      %v2583 = vrot.slane %v2487, 7
      %v2584 = vrot.slane %v2488, 7
      %v2585 = vrot.slane %v2489, 7
      %v2586 = vrot.slane %v2494, 7
      %v2587 = vrot.slane %v2495, 7
      %v2588 = vrot.slane %v2496, 7
      %v2589 = vrot.slane %v2497, 7
      %v2590 = vrot.slane %v2502, 7
      %v2591 = vrot.slane %v2503, 7
      %v2592 = vrot.slane %v2504, 7
      %v2593 = vrot.slane %v2505, 7
      %v2594 = vrot.slane %v2510, 7
      %v2595 = vrot.slane %v2511, 7
      %v2596 = vrot.slane %v2512, 7
      %v2597 = vrot.slane %v2513, 7
      %v2630 = vmax.f32 %v2462, %v2566
      %v2631 = vmax.f32 %v2463, %v2567
      %v2632 = vmax.f32 %v2464, %v2568
      %v2633 = vmax.f32 %v2465, %v2569
      %v2634 = vmax.f32 %v2466, %v2566
      %v2635 = vmax.f32 %v2467, %v2567
      %v2636 = vmax.f32 %v2468, %v2568
      %v2637 = vmax.f32 %v2469, %v2569
      %v2638 = vmax.f32 %v2470, %v2570
      %v2639 = vmax.f32 %v2471, %v2571
      %v2640 = vmax.f32 %v2472, %v2572
      %v2641 = vmax.f32 %v2473, %v2573
      %v2642 = vmax.f32 %v2474, %v2570
      %v2643 = vmax.f32 %v2475, %v2571
      %v2644 = vmax.f32 %v2476, %v2572
      %v2645 = vmax.f32 %v2477, %v2573
      %v2646 = vmax.f32 %v2478, %v2574
      %v2647 = vmax.f32 %v2479, %v2575
      %v2648 = vmax.f32 %v2480, %v2576
      %v2649 = vmax.f32 %v2481, %v2577
      %v2650 = vmax.f32 %v2482, %v2574
      %v2651 = vmax.f32 %v2483, %v2575
      %v2652 = vmax.f32 %v2484, %v2576
      %v2653 = vmax.f32 %v2485, %v2577
      %v2654 = vmax.f32 %v2486, %v2578
      %v2655 = vmax.f32 %v2487, %v2579
      %v2656 = vmax.f32 %v2488, %v2580
      %v2657 = vmax.f32 %v2489, %v2581
      %v2658 = vmax.f32 %v2490, %v2578
      %v2659 = vmax.f32 %v2491, %v2579
      %v2660 = vmax.f32 %v2492, %v2580
      %v2661 = vmax.f32 %v2493, %v2581
      %v2662 = vmax.f32 %v2494, %v2582
      %v2663 = vmax.f32 %v2495, %v2583
      %v2664 = vmax.f32 %v2496, %v2584
      %v2665 = vmax.f32 %v2497, %v2585
      %v2666 = vmax.f32 %v2498, %v2582
      %v2667 = vmax.f32 %v2499, %v2583
      %v2668 = vmax.f32 %v2500, %v2584
      %v2669 = vmax.f32 %v2501, %v2585
      %v2670 = vmax.f32 %v2502, %v2586
      %v2671 = vmax.f32 %v2503, %v2587
      %v2672 = vmax.f32 %v2504, %v2588
      %v2673 = vmax.f32 %v2505, %v2589
      %v2674 = vmax.f32 %v2506, %v2586
      %v2675 = vmax.f32 %v2507, %v2587
      %v2676 = vmax.f32 %v2508, %v2588
      %v2677 = vmax.f32 %v2509, %v2589
      %v2678 = vmax.f32 %v2510, %v2590
      %v2679 = vmax.f32 %v2511, %v2591
      %v2680 = vmax.f32 %v2512, %v2592
      %v2681 = vmax.f32 %v2513, %v2593
      %v2682 = vmax.f32 %v2514, %v2590
      %v2683 = vmax.f32 %v2515, %v2591
      %v2684 = vmax.f32 %v2516, %v2592
      %v2685 = vmax.f32 %v2517, %v2593
      %v2686 = vmax.f32 %v2518, %v2594
      %v2687 = vmax.f32 %v2519, %v2595
      %v2688 = vmax.f32 %v2520, %v2596
      %v2689 = vmax.f32 %v2521, %v2597
      %v2690 = vmax.f32 %v2522, %v2594
      %v2691 = vmax.f32 %v2523, %v2595
      %v2692 = vmax.f32 %v2524, %v2596
      %v2693 = vmax.f32 %v2525, %v2597
      %v2694 = vmax.f32 %v2630, %v2454
      %v2695 = vmax.f32 %v2631, %v2455
      %v2696 = vmax.f32 %v2632, %v2456
      %v2697 = vmax.f32 %v2633, %v2457
      %v2698 = vmax.f32 %v2634, %v2458
      %v2699 = vmax.f32 %v2635, %v2459
      %v2700 = vmax.f32 %v2636, %v2460
      %v2701 = vmax.f32 %v2637, %v2461
      %v2702 = vmax.f32 %v2638, %v2462
      %v2703 = vmax.f32 %v2639, %v2463
      %v2704 = vmax.f32 %v2640, %v2464
      %v2705 = vmax.f32 %v2641, %v2465
      %v2706 = vmax.f32 %v2642, %v2466
      %v2707 = vmax.f32 %v2643, %v2467
      %v2708 = vmax.f32 %v2644, %v2468
      %v2709 = vmax.f32 %v2645, %v2469
      %v2710 = vmax.f32 %v2646, %v2470
      %v2711 = vmax.f32 %v2647, %v2471
      %v2712 = vmax.f32 %v2648, %v2472
      %v2713 = vmax.f32 %v2649, %v2473
      %v2714 = vmax.f32 %v2650, %v2474
      %v2715 = vmax.f32 %v2651, %v2475
      %v2716 = vmax.f32 %v2652, %v2476
      %v2717 = vmax.f32 %v2653, %v2477
      %v2718 = vmax.f32 %v2654, %v2478
      %v2719 = vmax.f32 %v2655, %v2479
      %v2720 = vmax.f32 %v2656, %v2480
      %v2721 = vmax.f32 %v2657, %v2481
      %v2722 = vmax.f32 %v2658, %v2482
      %v2723 = vmax.f32 %v2659, %v2483
      %v2724 = vmax.f32 %v2660, %v2484
      %v2725 = vmax.f32 %v2661, %v2485
      %v2726 = vmax.f32 %v2662, %v2486
      %v2727 = vmax.f32 %v2663, %v2487
      %v2728 = vmax.f32 %v2664, %v2488
      %v2729 = vmax.f32 %v2665, %v2489
      %v2730 = vmax.f32 %v2666, %v2490
      %v2731 = vmax.f32 %v2667, %v2491
      %v2732 = vmax.f32 %v2668, %v2492
      %v2733 = vmax.f32 %v2669, %v2493
      %v2734 = vmax.f32 %v2670, %v2494
      %v2735 = vmax.f32 %v2671, %v2495
      %v2736 = vmax.f32 %v2672, %v2496
      %v2737 = vmax.f32 %v2673, %v2497
      %v2738 = vmax.f32 %v2674, %v2498
      %v2739 = vmax.f32 %v2675, %v2499
      %v2740 = vmax.f32 %v2676, %v2500
      %v2741 = vmax.f32 %v2677, %v2501
      %v2742 = vmax.f32 %v2678, %v2502
      %v2743 = vmax.f32 %v2679, %v2503
      %v2744 = vmax.f32 %v2680, %v2504
      %v2745 = vmax.f32 %v2681, %v2505
      %v2746 = vmax.f32 %v2682, %v2506
      %v2747 = vmax.f32 %v2683, %v2507
      %v2748 = vmax.f32 %v2684, %v2508
      %v2749 = vmax.f32 %v2685, %v2509
      %v2750 = vmax.f32 %v2686, %v2510
      %v2751 = vmax.f32 %v2687, %v2511
      %v2752 = vmax.f32 %v2688, %v2512
      %v2753 = vmax.f32 %v2689, %v2513
      %v2754 = vmax.f32 %v2690, %v2514
      %v2755 = vmax.f32 %v2691, %v2515
      %v2756 = vmax.f32 %v2692, %v2516
      %v2757 = vmax.f32 %v2693, %v2517
      %vm2790 = vcmask 1046528
      %v2791 = vrot.slane %v2454, 1
      %v2792 = vrot.slane %v2458, 1
      %v2793 = vsel %vm2790, %v2791, %v2792
      %v2794 = vrot.slane %v2455, 1
      %v2795 = vrot.slane %v2459, 1
      %v2796 = vsel %vm2790, %v2794, %v2795
      %v2797 = vrot.slane %v2456, 1
      %v2798 = vrot.slane %v2460, 1
      %v2799 = vsel %vm2790, %v2797, %v2798
      %v2800 = vrot.slane %v2457, 1
      %v2801 = vrot.slane %v2461, 1
      %v2802 = vsel %vm2790, %v2800, %v2801
      %v2803 = vrot.slane %v2462, 1
      %v2804 = vrot.slane %v2466, 1
      %v2805 = vsel %vm2790, %v2803, %v2804
      %v2806 = vrot.slane %v2463, 1
      %v2807 = vrot.slane %v2467, 1
      %v2808 = vsel %vm2790, %v2806, %v2807
      %v2809 = vrot.slane %v2464, 1
      %v2810 = vrot.slane %v2468, 1
      %v2811 = vsel %vm2790, %v2809, %v2810
      %v2812 = vrot.slane %v2465, 1
      %v2813 = vrot.slane %v2469, 1
      %v2814 = vsel %vm2790, %v2812, %v2813
      %v2815 = vrot.slane %v2470, 1
      %v2816 = vrot.slane %v2474, 1
      %v2817 = vsel %vm2790, %v2815, %v2816
      %v2818 = vrot.slane %v2471, 1
      %v2819 = vrot.slane %v2475, 1
      %v2820 = vsel %vm2790, %v2818, %v2819
      %v2821 = vrot.slane %v2472, 1
      %v2822 = vrot.slane %v2476, 1
      %v2823 = vsel %vm2790, %v2821, %v2822
      %v2824 = vrot.slane %v2473, 1
      %v2825 = vrot.slane %v2477, 1
      %v2826 = vsel %vm2790, %v2824, %v2825
      %v2827 = vrot.slane %v2478, 1
      %v2828 = vrot.slane %v2482, 1
      %v2829 = vsel %vm2790, %v2827, %v2828
      %v2830 = vrot.slane %v2479, 1
      %v2831 = vrot.slane %v2483, 1
      %v2832 = vsel %vm2790, %v2830, %v2831
      %v2833 = vrot.slane %v2480, 1
      %v2834 = vrot.slane %v2484, 1
      %v2835 = vsel %vm2790, %v2833, %v2834
      %v2836 = vrot.slane %v2481, 1
      %v2837 = vrot.slane %v2485, 1
      %v2838 = vsel %vm2790, %v2836, %v2837
      %v2839 = vrot.slane %v2486, 1
      %v2840 = vrot.slane %v2490, 1
      %v2841 = vsel %vm2790, %v2839, %v2840
      %v2842 = vrot.slane %v2487, 1
      %v2843 = vrot.slane %v2491, 1
      %v2844 = vsel %vm2790, %v2842, %v2843
      %v2845 = vrot.slane %v2488, 1
      %v2846 = vrot.slane %v2492, 1
      %v2847 = vsel %vm2790, %v2845, %v2846
      %v2848 = vrot.slane %v2489, 1
      %v2849 = vrot.slane %v2493, 1
      %v2850 = vsel %vm2790, %v2848, %v2849
      %v2851 = vrot.slane %v2494, 1
      %v2852 = vrot.slane %v2498, 1
      %v2853 = vsel %vm2790, %v2851, %v2852
      %v2854 = vrot.slane %v2495, 1
      %v2855 = vrot.slane %v2499, 1
      %v2856 = vsel %vm2790, %v2854, %v2855
      %v2857 = vrot.slane %v2496, 1
      %v2858 = vrot.slane %v2500, 1
      %v2859 = vsel %vm2790, %v2857, %v2858
      %v2860 = vrot.slane %v2497, 1
      %v2861 = vrot.slane %v2501, 1
      %v2862 = vsel %vm2790, %v2860, %v2861
      %v2863 = vrot.slane %v2502, 1
      %v2864 = vrot.slane %v2506, 1
      %v2865 = vsel %vm2790, %v2863, %v2864
      %v2866 = vrot.slane %v2503, 1
      %v2867 = vrot.slane %v2507, 1
      %v2868 = vsel %vm2790, %v2866, %v2867
      %v2869 = vrot.slane %v2504, 1
      %v2870 = vrot.slane %v2508, 1
      %v2871 = vsel %vm2790, %v2869, %v2870
      %v2872 = vrot.slane %v2505, 1
      %v2873 = vrot.slane %v2509, 1
      %v2874 = vsel %vm2790, %v2872, %v2873
      %v2875 = vrot.slane %v2510, 1
      %v2876 = vrot.slane %v2514, 1
      %v2877 = vsel %vm2790, %v2875, %v2876
      %v2878 = vrot.slane %v2511, 1
      %v2879 = vrot.slane %v2515, 1
      %v2880 = vsel %vm2790, %v2878, %v2879
      %v2881 = vrot.slane %v2512, 1
      %v2882 = vrot.slane %v2516, 1
      %v2883 = vsel %vm2790, %v2881, %v2882
      %v2884 = vrot.slane %v2513, 1
      %v2885 = vrot.slane %v2517, 1
      %v2886 = vsel %vm2790, %v2884, %v2885
      %v2951 = vmax.f32 %v2694, %v2793
      %v2952 = vmax.f32 %v2695, %v2796
      %v2953 = vmax.f32 %v2696, %v2799
      %v2954 = vmax.f32 %v2697, %v2802
      %v2955 = vmax.f32 %v2698, %v2792
      %v2956 = vmax.f32 %v2699, %v2795
      %v2957 = vmax.f32 %v2700, %v2798
      %v2958 = vmax.f32 %v2701, %v2801
      %v2959 = vmax.f32 %v2702, %v2805
      %v2960 = vmax.f32 %v2703, %v2808
      %v2961 = vmax.f32 %v2704, %v2811
      %v2962 = vmax.f32 %v2705, %v2814
      %v2963 = vmax.f32 %v2706, %v2804
      %v2964 = vmax.f32 %v2707, %v2807
      %v2965 = vmax.f32 %v2708, %v2810
      %v2966 = vmax.f32 %v2709, %v2813
      %v2967 = vmax.f32 %v2710, %v2817
      %v2968 = vmax.f32 %v2711, %v2820
      %v2969 = vmax.f32 %v2712, %v2823
      %v2970 = vmax.f32 %v2713, %v2826
      %v2971 = vmax.f32 %v2714, %v2816
      %v2972 = vmax.f32 %v2715, %v2819
      %v2973 = vmax.f32 %v2716, %v2822
      %v2974 = vmax.f32 %v2717, %v2825
      %v2975 = vmax.f32 %v2718, %v2829
      %v2976 = vmax.f32 %v2719, %v2832
      %v2977 = vmax.f32 %v2720, %v2835
      %v2978 = vmax.f32 %v2721, %v2838
      %v2979 = vmax.f32 %v2722, %v2828
      %v2980 = vmax.f32 %v2723, %v2831
      %v2981 = vmax.f32 %v2724, %v2834
      %v2982 = vmax.f32 %v2725, %v2837
      %v2983 = vmax.f32 %v2726, %v2841
      %v2984 = vmax.f32 %v2727, %v2844
      %v2985 = vmax.f32 %v2728, %v2847
      %v2986 = vmax.f32 %v2729, %v2850
      %v2987 = vmax.f32 %v2730, %v2840
      %v2988 = vmax.f32 %v2731, %v2843
      %v2989 = vmax.f32 %v2732, %v2846
      %v2990 = vmax.f32 %v2733, %v2849
      %v2991 = vmax.f32 %v2734, %v2853
      %v2992 = vmax.f32 %v2735, %v2856
      %v2993 = vmax.f32 %v2736, %v2859
      %v2994 = vmax.f32 %v2737, %v2862
      %v2995 = vmax.f32 %v2738, %v2852
      %v2996 = vmax.f32 %v2739, %v2855
      %v2997 = vmax.f32 %v2740, %v2858
      %v2998 = vmax.f32 %v2741, %v2861
      %v2999 = vmax.f32 %v2742, %v2865
      %v3000 = vmax.f32 %v2743, %v2868
      %v3001 = vmax.f32 %v2744, %v2871
      %v3002 = vmax.f32 %v2745, %v2874
      %v3003 = vmax.f32 %v2746, %v2864
      %v3004 = vmax.f32 %v2747, %v2867
      %v3005 = vmax.f32 %v2748, %v2870
      %v3006 = vmax.f32 %v2749, %v2873
      %v3007 = vmax.f32 %v2750, %v2877
      %v3008 = vmax.f32 %v2751, %v2880
      %v3009 = vmax.f32 %v2752, %v2883
      %v3010 = vmax.f32 %v2753, %v2886
      %v3011 = vmax.f32 %v2754, %v2876
      %v3012 = vmax.f32 %v2755, %v2879
      %v3013 = vmax.f32 %v2756, %v2882
      %v3014 = vmax.f32 %v2757, %v2885
      %v3019 = vrot.slane %v2518, 7
      %v3020 = vrot.slane %v2519, 7
      %v3021 = vrot.slane %v2520, 7
      %v3022 = vrot.slane %v2521, 7
      %v3027 = vmax.f32 %v2951, %v2570
      %v3028 = vmax.f32 %v2952, %v2571
      %v3029 = vmax.f32 %v2953, %v2572
      %v3030 = vmax.f32 %v2954, %v2573
      %v3031 = vmax.f32 %v2955, %v2570
      %v3032 = vmax.f32 %v2956, %v2571
      %v3033 = vmax.f32 %v2957, %v2572
      %v3034 = vmax.f32 %v2958, %v2573
      %v3035 = vmax.f32 %v2959, %v2574
      %v3036 = vmax.f32 %v2960, %v2575
      %v3037 = vmax.f32 %v2961, %v2576
      %v3038 = vmax.f32 %v2962, %v2577
      %v3039 = vmax.f32 %v2963, %v2574
      %v3040 = vmax.f32 %v2964, %v2575
      %v3041 = vmax.f32 %v2965, %v2576
      %v3042 = vmax.f32 %v2966, %v2577
      %v3043 = vmax.f32 %v2967, %v2578
      %v3044 = vmax.f32 %v2968, %v2579
      %v3045 = vmax.f32 %v2969, %v2580
      %v3046 = vmax.f32 %v2970, %v2581
      %v3047 = vmax.f32 %v2971, %v2578
      %v3048 = vmax.f32 %v2972, %v2579
      %v3049 = vmax.f32 %v2973, %v2580
      %v3050 = vmax.f32 %v2974, %v2581
      %v3051 = vmax.f32 %v2975, %v2582
      %v3052 = vmax.f32 %v2976, %v2583
      %v3053 = vmax.f32 %v2977, %v2584
      %v3054 = vmax.f32 %v2978, %v2585
      %v3055 = vmax.f32 %v2979, %v2582
      %v3056 = vmax.f32 %v2980, %v2583
      %v3057 = vmax.f32 %v2981, %v2584
      %v3058 = vmax.f32 %v2982, %v2585
      %v3059 = vmax.f32 %v2983, %v2586
      %v3060 = vmax.f32 %v2984, %v2587
      %v3061 = vmax.f32 %v2985, %v2588
      %v3062 = vmax.f32 %v2986, %v2589
      %v3063 = vmax.f32 %v2987, %v2586
      %v3064 = vmax.f32 %v2988, %v2587
      %v3065 = vmax.f32 %v2989, %v2588
      %v3066 = vmax.f32 %v2990, %v2589
      %v3067 = vmax.f32 %v2991, %v2590
      %v3068 = vmax.f32 %v2992, %v2591
      %v3069 = vmax.f32 %v2993, %v2592
      %v3070 = vmax.f32 %v2994, %v2593
      %v3071 = vmax.f32 %v2995, %v2590
      %v3072 = vmax.f32 %v2996, %v2591
      %v3073 = vmax.f32 %v2997, %v2592
      %v3074 = vmax.f32 %v2998, %v2593
      %v3075 = vmax.f32 %v2999, %v2594
      %v3076 = vmax.f32 %v3000, %v2595
      %v3077 = vmax.f32 %v3001, %v2596
      %v3078 = vmax.f32 %v3002, %v2597
      %v3079 = vmax.f32 %v3003, %v2594
      %v3080 = vmax.f32 %v3004, %v2595
      %v3081 = vmax.f32 %v3005, %v2596
      %v3082 = vmax.f32 %v3006, %v2597
      %v3083 = vmax.f32 %v3007, %v3019
      %v3084 = vmax.f32 %v3008, %v3020
      %v3085 = vmax.f32 %v3009, %v3021
      %v3086 = vmax.f32 %v3010, %v3022
      %v3087 = vmax.f32 %v3011, %v3019
      %v3088 = vmax.f32 %v3012, %v3020
      %v3089 = vmax.f32 %v3013, %v3021
      %v3090 = vmax.f32 %v3014, %v3022
      %v3095 = vrot.slane %v2518, 1
      %v3096 = vrot.slane %v2522, 1
      %v3097 = vsel %vm2790, %v3095, %v3096
      %v3098 = vrot.slane %v2519, 1
      %v3099 = vrot.slane %v2523, 1
      %v3100 = vsel %vm2790, %v3098, %v3099
      %v3101 = vrot.slane %v2520, 1
      %v3102 = vrot.slane %v2524, 1
      %v3103 = vsel %vm2790, %v3101, %v3102
      %v3104 = vrot.slane %v2521, 1
      %v3105 = vrot.slane %v2525, 1
      %v3106 = vsel %vm2790, %v3104, %v3105
      %v3115 = vmax.f32 %v3027, %v2805
      %v3116 = vmax.f32 %v3028, %v2808
      %v3117 = vmax.f32 %v3029, %v2811
      %v3118 = vmax.f32 %v3030, %v2814
      %v3119 = vmax.f32 %v3031, %v2804
      %v3120 = vmax.f32 %v3032, %v2807
      %v3121 = vmax.f32 %v3033, %v2810
      %v3122 = vmax.f32 %v3034, %v2813
      %v3123 = vmax.f32 %v3035, %v2817
      %v3124 = vmax.f32 %v3036, %v2820
      %v3125 = vmax.f32 %v3037, %v2823
      %v3126 = vmax.f32 %v3038, %v2826
      %v3127 = vmax.f32 %v3039, %v2816
      %v3128 = vmax.f32 %v3040, %v2819
      %v3129 = vmax.f32 %v3041, %v2822
      %v3130 = vmax.f32 %v3042, %v2825
      %v3131 = vmax.f32 %v3043, %v2829
      %v3132 = vmax.f32 %v3044, %v2832
      %v3133 = vmax.f32 %v3045, %v2835
      %v3134 = vmax.f32 %v3046, %v2838
      %v3135 = vmax.f32 %v3047, %v2828
      %v3136 = vmax.f32 %v3048, %v2831
      %v3137 = vmax.f32 %v3049, %v2834
      %v3138 = vmax.f32 %v3050, %v2837
      %v3139 = vmax.f32 %v3051, %v2841
      %v3140 = vmax.f32 %v3052, %v2844
      %v3141 = vmax.f32 %v3053, %v2847
      %v3142 = vmax.f32 %v3054, %v2850
      %v3143 = vmax.f32 %v3055, %v2840
      %v3144 = vmax.f32 %v3056, %v2843
      %v3145 = vmax.f32 %v3057, %v2846
      %v3146 = vmax.f32 %v3058, %v2849
      %v3147 = vmax.f32 %v3059, %v2853
      %v3148 = vmax.f32 %v3060, %v2856
      %v3149 = vmax.f32 %v3061, %v2859
      %v3150 = vmax.f32 %v3062, %v2862
      %v3151 = vmax.f32 %v3063, %v2852
      %v3152 = vmax.f32 %v3064, %v2855
      %v3153 = vmax.f32 %v3065, %v2858
      %v3154 = vmax.f32 %v3066, %v2861
      %v3155 = vmax.f32 %v3067, %v2865
      %v3156 = vmax.f32 %v3068, %v2868
      %v3157 = vmax.f32 %v3069, %v2871
      %v3158 = vmax.f32 %v3070, %v2874
      %v3159 = vmax.f32 %v3071, %v2864
      %v3160 = vmax.f32 %v3072, %v2867
      %v3161 = vmax.f32 %v3073, %v2870
      %v3162 = vmax.f32 %v3074, %v2873
      %v3163 = vmax.f32 %v3075, %v2877
      %v3164 = vmax.f32 %v3076, %v2880
      %v3165 = vmax.f32 %v3077, %v2883
      %v3166 = vmax.f32 %v3078, %v2886
      %v3167 = vmax.f32 %v3079, %v2876
      %v3168 = vmax.f32 %v3080, %v2879
      %v3169 = vmax.f32 %v3081, %v2882
      %v3170 = vmax.f32 %v3082, %v2885
      %v3171 = vmax.f32 %v3083, %v3097
      %v3172 = vmax.f32 %v3084, %v3100
      %v3173 = vmax.f32 %v3085, %v3103
      %v3174 = vmax.f32 %v3086, %v3106
      %v3175 = vmax.f32 %v3087, %v3096
      %v3176 = vmax.f32 %v3088, %v3099
      %v3177 = vmax.f32 %v3089, %v3102
      %v3178 = vmax.f32 %v3090, %v3105
      %v3183 = vrot.slane %v2526, 7
      %v3184 = vrot.slane %v2527, 7
      %v3185 = vrot.slane %v2528, 7
      %v3186 = vrot.slane %v2529, 7
      %v3191 = vmax.f32 %v3115, %v2574
      %v3192 = vmax.f32 %v3116, %v2575
      %v3193 = vmax.f32 %v3117, %v2576
      %v3194 = vmax.f32 %v3118, %v2577
      %v3195 = vmax.f32 %v3119, %v2574
      %v3196 = vmax.f32 %v3120, %v2575
      %v3197 = vmax.f32 %v3121, %v2576
      %v3198 = vmax.f32 %v3122, %v2577
      %v3199 = vmax.f32 %v3123, %v2578
      %v3200 = vmax.f32 %v3124, %v2579
      %v3201 = vmax.f32 %v3125, %v2580
      %v3202 = vmax.f32 %v3126, %v2581
      %v3203 = vmax.f32 %v3127, %v2578
      %v3204 = vmax.f32 %v3128, %v2579
      %v3205 = vmax.f32 %v3129, %v2580
      %v3206 = vmax.f32 %v3130, %v2581
      %v3207 = vmax.f32 %v3131, %v2582
      %v3208 = vmax.f32 %v3132, %v2583
      %v3209 = vmax.f32 %v3133, %v2584
      %v3210 = vmax.f32 %v3134, %v2585
      %v3211 = vmax.f32 %v3135, %v2582
      %v3212 = vmax.f32 %v3136, %v2583
      %v3213 = vmax.f32 %v3137, %v2584
      %v3214 = vmax.f32 %v3138, %v2585
      %v3215 = vmax.f32 %v3139, %v2586
      %v3216 = vmax.f32 %v3140, %v2587
      %v3217 = vmax.f32 %v3141, %v2588
      %v3218 = vmax.f32 %v3142, %v2589
      %v3219 = vmax.f32 %v3143, %v2586
      %v3220 = vmax.f32 %v3144, %v2587
      %v3221 = vmax.f32 %v3145, %v2588
      %v3222 = vmax.f32 %v3146, %v2589
      %v3223 = vmax.f32 %v3147, %v2590
      %v3224 = vmax.f32 %v3148, %v2591
      %v3225 = vmax.f32 %v3149, %v2592
      %v3226 = vmax.f32 %v3150, %v2593
      %v3227 = vmax.f32 %v3151, %v2590
      %v3228 = vmax.f32 %v3152, %v2591
      %v3229 = vmax.f32 %v3153, %v2592
      %v3230 = vmax.f32 %v3154, %v2593
      %v3231 = vmax.f32 %v3155, %v2594
      %v3232 = vmax.f32 %v3156, %v2595
      %v3233 = vmax.f32 %v3157, %v2596
      %v3234 = vmax.f32 %v3158, %v2597
      %v3235 = vmax.f32 %v3159, %v2594
      %v3236 = vmax.f32 %v3160, %v2595
      %v3237 = vmax.f32 %v3161, %v2596
      %v3238 = vmax.f32 %v3162, %v2597
      %v3239 = vmax.f32 %v3163, %v3019
      %v3240 = vmax.f32 %v3164, %v3020
      %v3241 = vmax.f32 %v3165, %v3021
      %v3242 = vmax.f32 %v3166, %v3022
      %v3243 = vmax.f32 %v3167, %v3019
      %v3244 = vmax.f32 %v3168, %v3020
      %v3245 = vmax.f32 %v3169, %v3021
      %v3246 = vmax.f32 %v3170, %v3022
      %v3247 = vmax.f32 %v3171, %v3183
      %v3248 = vmax.f32 %v3172, %v3184
      %v3249 = vmax.f32 %v3173, %v3185
      %v3250 = vmax.f32 %v3174, %v3186
      %v3251 = vmax.f32 %v3175, %v3183
      %v3252 = vmax.f32 %v3176, %v3184
      %v3253 = vmax.f32 %v3177, %v3185
      %v3254 = vmax.f32 %v3178, %v3186
      %v3255 = vmax.f32 %v3191, %v2470
      %v3256 = vmax.f32 %v3192, %v2471
      %v3257 = vmax.f32 %v3193, %v2472
      %v3258 = vmax.f32 %v3194, %v2473
      %v3259 = vmax.f32 %v3195, %v2474
      %v3260 = vmax.f32 %v3196, %v2475
      %v3261 = vmax.f32 %v3197, %v2476
      %v3262 = vmax.f32 %v3198, %v2477
      %v3263 = vmax.f32 %v3199, %v2478
      %v3264 = vmax.f32 %v3200, %v2479
      %v3265 = vmax.f32 %v3201, %v2480
      %v3266 = vmax.f32 %v3202, %v2481
      %v3267 = vmax.f32 %v3203, %v2482
      %v3268 = vmax.f32 %v3204, %v2483
      %v3269 = vmax.f32 %v3205, %v2484
      %v3270 = vmax.f32 %v3206, %v2485
      %v3271 = vmax.f32 %v3207, %v2486
      %v3272 = vmax.f32 %v3208, %v2487
      %v3273 = vmax.f32 %v3209, %v2488
      %v3274 = vmax.f32 %v3210, %v2489
      %v3275 = vmax.f32 %v3211, %v2490
      %v3276 = vmax.f32 %v3212, %v2491
      %v3277 = vmax.f32 %v3213, %v2492
      %v3278 = vmax.f32 %v3214, %v2493
      %v3279 = vmax.f32 %v3215, %v2494
      %v3280 = vmax.f32 %v3216, %v2495
      %v3281 = vmax.f32 %v3217, %v2496
      %v3282 = vmax.f32 %v3218, %v2497
      %v3283 = vmax.f32 %v3219, %v2498
      %v3284 = vmax.f32 %v3220, %v2499
      %v3285 = vmax.f32 %v3221, %v2500
      %v3286 = vmax.f32 %v3222, %v2501
      %v3287 = vmax.f32 %v3223, %v2502
      %v3288 = vmax.f32 %v3224, %v2503
      %v3289 = vmax.f32 %v3225, %v2504
      %v3290 = vmax.f32 %v3226, %v2505
      %v3291 = vmax.f32 %v3227, %v2506
      %v3292 = vmax.f32 %v3228, %v2507
      %v3293 = vmax.f32 %v3229, %v2508
      %v3294 = vmax.f32 %v3230, %v2509
      %v3295 = vmax.f32 %v3231, %v2510
      %v3296 = vmax.f32 %v3232, %v2511
      %v3297 = vmax.f32 %v3233, %v2512
      %v3298 = vmax.f32 %v3234, %v2513
      %v3299 = vmax.f32 %v3235, %v2514
      %v3300 = vmax.f32 %v3236, %v2515
      %v3301 = vmax.f32 %v3237, %v2516
      %v3302 = vmax.f32 %v3238, %v2517
      %v3303 = vmax.f32 %v3239, %v2518
      %v3304 = vmax.f32 %v3240, %v2519
      %v3305 = vmax.f32 %v3241, %v2520
      %v3306 = vmax.f32 %v3242, %v2521
      %v3307 = vmax.f32 %v3243, %v2522
      %v3308 = vmax.f32 %v3244, %v2523
      %v3309 = vmax.f32 %v3245, %v2524
      %v3310 = vmax.f32 %v3246, %v2525
      %v3311 = vmax.f32 %v3247, %v2526
      %v3312 = vmax.f32 %v3248, %v2527
      %v3313 = vmax.f32 %v3249, %v2528
      %v3314 = vmax.f32 %v3250, %v2529
      %v3315 = vmax.f32 %v3251, %v2530
      %v3316 = vmax.f32 %v3252, %v2531
      %v3317 = vmax.f32 %v3253, %v2532
      %v3318 = vmax.f32 %v3254, %v2533
      %v3323 = vrot.slane %v2526, 1
      %v3324 = vrot.slane %v2530, 1
      %v3325 = vsel %vm2790, %v3323, %v3324
      %v3326 = vrot.slane %v2527, 1
      %v3327 = vrot.slane %v2531, 1
      %v3328 = vsel %vm2790, %v3326, %v3327
      %v3329 = vrot.slane %v2528, 1
      %v3330 = vrot.slane %v2532, 1
      %v3331 = vsel %vm2790, %v3329, %v3330
      %v3332 = vrot.slane %v2529, 1
      %v3333 = vrot.slane %v2533, 1
      %v3334 = vsel %vm2790, %v3332, %v3333
      %v3343 = vmax.f32 %v3255, %v2817
      %v3344 = vmax.f32 %v3256, %v2820
      %v3345 = vmax.f32 %v3257, %v2823
      %v3346 = vmax.f32 %v3258, %v2826
      %v3347 = vmax.f32 %v3259, %v2816
      %v3348 = vmax.f32 %v3260, %v2819
      %v3349 = vmax.f32 %v3261, %v2822
      %v3350 = vmax.f32 %v3262, %v2825
      %v3351 = vmax.f32 %v3263, %v2829
      %v3352 = vmax.f32 %v3264, %v2832
      %v3353 = vmax.f32 %v3265, %v2835
      %v3354 = vmax.f32 %v3266, %v2838
      %v3355 = vmax.f32 %v3267, %v2828
      %v3356 = vmax.f32 %v3268, %v2831
      %v3357 = vmax.f32 %v3269, %v2834
      %v3358 = vmax.f32 %v3270, %v2837
      %v3359 = vmax.f32 %v3271, %v2841
      %v3360 = vmax.f32 %v3272, %v2844
      %v3361 = vmax.f32 %v3273, %v2847
      %v3362 = vmax.f32 %v3274, %v2850
      %v3363 = vmax.f32 %v3275, %v2840
      %v3364 = vmax.f32 %v3276, %v2843
      %v3365 = vmax.f32 %v3277, %v2846
      %v3366 = vmax.f32 %v3278, %v2849
      %v3367 = vmax.f32 %v3279, %v2853
      %v3368 = vmax.f32 %v3280, %v2856
      %v3369 = vmax.f32 %v3281, %v2859
      %v3370 = vmax.f32 %v3282, %v2862
      %v3371 = vmax.f32 %v3283, %v2852
      %v3372 = vmax.f32 %v3284, %v2855
      %v3373 = vmax.f32 %v3285, %v2858
      %v3374 = vmax.f32 %v3286, %v2861
      %v3375 = vmax.f32 %v3287, %v2865
      %v3376 = vmax.f32 %v3288, %v2868
      %v3377 = vmax.f32 %v3289, %v2871
      %v3378 = vmax.f32 %v3290, %v2874
      %v3379 = vmax.f32 %v3291, %v2864
      %v3380 = vmax.f32 %v3292, %v2867
      %v3381 = vmax.f32 %v3293, %v2870
      %v3382 = vmax.f32 %v3294, %v2873
      %v3383 = vmax.f32 %v3295, %v2877
      %v3384 = vmax.f32 %v3296, %v2880
      %v3385 = vmax.f32 %v3297, %v2883
      %v3386 = vmax.f32 %v3298, %v2886
      %v3387 = vmax.f32 %v3299, %v2876
      %v3388 = vmax.f32 %v3300, %v2879
      %v3389 = vmax.f32 %v3301, %v2882
      %v3390 = vmax.f32 %v3302, %v2885
      %v3391 = vmax.f32 %v3303, %v3097
      %v3392 = vmax.f32 %v3304, %v3100
      %v3393 = vmax.f32 %v3305, %v3103
      %v3394 = vmax.f32 %v3306, %v3106
      %v3395 = vmax.f32 %v3307, %v3096
      %v3396 = vmax.f32 %v3308, %v3099
      %v3397 = vmax.f32 %v3309, %v3102
      %v3398 = vmax.f32 %v3310, %v3105
      %v3399 = vmax.f32 %v3311, %v3325
      %v3400 = vmax.f32 %v3312, %v3328
      %v3401 = vmax.f32 %v3313, %v3331
      %v3402 = vmax.f32 %v3314, %v3334
      %v3403 = vmax.f32 %v3315, %v3324
      %v3404 = vmax.f32 %v3316, %v3327
      %v3405 = vmax.f32 %v3317, %v3330
      %v3406 = vmax.f32 %v3318, %v3333
      %v3471 = vrot.slane %v3343, 1
      %v3472 = vrot.slane %v3347, 1
      %v3473 = vsel %vm2790, %v3471, %v3472
      %v3474 = vrot.slane %v3344, 1
      %v3475 = vrot.slane %v3348, 1
      %v3476 = vsel %vm2790, %v3474, %v3475
      %v3477 = vrot.slane %v3345, 1
      %v3478 = vrot.slane %v3349, 1
      %v3479 = vsel %vm2790, %v3477, %v3478
      %v3480 = vrot.slane %v3346, 1
      %v3481 = vrot.slane %v3350, 1
      %v3482 = vsel %vm2790, %v3480, %v3481
      %v3483 = vrot.slane %v3351, 1
      %v3484 = vrot.slane %v3355, 1
      %v3485 = vsel %vm2790, %v3483, %v3484
      %v3486 = vrot.slane %v3352, 1
      %v3487 = vrot.slane %v3356, 1
      %v3488 = vsel %vm2790, %v3486, %v3487
      %v3489 = vrot.slane %v3353, 1
      %v3490 = vrot.slane %v3357, 1
      %v3491 = vsel %vm2790, %v3489, %v3490
      %v3492 = vrot.slane %v3354, 1
      %v3493 = vrot.slane %v3358, 1
      %v3494 = vsel %vm2790, %v3492, %v3493
      %v3495 = vrot.slane %v3359, 1
      %v3496 = vrot.slane %v3363, 1
      %v3497 = vsel %vm2790, %v3495, %v3496
      %v3498 = vrot.slane %v3360, 1
      %v3499 = vrot.slane %v3364, 1
      %v3500 = vsel %vm2790, %v3498, %v3499
      %v3501 = vrot.slane %v3361, 1
      %v3502 = vrot.slane %v3365, 1
      %v3503 = vsel %vm2790, %v3501, %v3502
      %v3504 = vrot.slane %v3362, 1
      %v3505 = vrot.slane %v3366, 1
      %v3506 = vsel %vm2790, %v3504, %v3505
      %v3507 = vrot.slane %v3367, 1
      %v3508 = vrot.slane %v3371, 1
      %v3509 = vsel %vm2790, %v3507, %v3508
      %v3510 = vrot.slane %v3368, 1
      %v3511 = vrot.slane %v3372, 1
      %v3512 = vsel %vm2790, %v3510, %v3511
      %v3513 = vrot.slane %v3369, 1
      %v3514 = vrot.slane %v3373, 1
      %v3515 = vsel %vm2790, %v3513, %v3514
      %v3516 = vrot.slane %v3370, 1
      %v3517 = vrot.slane %v3374, 1
      %v3518 = vsel %vm2790, %v3516, %v3517
      %v3519 = vrot.slane %v3375, 1
      %v3520 = vrot.slane %v3379, 1
      %v3521 = vsel %vm2790, %v3519, %v3520
      %v3522 = vrot.slane %v3376, 1
      %v3523 = vrot.slane %v3380, 1
      %v3524 = vsel %vm2790, %v3522, %v3523
      %v3525 = vrot.slane %v3377, 1
      %v3526 = vrot.slane %v3381, 1
      %v3527 = vsel %vm2790, %v3525, %v3526
      %v3528 = vrot.slane %v3378, 1
      %v3529 = vrot.slane %v3382, 1
      %v3530 = vsel %vm2790, %v3528, %v3529
      %v3531 = vrot.slane %v3383, 1
      %v3532 = vrot.slane %v3387, 1
      %v3533 = vsel %vm2790, %v3531, %v3532
      %v3534 = vrot.slane %v3384, 1
      %v3535 = vrot.slane %v3388, 1
      %v3536 = vsel %vm2790, %v3534, %v3535
      %v3537 = vrot.slane %v3385, 1
      %v3538 = vrot.slane %v3389, 1
      %v3539 = vsel %vm2790, %v3537, %v3538
      %v3540 = vrot.slane %v3386, 1
      %v3541 = vrot.slane %v3390, 1
      %v3542 = vsel %vm2790, %v3540, %v3541
      %v3543 = vrot.slane %v3391, 1
      %v3544 = vrot.slane %v3395, 1
      %v3545 = vsel %vm2790, %v3543, %v3544
      %v3546 = vrot.slane %v3392, 1
      %v3547 = vrot.slane %v3396, 1
      %v3548 = vsel %vm2790, %v3546, %v3547
      %v3549 = vrot.slane %v3393, 1
      %v3550 = vrot.slane %v3397, 1
      %v3551 = vsel %vm2790, %v3549, %v3550
      %v3552 = vrot.slane %v3394, 1
      %v3553 = vrot.slane %v3398, 1
      %v3554 = vsel %vm2790, %v3552, %v3553
      %v3555 = vrot.slane %v3399, 1
      %v3556 = vrot.slane %v3403, 1
      %v3557 = vsel %vm2790, %v3555, %v3556
      %v3558 = vrot.slane %v3400, 1
      %v3559 = vrot.slane %v3404, 1
      %v3560 = vsel %vm2790, %v3558, %v3559
      %v3561 = vrot.slane %v3401, 1
      %v3562 = vrot.slane %v3405, 1
      %v3563 = vsel %vm2790, %v3561, %v3562
      %v3564 = vrot.slane %v3402, 1
      %v3565 = vrot.slane %v3406, 1
      %v3566 = vsel %vm2790, %v3564, %v3565
      %v3599 = vpack.c.bf16 %v3485, %v3473
      %v3600 = vpack.c.bf16 %v3488, %v3476
      %v3601 = vpack.c.bf16 %v3491, %v3479
      %v3602 = vpack.c.bf16 %v3494, %v3482
      %v3603 = vpack.c.bf16 %v3509, %v3497
      %v3604 = vpack.c.bf16 %v3512, %v3500
      %v3605 = vpack.c.bf16 %v3515, %v3503
      %v3606 = vpack.c.bf16 %v3518, %v3506
      %v3607 = vpack.c.bf16 %v3533, %v3521
      %v3608 = vpack.c.bf16 %v3536, %v3524
      %v3609 = vpack.c.bf16 %v3539, %v3527
      %v3610 = vpack.c.bf16 %v3542, %v3530
      %v3611 = vpack.c.bf16 %v3557, %v3545
      %v3612 = vpack.c.bf16 %v3560, %v3548
      %v3613 = vpack.c.bf16 %v3563, %v3551
      %v3614 = vpack.c.bf16 %v3566, %v3554
      %v3615 = vld [vmem:[%s11] sm:$0xf]
      %v3616 = vld [vmem:[%s11 + $0x4] sm:$0xf]
      %v3617 = vld [vmem:[%s11 + $0x8] sm:$0xf]
      %v3618 = vld [vmem:[%s11 + $0xc] sm:$0xf]
      %v3619 = vld [vmem:[%s11 + $0x10] sm:$0xf]
      %v3620 = vld [vmem:[%s11 + $0x14] sm:$0xf]
      %v3621 = vld [vmem:[%s11 + $0x18] sm:$0xf]
      %v3622 = vld [vmem:[%s11 + $0x1c] sm:$0xf]
      %v3623 = vld [vmem:[%s11 + $0x20] sm:$0xf]
      %v3624 = vld [vmem:[%s11 + $0x24] sm:$0xf]
      %v3625 = vld [vmem:[%s11 + $0x28] sm:$0xf]
      %v3626 = vld [vmem:[%s11 + $0x2c] sm:$0xf]
      %v3627 = vld [vmem:[%s11 + $0x30] sm:$0xf]
      %v3628 = vld [vmem:[%s11 + $0x34] sm:$0xf]
      %v3629 = vld [vmem:[%s11 + $0x38] sm:$0xf]
      %v3630 = vld [vmem:[%s11 + $0x3c] sm:$0xf]
      %v3631 = vld [vmem:[%s11 + $0x40] sm:$0xf]
      %v3632 = vld [vmem:[%s11 + $0x44] sm:$0xf]
      %v3633 = vld [vmem:[%s11 + $0x48] sm:$0xf]
      %v3634 = vld [vmem:[%s11 + $0x4c] sm:$0xf]
      %v3635 = vld [vmem:[%s11 + $0x50] sm:$0xf]
      %v3636 = vld [vmem:[%s11 + $0x54] sm:$0xf]
      %v3637 = vld [vmem:[%s11 + $0x58] sm:$0xf]
      %v3638 = vld [vmem:[%s11 + $0x5c] sm:$0xf]
      %v3639 = vld [vmem:[%s11 + $0x60] sm:$0xf]
      %v3640 = vld [vmem:[%s11 + $0x64] sm:$0xf]
      %v3641 = vld [vmem:[%s11 + $0x68] sm:$0xf]
      %v3642 = vld [vmem:[%s11 + $0x6c] sm:$0xf]
      %v3643 = vld [vmem:[%s11 + $0x70] sm:$0xf]
      %v3644 = vld [vmem:[%s11 + $0x74] sm:$0xf]
      %v3645 = vld [vmem:[%s11 + $0x78] sm:$0xf]
      %v3646 = vld [vmem:[%s11 + $0x7c] sm:$0xf]
      %v3647 = vld [vmem:[%s11 + $0x80] sm:$0xf]
      %v3648 = vld [vmem:[%s11 + $0x84] sm:$0xf]
      %v3649 = vld [vmem:[%s11 + $0x88] sm:$0xf]
      %v3650 = vld [vmem:[%s11 + $0x8c] sm:$0xf]
      %v3651 = vld [vmem:[%s11 + $0x90] sm:$0xf]
      %v3652 = vld [vmem:[%s11 + $0x94] sm:$0xf]
      %v3653 = vld [vmem:[%s11 + $0x98] sm:$0xf]
      %v3654 = vld [vmem:[%s11 + $0x9c] sm:$0xf]
      %v3655 = vld [vmem:[%s11 + $0xa0] sm:$0xf]
      %v3656 = vld [vmem:[%s11 + $0xa4] sm:$0xf]
      %v3657 = vld [vmem:[%s11 + $0xa8] sm:$0xf]
      %v3658 = vld [vmem:[%s11 + $0xac] sm:$0xf]
      %v3659 = vld [vmem:[%s11 + $0xb0] sm:$0xf]
      %v3660 = vld [vmem:[%s11 + $0xb4] sm:$0xf]
      %v3661 = vld [vmem:[%s11 + $0xb8] sm:$0xf]
      %v3662 = vld [vmem:[%s11 + $0xbc] sm:$0xf]
      %v3663 = vld [vmem:[%s11 + $0xc0] sm:$0xf]
      %v3664 = vld [vmem:[%s11 + $0xc4] sm:$0xf]
      %v3665 = vld [vmem:[%s11 + $0xc8] sm:$0xf]
      %v3666 = vld [vmem:[%s11 + $0xcc] sm:$0xf]
      %v3667 = vld [vmem:[%s11 + $0xd0] sm:$0xf]
      %v3668 = vld [vmem:[%s11 + $0xd4] sm:$0xf]
      %v3669 = vld [vmem:[%s11 + $0xd8] sm:$0xf]
      %v3670 = vld [vmem:[%s11 + $0xdc] sm:$0xf]
      %v3671 = vld [vmem:[%s11 + $0xe0] sm:$0xf]
      %v3672 = vld [vmem:[%s11 + $0xe4] sm:$0xf]
      %v3673 = vld [vmem:[%s11 + $0xe8] sm:$0xf]
      %v3674 = vld [vmem:[%s11 + $0xec] sm:$0xf]
      %v3675 = vld [vmem:[%s11 + $0xf0] sm:$0xf]
      %v3676 = vld [vmem:[%s11 + $0xf4] sm:$0xf]
      %v3677 = vld [vmem:[%s11 + $0xf8] sm:$0xf]
      %v3678 = vld [vmem:[%s11 + $0xfc] sm:$0xf]
      %v3679 = vld [vmem:[%s12] sm:$0x1]
      %v3681 = vlaneseq
      %v3682 = vshrl.u32 %v3681, 7
      %v3683 = vsub.s32 0, %v3682
      %v3684 = vrot.slane %v3679, %v3683
      %v3750 = vunpack.c.l.b16 %v3615
      %v3751 = vunpack.c.l.b16 %v3616
      %v3752 = vunpack.c.l.b16 %v3617
      %v3753 = vunpack.c.l.b16 %v3618
      %v3754 = vunpack.c.l.b16 %v3619
      %v3755 = vunpack.c.l.b16 %v3620
      %v3756 = vunpack.c.l.b16 %v3621
      %v3757 = vunpack.c.l.b16 %v3622
      %v3758 = vunpack.c.l.b16 %v3623
      %v3759 = vunpack.c.l.b16 %v3624
      %v3760 = vunpack.c.l.b16 %v3625
      %v3761 = vunpack.c.l.b16 %v3626
      %v3762 = vunpack.c.l.b16 %v3627
      %v3763 = vunpack.c.l.b16 %v3628
      %v3764 = vunpack.c.l.b16 %v3629
      %v3765 = vunpack.c.l.b16 %v3630
      %v3766 = vunpack.c.l.b16 %v3631
      %v3767 = vunpack.c.l.b16 %v3632
      %v3768 = vunpack.c.l.b16 %v3633
      %v3769 = vunpack.c.l.b16 %v3634
      %v3770 = vunpack.c.l.b16 %v3635
      %v3771 = vunpack.c.l.b16 %v3636
      %v3772 = vunpack.c.l.b16 %v3637
      %v3773 = vunpack.c.l.b16 %v3638
      %v3774 = vunpack.c.l.b16 %v3639
      %v3775 = vunpack.c.l.b16 %v3640
      %v3776 = vunpack.c.l.b16 %v3641
      %v3777 = vunpack.c.l.b16 %v3642
      %v3778 = vunpack.c.l.b16 %v3643
      %v3779 = vunpack.c.l.b16 %v3644
      %v3780 = vunpack.c.l.b16 %v3645
      %v3781 = vunpack.c.l.b16 %v3646
      %v3782 = vunpack.c.l.b16 %v3647
      %v3783 = vunpack.c.l.b16 %v3648
      %v3784 = vunpack.c.l.b16 %v3649
      %v3785 = vunpack.c.l.b16 %v3650
      %v3786 = vunpack.c.l.b16 %v3651
      %v3787 = vunpack.c.l.b16 %v3652
      %v3788 = vunpack.c.l.b16 %v3653
      %v3789 = vunpack.c.l.b16 %v3654
      %v3790 = vunpack.c.l.b16 %v3655
      %v3791 = vunpack.c.l.b16 %v3656
      %v3792 = vunpack.c.l.b16 %v3657
      %v3793 = vunpack.c.l.b16 %v3658
      %v3794 = vunpack.c.l.b16 %v3659
      %v3795 = vunpack.c.l.b16 %v3660
      %v3796 = vunpack.c.l.b16 %v3661
      %v3797 = vunpack.c.l.b16 %v3662
      %v3798 = vunpack.c.l.b16 %v3663
      %v3799 = vunpack.c.l.b16 %v3664
      %v3800 = vunpack.c.l.b16 %v3665
      %v3801 = vunpack.c.l.b16 %v3666
      %v3802 = vunpack.c.l.b16 %v3667
      %v3803 = vunpack.c.l.b16 %v3668
      %v3804 = vunpack.c.l.b16 %v3669
      %v3805 = vunpack.c.l.b16 %v3670
      %v3806 = vunpack.c.l.b16 %v3671
      %v3807 = vunpack.c.l.b16 %v3672
      %v3808 = vunpack.c.l.b16 %v3673
      %v3809 = vunpack.c.l.b16 %v3674
      %v3810 = vunpack.c.l.b16 %v3675
      %v3811 = vunpack.c.l.b16 %v3676
      %v3812 = vunpack.c.l.b16 %v3677
      %v3813 = vunpack.c.l.b16 %v3678
      %v3814 = vpack.c.b16 %v3751, %v3750
      %v3815 = vpack.c.b16 %v3753, %v3752
      %v3816 = vpack.c.b16 %v3755, %v3754
      %v3817 = vpack.c.b16 %v3757, %v3756
      %v3818 = vpack.c.b16 %v3759, %v3758
      %v3819 = vpack.c.b16 %v3761, %v3760
      %v3820 = vpack.c.b16 %v3763, %v3762
      %v3821 = vpack.c.b16 %v3765, %v3764
      %v3822 = vpack.c.b16 %v3767, %v3766
      %v3823 = vpack.c.b16 %v3769, %v3768
      %v3824 = vpack.c.b16 %v3771, %v3770
      %v3825 = vpack.c.b16 %v3773, %v3772
      %v3826 = vpack.c.b16 %v3775, %v3774
      %v3827 = vpack.c.b16 %v3777, %v3776
      %v3828 = vpack.c.b16 %v3779, %v3778
      %v3829 = vpack.c.b16 %v3781, %v3780
      %v3830 = vpack.c.b16 %v3783, %v3782
      %v3831 = vpack.c.b16 %v3785, %v3784
      %v3832 = vpack.c.b16 %v3787, %v3786
      %v3833 = vpack.c.b16 %v3789, %v3788
      %v3834 = vpack.c.b16 %v3791, %v3790
      %v3835 = vpack.c.b16 %v3793, %v3792
      %v3836 = vpack.c.b16 %v3795, %v3794
      %v3837 = vpack.c.b16 %v3797, %v3796
      %v3838 = vpack.c.b16 %v3799, %v3798
      %v3839 = vpack.c.b16 %v3801, %v3800
      %v3840 = vpack.c.b16 %v3803, %v3802
      %v3841 = vpack.c.b16 %v3805, %v3804
      %v3842 = vpack.c.b16 %v3807, %v3806
      %v3843 = vpack.c.b16 %v3809, %v3808
      %v3844 = vpack.c.b16 %v3811, %v3810
      %v3845 = vpack.c.b16 %v3813, %v3812
      %3878 = vmatprep.subr.bf16.mxu0 0
      %3879 = vmatpush1.bf16.msra.mxu0 %v3814
      %3880 = vmatprep.subr.bf16.mxu0 0
      %3881 = vmatpush1.bf16.msra.mxu0 %v3815
      %3882 = vmatprep.subr.bf16.mxu0 0
      %3883 = vmatpush1.bf16.msra.mxu0 %v3816
      %3884 = vmatprep.subr.bf16.mxu0 0
      %3885 = vmatpush1.bf16.msra.mxu0 %v3817
      %3886 = vmatprep.subr.bf16.mxu0 0
      %3887 = vmatpush1.bf16.msra.mxu0 %v3818
      %3888 = vmatprep.subr.bf16.mxu0 0
      %3889 = vmatpush1.bf16.msra.mxu0 %v3819
      %3890 = vmatprep.subr.bf16.mxu0 0
      %3891 = vmatpush1.bf16.msra.mxu0 %v3820
      %3892 = vmatprep.subr.bf16.mxu0 0
      %3893 = vmatpush1.bf16.msra.mxu0 %v3821
      %3894 = vmatprep.subr.bf16.mxu0 0
      %3895 = vmatpush1.bf16.msra.mxu0 %v3822
      %3896 = vmatprep.subr.bf16.mxu0 0
      %3897 = vmatpush1.bf16.msra.mxu0 %v3823
      %3898 = vmatprep.subr.bf16.mxu0 0
      %3899 = vmatpush1.bf16.msra.mxu0 %v3824
      %3900 = vmatprep.subr.bf16.mxu0 0
      %3901 = vmatpush1.bf16.msra.mxu0 %v3825
      %3902 = vmatprep.subr.bf16.mxu0 0
      %3903 = vmatpush1.bf16.msra.mxu0 %v3826
      %3904 = vmatprep.subr.bf16.mxu0 0
      %3905 = vmatpush1.bf16.msra.mxu0 %v3827
      %3906 = vmatprep.subr.bf16.mxu0 0
      %3907 = vmatpush1.bf16.msra.mxu0 %v3828
      %3908 = vmatprep.subr.bf16.mxu0 0
      %3909 = vmatpush1.bf16.msra.mxu0 %v3829
      %3910 = vmatprep.mubr.bf16.mxu0 %v3600
      %3911 = vmatmul.mubr.bf16.gmra.mrb[0].mxu0 %v3599
      %v3912 = vpop.f32.mrb[0].mxu0
      %v3913 = vadd.f32 %v3684, %v3912
      %v3914 = vpop.f32.mrb[0].mxu0
      %v3915 = vpop.f32.mrb[0].mxu0
      %v3916 = vadd.f32 %v3684, %v3915
      %v3917 = vpop.f32.mrb[0].mxu0
      %3918 = vmatprep.mubr.bf16.mxu0 %v3604
      %3919 = vmatmul.mubr.bf16.gmra.mrb[0].mxu0 %v3603
      %v3920 = vpop.f32.mrb[0].mxu0
      %v3921 = vadd.f32 %v3684, %v3920
      %v3922 = vpop.f32.mrb[0].mxu0
      %v3923 = vpop.f32.mrb[0].mxu0
      %v3924 = vadd.f32 %v3684, %v3923
      %v3925 = vpop.f32.mrb[0].mxu0
      %3926 = vmatprep.mubr.bf16.mxu0 %v3608
      %3927 = vmatmul.mubr.bf16.gmra.mrb[0].mxu0 %v3607
      %v3928 = vpop.f32.mrb[0].mxu0
      %v3929 = vadd.f32 %v3684, %v3928
      %v3930 = vpop.f32.mrb[0].mxu0
      %v3931 = vpop.f32.mrb[0].mxu0
      %v3932 = vadd.f32 %v3684, %v3931
      %v3933 = vpop.f32.mrb[0].mxu0
      %3934 = vmatprep.mubr.bf16.mxu0 %v3612
      %3935 = vmatmul.mubr.bf16.gmra.mrb[0].mxu0 %v3611
      %v3936 = vpop.f32.mrb[0].mxu0
      %v3937 = vadd.f32 %v3684, %v3936
      %v3938 = vpop.f32.mrb[0].mxu0
      %v3939 = vpop.f32.mrb[0].mxu0
      %v3940 = vadd.f32 %v3684, %v3939
      %v3941 = vpop.f32.mrb[0].mxu0
      %3942 = vdwg.mxu0
      %3943 = vmatprep.subr.bf16.mxu0 0
      %3944 = vmatpush1.bf16.msra.mxu0 %v3830
      %3945 = vmatprep.subr.bf16.mxu0 0
      %3946 = vmatpush1.bf16.msra.mxu0 %v3831
      %3947 = vmatprep.subr.bf16.mxu0 0
      %3948 = vmatpush1.bf16.msra.mxu0 %v3832
      %3949 = vmatprep.subr.bf16.mxu0 0
      %3950 = vmatpush1.bf16.msra.mxu0 %v3833
      %3951 = vmatprep.subr.bf16.mxu0 0
      %3952 = vmatpush1.bf16.msra.mxu0 %v3834
      %3953 = vmatprep.subr.bf16.mxu0 0
      %3954 = vmatpush1.bf16.msra.mxu0 %v3835
      %3955 = vmatprep.subr.bf16.mxu0 0
      %3956 = vmatpush1.bf16.msra.mxu0 %v3836
      %3957 = vmatprep.subr.bf16.mxu0 0
      %3958 = vmatpush1.bf16.msra.mxu0 %v3837
      %3959 = vmatprep.subr.bf16.mxu0 0
      %3960 = vmatpush1.bf16.msra.mxu0 %v3838
      %3961 = vmatprep.subr.bf16.mxu0 0
      %3962 = vmatpush1.bf16.msra.mxu0 %v3839
      %3963 = vmatprep.subr.bf16.mxu0 0
      %3964 = vmatpush1.bf16.msra.mxu0 %v3840
      %3965 = vmatprep.subr.bf16.mxu0 0
      %3966 = vmatpush1.bf16.msra.mxu0 %v3841
      %3967 = vmatprep.subr.bf16.mxu0 0
      %3968 = vmatpush1.bf16.msra.mxu0 %v3842
      %3969 = vmatprep.subr.bf16.mxu0 0
      %3970 = vmatpush1.bf16.msra.mxu0 %v3843
      %3971 = vmatprep.subr.bf16.mxu0 0
      %3972 = vmatpush1.bf16.msra.mxu0 %v3844
      %3973 = vmatprep.subr.bf16.mxu0 0
      %3974 = vmatpush1.bf16.msra.mxu0 %v3845
      %3975 = vmatprep.mubr.bf16.mxu0 %v3602
      %3976 = vmatmul.mubr.bf16.gmra.mrb[0].mxu0 %v3601
      %v3977 = vpop.f32.mrb[0].mxu0
      %v3978 = vadd.f32 %v3913, %v3977
      %v3979 = vpop.f32.mrb[0].mxu0
      %v3980 = vpop.f32.mrb[0].mxu0
      %v3981 = vadd.f32 %v3916, %v3980
      %v3982 = vpop.f32.mrb[0].mxu0
      %3983 = vmatprep.mubr.bf16.mxu0 %v3606
      %3984 = vmatmul.mubr.bf16.gmra.mrb[0].mxu0 %v3605
      %v3985 = vpop.f32.mrb[0].mxu0
      %v3986 = vadd.f32 %v3921, %v3985
      %v3987 = vpop.f32.mrb[0].mxu0
      %v3988 = vpop.f32.mrb[0].mxu0
      %v3989 = vadd.f32 %v3924, %v3988
      %v3990 = vpop.f32.mrb[0].mxu0
      %3991 = vmatprep.mubr.bf16.mxu0 %v3610
      %3992 = vmatmul.mubr.bf16.gmra.mrb[0].mxu0 %v3609
      %v3993 = vpop.f32.mrb[0].mxu0
      %v3994 = vadd.f32 %v3929, %v3993
      %v3995 = vpop.f32.mrb[0].mxu0
      %v3996 = vpop.f32.mrb[0].mxu0
      %v3997 = vadd.f32 %v3932, %v3996
      %v3998 = vpop.f32.mrb[0].mxu0
      %3999 = vmatprep.mubr.bf16.mxu0 %v3614
      %4000 = vmatmul.mubr.bf16.gmra.mrb[0].mxu0 %v3613
      %v4001 = vpop.f32.mrb[0].mxu0
      %v4002 = vadd.f32 %v3937, %v4001
      %v4003 = vpop.f32.mrb[0].mxu0
      %v4004 = vpop.f32.mrb[0].mxu0
      %v4005 = vadd.f32 %v3940, %v4004
      %v4006 = vpop.f32.mrb[0].mxu0
      %4007 = vdwg.mxu0
      %v4008 = vmax.f32 %v3978, 0.0
      %v4009 = vmax.f32 %v3981, 0.0
      %v4010 = vmax.f32 %v3986, 0.0
      %v4011 = vmax.f32 %v3989, 0.0
      %v4012 = vmax.f32 %v3994, 0.0
      %v4013 = vmax.f32 %v3997, 0.0
      %v4014 = vmax.f32 %v4002, 0.0
      %v4015 = vmax.f32 %v4005, 0.0
      %vm4016 = vcmask 523264
      %4017 = vst.msk [vmem:[%s558] sm:$0xff] %vm4016, %v4008
      %4018 = vst.msk [vmem:[%s558 + $0x8] sm:$0xff] %vm4016, %v4009
      %4019 = vst.msk [vmem:[%s558 + $0x10] sm:$0xff] %vm4016, %v4010
      %4020 = vst.msk [vmem:[%s558 + $0x18] sm:$0xff] %vm4016, %v4011
      %4021 = vst.msk [vmem:[%s558 + $0x20] sm:$0xff] %vm4016, %v4012
      %4022 = vst.msk [vmem:[%s558 + $0x28] sm:$0xff] %vm4016, %v4013
      %4023 = vst.msk [vmem:[%s558 + $0x30] sm:$0xff] %vm4016, %v4014
      %4024 = vst.msk [vmem:[%s558 + $0x38] sm:$0xff] %vm4016, %v4015
      %v4025 = vld [vmem:[#allocation3] sm:$0xff]
      %v4026 = vld [vmem:[#allocation3 + $0x8] sm:$0xff]
      %v4027 = vld [vmem:[#allocation3 + $0x10] sm:$0x3]
      %v4028 = vld [vmem:[#allocation3 + $0x18] sm:$0x3]
      %v4029 = vld [vmem:[#allocation3 + $0x20] sm:$0xff]
      %v4030 = vld [vmem:[#allocation3 + $0x28] sm:$0xff]
      %v4031 = vld [vmem:[#allocation3 + $0x30] sm:$0x3]
      %v4032 = vld [vmem:[#allocation3 + $0x38] sm:$0x3]
      %v4033 = vld [vmem:[#allocation3 + $0x40] sm:$0xff]
      %v4034 = vld [vmem:[#allocation3 + $0x48] sm:$0xff]
      %v4035 = vld [vmem:[#allocation3 + $0x50] sm:$0x3]
      %v4036 = vld [vmem:[#allocation3 + $0x58] sm:$0x3]
      %v4037 = vld [vmem:[#allocation3 + $0x60] sm:$0xff]
      %v4038 = vld [vmem:[#allocation3 + $0x68] sm:$0xff]
      %v4039 = vld [vmem:[#allocation3 + $0x70] sm:$0x3]
      %v4040 = vld [vmem:[#allocation3 + $0x78] sm:$0x3]
      %v4041 = vld [vmem:[#allocation3 + $0x80] sm:$0xff]
      %v4042 = vld [vmem:[#allocation3 + $0x88] sm:$0xff]
      %v4043 = vld [vmem:[#allocation3 + $0x90] sm:$0x3]
      %v4044 = vld [vmem:[#allocation3 + $0x98] sm:$0x3]
      %v4045 = vld [vmem:[#allocation3 + $0xa0] sm:$0xff]
      %v4046 = vld [vmem:[#allocation3 + $0xa8] sm:$0xff]
      %v4047 = vld [vmem:[#allocation3 + $0xb0] sm:$0x3]
      %v4048 = vld [vmem:[#allocation3 + $0xb8] sm:$0x3]
      %v4049 = vld [vmem:[#allocation3 + $0xc0] sm:$0xff]
      %v4050 = vld [vmem:[#allocation3 + $0xc8] sm:$0xff]
      %v4051 = vld [vmem:[#allocation3 + $0xd0] sm:$0x3]
      %v4052 = vld [vmem:[#allocation3 + $0xd8] sm:$0x3]
      %v4053 = vld [vmem:[#allocation3 + $0xe0] sm:$0xff]
      %v4054 = vld [vmem:[#allocation3 + $0xe8] sm:$0xff]
      %v4055 = vld [vmem:[#allocation3 + $0xf0] sm:$0x3]
      %v4056 = vld [vmem:[#allocation3 + $0xf8] sm:$0x3]
      %v4057 = vld [vmem:[#allocation3 + $0x100] sm:$0xff]
      %v4058 = vld [vmem:[#allocation3 + $0x108] sm:$0xff]
      %v4059 = vld [vmem:[#allocation3 + $0x110] sm:$0x3]
      %v4060 = vld [vmem:[#allocation3 + $0x118] sm:$0x3]
      %v4061 = vld [vmem:[#allocation3 + $0x120] sm:$0xff]
      %v4062 = vld [vmem:[#allocation3 + $0x128] sm:$0xff]
      %v4063 = vld [vmem:[#allocation3 + $0x130] sm:$0x3]
      %v4064 = vld [vmem:[#allocation3 + $0x138] sm:$0x3]
      %v4065 = vpack.c.bf16 %v4029, %v4025
      %v4066 = vpack.c.bf16 %v4030, %v4026
      %v4067 = vpack.c.bf16 %v4037, %v4033
      %v4068 = vpack.c.bf16 %v4038, %v4034
      %v4069 = vpack.c.bf16 %v4045, %v4041
      %v4070 = vpack.c.bf16 %v4046, %v4042
      %v4071 = vpack.c.bf16 %v4053, %v4049
      %v4072 = vpack.c.bf16 %v4054, %v4050
      %v4073 = vld [vmem:[%s5] sm:$0xff]
      %v4074 = vld [vmem:[%s5 + $0x8] sm:$0xf]
      %v4075 = vld [vmem:[%s5 + $0xc] sm:$0xff]
      %v4076 = vld [vmem:[%s5 + $0x14] sm:$0xf]
      %v4077 = vld [vmem:[%s5 + $0x18] sm:$0xff]
      %v4078 = vld [vmem:[%s5 + $0x20] sm:$0xf]
      %v4079 = vld [vmem:[%s5 + $0x24] sm:$0xff]
      %v4080 = vld [vmem:[%s5 + $0x2c] sm:$0xf]
      %v4081 = vld [vmem:[%s5 + $0x30] sm:$0xff]
      %v4082 = vld [vmem:[%s5 + $0x38] sm:$0xf]
      %v4083 = vld [vmem:[%s5 + $0x3c] sm:$0xff]
      %v4084 = vld [vmem:[%s5 + $0x44] sm:$0xf]
      %v4085 = vld [vmem:[%s5 + $0x48] sm:$0xff]
      %v4086 = vld [vmem:[%s5 + $0x50] sm:$0xf]
      %v4087 = vld [vmem:[%s5 + $0x54] sm:$0xff]
      %v4088 = vld [vmem:[%s5 + $0x5c] sm:$0xf]
      %v4089 = vld [vmem:[%s5 + $0x60] sm:$0xff]
      %v4090 = vld [vmem:[%s5 + $0x68] sm:$0xf]
      %v4091 = vld [vmem:[%s5 + $0x6c] sm:$0xff]
      %v4092 = vld [vmem:[%s5 + $0x74] sm:$0xf]
      %v4093 = vld [vmem:[%s5 + $0x78] sm:$0xff]
      %v4094 = vld [vmem:[%s5 + $0x80] sm:$0xf]
      %v4095 = vld [vmem:[%s5 + $0x84] sm:$0xff]
      %v4096 = vld [vmem:[%s5 + $0x8c] sm:$0xf]
      %v4097 = vld [vmem:[%s5 + $0x90] sm:$0xff]
      %v4098 = vld [vmem:[%s5 + $0x98] sm:$0xf]
      %v4099 = vld [vmem:[%s5 + $0x9c] sm:$0xff]
      %v4100 = vld [vmem:[%s5 + $0xa4] sm:$0xf]
      %v4101 = vld [vmem:[%s5 + $0xa8] sm:$0xff]
      %v4102 = vld [vmem:[%s5 + $0xb0] sm:$0xf]
      %v4103 = vld [vmem:[%s5 + $0xb4] sm:$0xff]
      %v4104 = vld [vmem:[%s5 + $0xbc] sm:$0xf]
      %v4105 = vld [vmem:[%s5 + $0xc0] sm:$0xff]
      %v4106 = vld [vmem:[%s5 + $0xc8] sm:$0xf]
      %v4107 = vld [vmem:[%s5 + $0xcc] sm:$0xff]
      %v4108 = vld [vmem:[%s5 + $0xd4] sm:$0xf]
      %v4141 = vrot.slane %v4025, 1
      %v4142 = vrot.slane %v4027, 1
      %v4143 = vsel %vm2790, %v4141, %v4142
      %v4144 = vrot.slane %v4026, 1
      %v4145 = vrot.slane %v4028, 1
      %v4146 = vsel %vm2790, %v4144, %v4145
      %v4147 = vrot.slane %v4029, 1
      %v4148 = vrot.slane %v4031, 1
      %v4149 = vsel %vm2790, %v4147, %v4148
      %v4150 = vrot.slane %v4030, 1
      %v4151 = vrot.slane %v4032, 1
      %v4152 = vsel %vm2790, %v4150, %v4151
      %v4153 = vrot.slane %v4033, 1
      %v4154 = vrot.slane %v4035, 1
      %v4155 = vsel %vm2790, %v4153, %v4154
      %v4156 = vrot.slane %v4034, 1
      %v4157 = vrot.slane %v4036, 1
      %v4158 = vsel %vm2790, %v4156, %v4157
      %v4159 = vrot.slane %v4037, 1
      %v4160 = vrot.slane %v4039, 1
      %v4161 = vsel %vm2790, %v4159, %v4160
      %v4162 = vrot.slane %v4038, 1
      %v4163 = vrot.slane %v4040, 1
      %v4164 = vsel %vm2790, %v4162, %v4163
      %v4165 = vrot.slane %v4041, 1
      %v4166 = vrot.slane %v4043, 1
      %v4167 = vsel %vm2790, %v4165, %v4166
      %v4168 = vrot.slane %v4042, 1
      %v4169 = vrot.slane %v4044, 1
      %v4170 = vsel %vm2790, %v4168, %v4169
      %v4171 = vrot.slane %v4045, 1
      %v4172 = vrot.slane %v4047, 1
      %v4173 = vsel %vm2790, %v4171, %v4172
      %v4174 = vrot.slane %v4046, 1
      %v4175 = vrot.slane %v4048, 1
      %v4176 = vsel %vm2790, %v4174, %v4175
      %v4177 = vrot.slane %v4049, 1
      %v4178 = vrot.slane %v4051, 1
      %v4179 = vsel %vm2790, %v4177, %v4178
      %v4180 = vrot.slane %v4050, 1
      %v4181 = vrot.slane %v4052, 1
      %v4182 = vsel %vm2790, %v4180, %v4181
      %v4183 = vrot.slane %v4053, 1
      %v4184 = vrot.slane %v4055, 1
      %v4185 = vsel %vm2790, %v4183, %v4184
      %v4186 = vrot.slane %v4054, 1
      %v4187 = vrot.slane %v4056, 1
      %v4188 = vsel %vm2790, %v4186, %v4187
      %v4205 = vpack.c.bf16 %v4149, %v4143
      %v4206 = vpack.c.bf16 %v4152, %v4146
      %v4207 = vpack.c.bf16 %v4161, %v4155
      %v4208 = vpack.c.bf16 %v4164, %v4158
      %v4209 = vpack.c.bf16 %v4173, %v4167
      %v4210 = vpack.c.bf16 %v4176, %v4170
      %v4211 = vpack.c.bf16 %v4185, %v4179
      %v4212 = vpack.c.bf16 %v4188, %v4182
      %s4213 = scalar_lea.vmem %s5, 216
      %v4214 = vld [vmem:[%s4213] sm:$0xff]
      %v4215 = vld [vmem:[%s4213 + $0x8] sm:$0xf]
      %v4216 = vld [vmem:[%s4213 + $0xc] sm:$0xff]
      %v4217 = vld [vmem:[%s4213 + $0x14] sm:$0xf]
      %v4218 = vld [vmem:[%s4213 + $0x18] sm:$0xff]
      %v4219 = vld [vmem:[%s4213 + $0x20] sm:$0xf]
      %v4220 = vld [vmem:[%s4213 + $0x24] sm:$0xff]
      %v4221 = vld [vmem:[%s4213 + $0x2c] sm:$0xf]
      %v4222 = vld [vmem:[%s4213 + $0x30] sm:$0xff]
      %v4223 = vld [vmem:[%s4213 + $0x38] sm:$0xf]
      %v4224 = vld [vmem:[%s4213 + $0x3c] sm:$0xff]
      %v4225 = vld [vmem:[%s4213 + $0x44] sm:$0xf]
      %v4226 = vld [vmem:[%s4213 + $0x48] sm:$0xff]
      %v4227 = vld [vmem:[%s4213 + $0x50] sm:$0xf]
      %v4228 = vld [vmem:[%s4213 + $0x54] sm:$0xff]
      %v4229 = vld [vmem:[%s4213 + $0x5c] sm:$0xf]
      %v4230 = vld [vmem:[%s4213 + $0x60] sm:$0xff]
      %v4231 = vld [vmem:[%s4213 + $0x68] sm:$0xf]
      %v4232 = vld [vmem:[%s4213 + $0x6c] sm:$0xff]
      %v4233 = vld [vmem:[%s4213 + $0x74] sm:$0xf]
      %v4234 = vld [vmem:[%s4213 + $0x78] sm:$0xff]
      %v4235 = vld [vmem:[%s4213 + $0x80] sm:$0xf]
      %v4236 = vld [vmem:[%s4213 + $0x84] sm:$0xff]
      %v4237 = vld [vmem:[%s4213 + $0x8c] sm:$0xf]
      %v4238 = vld [vmem:[%s4213 + $0x90] sm:$0xff]
      %v4239 = vld [vmem:[%s4213 + $0x98] sm:$0xf]
      %v4240 = vld [vmem:[%s4213 + $0x9c] sm:$0xff]
      %v4241 = vld [vmem:[%s4213 + $0xa4] sm:$0xf]
      %v4242 = vld [vmem:[%s4213 + $0xa8] sm:$0xff]
      %v4243 = vld [vmem:[%s4213 + $0xb0] sm:$0xf]
      %v4244 = vld [vmem:[%s4213 + $0xb4] sm:$0xff]
      %v4245 = vld [vmem:[%s4213 + $0xbc] sm:$0xf]
      %v4246 = vld [vmem:[%s4213 + $0xc0] sm:$0xff]
      %v4247 = vld [vmem:[%s4213 + $0xc8] sm:$0xf]
      %v4248 = vld [vmem:[%s4213 + $0xcc] sm:$0xff]
      %v4249 = vld [vmem:[%s4213 + $0xd4] sm:$0xf]
      %v4286 = vunpack.c.l.b16 %v4214
      %v4287 = vunpack.c.h.b16 %v4214
      %v4288 = vunpack.c.l.b16 %v4215
      %v4289 = vunpack.c.l.b16 %v4216
      %v4290 = vunpack.c.h.b16 %v4216
      %v4291 = vunpack.c.l.b16 %v4217
      %v4292 = vunpack.c.l.b16 %v4218
      %v4293 = vunpack.c.h.b16 %v4218
      %v4294 = vunpack.c.l.b16 %v4219
      %v4295 = vunpack.c.l.b16 %v4220
      %v4296 = vunpack.c.h.b16 %v4220
      %v4297 = vunpack.c.l.b16 %v4221
      %v4298 = vunpack.c.l.b16 %v4222
      %v4299 = vunpack.c.h.b16 %v4222
      %v4300 = vunpack.c.l.b16 %v4223
      %v4301 = vunpack.c.l.b16 %v4224
      %v4302 = vunpack.c.h.b16 %v4224
      %v4303 = vunpack.c.l.b16 %v4225
      %v4304 = vunpack.c.l.b16 %v4226
      %v4305 = vunpack.c.h.b16 %v4226
      %v4306 = vunpack.c.l.b16 %v4227
      %v4307 = vunpack.c.l.b16 %v4228
      %v4308 = vunpack.c.h.b16 %v4228
      %v4309 = vunpack.c.l.b16 %v4229
      %v4310 = vunpack.c.l.b16 %v4230
      %v4311 = vunpack.c.h.b16 %v4230
      %v4312 = vunpack.c.l.b16 %v4231
      %v4313 = vunpack.c.l.b16 %v4232
      %v4314 = vunpack.c.h.b16 %v4232
      %v4315 = vunpack.c.l.b16 %v4233
      %v4316 = vunpack.c.l.b16 %v4234
      %v4317 = vunpack.c.h.b16 %v4234
      %v4318 = vunpack.c.l.b16 %v4235
      %v4319 = vunpack.c.l.b16 %v4236
      %v4320 = vunpack.c.h.b16 %v4236
      %v4321 = vunpack.c.l.b16 %v4237
      %v4322 = vunpack.c.l.b16 %v4238
      %v4323 = vunpack.c.h.b16 %v4238
      %v4324 = vunpack.c.l.b16 %v4239
      %v4325 = vunpack.c.l.b16 %v4240
      %v4326 = vunpack.c.h.b16 %v4240
      %v4327 = vunpack.c.l.b16 %v4241
      %v4328 = vunpack.c.l.b16 %v4242
      %v4329 = vunpack.c.h.b16 %v4242
      %v4330 = vunpack.c.l.b16 %v4243
      %v4331 = vunpack.c.l.b16 %v4244
      %v4332 = vunpack.c.h.b16 %v4244
      %v4333 = vunpack.c.l.b16 %v4245
      %v4334 = vunpack.c.l.b16 %v4246
      %v4335 = vunpack.c.h.b16 %v4246
      %v4336 = vunpack.c.l.b16 %v4247
      %v4337 = vunpack.c.l.b16 %v4248
      %v4338 = vunpack.c.h.b16 %v4248
      %v4339 = vunpack.c.l.b16 %v4249
      %v4340 = vpack.c.b16 %v4289, %v4286
      %v4341 = vpack.c.b16 %v4290, %v4287
      %v4342 = vpack.c.b16 %v4291, %v4288
      %v4343 = vpack.c.b16 %v4295, %v4292
      %v4344 = vpack.c.b16 %v4296, %v4293
      %v4345 = vpack.c.b16 %v4297, %v4294
      %v4346 = vpack.c.b16 %v4301, %v4298
      %v4347 = vpack.c.b16 %v4302, %v4299
      %v4348 = vpack.c.b16 %v4303, %v4300
      %v4349 = vpack.c.b16 %v4307, %v4304
      %v4350 = vpack.c.b16 %v4308, %v4305
      %v4351 = vpack.c.b16 %v4309, %v4306
      %v4352 = vpack.c.b16 %v4313, %v4310
      %v4353 = vpack.c.b16 %v4314, %v4311
      %v4354 = vpack.c.b16 %v4315, %v4312
      %v4355 = vpack.c.b16 %v4319, %v4316
      %v4356 = vpack.c.b16 %v4320, %v4317
      %v4357 = vpack.c.b16 %v4321, %v4318
      %v4358 = vpack.c.b16 %v4325, %v4322
      %v4359 = vpack.c.b16 %v4326, %v4323
      %v4360 = vpack.c.b16 %v4327, %v4324
      %v4361 = vpack.c.b16 %v4331, %v4328
      %v4362 = vpack.c.b16 %v4332, %v4329
      %v4363 = vpack.c.b16 %v4333, %v4330
      %v4364 = vpack.c.b16 %v4337, %v4334
      %v4365 = vpack.c.b16 %v4338, %v4335
      %v4366 = vpack.c.b16 %v4339, %v4336
      %v4395 = vsel %vm1215, %v4206, 0
      %v4398 = vsel %vm1215, %v4208, 0
      %v4401 = vsel %vm1215, %v4210, 0
      %v4404 = vsel %vm1215, %v4212, 0
      %4406 = vmatprep.subr.bf16.mxu0 %v4341
      %4407 = vmatpush1.bf16.msra.mxu0 %v4340
      %4408 = vmatprep.subr.bf16.mxu0 %v4344
      %4409 = vmatpush1.bf16.msra.mxu0 %v4343
      %4410 = vmatprep.subr.bf16.mxu0 %v4347
      %4411 = vmatpush1.bf16.msra.mxu0 %v4346
      %4412 = vmatprep.subr.bf16.mxu0 %v4350
      %4413 = vmatpush1.bf16.msra.mxu0 %v4349
      %4414 = vmatprep.subr.bf16.mxu0 %v4353
      %4415 = vmatpush1.bf16.msra.mxu0 %v4352
      %4416 = vmatprep.subr.bf16.mxu0 %v4356
      %4417 = vmatpush1.bf16.msra.mxu0 %v4355
      %4418 = vmatprep.subr.bf16.mxu0 %v4359
      %4419 = vmatpush1.bf16.msra.mxu0 %v4358
      %4420 = vmatprep.subr.bf16.mxu0 %v4362
      %4421 = vmatpush1.bf16.msra.mxu0 %v4361
      %4422 = vmatprep.subr.bf16.mxu0 %v4365
      %4423 = vmatpush1.bf16.msra.mxu0 %v4364
      %4424 = vmatprep.subr.bf16.mxu0 0
      %4425 = vmatpush1.bf16.msra.mxu0 0
      %4426 = vmatprep.subr.bf16.mxu0 0
      %4427 = vmatpush1.bf16.msra.mxu0 0
      %4428 = vmatprep.subr.bf16.mxu0 0
      %4429 = vmatpush1.bf16.msra.mxu0 0
      %4430 = vmatprep.subr.bf16.mxu0 0
      %4431 = vmatpush1.bf16.msra.mxu0 0
      %4432 = vmatprep.subr.bf16.mxu0 0
      %4433 = vmatpush1.bf16.msra.mxu0 0
      %4434 = vmatprep.subr.bf16.mxu0 0
      %4435 = vmatpush1.bf16.msra.mxu0 0
      %4436 = vmatprep.subr.bf16.mxu0 0
      %4437 = vmatpush1.bf16.msra.mxu0 0
      %4438 = vmatprep.mubr.bf16.mxu0 %v4395
      %4439 = vmatmul.mubr.bf16.gmra.mrb[0].mxu0 %v4205
      %v4440 = vpop.f32.mrb[0].mxu0
      %v4441 = vadd.f32 0.0, %v4440
      %v4442 = vpop.f32.mrb[0].mxu0
      %v4443 = vadd.f32 0.0, %v4442
      %v4444 = vpop.f32.mrb[0].mxu0
      %v4445 = vadd.f32 0.0, %v4444
      %v4446 = vpop.f32.mrb[0].mxu0
      %v4447 = vadd.f32 0.0, %v4446
      %4448 = vmatprep.mubr.bf16.mxu0 %v4398
      %4449 = vmatmul.mubr.bf16.gmra.mrb[0].mxu0 %v4207
      %v4450 = vpop.f32.mrb[0].mxu0
      %v4451 = vadd.f32 0.0, %v4450
      %v4452 = vpop.f32.mrb[0].mxu0
      %v4453 = vadd.f32 0.0, %v4452
      %v4454 = vpop.f32.mrb[0].mxu0
      %v4455 = vadd.f32 0.0, %v4454
      %v4456 = vpop.f32.mrb[0].mxu0
      %v4457 = vadd.f32 0.0, %v4456
      %4458 = vmatprep.mubr.bf16.mxu0 %v4401
      %4459 = vmatmul.mubr.bf16.gmra.mrb[0].mxu0 %v4209
      %v4460 = vpop.f32.mrb[0].mxu0
      %v4461 = vadd.f32 0.0, %v4460
      %v4462 = vpop.f32.mrb[0].mxu0
      %v4463 = vadd.f32 0.0, %v4462
      %v4464 = vpop.f32.mrb[0].mxu0
      %v4465 = vadd.f32 0.0, %v4464
      %v4466 = vpop.f32.mrb[0].mxu0
      %v4467 = vadd.f32 0.0, %v4466
      %4468 = vmatprep.mubr.bf16.mxu0 %v4404
      %4469 = vmatmul.mubr.bf16.gmra.mrb[0].mxu0 %v4211
      %v4470 = vpop.f32.mrb[0].mxu0
      %v4471 = vadd.f32 0.0, %v4470
      %v4472 = vpop.f32.mrb[0].mxu0
      %v4473 = vadd.f32 0.0, %v4472
      %v4474 = vpop.f32.mrb[0].mxu0
      %v4475 = vadd.f32 0.0, %v4474
      %v4476 = vpop.f32.mrb[0].mxu0
      %v4477 = vadd.f32 0.0, %v4476
      %4478 = vdwg.mxu0
      %4479 = vmatprep.subr.bf16.mxu0 0
      %4480 = vmatpush1.bf16.msra.mxu0 %v4342
      %4481 = vmatprep.subr.bf16.mxu0 0
      %4482 = vmatpush1.bf16.msra.mxu0 %v4345
      %4483 = vmatprep.subr.bf16.mxu0 0
      %4484 = vmatpush1.bf16.msra.mxu0 %v4348
      %4485 = vmatprep.subr.bf16.mxu0 0
      %4486 = vmatpush1.bf16.msra.mxu0 %v4351
      %4487 = vmatprep.subr.bf16.mxu0 0
      %4488 = vmatpush1.bf16.msra.mxu0 %v4354
      %4489 = vmatprep.subr.bf16.mxu0 0
      %4490 = vmatpush1.bf16.msra.mxu0 %v4357
      %4491 = vmatprep.subr.bf16.mxu0 0
      %4492 = vmatpush1.bf16.msra.mxu0 %v4360
      %4493 = vmatprep.subr.bf16.mxu0 0
      %4494 = vmatpush1.bf16.msra.mxu0 %v4363
      %4495 = vmatprep.subr.bf16.mxu0 0
      %4496 = vmatpush1.bf16.msra.mxu0 %v4366
      %4497 = vmatprep.subr.bf16.mxu0 0
      %4498 = vmatpush1.bf16.msra.mxu0 0
      %4499 = vmatprep.subr.bf16.mxu0 0
      %4500 = vmatpush1.bf16.msra.mxu0 0
      %4501 = vmatprep.subr.bf16.mxu0 0
      %4502 = vmatpush1.bf16.msra.mxu0 0
      %4503 = vmatprep.subr.bf16.mxu0 0
      %4504 = vmatpush1.bf16.msra.mxu0 0
      %4505 = vmatprep.subr.bf16.mxu0 0
      %4506 = vmatpush1.bf16.msra.mxu0 0
      %4507 = vmatprep.subr.bf16.mxu0 0
      %4508 = vmatpush1.bf16.msra.mxu0 0
      %4509 = vmatprep.subr.bf16.mxu0 0
      %4510 = vmatpush1.bf16.msra.mxu0 0
      %4511 = vmatprep.mubr.bf16.mxu0 %v4395
      %4512 = vmatmul.mubr.bf16.gmra.mrb[0].mxu0 %v4205
      %v4513 = vpop.f32.mrb[0].mxu0
      %v4514 = vadd.f32 0.0, %v4513
      %v4515 = vpop.f32.mrb[0].mxu0
      %v4516 = vpop.f32.mrb[0].mxu0
      %v4517 = vadd.f32 0.0, %v4516
      %v4518 = vpop.f32.mrb[0].mxu0
      %4519 = vmatprep.mubr.bf16.mxu0 %v4398
      %4520 = vmatmul.mubr.bf16.gmra.mrb[0].mxu0 %v4207
      %v4521 = vpop.f32.mrb[0].mxu0
      %v4522 = vadd.f32 0.0, %v4521
      %v4523 = vpop.f32.mrb[0].mxu0
      %v4524 = vpop.f32.mrb[0].mxu0
      %v4525 = vadd.f32 0.0, %v4524
      %v4526 = vpop.f32.mrb[0].mxu0
      %4527 = vmatprep.mubr.bf16.mxu0 %v4401
      %4528 = vmatmul.mubr.bf16.gmra.mrb[0].mxu0 %v4209
      %v4529 = vpop.f32.mrb[0].mxu0
      %v4530 = vadd.f32 0.0, %v4529
      %v4531 = vpop.f32.mrb[0].mxu0
      %v4532 = vpop.f32.mrb[0].mxu0
      %v4533 = vadd.f32 0.0, %v4532
      %v4534 = vpop.f32.mrb[0].mxu0
      %4535 = vmatprep.mubr.bf16.mxu0 %v4404
      %4536 = vmatmul.mubr.bf16.gmra.mrb[0].mxu0 %v4211
      %v4537 = vpop.f32.mrb[0].mxu0
      %v4538 = vadd.f32 0.0, %v4537
      %v4539 = vpop.f32.mrb[0].mxu0
      %v4540 = vpop.f32.mrb[0].mxu0
      %v4541 = vadd.f32 0.0, %v4540
      %v4542 = vpop.f32.mrb[0].mxu0
      %4543 = vdwg.mxu0
      %v4580 = vunpack.c.l.b16 %v4073
      %v4581 = vunpack.c.h.b16 %v4073
      %v4582 = vunpack.c.l.b16 %v4074
      %v4583 = vunpack.c.l.b16 %v4075
      %v4584 = vunpack.c.h.b16 %v4075
      %v4585 = vunpack.c.l.b16 %v4076
      %v4586 = vunpack.c.l.b16 %v4077
      %v4587 = vunpack.c.h.b16 %v4077
      %v4588 = vunpack.c.l.b16 %v4078
      %v4589 = vunpack.c.l.b16 %v4079
      %v4590 = vunpack.c.h.b16 %v4079
      %v4591 = vunpack.c.l.b16 %v4080
      %v4592 = vunpack.c.l.b16 %v4081
      %v4593 = vunpack.c.h.b16 %v4081
      %v4594 = vunpack.c.l.b16 %v4082
      %v4595 = vunpack.c.l.b16 %v4083
      %v4596 = vunpack.c.h.b16 %v4083
      %v4597 = vunpack.c.l.b16 %v4084
      %v4598 = vunpack.c.l.b16 %v4085
      %v4599 = vunpack.c.h.b16 %v4085
      %v4600 = vunpack.c.l.b16 %v4086
      %v4601 = vunpack.c.l.b16 %v4087
      %v4602 = vunpack.c.h.b16 %v4087
      %v4603 = vunpack.c.l.b16 %v4088
      %v4604 = vunpack.c.l.b16 %v4089
      %v4605 = vunpack.c.h.b16 %v4089
      %v4606 = vunpack.c.l.b16 %v4090
      %v4607 = vunpack.c.l.b16 %v4091
      %v4608 = vunpack.c.h.b16 %v4091
      %v4609 = vunpack.c.l.b16 %v4092
      %v4610 = vunpack.c.l.b16 %v4093
      %v4611 = vunpack.c.h.b16 %v4093
      %v4612 = vunpack.c.l.b16 %v4094
      %v4613 = vunpack.c.l.b16 %v4095
      %v4614 = vunpack.c.h.b16 %v4095
      %v4615 = vunpack.c.l.b16 %v4096
      %v4616 = vunpack.c.l.b16 %v4097
      %v4617 = vunpack.c.h.b16 %v4097
      %v4618 = vunpack.c.l.b16 %v4098
      %v4619 = vunpack.c.l.b16 %v4099
      %v4620 = vunpack.c.h.b16 %v4099
      %v4621 = vunpack.c.l.b16 %v4100
      %v4622 = vunpack.c.l.b16 %v4101
      %v4623 = vunpack.c.h.b16 %v4101
      %v4624 = vunpack.c.l.b16 %v4102
      %v4625 = vunpack.c.l.b16 %v4103
      %v4626 = vunpack.c.h.b16 %v4103
      %v4627 = vunpack.c.l.b16 %v4104
      %v4628 = vunpack.c.l.b16 %v4105
      %v4629 = vunpack.c.h.b16 %v4105
      %v4630 = vunpack.c.l.b16 %v4106
      %v4631 = vunpack.c.l.b16 %v4107
      %v4632 = vunpack.c.h.b16 %v4107
      %v4633 = vunpack.c.l.b16 %v4108
      %v4634 = vpack.c.b16 %v4583, %v4580
      %v4635 = vpack.c.b16 %v4584, %v4581
      %v4636 = vpack.c.b16 %v4585, %v4582
      %v4637 = vpack.c.b16 %v4589, %v4586
      %v4638 = vpack.c.b16 %v4590, %v4587
      %v4639 = vpack.c.b16 %v4591, %v4588
      %v4640 = vpack.c.b16 %v4595, %v4592
      %v4641 = vpack.c.b16 %v4596, %v4593
      %v4642 = vpack.c.b16 %v4597, %v4594
      %v4643 = vpack.c.b16 %v4601, %v4598
      %v4644 = vpack.c.b16 %v4602, %v4599
      %v4645 = vpack.c.b16 %v4603, %v4600
      %v4646 = vpack.c.b16 %v4607, %v4604
      %v4647 = vpack.c.b16 %v4608, %v4605
      %v4648 = vpack.c.b16 %v4609, %v4606
      %v4649 = vpack.c.b16 %v4613, %v4610
      %v4650 = vpack.c.b16 %v4614, %v4611
      %v4651 = vpack.c.b16 %v4615, %v4612
      %v4652 = vpack.c.b16 %v4619, %v4616
      %v4653 = vpack.c.b16 %v4620, %v4617
      %v4654 = vpack.c.b16 %v4621, %v4618
      %v4655 = vpack.c.b16 %v4625, %v4622
      %v4656 = vpack.c.b16 %v4626, %v4623
      %v4657 = vpack.c.b16 %v4627, %v4624
      %v4658 = vpack.c.b16 %v4631, %v4628
      %v4659 = vpack.c.b16 %v4632, %v4629
      %v4660 = vpack.c.b16 %v4633, %v4630
      %v4689 = vsel %vm1215, %v4066, 0
      %v4692 = vsel %vm1215, %v4068, 0
      %v4695 = vsel %vm1215, %v4070, 0
      %v4698 = vsel %vm1215, %v4072, 0
      %4700 = vmatprep.subr.bf16.mxu0 %v4635
      %4701 = vmatpush1.bf16.msra.mxu0 %v4634
      %4702 = vmatprep.subr.bf16.mxu0 %v4638
      %4703 = vmatpush1.bf16.msra.mxu0 %v4637
      %4704 = vmatprep.subr.bf16.mxu0 %v4641
      %4705 = vmatpush1.bf16.msra.mxu0 %v4640
      %4706 = vmatprep.subr.bf16.mxu0 %v4644
      %4707 = vmatpush1.bf16.msra.mxu0 %v4643
      %4708 = vmatprep.subr.bf16.mxu0 %v4647
      %4709 = vmatpush1.bf16.msra.mxu0 %v4646
      %4710 = vmatprep.subr.bf16.mxu0 %v4650
      %4711 = vmatpush1.bf16.msra.mxu0 %v4649
      %4712 = vmatprep.subr.bf16.mxu0 %v4653
      %4713 = vmatpush1.bf16.msra.mxu0 %v4652
      %4714 = vmatprep.subr.bf16.mxu0 %v4656
      %4715 = vmatpush1.bf16.msra.mxu0 %v4655
      %4716 = vmatprep.subr.bf16.mxu0 %v4659
      %4717 = vmatpush1.bf16.msra.mxu0 %v4658
      %4718 = vmatprep.subr.bf16.mxu0 0
      %4719 = vmatpush1.bf16.msra.mxu0 0
      %4720 = vmatprep.subr.bf16.mxu0 0
      %4721 = vmatpush1.bf16.msra.mxu0 0
      %4722 = vmatprep.subr.bf16.mxu0 0
      %4723 = vmatpush1.bf16.msra.mxu0 0
      %4724 = vmatprep.subr.bf16.mxu0 0
      %4725 = vmatpush1.bf16.msra.mxu0 0
      %4726 = vmatprep.subr.bf16.mxu0 0
      %4727 = vmatpush1.bf16.msra.mxu0 0
      %4728 = vmatprep.subr.bf16.mxu0 0
      %4729 = vmatpush1.bf16.msra.mxu0 0
      %4730 = vmatprep.subr.bf16.mxu0 0
      %4731 = vmatpush1.bf16.msra.mxu0 0
      %4732 = vmatprep.mubr.bf16.mxu0 %v4689
      %4733 = vmatmul.mubr.bf16.gmra.mrb[0].mxu0 %v4065
      %v4734 = vpop.f32.mrb[0].mxu0
      %v4735 = vadd.f32 %v4441, %v4734
      %v4736 = vpop.f32.mrb[0].mxu0
      %v4737 = vadd.f32 %v4443, %v4736
      %v4738 = vpop.f32.mrb[0].mxu0
      %v4739 = vadd.f32 %v4445, %v4738
      %v4740 = vpop.f32.mrb[0].mxu0
      %v4741 = vadd.f32 %v4447, %v4740
      %4742 = vmatprep.mubr.bf16.mxu0 %v4692
      %4743 = vmatmul.mubr.bf16.gmra.mrb[0].mxu0 %v4067
      %v4744 = vpop.f32.mrb[0].mxu0
      %v4745 = vadd.f32 %v4451, %v4744
      %v4746 = vpop.f32.mrb[0].mxu0
      %v4747 = vadd.f32 %v4453, %v4746
      %v4748 = vpop.f32.mrb[0].mxu0
      %v4749 = vadd.f32 %v4455, %v4748
      %v4750 = vpop.f32.mrb[0].mxu0
      %v4751 = vadd.f32 %v4457, %v4750
      %4752 = vmatprep.mubr.bf16.mxu0 %v4695
      %4753 = vmatmul.mubr.bf16.gmra.mrb[0].mxu0 %v4069
      %v4754 = vpop.f32.mrb[0].mxu0
      %v4755 = vadd.f32 %v4461, %v4754
      %v4756 = vpop.f32.mrb[0].mxu0
      %v4757 = vadd.f32 %v4463, %v4756
      %v4758 = vpop.f32.mrb[0].mxu0
      %v4759 = vadd.f32 %v4465, %v4758
      %v4760 = vpop.f32.mrb[0].mxu0
      %v4761 = vadd.f32 %v4467, %v4760
      %4762 = vmatprep.mubr.bf16.mxu0 %v4698
      %4763 = vmatmul.mubr.bf16.gmra.mrb[0].mxu0 %v4071
      %v4764 = vpop.f32.mrb[0].mxu0
      %v4765 = vadd.f32 %v4471, %v4764
      %v4766 = vpop.f32.mrb[0].mxu0
      %v4767 = vadd.f32 %v4473, %v4766
      %v4768 = vpop.f32.mrb[0].mxu0
      %v4769 = vadd.f32 %v4475, %v4768
      %v4770 = vpop.f32.mrb[0].mxu0
      %v4771 = vadd.f32 %v4477, %v4770
      %4772 = vdwg.mxu0
      %4773 = vmatprep.subr.bf16.mxu0 0
      %4774 = vmatpush1.bf16.msra.mxu0 %v4636
      %4775 = vmatprep.subr.bf16.mxu0 0
      %4776 = vmatpush1.bf16.msra.mxu0 %v4639
      %4777 = vmatprep.subr.bf16.mxu0 0
      %4778 = vmatpush1.bf16.msra.mxu0 %v4642
      %4779 = vmatprep.subr.bf16.mxu0 0
      %4780 = vmatpush1.bf16.msra.mxu0 %v4645
      %4781 = vmatprep.subr.bf16.mxu0 0
      %4782 = vmatpush1.bf16.msra.mxu0 %v4648
      %4783 = vmatprep.subr.bf16.mxu0 0
      %4784 = vmatpush1.bf16.msra.mxu0 %v4651
      %4785 = vmatprep.subr.bf16.mxu0 0
      %4786 = vmatpush1.bf16.msra.mxu0 %v4654
      %4787 = vmatprep.subr.bf16.mxu0 0
      %4788 = vmatpush1.bf16.msra.mxu0 %v4657
      %4789 = vmatprep.subr.bf16.mxu0 0
      %4790 = vmatpush1.bf16.msra.mxu0 %v4660
      %4791 = vmatprep.subr.bf16.mxu0 0
      %4792 = vmatpush1.bf16.msra.mxu0 0
      %4793 = vmatprep.subr.bf16.mxu0 0
      %4794 = vmatpush1.bf16.msra.mxu0 0
      %4795 = vmatprep.subr.bf16.mxu0 0
      %4796 = vmatpush1.bf16.msra.mxu0 0
      %4797 = vmatprep.subr.bf16.mxu0 0
      %4798 = vmatpush1.bf16.msra.mxu0 0
      %4799 = vmatprep.subr.bf16.mxu0 0
      %4800 = vmatpush1.bf16.msra.mxu0 0
      %4801 = vmatprep.subr.bf16.mxu0 0
      %4802 = vmatpush1.bf16.msra.mxu0 0
      %4803 = vmatprep.subr.bf16.mxu0 0
      %4804 = vmatpush1.bf16.msra.mxu0 0
      %4805 = vmatprep.mubr.bf16.mxu0 %v4689
      %4806 = vmatmul.mubr.bf16.gmra.mrb[0].mxu0 %v4065
      %v4807 = vpop.f32.mrb[0].mxu0
      %v4808 = vadd.f32 %v4514, %v4807
      %v4809 = vpop.f32.mrb[0].mxu0
      %v4810 = vpop.f32.mrb[0].mxu0
      %v4811 = vadd.f32 %v4517, %v4810
      %v4812 = vpop.f32.mrb[0].mxu0
      %4813 = vmatprep.mubr.bf16.mxu0 %v4692
      %4814 = vmatmul.mubr.bf16.gmra.mrb[0].mxu0 %v4067
      %v4815 = vpop.f32.mrb[0].mxu0
      %v4816 = vadd.f32 %v4522, %v4815
      %v4817 = vpop.f32.mrb[0].mxu0
      %v4818 = vpop.f32.mrb[0].mxu0
      %v4819 = vadd.f32 %v4525, %v4818
      %v4820 = vpop.f32.mrb[0].mxu0
      %4821 = vmatprep.mubr.bf16.mxu0 %v4695
      %4822 = vmatmul.mubr.bf16.gmra.mrb[0].mxu0 %v4069
      %v4823 = vpop.f32.mrb[0].mxu0
      %v4824 = vadd.f32 %v4530, %v4823
      %v4825 = vpop.f32.mrb[0].mxu0
      %v4826 = vpop.f32.mrb[0].mxu0
      %v4827 = vadd.f32 %v4533, %v4826
      %v4828 = vpop.f32.mrb[0].mxu0
      %4829 = vmatprep.mubr.bf16.mxu0 %v4698
      %4830 = vmatmul.mubr.bf16.gmra.mrb[0].mxu0 %v4071
      %v4831 = vpop.f32.mrb[0].mxu0
      %v4832 = vadd.f32 %v4538, %v4831
      %v4833 = vpop.f32.mrb[0].mxu0
      %v4834 = vpop.f32.mrb[0].mxu0
      %v4835 = vadd.f32 %v4541, %v4834
      %v4836 = vpop.f32.mrb[0].mxu0
      %4837 = vdwg.mxu0
      %vm4838 = vcmask 1045504
      %v4839 = vrot.slane %v4025, 2
      %v4840 = vrot.slane %v4027, 2
      %v4841 = vsel %vm4838, %v4839, %v4840
      %v4842 = vrot.slane %v4026, 2
      %v4843 = vrot.slane %v4028, 2
      %v4844 = vsel %vm4838, %v4842, %v4843
      %v4845 = vrot.slane %v4029, 2
      %v4846 = vrot.slane %v4031, 2
      %v4847 = vsel %vm4838, %v4845, %v4846
      %v4848 = vrot.slane %v4030, 2
      %v4849 = vrot.slane %v4032, 2
      %v4850 = vsel %vm4838, %v4848, %v4849
      %v4851 = vrot.slane %v4033, 2
      %v4852 = vrot.slane %v4035, 2
      %v4853 = vsel %vm4838, %v4851, %v4852
      %v4854 = vrot.slane %v4034, 2
      %v4855 = vrot.slane %v4036, 2
      %v4856 = vsel %vm4838, %v4854, %v4855
      %v4857 = vrot.slane %v4037, 2
      %v4858 = vrot.slane %v4039, 2
      %v4859 = vsel %vm4838, %v4857, %v4858
      %v4860 = vrot.slane %v4038, 2
      %v4861 = vrot.slane %v4040, 2
      %v4862 = vsel %vm4838, %v4860, %v4861
      %v4863 = vrot.slane %v4041, 2
      %v4864 = vrot.slane %v4043, 2
      %v4865 = vsel %vm4838, %v4863, %v4864
      %v4866 = vrot.slane %v4042, 2
      %v4867 = vrot.slane %v4044, 2
      %v4868 = vsel %vm4838, %v4866, %v4867
      %v4869 = vrot.slane %v4045, 2
      %v4870 = vrot.slane %v4047, 2
      %v4871 = vsel %vm4838, %v4869, %v4870
      %v4872 = vrot.slane %v4046, 2
      %v4873 = vrot.slane %v4048, 2
      %v4874 = vsel %vm4838, %v4872, %v4873
      %v4875 = vrot.slane %v4049, 2
      %v4876 = vrot.slane %v4051, 2
      %v4877 = vsel %vm4838, %v4875, %v4876
      %v4878 = vrot.slane %v4050, 2
      %v4879 = vrot.slane %v4052, 2
      %v4880 = vsel %vm4838, %v4878, %v4879
      %v4881 = vrot.slane %v4053, 2
      %v4882 = vrot.slane %v4055, 2
      %v4883 = vsel %vm4838, %v4881, %v4882
      %v4884 = vrot.slane %v4054, 2
      %v4885 = vrot.slane %v4056, 2
      %v4886 = vsel %vm4838, %v4884, %v4885
      %v4903 = vpack.c.bf16 %v4847, %v4841
      %v4904 = vpack.c.bf16 %v4850, %v4844
      %v4905 = vpack.c.bf16 %v4859, %v4853
      %v4906 = vpack.c.bf16 %v4862, %v4856
      %v4907 = vpack.c.bf16 %v4871, %v4865
      %v4908 = vpack.c.bf16 %v4874, %v4868
      %v4909 = vpack.c.bf16 %v4883, %v4877
      %v4910 = vpack.c.bf16 %v4886, %v4880
      %s4911 = scalar_lea.vmem %s5, 432
      %v4912 = vld [vmem:[%s4911] sm:$0xff]
      %v4913 = vld [vmem:[%s4911 + $0x8] sm:$0xf]
      %v4914 = vld [vmem:[%s4911 + $0xc] sm:$0xff]
      %v4915 = vld [vmem:[%s4911 + $0x14] sm:$0xf]
      %v4916 = vld [vmem:[%s4911 + $0x18] sm:$0xff]
      %v4917 = vld [vmem:[%s4911 + $0x20] sm:$0xf]
      %v4918 = vld [vmem:[%s4911 + $0x24] sm:$0xff]
      %v4919 = vld [vmem:[%s4911 + $0x2c] sm:$0xf]
      %v4920 = vld [vmem:[%s4911 + $0x30] sm:$0xff]
      %v4921 = vld [vmem:[%s4911 + $0x38] sm:$0xf]
      %v4922 = vld [vmem:[%s4911 + $0x3c] sm:$0xff]
      %v4923 = vld [vmem:[%s4911 + $0x44] sm:$0xf]
      %v4924 = vld [vmem:[%s4911 + $0x48] sm:$0xff]
      %v4925 = vld [vmem:[%s4911 + $0x50] sm:$0xf]
      %v4926 = vld [vmem:[%s4911 + $0x54] sm:$0xff]
      %v4927 = vld [vmem:[%s4911 + $0x5c] sm:$0xf]
      %v4928 = vld [vmem:[%s4911 + $0x60] sm:$0xff]
      %v4929 = vld [vmem:[%s4911 + $0x68] sm:$0xf]
      %v4930 = vld [vmem:[%s4911 + $0x6c] sm:$0xff]
      %v4931 = vld [vmem:[%s4911 + $0x74] sm:$0xf]
      %v4932 = vld [vmem:[%s4911 + $0x78] sm:$0xff]
      %v4933 = vld [vmem:[%s4911 + $0x80] sm:$0xf]
      %v4934 = vld [vmem:[%s4911 + $0x84] sm:$0xff]
      %v4935 = vld [vmem:[%s4911 + $0x8c] sm:$0xf]
      %v4936 = vld [vmem:[%s4911 + $0x90] sm:$0xff]
      %v4937 = vld [vmem:[%s4911 + $0x98] sm:$0xf]
      %v4938 = vld [vmem:[%s4911 + $0x9c] sm:$0xff]
      %v4939 = vld [vmem:[%s4911 + $0xa4] sm:$0xf]
      %v4940 = vld [vmem:[%s4911 + $0xa8] sm:$0xff]
      %v4941 = vld [vmem:[%s4911 + $0xb0] sm:$0xf]
      %v4942 = vld [vmem:[%s4911 + $0xb4] sm:$0xff]
      %v4943 = vld [vmem:[%s4911 + $0xbc] sm:$0xf]
      %v4944 = vld [vmem:[%s4911 + $0xc0] sm:$0xff]
      %v4945 = vld [vmem:[%s4911 + $0xc8] sm:$0xf]
      %v4946 = vld [vmem:[%s4911 + $0xcc] sm:$0xff]
      %v4947 = vld [vmem:[%s4911 + $0xd4] sm:$0xf]
      %v4984 = vunpack.c.l.b16 %v4912
      %v4985 = vunpack.c.h.b16 %v4912
      %v4986 = vunpack.c.l.b16 %v4913
      %v4987 = vunpack.c.l.b16 %v4914
      %v4988 = vunpack.c.h.b16 %v4914
      %v4989 = vunpack.c.l.b16 %v4915
      %v4990 = vunpack.c.l.b16 %v4916
      %v4991 = vunpack.c.h.b16 %v4916
      %v4992 = vunpack.c.l.b16 %v4917
      %v4993 = vunpack.c.l.b16 %v4918
      %v4994 = vunpack.c.h.b16 %v4918
      %v4995 = vunpack.c.l.b16 %v4919
      %v4996 = vunpack.c.l.b16 %v4920
      %v4997 = vunpack.c.h.b16 %v4920
      %v4998 = vunpack.c.l.b16 %v4921
      %v4999 = vunpack.c.l.b16 %v4922
      %v5000 = vunpack.c.h.b16 %v4922
      %v5001 = vunpack.c.l.b16 %v4923
      %v5002 = vunpack.c.l.b16 %v4924
      %v5003 = vunpack.c.h.b16 %v4924
      %v5004 = vunpack.c.l.b16 %v4925
      %v5005 = vunpack.c.l.b16 %v4926
      %v5006 = vunpack.c.h.b16 %v4926
      %v5007 = vunpack.c.l.b16 %v4927
      %v5008 = vunpack.c.l.b16 %v4928
      %v5009 = vunpack.c.h.b16 %v4928
      %v5010 = vunpack.c.l.b16 %v4929
      %v5011 = vunpack.c.l.b16 %v4930
      %v5012 = vunpack.c.h.b16 %v4930
      %v5013 = vunpack.c.l.b16 %v4931
      %v5014 = vunpack.c.l.b16 %v4932
      %v5015 = vunpack.c.h.b16 %v4932
      %v5016 = vunpack.c.l.b16 %v4933
      %v5017 = vunpack.c.l.b16 %v4934
      %v5018 = vunpack.c.h.b16 %v4934
      %v5019 = vunpack.c.l.b16 %v4935
      %v5020 = vunpack.c.l.b16 %v4936
      %v5021 = vunpack.c.h.b16 %v4936
      %v5022 = vunpack.c.l.b16 %v4937
      %v5023 = vunpack.c.l.b16 %v4938
      %v5024 = vunpack.c.h.b16 %v4938
      %v5025 = vunpack.c.l.b16 %v4939
      %v5026 = vunpack.c.l.b16 %v4940
      %v5027 = vunpack.c.h.b16 %v4940
      %v5028 = vunpack.c.l.b16 %v4941
      %v5029 = vunpack.c.l.b16 %v4942
      %v5030 = vunpack.c.h.b16 %v4942
      %v5031 = vunpack.c.l.b16 %v4943
      %v5032 = vunpack.c.l.b16 %v4944
      %v5033 = vunpack.c.h.b16 %v4944
      %v5034 = vunpack.c.l.b16 %v4945
      %v5035 = vunpack.c.l.b16 %v4946
      %v5036 = vunpack.c.h.b16 %v4946
      %v5037 = vunpack.c.l.b16 %v4947
      %v5038 = vpack.c.b16 %v4987, %v4984
      %v5039 = vpack.c.b16 %v4988, %v4985
      %v5040 = vpack.c.b16 %v4989, %v4986
      %v5041 = vpack.c.b16 %v4993, %v4990
      %v5042 = vpack.c.b16 %v4994, %v4991
      %v5043 = vpack.c.b16 %v4995, %v4992
      %v5044 = vpack.c.b16 %v4999, %v4996
      %v5045 = vpack.c.b16 %v5000, %v4997
      %v5046 = vpack.c.b16 %v5001, %v4998
      %v5047 = vpack.c.b16 %v5005, %v5002
      %v5048 = vpack.c.b16 %v5006, %v5003
      %v5049 = vpack.c.b16 %v5007, %v5004
      %v5050 = vpack.c.b16 %v5011, %v5008
      %v5051 = vpack.c.b16 %v5012, %v5009
      %v5052 = vpack.c.b16 %v5013, %v5010
      %v5053 = vpack.c.b16 %v5017, %v5014
      %v5054 = vpack.c.b16 %v5018, %v5015
      %v5055 = vpack.c.b16 %v5019, %v5016
      %v5056 = vpack.c.b16 %v5023, %v5020
      %v5057 = vpack.c.b16 %v5024, %v5021
      %v5058 = vpack.c.b16 %v5025, %v5022
      %v5059 = vpack.c.b16 %v5029, %v5026
      %v5060 = vpack.c.b16 %v5030, %v5027
      %v5061 = vpack.c.b16 %v5031, %v5028
      %v5062 = vpack.c.b16 %v5035, %v5032
      %v5063 = vpack.c.b16 %v5036, %v5033
      %v5064 = vpack.c.b16 %v5037, %v5034
      %v5093 = vsel %vm1215, %v4904, 0
      %v5096 = vsel %vm1215, %v4906, 0
      %v5099 = vsel %vm1215, %v4908, 0
      %v5102 = vsel %vm1215, %v4910, 0
      %5104 = vmatprep.subr.bf16.mxu0 %v5039
      %5105 = vmatpush1.bf16.msra.mxu0 %v5038
      %5106 = vmatprep.subr.bf16.mxu0 %v5042
      %5107 = vmatpush1.bf16.msra.mxu0 %v5041
      %5108 = vmatprep.subr.bf16.mxu0 %v5045
      %5109 = vmatpush1.bf16.msra.mxu0 %v5044
      %5110 = vmatprep.subr.bf16.mxu0 %v5048
      %5111 = vmatpush1.bf16.msra.mxu0 %v5047
      %5112 = vmatprep.subr.bf16.mxu0 %v5051
      %5113 = vmatpush1.bf16.msra.mxu0 %v5050
      %5114 = vmatprep.subr.bf16.mxu0 %v5054
      %5115 = vmatpush1.bf16.msra.mxu0 %v5053
      %5116 = vmatprep.subr.bf16.mxu0 %v5057
      %5117 = vmatpush1.bf16.msra.mxu0 %v5056
      %5118 = vmatprep.subr.bf16.mxu0 %v5060
      %5119 = vmatpush1.bf16.msra.mxu0 %v5059
      %5120 = vmatprep.subr.bf16.mxu0 %v5063
      %5121 = vmatpush1.bf16.msra.mxu0 %v5062
      %5122 = vmatprep.subr.bf16.mxu0 0
      %5123 = vmatpush1.bf16.msra.mxu0 0
      %5124 = vmatprep.subr.bf16.mxu0 0
      %5125 = vmatpush1.bf16.msra.mxu0 0
      %5126 = vmatprep.subr.bf16.mxu0 0
      %5127 = vmatpush1.bf16.msra.mxu0 0
      %5128 = vmatprep.subr.bf16.mxu0 0
      %5129 = vmatpush1.bf16.msra.mxu0 0
      %5130 = vmatprep.subr.bf16.mxu0 0
      %5131 = vmatpush1.bf16.msra.mxu0 0
      %5132 = vmatprep.subr.bf16.mxu0 0
      %5133 = vmatpush1.bf16.msra.mxu0 0
      %5134 = vmatprep.subr.bf16.mxu0 0
      %5135 = vmatpush1.bf16.msra.mxu0 0
      %5136 = vmatprep.mubr.bf16.mxu0 %v5093
      %5137 = vmatmul.mubr.bf16.gmra.mrb[0].mxu0 %v4903
      %v5138 = vpop.f32.mrb[0].mxu0
      %v5139 = vadd.f32 0.0, %v5138
      %v5140 = vpop.f32.mrb[0].mxu0
      %v5141 = vadd.f32 0.0, %v5140
      %v5142 = vpop.f32.mrb[0].mxu0
      %v5143 = vadd.f32 0.0, %v5142
      %v5144 = vpop.f32.mrb[0].mxu0
      %v5145 = vadd.f32 0.0, %v5144
      %5146 = vmatprep.mubr.bf16.mxu0 %v5096
      %5147 = vmatmul.mubr.bf16.gmra.mrb[0].mxu0 %v4905
      %v5148 = vpop.f32.mrb[0].mxu0
      %v5149 = vadd.f32 0.0, %v5148
      %v5150 = vpop.f32.mrb[0].mxu0
      %v5151 = vadd.f32 0.0, %v5150
      %v5152 = vpop.f32.mrb[0].mxu0
      %v5153 = vadd.f32 0.0, %v5152
      %v5154 = vpop.f32.mrb[0].mxu0
      %v5155 = vadd.f32 0.0, %v5154
      %5156 = vmatprep.mubr.bf16.mxu0 %v5099
      %5157 = vmatmul.mubr.bf16.gmra.mrb[0].mxu0 %v4907
      %v5158 = vpop.f32.mrb[0].mxu0
      %v5159 = vadd.f32 0.0, %v5158
      %v5160 = vpop.f32.mrb[0].mxu0
      %v5161 = vadd.f32 0.0, %v5160
      %v5162 = vpop.f32.mrb[0].mxu0
      %v5163 = vadd.f32 0.0, %v5162
      %v5164 = vpop.f32.mrb[0].mxu0
      %v5165 = vadd.f32 0.0, %v5164
      %5166 = vmatprep.mubr.bf16.mxu0 %v5102
      %5167 = vmatmul.mubr.bf16.gmra.mrb[0].mxu0 %v4909
      %v5168 = vpop.f32.mrb[0].mxu0
      %v5169 = vadd.f32 0.0, %v5168
      %v5170 = vpop.f32.mrb[0].mxu0
      %v5171 = vadd.f32 0.0, %v5170
      %v5172 = vpop.f32.mrb[0].mxu0
      %v5173 = vadd.f32 0.0, %v5172
      %v5174 = vpop.f32.mrb[0].mxu0
      %v5175 = vadd.f32 0.0, %v5174
      %5176 = vdwg.mxu0
      %5177 = vmatprep.subr.bf16.mxu0 0
      %5178 = vmatpush1.bf16.msra.mxu0 %v5040
      %5179 = vmatprep.subr.bf16.mxu0 0
      %5180 = vmatpush1.bf16.msra.mxu0 %v5043
      %5181 = vmatprep.subr.bf16.mxu0 0
      %5182 = vmatpush1.bf16.msra.mxu0 %v5046
      %5183 = vmatprep.subr.bf16.mxu0 0
      %5184 = vmatpush1.bf16.msra.mxu0 %v5049
      %5185 = vmatprep.subr.bf16.mxu0 0
      %5186 = vmatpush1.bf16.msra.mxu0 %v5052
      %5187 = vmatprep.subr.bf16.mxu0 0
      %5188 = vmatpush1.bf16.msra.mxu0 %v5055
      %5189 = vmatprep.subr.bf16.mxu0 0
      %5190 = vmatpush1.bf16.msra.mxu0 %v5058
      %5191 = vmatprep.subr.bf16.mxu0 0
      %5192 = vmatpush1.bf16.msra.mxu0 %v5061
      %5193 = vmatprep.subr.bf16.mxu0 0
      %5194 = vmatpush1.bf16.msra.mxu0 %v5064
      %5195 = vmatprep.subr.bf16.mxu0 0
      %5196 = vmatpush1.bf16.msra.mxu0 0
      %5197 = vmatprep.subr.bf16.mxu0 0
      %5198 = vmatpush1.bf16.msra.mxu0 0
      %5199 = vmatprep.subr.bf16.mxu0 0
      %5200 = vmatpush1.bf16.msra.mxu0 0
      %5201 = vmatprep.subr.bf16.mxu0 0
      %5202 = vmatpush1.bf16.msra.mxu0 0
      %5203 = vmatprep.subr.bf16.mxu0 0
      %5204 = vmatpush1.bf16.msra.mxu0 0
      %5205 = vmatprep.subr.bf16.mxu0 0
      %5206 = vmatpush1.bf16.msra.mxu0 0
      %5207 = vmatprep.subr.bf16.mxu0 0
      %5208 = vmatpush1.bf16.msra.mxu0 0
      %5209 = vmatprep.mubr.bf16.mxu0 %v5093
      %5210 = vmatmul.mubr.bf16.gmra.mrb[0].mxu0 %v4903
      %v5211 = vpop.f32.mrb[0].mxu0
      %v5212 = vadd.f32 0.0, %v5211
      %v5213 = vpop.f32.mrb[0].mxu0
      %v5214 = vpop.f32.mrb[0].mxu0
      %v5215 = vadd.f32 0.0, %v5214
      %v5216 = vpop.f32.mrb[0].mxu0
      %5217 = vmatprep.mubr.bf16.mxu0 %v5096
      %5218 = vmatmul.mubr.bf16.gmra.mrb[0].mxu0 %v4905
      %v5219 = vpop.f32.mrb[0].mxu0
      %v5220 = vadd.f32 0.0, %v5219
      %v5221 = vpop.f32.mrb[0].mxu0
      %v5222 = vpop.f32.mrb[0].mxu0
      %v5223 = vadd.f32 0.0, %v5222
      %v5224 = vpop.f32.mrb[0].mxu0
      %5225 = vmatprep.mubr.bf16.mxu0 %v5099
      %5226 = vmatmul.mubr.bf16.gmra.mrb[0].mxu0 %v4907
      %v5227 = vpop.f32.mrb[0].mxu0
      %v5228 = vadd.f32 0.0, %v5227
      %v5229 = vpop.f32.mrb[0].mxu0
      %v5230 = vpop.f32.mrb[0].mxu0
      %v5231 = vadd.f32 0.0, %v5230
      %v5232 = vpop.f32.mrb[0].mxu0
      %5233 = vmatprep.mubr.bf16.mxu0 %v5102
      %5234 = vmatmul.mubr.bf16.gmra.mrb[0].mxu0 %v4909
      %v5235 = vpop.f32.mrb[0].mxu0
      %v5236 = vadd.f32 0.0, %v5235
      %v5237 = vpop.f32.mrb[0].mxu0
      %v5238 = vpop.f32.mrb[0].mxu0
      %v5239 = vadd.f32 0.0, %v5238
      %v5240 = vpop.f32.mrb[0].mxu0
      %5241 = vdwg.mxu0
      %v5242 = vadd.f32 %v4735, %v5139
      %v5243 = vadd.f32 %v4737, %v5141
      %v5244 = vadd.f32 %v4808, %v5212
      %v5245 = vadd.f32 %v4739, %v5143
      %v5246 = vadd.f32 %v4741, %v5145
      %v5247 = vadd.f32 %v4811, %v5215
      %v5248 = vadd.f32 %v4745, %v5149
      %v5249 = vadd.f32 %v4747, %v5151
      %v5250 = vadd.f32 %v4816, %v5220
      %v5251 = vadd.f32 %v4749, %v5153
      %v5252 = vadd.f32 %v4751, %v5155
      %v5253 = vadd.f32 %v4819, %v5223
      %v5254 = vadd.f32 %v4755, %v5159
      %v5255 = vadd.f32 %v4757, %v5161
      %v5256 = vadd.f32 %v4824, %v5228
      %v5257 = vadd.f32 %v4759, %v5163
      %v5258 = vadd.f32 %v4761, %v5165
      %v5259 = vadd.f32 %v4827, %v5231
      %v5260 = vadd.f32 %v4765, %v5169
      %v5261 = vadd.f32 %v4767, %v5171
      %v5262 = vadd.f32 %v4832, %v5236
      %v5263 = vadd.f32 %v4769, %v5173
      %v5264 = vadd.f32 %v4771, %v5175
      %v5265 = vadd.f32 %v4835, %v5239
      %v5266 = vpack.c.bf16 %v4033, %v4029
      %v5267 = vpack.c.bf16 %v4034, %v4030
      %v5268 = vpack.c.bf16 %v4041, %v4037
      %v5269 = vpack.c.bf16 %v4042, %v4038
      %v5270 = vpack.c.bf16 %v4049, %v4045
      %v5271 = vpack.c.bf16 %v4050, %v4046
      %v5272 = vpack.c.bf16 %v4057, %v4053
      %v5273 = vpack.c.bf16 %v4058, %v4054
      %s5274 = scalar_lea.vmem %s5, 648
      %v5275 = vld [vmem:[%s5274] sm:$0xff]
      %v5276 = vld [vmem:[%s5274 + $0x8] sm:$0xf]
      %v5277 = vld [vmem:[%s5274 + $0xc] sm:$0xff]
      %v5278 = vld [vmem:[%s5274 + $0x14] sm:$0xf]
      %v5279 = vld [vmem:[%s5274 + $0x18] sm:$0xff]
      %v5280 = vld [vmem:[%s5274 + $0x20] sm:$0xf]
      %v5281 = vld [vmem:[%s5274 + $0x24] sm:$0xff]
      %v5282 = vld [vmem:[%s5274 + $0x2c] sm:$0xf]
      %v5283 = vld [vmem:[%s5274 + $0x30] sm:$0xff]
      %v5284 = vld [vmem:[%s5274 + $0x38] sm:$0xf]
      %v5285 = vld [vmem:[%s5274 + $0x3c] sm:$0xff]
      %v5286 = vld [vmem:[%s5274 + $0x44] sm:$0xf]
      %v5287 = vld [vmem:[%s5274 + $0x48] sm:$0xff]
      %v5288 = vld [vmem:[%s5274 + $0x50] sm:$0xf]
      %v5289 = vld [vmem:[%s5274 + $0x54] sm:$0xff]
      %v5290 = vld [vmem:[%s5274 + $0x5c] sm:$0xf]
      %v5291 = vld [vmem:[%s5274 + $0x60] sm:$0xff]
      %v5292 = vld [vmem:[%s5274 + $0x68] sm:$0xf]
      %v5293 = vld [vmem:[%s5274 + $0x6c] sm:$0xff]
      %v5294 = vld [vmem:[%s5274 + $0x74] sm:$0xf]
      %v5295 = vld [vmem:[%s5274 + $0x78] sm:$0xff]
      %v5296 = vld [vmem:[%s5274 + $0x80] sm:$0xf]
      %v5297 = vld [vmem:[%s5274 + $0x84] sm:$0xff]
      %v5298 = vld [vmem:[%s5274 + $0x8c] sm:$0xf]
      %v5299 = vld [vmem:[%s5274 + $0x90] sm:$0xff]
      %v5300 = vld [vmem:[%s5274 + $0x98] sm:$0xf]
      %v5301 = vld [vmem:[%s5274 + $0x9c] sm:$0xff]
      %v5302 = vld [vmem:[%s5274 + $0xa4] sm:$0xf]
      %v5303 = vld [vmem:[%s5274 + $0xa8] sm:$0xff]
      %v5304 = vld [vmem:[%s5274 + $0xb0] sm:$0xf]
      %v5305 = vld [vmem:[%s5274 + $0xb4] sm:$0xff]
      %v5306 = vld [vmem:[%s5274 + $0xbc] sm:$0xf]
      %v5307 = vld [vmem:[%s5274 + $0xc0] sm:$0xff]
      %v5308 = vld [vmem:[%s5274 + $0xc8] sm:$0xf]
      %v5309 = vld [vmem:[%s5274 + $0xcc] sm:$0xff]
      %v5310 = vld [vmem:[%s5274 + $0xd4] sm:$0xf]
      %v5347 = vunpack.c.l.b16 %v5275
      %v5348 = vunpack.c.h.b16 %v5275
      %v5349 = vunpack.c.l.b16 %v5276
      %v5350 = vunpack.c.l.b16 %v5277
      %v5351 = vunpack.c.h.b16 %v5277
      %v5352 = vunpack.c.l.b16 %v5278
      %v5353 = vunpack.c.l.b16 %v5279
      %v5354 = vunpack.c.h.b16 %v5279
      %v5355 = vunpack.c.l.b16 %v5280
      %v5356 = vunpack.c.l.b16 %v5281
      %v5357 = vunpack.c.h.b16 %v5281
      %v5358 = vunpack.c.l.b16 %v5282
      %v5359 = vunpack.c.l.b16 %v5283
      %v5360 = vunpack.c.h.b16 %v5283
      %v5361 = vunpack.c.l.b16 %v5284
      %v5362 = vunpack.c.l.b16 %v5285
      %v5363 = vunpack.c.h.b16 %v5285
      %v5364 = vunpack.c.l.b16 %v5286
      %v5365 = vunpack.c.l.b16 %v5287
      %v5366 = vunpack.c.h.b16 %v5287
      %v5367 = vunpack.c.l.b16 %v5288
      %v5368 = vunpack.c.l.b16 %v5289
      %v5369 = vunpack.c.h.b16 %v5289
      %v5370 = vunpack.c.l.b16 %v5290
      %v5371 = vunpack.c.l.b16 %v5291
      %v5372 = vunpack.c.h.b16 %v5291
      %v5373 = vunpack.c.l.b16 %v5292
      %v5374 = vunpack.c.l.b16 %v5293
      %v5375 = vunpack.c.h.b16 %v5293
      %v5376 = vunpack.c.l.b16 %v5294
      %v5377 = vunpack.c.l.b16 %v5295
      %v5378 = vunpack.c.h.b16 %v5295
      %v5379 = vunpack.c.l.b16 %v5296
      %v5380 = vunpack.c.l.b16 %v5297
      %v5381 = vunpack.c.h.b16 %v5297
      %v5382 = vunpack.c.l.b16 %v5298
      %v5383 = vunpack.c.l.b16 %v5299
      %v5384 = vunpack.c.h.b16 %v5299
      %v5385 = vunpack.c.l.b16 %v5300
      %v5386 = vunpack.c.l.b16 %v5301
      %v5387 = vunpack.c.h.b16 %v5301
      %v5388 = vunpack.c.l.b16 %v5302
      %v5389 = vunpack.c.l.b16 %v5303
      %v5390 = vunpack.c.h.b16 %v5303
      %v5391 = vunpack.c.l.b16 %v5304
      %v5392 = vunpack.c.l.b16 %v5305
      %v5393 = vunpack.c.h.b16 %v5305
      %v5394 = vunpack.c.l.b16 %v5306
      %v5395 = vunpack.c.l.b16 %v5307
      %v5396 = vunpack.c.h.b16 %v5307
      %v5397 = vunpack.c.l.b16 %v5308
      %v5398 = vunpack.c.l.b16 %v5309
      %v5399 = vunpack.c.h.b16 %v5309
      %v5400 = vunpack.c.l.b16 %v5310
      %v5401 = vpack.c.b16 %v5350, %v5347
      %v5402 = vpack.c.b16 %v5351, %v5348
      %v5403 = vpack.c.b16 %v5352, %v5349
      %v5404 = vpack.c.b16 %v5356, %v5353
      %v5405 = vpack.c.b16 %v5357, %v5354
      %v5406 = vpack.c.b16 %v5358, %v5355
      %v5407 = vpack.c.b16 %v5362, %v5359
      %v5408 = vpack.c.b16 %v5363, %v5360
      %v5409 = vpack.c.b16 %v5364, %v5361
      %v5410 = vpack.c.b16 %v5368, %v5365
      %v5411 = vpack.c.b16 %v5369, %v5366
      %v5412 = vpack.c.b16 %v5370, %v5367
      %v5413 = vpack.c.b16 %v5374, %v5371
      %v5414 = vpack.c.b16 %v5375, %v5372
      %v5415 = vpack.c.b16 %v5376, %v5373
      %v5416 = vpack.c.b16 %v5380, %v5377
      %v5417 = vpack.c.b16 %v5381, %v5378
      %v5418 = vpack.c.b16 %v5382, %v5379
      %v5419 = vpack.c.b16 %v5386, %v5383
      %v5420 = vpack.c.b16 %v5387, %v5384
      %v5421 = vpack.c.b16 %v5388, %v5385
      %v5422 = vpack.c.b16 %v5392, %v5389
      %v5423 = vpack.c.b16 %v5393, %v5390
      %v5424 = vpack.c.b16 %v5394, %v5391
      %v5425 = vpack.c.b16 %v5398, %v5395
      %v5426 = vpack.c.b16 %v5399, %v5396
      %v5427 = vpack.c.b16 %v5400, %v5397
      %v5456 = vsel %vm1215, %v5267, 0
      %v5459 = vsel %vm1215, %v5269, 0
      %v5462 = vsel %vm1215, %v5271, 0
      %v5465 = vsel %vm1215, %v5273, 0
      %5467 = vmatprep.subr.bf16.mxu0 %v5402
      %5468 = vmatpush1.bf16.msra.mxu0 %v5401
      %5469 = vmatprep.subr.bf16.mxu0 %v5405
      %5470 = vmatpush1.bf16.msra.mxu0 %v5404
      %5471 = vmatprep.subr.bf16.mxu0 %v5408
      %5472 = vmatpush1.bf16.msra.mxu0 %v5407
      %5473 = vmatprep.subr.bf16.mxu0 %v5411
      %5474 = vmatpush1.bf16.msra.mxu0 %v5410
      %5475 = vmatprep.subr.bf16.mxu0 %v5414
      %5476 = vmatpush1.bf16.msra.mxu0 %v5413
      %5477 = vmatprep.subr.bf16.mxu0 %v5417
      %5478 = vmatpush1.bf16.msra.mxu0 %v5416
      %5479 = vmatprep.subr.bf16.mxu0 %v5420
      %5480 = vmatpush1.bf16.msra.mxu0 %v5419
      %5481 = vmatprep.subr.bf16.mxu0 %v5423
      %5482 = vmatpush1.bf16.msra.mxu0 %v5422
      %5483 = vmatprep.subr.bf16.mxu0 %v5426
      %5484 = vmatpush1.bf16.msra.mxu0 %v5425
      %5485 = vmatprep.subr.bf16.mxu0 0
      %5486 = vmatpush1.bf16.msra.mxu0 0
      %5487 = vmatprep.subr.bf16.mxu0 0
      %5488 = vmatpush1.bf16.msra.mxu0 0
      %5489 = vmatprep.subr.bf16.mxu0 0
      %5490 = vmatpush1.bf16.msra.mxu0 0
      %5491 = vmatprep.subr.bf16.mxu0 0
      %5492 = vmatpush1.bf16.msra.mxu0 0
      %5493 = vmatprep.subr.bf16.mxu0 0
      %5494 = vmatpush1.bf16.msra.mxu0 0
      %5495 = vmatprep.subr.bf16.mxu0 0
      %5496 = vmatpush1.bf16.msra.mxu0 0
      %5497 = vmatprep.subr.bf16.mxu0 0
      %5498 = vmatpush1.bf16.msra.mxu0 0
      %5499 = vmatprep.mubr.bf16.mxu0 %v5456
      %5500 = vmatmul.mubr.bf16.gmra.mrb[0].mxu0 %v5266
      %v5501 = vpop.f32.mrb[0].mxu0
      %v5502 = vadd.f32 0.0, %v5501
      %v5503 = vpop.f32.mrb[0].mxu0
      %v5504 = vadd.f32 0.0, %v5503
      %v5505 = vpop.f32.mrb[0].mxu0
      %v5506 = vadd.f32 0.0, %v5505
      %v5507 = vpop.f32.mrb[0].mxu0
      %v5508 = vadd.f32 0.0, %v5507
      %5509 = vmatprep.mubr.bf16.mxu0 %v5459
      %5510 = vmatmul.mubr.bf16.gmra.mrb[0].mxu0 %v5268
      %v5511 = vpop.f32.mrb[0].mxu0
      %v5512 = vadd.f32 0.0, %v5511
      %v5513 = vpop.f32.mrb[0].mxu0
      %v5514 = vadd.f32 0.0, %v5513
      %v5515 = vpop.f32.mrb[0].mxu0
      %v5516 = vadd.f32 0.0, %v5515
      %v5517 = vpop.f32.mrb[0].mxu0
      %v5518 = vadd.f32 0.0, %v5517
      %5519 = vmatprep.mubr.bf16.mxu0 %v5462
      %5520 = vmatmul.mubr.bf16.gmra.mrb[0].mxu0 %v5270
      %v5521 = vpop.f32.mrb[0].mxu0
      %v5522 = vadd.f32 0.0, %v5521
      %v5523 = vpop.f32.mrb[0].mxu0
      %v5524 = vadd.f32 0.0, %v5523
      %v5525 = vpop.f32.mrb[0].mxu0
      %v5526 = vadd.f32 0.0, %v5525
      %v5527 = vpop.f32.mrb[0].mxu0
      %v5528 = vadd.f32 0.0, %v5527
      %5529 = vmatprep.mubr.bf16.mxu0 %v5465
      %5530 = vmatmul.mubr.bf16.gmra.mrb[0].mxu0 %v5272
      %v5531 = vpop.f32.mrb[0].mxu0
      %v5532 = vadd.f32 0.0, %v5531
      %v5533 = vpop.f32.mrb[0].mxu0
      %v5534 = vadd.f32 0.0, %v5533
      %v5535 = vpop.f32.mrb[0].mxu0
      %v5536 = vadd.f32 0.0, %v5535
      %v5537 = vpop.f32.mrb[0].mxu0
      %v5538 = vadd.f32 0.0, %v5537
      %5539 = vdwg.mxu0
      %5540 = vmatprep.subr.bf16.mxu0 0
      %5541 = vmatpush1.bf16.msra.mxu0 %v5403
      %5542 = vmatprep.subr.bf16.mxu0 0
      %5543 = vmatpush1.bf16.msra.mxu0 %v5406
      %5544 = vmatprep.subr.bf16.mxu0 0
      %5545 = vmatpush1.bf16.msra.mxu0 %v5409
      %5546 = vmatprep.subr.bf16.mxu0 0
      %5547 = vmatpush1.bf16.msra.mxu0 %v5412
      %5548 = vmatprep.subr.bf16.mxu0 0
      %5549 = vmatpush1.bf16.msra.mxu0 %v5415
      %5550 = vmatprep.subr.bf16.mxu0 0
      %5551 = vmatpush1.bf16.msra.mxu0 %v5418
      %5552 = vmatprep.subr.bf16.mxu0 0
      %5553 = vmatpush1.bf16.msra.mxu0 %v5421
      %5554 = vmatprep.subr.bf16.mxu0 0
      %5555 = vmatpush1.bf16.msra.mxu0 %v5424
      %5556 = vmatprep.subr.bf16.mxu0 0
      %5557 = vmatpush1.bf16.msra.mxu0 %v5427
      %5558 = vmatprep.subr.bf16.mxu0 0
      %5559 = vmatpush1.bf16.msra.mxu0 0
      %5560 = vmatprep.subr.bf16.mxu0 0
      %5561 = vmatpush1.bf16.msra.mxu0 0
      %5562 = vmatprep.subr.bf16.mxu0 0
      %5563 = vmatpush1.bf16.msra.mxu0 0
      %5564 = vmatprep.subr.bf16.mxu0 0
      %5565 = vmatpush1.bf16.msra.mxu0 0
      %5566 = vmatprep.subr.bf16.mxu0 0
      %5567 = vmatpush1.bf16.msra.mxu0 0
      %5568 = vmatprep.subr.bf16.mxu0 0
      %5569 = vmatpush1.bf16.msra.mxu0 0
      %5570 = vmatprep.subr.bf16.mxu0 0
      %5571 = vmatpush1.bf16.msra.mxu0 0
      %5572 = vmatprep.mubr.bf16.mxu0 %v5456
      %5573 = vmatmul.mubr.bf16.gmra.mrb[0].mxu0 %v5266
      %v5574 = vpop.f32.mrb[0].mxu0
      %v5575 = vadd.f32 0.0, %v5574
      %v5576 = vpop.f32.mrb[0].mxu0
      %v5577 = vpop.f32.mrb[0].mxu0
      %v5578 = vadd.f32 0.0, %v5577
      %v5579 = vpop.f32.mrb[0].mxu0
      %5580 = vmatprep.mubr.bf16.mxu0 %v5459
      %5581 = vmatmul.mubr.bf16.gmra.mrb[0].mxu0 %v5268
      %v5582 = vpop.f32.mrb[0].mxu0
      %v5583 = vadd.f32 0.0, %v5582
      %v5584 = vpop.f32.mrb[0].mxu0
      %v5585 = vpop.f32.mrb[0].mxu0
      %v5586 = vadd.f32 0.0, %v5585
      %v5587 = vpop.f32.mrb[0].mxu0
      %5588 = vmatprep.mubr.bf16.mxu0 %v5462
      %5589 = vmatmul.mubr.bf16.gmra.mrb[0].mxu0 %v5270
      %v5590 = vpop.f32.mrb[0].mxu0
      %v5591 = vadd.f32 0.0, %v5590
      %v5592 = vpop.f32.mrb[0].mxu0
      %v5593 = vpop.f32.mrb[0].mxu0
      %v5594 = vadd.f32 0.0, %v5593
      %v5595 = vpop.f32.mrb[0].mxu0
      %5596 = vmatprep.mubr.bf16.mxu0 %v5465
      %5597 = vmatmul.mubr.bf16.gmra.mrb[0].mxu0 %v5272
      %v5598 = vpop.f32.mrb[0].mxu0
      %v5599 = vadd.f32 0.0, %v5598
      %v5600 = vpop.f32.mrb[0].mxu0
      %v5601 = vpop.f32.mrb[0].mxu0
      %v5602 = vadd.f32 0.0, %v5601
      %v5603 = vpop.f32.mrb[0].mxu0
      %5604 = vdwg.mxu0
      %v5605 = vadd.f32 %v5242, %v5502
      %v5606 = vadd.f32 %v5243, %v5504
      %v5607 = vadd.f32 %v5244, %v5575
      %v5608 = vadd.f32 %v5245, %v5506
      %v5609 = vadd.f32 %v5246, %v5508
      %v5610 = vadd.f32 %v5247, %v5578
      %v5611 = vadd.f32 %v5248, %v5512
      %v5612 = vadd.f32 %v5249, %v5514
      %v5613 = vadd.f32 %v5250, %v5583
      %v5614 = vadd.f32 %v5251, %v5516
      %v5615 = vadd.f32 %v5252, %v5518
      %v5616 = vadd.f32 %v5253, %v5586
      %v5617 = vadd.f32 %v5254, %v5522
      %v5618 = vadd.f32 %v5255, %v5524
      %v5619 = vadd.f32 %v5256, %v5591
      %v5620 = vadd.f32 %v5257, %v5526
      %v5621 = vadd.f32 %v5258, %v5528
      %v5622 = vadd.f32 %v5259, %v5594
      %v5623 = vadd.f32 %v5260, %v5532
      %v5624 = vadd.f32 %v5261, %v5534
      %v5625 = vadd.f32 %v5262, %v5599
      %v5626 = vadd.f32 %v5263, %v5536
      %v5627 = vadd.f32 %v5264, %v5538
      %v5628 = vadd.f32 %v5265, %v5602
      %v5633 = vrot.slane %v4057, 1
      %v5634 = vrot.slane %v4059, 1
      %v5635 = vsel %vm2790, %v5633, %v5634
      %v5636 = vrot.slane %v4058, 1
      %v5637 = vrot.slane %v4060, 1
      %v5638 = vsel %vm2790, %v5636, %v5637
      %v5641 = vpack.c.bf16 %v4155, %v4149
      %v5642 = vpack.c.bf16 %v4158, %v4152
      %v5643 = vpack.c.bf16 %v4167, %v4161
      %v5644 = vpack.c.bf16 %v4170, %v4164
      %v5645 = vpack.c.bf16 %v4179, %v4173
      %v5646 = vpack.c.bf16 %v4182, %v4176
      %v5647 = vpack.c.bf16 %v5635, %v4185
      %v5648 = vpack.c.bf16 %v5638, %v4188
      %s5649 = scalar_lea.vmem %s5, 864
      %v5650 = vld [vmem:[%s5649] sm:$0xff]
      %v5651 = vld [vmem:[%s5649 + $0x8] sm:$0xf]
      %v5652 = vld [vmem:[%s5649 + $0xc] sm:$0xff]
      %v5653 = vld [vmem:[%s5649 + $0x14] sm:$0xf]
      %v5654 = vld [vmem:[%s5649 + $0x18] sm:$0xff]
      %v5655 = vld [vmem:[%s5649 + $0x20] sm:$0xf]
      %v5656 = vld [vmem:[%s5649 + $0x24] sm:$0xff]
      %v5657 = vld [vmem:[%s5649 + $0x2c] sm:$0xf]
      %v5658 = vld [vmem:[%s5649 + $0x30] sm:$0xff]
      %v5659 = vld [vmem:[%s5649 + $0x38] sm:$0xf]
      %v5660 = vld [vmem:[%s5649 + $0x3c] sm:$0xff]
      %v5661 = vld [vmem:[%s5649 + $0x44] sm:$0xf]
      %v5662 = vld [vmem:[%s5649 + $0x48] sm:$0xff]
      %v5663 = vld [vmem:[%s5649 + $0x50] sm:$0xf]
      %v5664 = vld [vmem:[%s5649 + $0x54] sm:$0xff]
      %v5665 = vld [vmem:[%s5649 + $0x5c] sm:$0xf]
      %v5666 = vld [vmem:[%s5649 + $0x60] sm:$0xff]
      %v5667 = vld [vmem:[%s5649 + $0x68] sm:$0xf]
      %v5668 = vld [vmem:[%s5649 + $0x6c] sm:$0xff]
      %v5669 = vld [vmem:[%s5649 + $0x74] sm:$0xf]
      %v5670 = vld [vmem:[%s5649 + $0x78] sm:$0xff]
      %v5671 = vld [vmem:[%s5649 + $0x80] sm:$0xf]
      %v5672 = vld [vmem:[%s5649 + $0x84] sm:$0xff]
      %v5673 = vld [vmem:[%s5649 + $0x8c] sm:$0xf]
      %v5674 = vld [vmem:[%s5649 + $0x90] sm:$0xff]
      %v5675 = vld [vmem:[%s5649 + $0x98] sm:$0xf]
      %v5676 = vld [vmem:[%s5649 + $0x9c] sm:$0xff]
      %v5677 = vld [vmem:[%s5649 + $0xa4] sm:$0xf]
      %v5678 = vld [vmem:[%s5649 + $0xa8] sm:$0xff]
      %v5679 = vld [vmem:[%s5649 + $0xb0] sm:$0xf]
      %v5680 = vld [vmem:[%s5649 + $0xb4] sm:$0xff]
      %v5681 = vld [vmem:[%s5649 + $0xbc] sm:$0xf]
      %v5682 = vld [vmem:[%s5649 + $0xc0] sm:$0xff]
      %v5683 = vld [vmem:[%s5649 + $0xc8] sm:$0xf]
      %v5684 = vld [vmem:[%s5649 + $0xcc] sm:$0xff]
      %v5685 = vld [vmem:[%s5649 + $0xd4] sm:$0xf]
      %v5722 = vunpack.c.l.b16 %v5650
      %v5723 = vunpack.c.h.b16 %v5650
      %v5724 = vunpack.c.l.b16 %v5651
      %v5725 = vunpack.c.l.b16 %v5652
      %v5726 = vunpack.c.h.b16 %v5652
      %v5727 = vunpack.c.l.b16 %v5653
      %v5728 = vunpack.c.l.b16 %v5654
      %v5729 = vunpack.c.h.b16 %v5654
      %v5730 = vunpack.c.l.b16 %v5655
      %v5731 = vunpack.c.l.b16 %v5656
      %v5732 = vunpack.c.h.b16 %v5656
      %v5733 = vunpack.c.l.b16 %v5657
      %v5734 = vunpack.c.l.b16 %v5658
      %v5735 = vunpack.c.h.b16 %v5658
      %v5736 = vunpack.c.l.b16 %v5659
      %v5737 = vunpack.c.l.b16 %v5660
      %v5738 = vunpack.c.h.b16 %v5660
      %v5739 = vunpack.c.l.b16 %v5661
      %v5740 = vunpack.c.l.b16 %v5662
      %v5741 = vunpack.c.h.b16 %v5662
      %v5742 = vunpack.c.l.b16 %v5663
      %v5743 = vunpack.c.l.b16 %v5664
      %v5744 = vunpack.c.h.b16 %v5664
      %v5745 = vunpack.c.l.b16 %v5665
      %v5746 = vunpack.c.l.b16 %v5666
      %v5747 = vunpack.c.h.b16 %v5666
      %v5748 = vunpack.c.l.b16 %v5667
      %v5749 = vunpack.c.l.b16 %v5668
      %v5750 = vunpack.c.h.b16 %v5668
      %v5751 = vunpack.c.l.b16 %v5669
      %v5752 = vunpack.c.l.b16 %v5670
      %v5753 = vunpack.c.h.b16 %v5670
      %v5754 = vunpack.c.l.b16 %v5671
      %v5755 = vunpack.c.l.b16 %v5672
      %v5756 = vunpack.c.h.b16 %v5672
      %v5757 = vunpack.c.l.b16 %v5673
      %v5758 = vunpack.c.l.b16 %v5674
      %v5759 = vunpack.c.h.b16 %v5674
      %v5760 = vunpack.c.l.b16 %v5675
      %v5761 = vunpack.c.l.b16 %v5676
      %v5762 = vunpack.c.h.b16 %v5676
      %v5763 = vunpack.c.l.b16 %v5677
      %v5764 = vunpack.c.l.b16 %v5678
      %v5765 = vunpack.c.h.b16 %v5678
      %v5766 = vunpack.c.l.b16 %v5679
      %v5767 = vunpack.c.l.b16 %v5680
      %v5768 = vunpack.c.h.b16 %v5680
      %v5769 = vunpack.c.l.b16 %v5681
      %v5770 = vunpack.c.l.b16 %v5682
      %v5771 = vunpack.c.h.b16 %v5682
      %v5772 = vunpack.c.l.b16 %v5683
      %v5773 = vunpack.c.l.b16 %v5684
      %v5774 = vunpack.c.h.b16 %v5684
      %v5775 = vunpack.c.l.b16 %v5685
      %v5776 = vpack.c.b16 %v5725, %v5722
      %v5777 = vpack.c.b16 %v5726, %v5723
      %v5778 = vpack.c.b16 %v5727, %v5724
      %v5779 = vpack.c.b16 %v5731, %v5728
      %v5780 = vpack.c.b16 %v5732, %v5729
      %v5781 = vpack.c.b16 %v5733, %v5730
      %v5782 = vpack.c.b16 %v5737, %v5734
      %v5783 = vpack.c.b16 %v5738, %v5735
      %v5784 = vpack.c.b16 %v5739, %v5736
      %v5785 = vpack.c.b16 %v5743, %v5740
      %v5786 = vpack.c.b16 %v5744, %v5741
      %v5787 = vpack.c.b16 %v5745, %v5742
      %v5788 = vpack.c.b16 %v5749, %v5746
      %v5789 = vpack.c.b16 %v5750, %v5747
      %v5790 = vpack.c.b16 %v5751, %v5748
      %v5791 = vpack.c.b16 %v5755, %v5752
      %v5792 = vpack.c.b16 %v5756, %v5753
      %v5793 = vpack.c.b16 %v5757, %v5754
      %v5794 = vpack.c.b16 %v5761, %v5758
      %v5795 = vpack.c.b16 %v5762, %v5759
      %v5796 = vpack.c.b16 %v5763, %v5760
      %v5797 = vpack.c.b16 %v5767, %v5764
      %v5798 = vpack.c.b16 %v5768, %v5765
      %v5799 = vpack.c.b16 %v5769, %v5766
      %v5800 = vpack.c.b16 %v5773, %v5770
      %v5801 = vpack.c.b16 %v5774, %v5771
      %v5802 = vpack.c.b16 %v5775, %v5772
      %v5831 = vsel %vm1215, %v5642, 0
      %v5834 = vsel %vm1215, %v5644, 0
      %v5837 = vsel %vm1215, %v5646, 0
      %v5840 = vsel %vm1215, %v5648, 0
      %5842 = vmatprep.subr.bf16.mxu0 %v5777
      %5843 = vmatpush1.bf16.msra.mxu0 %v5776
      %5844 = vmatprep.subr.bf16.mxu0 %v5780
      %5845 = vmatpush1.bf16.msra.mxu0 %v5779
      %5846 = vmatprep.subr.bf16.mxu0 %v5783
      %5847 = vmatpush1.bf16.msra.mxu0 %v5782
      %5848 = vmatprep.subr.bf16.mxu0 %v5786
      %5849 = vmatpush1.bf16.msra.mxu0 %v5785
      %5850 = vmatprep.subr.bf16.mxu0 %v5789
      %5851 = vmatpush1.bf16.msra.mxu0 %v5788
      %5852 = vmatprep.subr.bf16.mxu0 %v5792
      %5853 = vmatpush1.bf16.msra.mxu0 %v5791
      %5854 = vmatprep.subr.bf16.mxu0 %v5795
      %5855 = vmatpush1.bf16.msra.mxu0 %v5794
      %5856 = vmatprep.subr.bf16.mxu0 %v5798
      %5857 = vmatpush1.bf16.msra.mxu0 %v5797
      %5858 = vmatprep.subr.bf16.mxu0 %v5801
      %5859 = vmatpush1.bf16.msra.mxu0 %v5800
      %5860 = vmatprep.subr.bf16.mxu0 0
      %5861 = vmatpush1.bf16.msra.mxu0 0
      %5862 = vmatprep.subr.bf16.mxu0 0
      %5863 = vmatpush1.bf16.msra.mxu0 0
      %5864 = vmatprep.subr.bf16.mxu0 0
      %5865 = vmatpush1.bf16.msra.mxu0 0
      %5866 = vmatprep.subr.bf16.mxu0 0
      %5867 = vmatpush1.bf16.msra.mxu0 0
      %5868 = vmatprep.subr.bf16.mxu0 0
      %5869 = vmatpush1.bf16.msra.mxu0 0
      %5870 = vmatprep.subr.bf16.mxu0 0
      %5871 = vmatpush1.bf16.msra.mxu0 0
      %5872 = vmatprep.subr.bf16.mxu0 0
      %5873 = vmatpush1.bf16.msra.mxu0 0
      %5874 = vmatprep.mubr.bf16.mxu0 %v5831
      %5875 = vmatmul.mubr.bf16.gmra.mrb[0].mxu0 %v5641
      %v5876 = vpop.f32.mrb[0].mxu0
      %v5877 = vadd.f32 0.0, %v5876
      %v5878 = vpop.f32.mrb[0].mxu0
      %v5879 = vadd.f32 0.0, %v5878
      %v5880 = vpop.f32.mrb[0].mxu0
      %v5881 = vadd.f32 0.0, %v5880
      %v5882 = vpop.f32.mrb[0].mxu0
      %v5883 = vadd.f32 0.0, %v5882
      %5884 = vmatprep.mubr.bf16.mxu0 %v5834
      %5885 = vmatmul.mubr.bf16.gmra.mrb[0].mxu0 %v5643
      %v5886 = vpop.f32.mrb[0].mxu0
      %v5887 = vadd.f32 0.0, %v5886
      %v5888 = vpop.f32.mrb[0].mxu0
      %v5889 = vadd.f32 0.0, %v5888
      %v5890 = vpop.f32.mrb[0].mxu0
      %v5891 = vadd.f32 0.0, %v5890
      %v5892 = vpop.f32.mrb[0].mxu0
      %v5893 = vadd.f32 0.0, %v5892
      %5894 = vmatprep.mubr.bf16.mxu0 %v5837
      %5895 = vmatmul.mubr.bf16.gmra.mrb[0].mxu0 %v5645
      %v5896 = vpop.f32.mrb[0].mxu0
      %v5897 = vadd.f32 0.0, %v5896
      %v5898 = vpop.f32.mrb[0].mxu0
      %v5899 = vadd.f32 0.0, %v5898
      %v5900 = vpop.f32.mrb[0].mxu0
      %v5901 = vadd.f32 0.0, %v5900
      %v5902 = vpop.f32.mrb[0].mxu0
      %v5903 = vadd.f32 0.0, %v5902
      %5904 = vmatprep.mubr.bf16.mxu0 %v5840
      %5905 = vmatmul.mubr.bf16.gmra.mrb[0].mxu0 %v5647
      %v5906 = vpop.f32.mrb[0].mxu0
      %v5907 = vadd.f32 0.0, %v5906
      %v5908 = vpop.f32.mrb[0].mxu0
      %v5909 = vadd.f32 0.0, %v5908
      %v5910 = vpop.f32.mrb[0].mxu0
      %v5911 = vadd.f32 0.0, %v5910
      %v5912 = vpop.f32.mrb[0].mxu0
      %v5913 = vadd.f32 0.0, %v5912
      %5914 = vdwg.mxu0
      %5915 = vmatprep.subr.bf16.mxu0 0
      %5916 = vmatpush1.bf16.msra.mxu0 %v5778
      %5917 = vmatprep.subr.bf16.mxu0 0
      %5918 = vmatpush1.bf16.msra.mxu0 %v5781
      %5919 = vmatprep.subr.bf16.mxu0 0
      %5920 = vmatpush1.bf16.msra.mxu0 %v5784
      %5921 = vmatprep.subr.bf16.mxu0 0
      %5922 = vmatpush1.bf16.msra.mxu0 %v5787
      %5923 = vmatprep.subr.bf16.mxu0 0
      %5924 = vmatpush1.bf16.msra.mxu0 %v5790
      %5925 = vmatprep.subr.bf16.mxu0 0
      %5926 = vmatpush1.bf16.msra.mxu0 %v5793
      %5927 = vmatprep.subr.bf16.mxu0 0
      %5928 = vmatpush1.bf16.msra.mxu0 %v5796
      %5929 = vmatprep.subr.bf16.mxu0 0
      %5930 = vmatpush1.bf16.msra.mxu0 %v5799
      %5931 = vmatprep.subr.bf16.mxu0 0
      %5932 = vmatpush1.bf16.msra.mxu0 %v5802
      %5933 = vmatprep.subr.bf16.mxu0 0
      %5934 = vmatpush1.bf16.msra.mxu0 0
      %5935 = vmatprep.subr.bf16.mxu0 0
      %5936 = vmatpush1.bf16.msra.mxu0 0
      %5937 = vmatprep.subr.bf16.mxu0 0
      %5938 = vmatpush1.bf16.msra.mxu0 0
      %5939 = vmatprep.subr.bf16.mxu0 0
      %5940 = vmatpush1.bf16.msra.mxu0 0
      %5941 = vmatprep.subr.bf16.mxu0 0
      %5942 = vmatpush1.bf16.msra.mxu0 0
      %5943 = vmatprep.subr.bf16.mxu0 0
      %5944 = vmatpush1.bf16.msra.mxu0 0
      %5945 = vmatprep.subr.bf16.mxu0 0
      %5946 = vmatpush1.bf16.msra.mxu0 0
      %5947 = vmatprep.mubr.bf16.mxu0 %v5831
      %5948 = vmatmul.mubr.bf16.gmra.mrb[0].mxu0 %v5641
      %v5949 = vpop.f32.mrb[0].mxu0
      %v5950 = vadd.f32 0.0, %v5949
      %v5951 = vpop.f32.mrb[0].mxu0
      %v5952 = vpop.f32.mrb[0].mxu0
      %v5953 = vadd.f32 0.0, %v5952
      %v5954 = vpop.f32.mrb[0].mxu0
      %5955 = vmatprep.mubr.bf16.mxu0 %v5834
      %5956 = vmatmul.mubr.bf16.gmra.mrb[0].mxu0 %v5643
      %v5957 = vpop.f32.mrb[0].mxu0
      %v5958 = vadd.f32 0.0, %v5957
      %v5959 = vpop.f32.mrb[0].mxu0
      %v5960 = vpop.f32.mrb[0].mxu0
      %v5961 = vadd.f32 0.0, %v5960
      %v5962 = vpop.f32.mrb[0].mxu0
      %5963 = vmatprep.mubr.bf16.mxu0 %v5837
      %5964 = vmatmul.mubr.bf16.gmra.mrb[0].mxu0 %v5645
      %v5965 = vpop.f32.mrb[0].mxu0
      %v5966 = vadd.f32 0.0, %v5965
      %v5967 = vpop.f32.mrb[0].mxu0
      %v5968 = vpop.f32.mrb[0].mxu0
      %v5969 = vadd.f32 0.0, %v5968
      %v5970 = vpop.f32.mrb[0].mxu0
      %5971 = vmatprep.mubr.bf16.mxu0 %v5840
      %5972 = vmatmul.mubr.bf16.gmra.mrb[0].mxu0 %v5647
      %v5973 = vpop.f32.mrb[0].mxu0
      %v5974 = vadd.f32 0.0, %v5973
      %v5975 = vpop.f32.mrb[0].mxu0
      %v5976 = vpop.f32.mrb[0].mxu0
      %v5977 = vadd.f32 0.0, %v5976
      %v5978 = vpop.f32.mrb[0].mxu0
      %5979 = vdwg.mxu0
      %v5980 = vadd.f32 %v5605, %v5877
      %v5981 = vadd.f32 %v5606, %v5879
      %v5982 = vadd.f32 %v5607, %v5950
      %v5983 = vadd.f32 %v5608, %v5881
      %v5984 = vadd.f32 %v5609, %v5883
      %v5985 = vadd.f32 %v5610, %v5953
      %v5986 = vadd.f32 %v5611, %v5887
      %v5987 = vadd.f32 %v5612, %v5889
      %v5988 = vadd.f32 %v5613, %v5958
      %v5989 = vadd.f32 %v5614, %v5891
      %v5990 = vadd.f32 %v5615, %v5893
      %v5991 = vadd.f32 %v5616, %v5961
      %v5992 = vadd.f32 %v5617, %v5897
      %v5993 = vadd.f32 %v5618, %v5899
      %v5994 = vadd.f32 %v5619, %v5966
      %v5995 = vadd.f32 %v5620, %v5901
      %v5996 = vadd.f32 %v5621, %v5903
      %v5997 = vadd.f32 %v5622, %v5969
      %v5998 = vadd.f32 %v5623, %v5907
      %v5999 = vadd.f32 %v5624, %v5909
      %v6000 = vadd.f32 %v5625, %v5974
      %v6001 = vadd.f32 %v5626, %v5911
      %v6002 = vadd.f32 %v5627, %v5913
      %v6003 = vadd.f32 %v5628, %v5977
      %v6004 = vrot.slane %v4057, 2
      %v6005 = vrot.slane %v4059, 2
      %v6006 = vsel %vm4838, %v6004, %v6005
      %v6007 = vrot.slane %v4058, 2
      %v6008 = vrot.slane %v4060, 2
      %v6009 = vsel %vm4838, %v6007, %v6008
      %v6012 = vpack.c.bf16 %v4853, %v4847
      %v6013 = vpack.c.bf16 %v4856, %v4850
      %v6014 = vpack.c.bf16 %v4865, %v4859
      %v6015 = vpack.c.bf16 %v4868, %v4862
      %v6016 = vpack.c.bf16 %v4877, %v4871
      %v6017 = vpack.c.bf16 %v4880, %v4874
      %v6018 = vpack.c.bf16 %v6006, %v4883
      %v6019 = vpack.c.bf16 %v6009, %v4886
      %s6020 = scalar_lea.vmem %s5, 1080
      %v6021 = vld [vmem:[%s6020] sm:$0xff]
      %v6022 = vld [vmem:[%s6020 + $0x8] sm:$0xf]
      %v6023 = vld [vmem:[%s6020 + $0xc] sm:$0xff]
      %v6024 = vld [vmem:[%s6020 + $0x14] sm:$0xf]
      %v6025 = vld [vmem:[%s6020 + $0x18] sm:$0xff]
      %v6026 = vld [vmem:[%s6020 + $0x20] sm:$0xf]
      %v6027 = vld [vmem:[%s6020 + $0x24] sm:$0xff]
      %v6028 = vld [vmem:[%s6020 + $0x2c] sm:$0xf]
      %v6029 = vld [vmem:[%s6020 + $0x30] sm:$0xff]
      %v6030 = vld [vmem:[%s6020 + $0x38] sm:$0xf]
      %v6031 = vld [vmem:[%s6020 + $0x3c] sm:$0xff]
      %v6032 = vld [vmem:[%s6020 + $0x44] sm:$0xf]
      %v6033 = vld [vmem:[%s6020 + $0x48] sm:$0xff]
      %v6034 = vld [vmem:[%s6020 + $0x50] sm:$0xf]
      %v6035 = vld [vmem:[%s6020 + $0x54] sm:$0xff]
      %v6036 = vld [vmem:[%s6020 + $0x5c] sm:$0xf]
      %v6037 = vld [vmem:[%s6020 + $0x60] sm:$0xff]
      %v6038 = vld [vmem:[%s6020 + $0x68] sm:$0xf]
      %v6039 = vld [vmem:[%s6020 + $0x6c] sm:$0xff]
      %v6040 = vld [vmem:[%s6020 + $0x74] sm:$0xf]
      %v6041 = vld [vmem:[%s6020 + $0x78] sm:$0xff]
      %v6042 = vld [vmem:[%s6020 + $0x80] sm:$0xf]
      %v6043 = vld [vmem:[%s6020 + $0x84] sm:$0xff]
      %v6044 = vld [vmem:[%s6020 + $0x8c] sm:$0xf]
      %v6045 = vld [vmem:[%s6020 + $0x90] sm:$0xff]
      %v6046 = vld [vmem:[%s6020 + $0x98] sm:$0xf]
      %v6047 = vld [vmem:[%s6020 + $0x9c] sm:$0xff]
      %v6048 = vld [vmem:[%s6020 + $0xa4] sm:$0xf]
      %v6049 = vld [vmem:[%s6020 + $0xa8] sm:$0xff]
      %v6050 = vld [vmem:[%s6020 + $0xb0] sm:$0xf]
      %v6051 = vld [vmem:[%s6020 + $0xb4] sm:$0xff]
      %v6052 = vld [vmem:[%s6020 + $0xbc] sm:$0xf]
      %v6053 = vld [vmem:[%s6020 + $0xc0] sm:$0xff]
      %v6054 = vld [vmem:[%s6020 + $0xc8] sm:$0xf]
      %v6055 = vld [vmem:[%s6020 + $0xcc] sm:$0xff]
      %v6056 = vld [vmem:[%s6020 + $0xd4] sm:$0xf]
      %v6093 = vunpack.c.l.b16 %v6021
      %v6094 = vunpack.c.h.b16 %v6021
      %v6095 = vunpack.c.l.b16 %v6022
      %v6096 = vunpack.c.l.b16 %v6023
      %v6097 = vunpack.c.h.b16 %v6023
      %v6098 = vunpack.c.l.b16 %v6024
      %v6099 = vunpack.c.l.b16 %v6025
      %v6100 = vunpack.c.h.b16 %v6025
      %v6101 = vunpack.c.l.b16 %v6026
      %v6102 = vunpack.c.l.b16 %v6027
      %v6103 = vunpack.c.h.b16 %v6027
      %v6104 = vunpack.c.l.b16 %v6028
      %v6105 = vunpack.c.l.b16 %v6029
      %v6106 = vunpack.c.h.b16 %v6029
      %v6107 = vunpack.c.l.b16 %v6030
      %v6108 = vunpack.c.l.b16 %v6031
      %v6109 = vunpack.c.h.b16 %v6031
      %v6110 = vunpack.c.l.b16 %v6032
      %v6111 = vunpack.c.l.b16 %v6033
      %v6112 = vunpack.c.h.b16 %v6033
      %v6113 = vunpack.c.l.b16 %v6034
      %v6114 = vunpack.c.l.b16 %v6035
      %v6115 = vunpack.c.h.b16 %v6035
      %v6116 = vunpack.c.l.b16 %v6036
      %v6117 = vunpack.c.l.b16 %v6037
      %v6118 = vunpack.c.h.b16 %v6037
      %v6119 = vunpack.c.l.b16 %v6038
      %v6120 = vunpack.c.l.b16 %v6039
      %v6121 = vunpack.c.h.b16 %v6039
      %v6122 = vunpack.c.l.b16 %v6040
      %v6123 = vunpack.c.l.b16 %v6041
      %v6124 = vunpack.c.h.b16 %v6041
      %v6125 = vunpack.c.l.b16 %v6042
      %v6126 = vunpack.c.l.b16 %v6043
      %v6127 = vunpack.c.h.b16 %v6043
      %v6128 = vunpack.c.l.b16 %v6044
      %v6129 = vunpack.c.l.b16 %v6045
      %v6130 = vunpack.c.h.b16 %v6045
      %v6131 = vunpack.c.l.b16 %v6046
      %v6132 = vunpack.c.l.b16 %v6047
      %v6133 = vunpack.c.h.b16 %v6047
      %v6134 = vunpack.c.l.b16 %v6048
      %v6135 = vunpack.c.l.b16 %v6049
      %v6136 = vunpack.c.h.b16 %v6049
      %v6137 = vunpack.c.l.b16 %v6050
      %v6138 = vunpack.c.l.b16 %v6051
      %v6139 = vunpack.c.h.b16 %v6051
      %v6140 = vunpack.c.l.b16 %v6052
      %v6141 = vunpack.c.l.b16 %v6053
      %v6142 = vunpack.c.h.b16 %v6053
      %v6143 = vunpack.c.l.b16 %v6054
      %v6144 = vunpack.c.l.b16 %v6055
      %v6145 = vunpack.c.h.b16 %v6055
      %v6146 = vunpack.c.l.b16 %v6056
      %v6147 = vpack.c.b16 %v6096, %v6093
      %v6148 = vpack.c.b16 %v6097, %v6094
      %v6149 = vpack.c.b16 %v6098, %v6095
      %v6150 = vpack.c.b16 %v6102, %v6099
      %v6151 = vpack.c.b16 %v6103, %v6100
      %v6152 = vpack.c.b16 %v6104, %v6101
      %v6153 = vpack.c.b16 %v6108, %v6105
      %v6154 = vpack.c.b16 %v6109, %v6106
      %v6155 = vpack.c.b16 %v6110, %v6107
      %v6156 = vpack.c.b16 %v6114, %v6111
      %v6157 = vpack.c.b16 %v6115, %v6112
      %v6158 = vpack.c.b16 %v6116, %v6113
      %v6159 = vpack.c.b16 %v6120, %v6117
      %v6160 = vpack.c.b16 %v6121, %v6118
      %v6161 = vpack.c.b16 %v6122, %v6119
      %v6162 = vpack.c.b16 %v6126, %v6123
      %v6163 = vpack.c.b16 %v6127, %v6124
      %v6164 = vpack.c.b16 %v6128, %v6125
      %v6165 = vpack.c.b16 %v6132, %v6129
      %v6166 = vpack.c.b16 %v6133, %v6130
      %v6167 = vpack.c.b16 %v6134, %v6131
      %v6168 = vpack.c.b16 %v6138, %v6135
      %v6169 = vpack.c.b16 %v6139, %v6136
      %v6170 = vpack.c.b16 %v6140, %v6137
      %v6171 = vpack.c.b16 %v6144, %v6141
      %v6172 = vpack.c.b16 %v6145, %v6142
      %v6173 = vpack.c.b16 %v6146, %v6143
      %v6202 = vsel %vm1215, %v6013, 0
      %v6205 = vsel %vm1215, %v6015, 0
      %v6208 = vsel %vm1215, %v6017, 0
      %v6211 = vsel %vm1215, %v6019, 0
      %6213 = vmatprep.subr.bf16.mxu0 %v6148
      %6214 = vmatpush1.bf16.msra.mxu0 %v6147
      %6215 = vmatprep.subr.bf16.mxu0 %v6151
      %6216 = vmatpush1.bf16.msra.mxu0 %v6150
      %6217 = vmatprep.subr.bf16.mxu0 %v6154
      %6218 = vmatpush1.bf16.msra.mxu0 %v6153
      %6219 = vmatprep.subr.bf16.mxu0 %v6157
      %6220 = vmatpush1.bf16.msra.mxu0 %v6156
      %6221 = vmatprep.subr.bf16.mxu0 %v6160
      %6222 = vmatpush1.bf16.msra.mxu0 %v6159
      %6223 = vmatprep.subr.bf16.mxu0 %v6163
      %6224 = vmatpush1.bf16.msra.mxu0 %v6162
      %6225 = vmatprep.subr.bf16.mxu0 %v6166
      %6226 = vmatpush1.bf16.msra.mxu0 %v6165
      %6227 = vmatprep.subr.bf16.mxu0 %v6169
      %6228 = vmatpush1.bf16.msra.mxu0 %v6168
      %6229 = vmatprep.subr.bf16.mxu0 %v6172
      %6230 = vmatpush1.bf16.msra.mxu0 %v6171
      %6231 = vmatprep.subr.bf16.mxu0 0
      %6232 = vmatpush1.bf16.msra.mxu0 0
      %6233 = vmatprep.subr.bf16.mxu0 0
      %6234 = vmatpush1.bf16.msra.mxu0 0
      %6235 = vmatprep.subr.bf16.mxu0 0
      %6236 = vmatpush1.bf16.msra.mxu0 0
      %6237 = vmatprep.subr.bf16.mxu0 0
      %6238 = vmatpush1.bf16.msra.mxu0 0
      %6239 = vmatprep.subr.bf16.mxu0 0
      %6240 = vmatpush1.bf16.msra.mxu0 0
      %6241 = vmatprep.subr.bf16.mxu0 0
      %6242 = vmatpush1.bf16.msra.mxu0 0
      %6243 = vmatprep.subr.bf16.mxu0 0
      %6244 = vmatpush1.bf16.msra.mxu0 0
      %6245 = vmatprep.mubr.bf16.mxu0 %v6202
      %6246 = vmatmul.mubr.bf16.gmra.mrb[0].mxu0 %v6012
      %v6247 = vpop.f32.mrb[0].mxu0
      %v6248 = vadd.f32 0.0, %v6247
      %v6249 = vpop.f32.mrb[0].mxu0
      %v6250 = vadd.f32 0.0, %v6249
      %v6251 = vpop.f32.mrb[0].mxu0
      %v6252 = vadd.f32 0.0, %v6251
      %v6253 = vpop.f32.mrb[0].mxu0
      %v6254 = vadd.f32 0.0, %v6253
      %6255 = vmatprep.mubr.bf16.mxu0 %v6205
      %6256 = vmatmul.mubr.bf16.gmra.mrb[0].mxu0 %v6014
      %v6257 = vpop.f32.mrb[0].mxu0
      %v6258 = vadd.f32 0.0, %v6257
      %v6259 = vpop.f32.mrb[0].mxu0
      %v6260 = vadd.f32 0.0, %v6259
      %v6261 = vpop.f32.mrb[0].mxu0
      %v6262 = vadd.f32 0.0, %v6261
      %v6263 = vpop.f32.mrb[0].mxu0
      %v6264 = vadd.f32 0.0, %v6263
      %6265 = vmatprep.mubr.bf16.mxu0 %v6208
      %6266 = vmatmul.mubr.bf16.gmra.mrb[0].mxu0 %v6016
      %v6267 = vpop.f32.mrb[0].mxu0
      %v6268 = vadd.f32 0.0, %v6267
      %v6269 = vpop.f32.mrb[0].mxu0
      %v6270 = vadd.f32 0.0, %v6269
      %v6271 = vpop.f32.mrb[0].mxu0
      %v6272 = vadd.f32 0.0, %v6271
      %v6273 = vpop.f32.mrb[0].mxu0
      %v6274 = vadd.f32 0.0, %v6273
      %6275 = vmatprep.mubr.bf16.mxu0 %v6211
      %6276 = vmatmul.mubr.bf16.gmra.mrb[0].mxu0 %v6018
      %v6277 = vpop.f32.mrb[0].mxu0
      %v6278 = vadd.f32 0.0, %v6277
      %v6279 = vpop.f32.mrb[0].mxu0
      %v6280 = vadd.f32 0.0, %v6279
      %v6281 = vpop.f32.mrb[0].mxu0
      %v6282 = vadd.f32 0.0, %v6281
      %v6283 = vpop.f32.mrb[0].mxu0
      %v6284 = vadd.f32 0.0, %v6283
      %6285 = vdwg.mxu0
      %6286 = vmatprep.subr.bf16.mxu0 0
      %6287 = vmatpush1.bf16.msra.mxu0 %v6149
      %6288 = vmatprep.subr.bf16.mxu0 0
      %6289 = vmatpush1.bf16.msra.mxu0 %v6152
      %6290 = vmatprep.subr.bf16.mxu0 0
      %6291 = vmatpush1.bf16.msra.mxu0 %v6155
      %6292 = vmatprep.subr.bf16.mxu0 0
      %6293 = vmatpush1.bf16.msra.mxu0 %v6158
      %6294 = vmatprep.subr.bf16.mxu0 0
      %6295 = vmatpush1.bf16.msra.mxu0 %v6161
      %6296 = vmatprep.subr.bf16.mxu0 0
      %6297 = vmatpush1.bf16.msra.mxu0 %v6164
      %6298 = vmatprep.subr.bf16.mxu0 0
      %6299 = vmatpush1.bf16.msra.mxu0 %v6167
      %6300 = vmatprep.subr.bf16.mxu0 0
      %6301 = vmatpush1.bf16.msra.mxu0 %v6170
      %6302 = vmatprep.subr.bf16.mxu0 0
      %6303 = vmatpush1.bf16.msra.mxu0 %v6173
      %6304 = vmatprep.subr.bf16.mxu0 0
      %6305 = vmatpush1.bf16.msra.mxu0 0
      %6306 = vmatprep.subr.bf16.mxu0 0
      %6307 = vmatpush1.bf16.msra.mxu0 0
      %6308 = vmatprep.subr.bf16.mxu0 0
      %6309 = vmatpush1.bf16.msra.mxu0 0
      %6310 = vmatprep.subr.bf16.mxu0 0
      %6311 = vmatpush1.bf16.msra.mxu0 0
      %6312 = vmatprep.subr.bf16.mxu0 0
      %6313 = vmatpush1.bf16.msra.mxu0 0
      %6314 = vmatprep.subr.bf16.mxu0 0
      %6315 = vmatpush1.bf16.msra.mxu0 0
      %6316 = vmatprep.subr.bf16.mxu0 0
      %6317 = vmatpush1.bf16.msra.mxu0 0
      %6318 = vmatprep.mubr.bf16.mxu0 %v6202
      %6319 = vmatmul.mubr.bf16.gmra.mrb[0].mxu0 %v6012
      %v6320 = vpop.f32.mrb[0].mxu0
      %v6321 = vadd.f32 0.0, %v6320
      %v6322 = vpop.f32.mrb[0].mxu0
      %v6323 = vpop.f32.mrb[0].mxu0
      %v6324 = vadd.f32 0.0, %v6323
      %v6325 = vpop.f32.mrb[0].mxu0
      %6326 = vmatprep.mubr.bf16.mxu0 %v6205
      %6327 = vmatmul.mubr.bf16.gmra.mrb[0].mxu0 %v6014
      %v6328 = vpop.f32.mrb[0].mxu0
      %v6329 = vadd.f32 0.0, %v6328
      %v6330 = vpop.f32.mrb[0].mxu0
      %v6331 = vpop.f32.mrb[0].mxu0
      %v6332 = vadd.f32 0.0, %v6331
      %v6333 = vpop.f32.mrb[0].mxu0
      %6334 = vmatprep.mubr.bf16.mxu0 %v6208
      %6335 = vmatmul.mubr.bf16.gmra.mrb[0].mxu0 %v6016
      %v6336 = vpop.f32.mrb[0].mxu0
      %v6337 = vadd.f32 0.0, %v6336
      %v6338 = vpop.f32.mrb[0].mxu0
      %v6339 = vpop.f32.mrb[0].mxu0
      %v6340 = vadd.f32 0.0, %v6339
      %v6341 = vpop.f32.mrb[0].mxu0
      %6342 = vmatprep.mubr.bf16.mxu0 %v6211
      %6343 = vmatmul.mubr.bf16.gmra.mrb[0].mxu0 %v6018
      %v6344 = vpop.f32.mrb[0].mxu0
      %v6345 = vadd.f32 0.0, %v6344
      %v6346 = vpop.f32.mrb[0].mxu0
      %v6347 = vpop.f32.mrb[0].mxu0
      %v6348 = vadd.f32 0.0, %v6347
      %v6349 = vpop.f32.mrb[0].mxu0
      %6350 = vdwg.mxu0
      %v6351 = vadd.f32 %v5980, %v6248
      %v6352 = vadd.f32 %v5981, %v6250
      %v6353 = vadd.f32 %v5982, %v6321
      %v6354 = vadd.f32 %v5983, %v6252
      %v6355 = vadd.f32 %v5984, %v6254
      %v6356 = vadd.f32 %v5985, %v6324
      %v6357 = vadd.f32 %v5986, %v6258
      %v6358 = vadd.f32 %v5987, %v6260
      %v6359 = vadd.f32 %v5988, %v6329
      %v6360 = vadd.f32 %v5989, %v6262
      %v6361 = vadd.f32 %v5990, %v6264
      %v6362 = vadd.f32 %v5991, %v6332
      %v6363 = vadd.f32 %v5992, %v6268
      %v6364 = vadd.f32 %v5993, %v6270
      %v6365 = vadd.f32 %v5994, %v6337
      %v6366 = vadd.f32 %v5995, %v6272
      %v6367 = vadd.f32 %v5996, %v6274
      %v6368 = vadd.f32 %v5997, %v6340
      %v6369 = vadd.f32 %v5998, %v6278
      %v6370 = vadd.f32 %v5999, %v6280
      %v6371 = vadd.f32 %v6000, %v6345
      %v6372 = vadd.f32 %v6001, %v6282
      %v6373 = vadd.f32 %v6002, %v6284
      %v6374 = vadd.f32 %v6003, %v6348
      %v6375 = vpack.c.bf16 %v4061, %v4057
      %v6376 = vpack.c.bf16 %v4062, %v4058
      %s6377 = scalar_lea.vmem %s5, 1296
      %v6378 = vld [vmem:[%s6377] sm:$0xff]
      %v6379 = vld [vmem:[%s6377 + $0x8] sm:$0xf]
      %v6380 = vld [vmem:[%s6377 + $0xc] sm:$0xff]
      %v6381 = vld [vmem:[%s6377 + $0x14] sm:$0xf]
      %v6382 = vld [vmem:[%s6377 + $0x18] sm:$0xff]
      %v6383 = vld [vmem:[%s6377 + $0x20] sm:$0xf]
      %v6384 = vld [vmem:[%s6377 + $0x24] sm:$0xff]
      %v6385 = vld [vmem:[%s6377 + $0x2c] sm:$0xf]
      %v6386 = vld [vmem:[%s6377 + $0x30] sm:$0xff]
      %v6387 = vld [vmem:[%s6377 + $0x38] sm:$0xf]
      %v6388 = vld [vmem:[%s6377 + $0x3c] sm:$0xff]
      %v6389 = vld [vmem:[%s6377 + $0x44] sm:$0xf]
      %v6390 = vld [vmem:[%s6377 + $0x48] sm:$0xff]
      %v6391 = vld [vmem:[%s6377 + $0x50] sm:$0xf]
      %v6392 = vld [vmem:[%s6377 + $0x54] sm:$0xff]
      %v6393 = vld [vmem:[%s6377 + $0x5c] sm:$0xf]
      %v6394 = vld [vmem:[%s6377 + $0x60] sm:$0xff]
      %v6395 = vld [vmem:[%s6377 + $0x68] sm:$0xf]
      %v6396 = vld [vmem:[%s6377 + $0x6c] sm:$0xff]
      %v6397 = vld [vmem:[%s6377 + $0x74] sm:$0xf]
      %v6398 = vld [vmem:[%s6377 + $0x78] sm:$0xff]
      %v6399 = vld [vmem:[%s6377 + $0x80] sm:$0xf]
      %v6400 = vld [vmem:[%s6377 + $0x84] sm:$0xff]
      %v6401 = vld [vmem:[%s6377 + $0x8c] sm:$0xf]
      %v6402 = vld [vmem:[%s6377 + $0x90] sm:$0xff]
      %v6403 = vld [vmem:[%s6377 + $0x98] sm:$0xf]
      %v6404 = vld [vmem:[%s6377 + $0x9c] sm:$0xff]
      %v6405 = vld [vmem:[%s6377 + $0xa4] sm:$0xf]
      %v6406 = vld [vmem:[%s6377 + $0xa8] sm:$0xff]
      %v6407 = vld [vmem:[%s6377 + $0xb0] sm:$0xf]
      %v6408 = vld [vmem:[%s6377 + $0xb4] sm:$0xff]
      %v6409 = vld [vmem:[%s6377 + $0xbc] sm:$0xf]
      %v6410 = vld [vmem:[%s6377 + $0xc0] sm:$0xff]
      %v6411 = vld [vmem:[%s6377 + $0xc8] sm:$0xf]
      %v6412 = vld [vmem:[%s6377 + $0xcc] sm:$0xff]
      %v6413 = vld [vmem:[%s6377 + $0xd4] sm:$0xf]
      %v6450 = vunpack.c.l.b16 %v6378
      %v6451 = vunpack.c.h.b16 %v6378
      %v6452 = vunpack.c.l.b16 %v6379
      %v6453 = vunpack.c.l.b16 %v6380
      %v6454 = vunpack.c.h.b16 %v6380
      %v6455 = vunpack.c.l.b16 %v6381
      %v6456 = vunpack.c.l.b16 %v6382
      %v6457 = vunpack.c.h.b16 %v6382
      %v6458 = vunpack.c.l.b16 %v6383
      %v6459 = vunpack.c.l.b16 %v6384
      %v6460 = vunpack.c.h.b16 %v6384
      %v6461 = vunpack.c.l.b16 %v6385
      %v6462 = vunpack.c.l.b16 %v6386
      %v6463 = vunpack.c.h.b16 %v6386
      %v6464 = vunpack.c.l.b16 %v6387
      %v6465 = vunpack.c.l.b16 %v6388
      %v6466 = vunpack.c.h.b16 %v6388
      %v6467 = vunpack.c.l.b16 %v6389
      %v6468 = vunpack.c.l.b16 %v6390
      %v6469 = vunpack.c.h.b16 %v6390
      %v6470 = vunpack.c.l.b16 %v6391
      %v6471 = vunpack.c.l.b16 %v6392
      %v6472 = vunpack.c.h.b16 %v6392
      %v6473 = vunpack.c.l.b16 %v6393
      %v6474 = vunpack.c.l.b16 %v6394
      %v6475 = vunpack.c.h.b16 %v6394
      %v6476 = vunpack.c.l.b16 %v6395
      %v6477 = vunpack.c.l.b16 %v6396
      %v6478 = vunpack.c.h.b16 %v6396
      %v6479 = vunpack.c.l.b16 %v6397
      %v6480 = vunpack.c.l.b16 %v6398
      %v6481 = vunpack.c.h.b16 %v6398
      %v6482 = vunpack.c.l.b16 %v6399
      %v6483 = vunpack.c.l.b16 %v6400
      %v6484 = vunpack.c.h.b16 %v6400
      %v6485 = vunpack.c.l.b16 %v6401
      %v6486 = vunpack.c.l.b16 %v6402
      %v6487 = vunpack.c.h.b16 %v6402
      %v6488 = vunpack.c.l.b16 %v6403
      %v6489 = vunpack.c.l.b16 %v6404
      %v6490 = vunpack.c.h.b16 %v6404
      %v6491 = vunpack.c.l.b16 %v6405
      %v6492 = vunpack.c.l.b16 %v6406
      %v6493 = vunpack.c.h.b16 %v6406
      %v6494 = vunpack.c.l.b16 %v6407
      %v6495 = vunpack.c.l.b16 %v6408
      %v6496 = vunpack.c.h.b16 %v6408
      %v6497 = vunpack.c.l.b16 %v6409
      %v6498 = vunpack.c.l.b16 %v6410
      %v6499 = vunpack.c.h.b16 %v6410
      %v6500 = vunpack.c.l.b16 %v6411
      %v6501 = vunpack.c.l.b16 %v6412
      %v6502 = vunpack.c.h.b16 %v6412
      %v6503 = vunpack.c.l.b16 %v6413
      %v6504 = vpack.c.b16 %v6453, %v6450
      %v6505 = vpack.c.b16 %v6454, %v6451
      %v6506 = vpack.c.b16 %v6455, %v6452
      %v6507 = vpack.c.b16 %v6459, %v6456
      %v6508 = vpack.c.b16 %v6460, %v6457
      %v6509 = vpack.c.b16 %v6461, %v6458
      %v6510 = vpack.c.b16 %v6465, %v6462
      %v6511 = vpack.c.b16 %v6466, %v6463
      %v6512 = vpack.c.b16 %v6467, %v6464
      %v6513 = vpack.c.b16 %v6471, %v6468
      %v6514 = vpack.c.b16 %v6472, %v6469
      %v6515 = vpack.c.b16 %v6473, %v6470
      %v6516 = vpack.c.b16 %v6477, %v6474
      %v6517 = vpack.c.b16 %v6478, %v6475
      %v6518 = vpack.c.b16 %v6479, %v6476
      %v6519 = vpack.c.b16 %v6483, %v6480
      %v6520 = vpack.c.b16 %v6484, %v6481
      %v6521 = vpack.c.b16 %v6485, %v6482
      %v6522 = vpack.c.b16 %v6489, %v6486
      %v6523 = vpack.c.b16 %v6490, %v6487
      %v6524 = vpack.c.b16 %v6491, %v6488
      %v6525 = vpack.c.b16 %v6495, %v6492
      %v6526 = vpack.c.b16 %v6496, %v6493
      %v6527 = vpack.c.b16 %v6497, %v6494
      %v6528 = vpack.c.b16 %v6501, %v6498
      %v6529 = vpack.c.b16 %v6502, %v6499
      %v6530 = vpack.c.b16 %v6503, %v6500
      %v6559 = vsel %vm1215, %v6376, 0
      %6561 = vmatprep.subr.bf16.mxu0 %v6505
      %6562 = vmatpush1.bf16.msra.mxu0 %v6504
      %6563 = vmatprep.subr.bf16.mxu0 %v6508
      %6564 = vmatpush1.bf16.msra.mxu0 %v6507
      %6565 = vmatprep.subr.bf16.mxu0 %v6511
      %6566 = vmatpush1.bf16.msra.mxu0 %v6510
      %6567 = vmatprep.subr.bf16.mxu0 %v6514
      %6568 = vmatpush1.bf16.msra.mxu0 %v6513
      %6569 = vmatprep.subr.bf16.mxu0 %v6517
      %6570 = vmatpush1.bf16.msra.mxu0 %v6516
      %6571 = vmatprep.subr.bf16.mxu0 %v6520
      %6572 = vmatpush1.bf16.msra.mxu0 %v6519
      %6573 = vmatprep.subr.bf16.mxu0 %v6523
      %6574 = vmatpush1.bf16.msra.mxu0 %v6522
      %6575 = vmatprep.subr.bf16.mxu0 %v6526
      %6576 = vmatpush1.bf16.msra.mxu0 %v6525
      %6577 = vmatprep.subr.bf16.mxu0 %v6529
      %6578 = vmatpush1.bf16.msra.mxu0 %v6528
      %6579 = vmatprep.subr.bf16.mxu0 0
      %6580 = vmatpush1.bf16.msra.mxu0 0
      %6581 = vmatprep.subr.bf16.mxu0 0
      %6582 = vmatpush1.bf16.msra.mxu0 0
      %6583 = vmatprep.subr.bf16.mxu0 0
      %6584 = vmatpush1.bf16.msra.mxu0 0
      %6585 = vmatprep.subr.bf16.mxu0 0
      %6586 = vmatpush1.bf16.msra.mxu0 0
      %6587 = vmatprep.subr.bf16.mxu0 0
      %6588 = vmatpush1.bf16.msra.mxu0 0
      %6589 = vmatprep.subr.bf16.mxu0 0
      %6590 = vmatpush1.bf16.msra.mxu0 0
      %6591 = vmatprep.subr.bf16.mxu0 0
      %6592 = vmatpush1.bf16.msra.mxu0 0
      %6593 = vmatprep.mubr.bf16.mxu0 %v4692
      %6594 = vmatmul.mubr.bf16.gmra.mrb[0].mxu0 %v4067
      %v6595 = vpop.f32.mrb[0].mxu0
      %v6596 = vadd.f32 0.0, %v6595
      %v6597 = vpop.f32.mrb[0].mxu0
      %v6598 = vadd.f32 0.0, %v6597
      %v6599 = vpop.f32.mrb[0].mxu0
      %v6600 = vadd.f32 0.0, %v6599
      %v6601 = vpop.f32.mrb[0].mxu0
      %v6602 = vadd.f32 0.0, %v6601
      %6603 = vmatprep.mubr.bf16.mxu0 %v4695
      %6604 = vmatmul.mubr.bf16.gmra.mrb[0].mxu0 %v4069
      %v6605 = vpop.f32.mrb[0].mxu0
      %v6606 = vadd.f32 0.0, %v6605
      %v6607 = vpop.f32.mrb[0].mxu0
      %v6608 = vadd.f32 0.0, %v6607
      %v6609 = vpop.f32.mrb[0].mxu0
      %v6610 = vadd.f32 0.0, %v6609
      %v6611 = vpop.f32.mrb[0].mxu0
      %v6612 = vadd.f32 0.0, %v6611
      %6613 = vmatprep.mubr.bf16.mxu0 %v4698
      %6614 = vmatmul.mubr.bf16.gmra.mrb[0].mxu0 %v4071
      %v6615 = vpop.f32.mrb[0].mxu0
      %v6616 = vadd.f32 0.0, %v6615
      %v6617 = vpop.f32.mrb[0].mxu0
      %v6618 = vadd.f32 0.0, %v6617
      %v6619 = vpop.f32.mrb[0].mxu0
      %v6620 = vadd.f32 0.0, %v6619
      %v6621 = vpop.f32.mrb[0].mxu0
      %v6622 = vadd.f32 0.0, %v6621
      %6623 = vmatprep.mubr.bf16.mxu0 %v6559
      %6624 = vmatmul.mubr.bf16.gmra.mrb[0].mxu0 %v6375
      %v6625 = vpop.f32.mrb[0].mxu0
      %v6626 = vadd.f32 0.0, %v6625
      %v6627 = vpop.f32.mrb[0].mxu0
      %v6628 = vadd.f32 0.0, %v6627
      %v6629 = vpop.f32.mrb[0].mxu0
      %v6630 = vadd.f32 0.0, %v6629
      %v6631 = vpop.f32.mrb[0].mxu0
      %v6632 = vadd.f32 0.0, %v6631
      %6633 = vdwg.mxu0
      %6634 = vmatprep.subr.bf16.mxu0 0
      %6635 = vmatpush1.bf16.msra.mxu0 %v6506
      %6636 = vmatprep.subr.bf16.mxu0 0
      %6637 = vmatpush1.bf16.msra.mxu0 %v6509
      %6638 = vmatprep.subr.bf16.mxu0 0
      %6639 = vmatpush1.bf16.msra.mxu0 %v6512
      %6640 = vmatprep.subr.bf16.mxu0 0
      %6641 = vmatpush1.bf16.msra.mxu0 %v6515
      %6642 = vmatprep.subr.bf16.mxu0 0
      %6643 = vmatpush1.bf16.msra.mxu0 %v6518
      %6644 = vmatprep.subr.bf16.mxu0 0
      %6645 = vmatpush1.bf16.msra.mxu0 %v6521
      %6646 = vmatprep.subr.bf16.mxu0 0
      %6647 = vmatpush1.bf16.msra.mxu0 %v6524
      %6648 = vmatprep.subr.bf16.mxu0 0
      %6649 = vmatpush1.bf16.msra.mxu0 %v6527
      %6650 = vmatprep.subr.bf16.mxu0 0
      %6651 = vmatpush1.bf16.msra.mxu0 %v6530
      %6652 = vmatprep.subr.bf16.mxu0 0
      %6653 = vmatpush1.bf16.msra.mxu0 0
      %6654 = vmatprep.subr.bf16.mxu0 0
      %6655 = vmatpush1.bf16.msra.mxu0 0
      %6656 = vmatprep.subr.bf16.mxu0 0
      %6657 = vmatpush1.bf16.msra.mxu0 0
      %6658 = vmatprep.subr.bf16.mxu0 0
      %6659 = vmatpush1.bf16.msra.mxu0 0
      %6660 = vmatprep.subr.bf16.mxu0 0
      %6661 = vmatpush1.bf16.msra.mxu0 0
      %6662 = vmatprep.subr.bf16.mxu0 0
      %6663 = vmatpush1.bf16.msra.mxu0 0
      %6664 = vmatprep.subr.bf16.mxu0 0
      %6665 = vmatpush1.bf16.msra.mxu0 0
      %6666 = vmatprep.mubr.bf16.mxu0 %v4692
      %6667 = vmatmul.mubr.bf16.gmra.mrb[0].mxu0 %v4067
      %v6668 = vpop.f32.mrb[0].mxu0
      %v6669 = vadd.f32 0.0, %v6668
      %v6670 = vpop.f32.mrb[0].mxu0
      %v6671 = vpop.f32.mrb[0].mxu0
      %v6672 = vadd.f32 0.0, %v6671
      %v6673 = vpop.f32.mrb[0].mxu0
      %6674 = vmatprep.mubr.bf16.mxu0 %v4695
      %6675 = vmatmul.mubr.bf16.gmra.mrb[0].mxu0 %v4069
      %v6676 = vpop.f32.mrb[0].mxu0
      %v6677 = vadd.f32 0.0, %v6676
      %v6678 = vpop.f32.mrb[0].mxu0
      %v6679 = vpop.f32.mrb[0].mxu0
      %v6680 = vadd.f32 0.0, %v6679
      %v6681 = vpop.f32.mrb[0].mxu0
      %6682 = vmatprep.mubr.bf16.mxu0 %v4698
      %6683 = vmatmul.mubr.bf16.gmra.mrb[0].mxu0 %v4071
      %v6684 = vpop.f32.mrb[0].mxu0
      %v6685 = vadd.f32 0.0, %v6684
      %v6686 = vpop.f32.mrb[0].mxu0
      %v6687 = vpop.f32.mrb[0].mxu0
      %v6688 = vadd.f32 0.0, %v6687
      %v6689 = vpop.f32.mrb[0].mxu0
      %6690 = vmatprep.mubr.bf16.mxu0 %v6559
      %6691 = vmatmul.mubr.bf16.gmra.mrb[0].mxu0 %v6375
      %v6692 = vpop.f32.mrb[0].mxu0
      %v6693 = vadd.f32 0.0, %v6692
      %v6694 = vpop.f32.mrb[0].mxu0
      %v6695 = vpop.f32.mrb[0].mxu0
      %v6696 = vadd.f32 0.0, %v6695
      %v6697 = vpop.f32.mrb[0].mxu0
      %6698 = vdwg.mxu0
      %v6699 = vadd.f32 %v6351, %v6596
      %v6700 = vadd.f32 %v6352, %v6598
      %v6701 = vadd.f32 %v6353, %v6669
      %v6702 = vadd.f32 %v6354, %v6600
      %v6703 = vadd.f32 %v6355, %v6602
      %v6704 = vadd.f32 %v6356, %v6672
      %v6705 = vadd.f32 %v6357, %v6606
      %v6706 = vadd.f32 %v6358, %v6608
      %v6707 = vadd.f32 %v6359, %v6677
      %v6708 = vadd.f32 %v6360, %v6610
      %v6709 = vadd.f32 %v6361, %v6612
      %v6710 = vadd.f32 %v6362, %v6680
      %v6711 = vadd.f32 %v6363, %v6616
      %v6712 = vadd.f32 %v6364, %v6618
      %v6713 = vadd.f32 %v6365, %v6685
      %v6714 = vadd.f32 %v6366, %v6620
      %v6715 = vadd.f32 %v6367, %v6622
      %v6716 = vadd.f32 %v6368, %v6688
      %v6717 = vadd.f32 %v6369, %v6626
      %v6718 = vadd.f32 %v6370, %v6628
      %v6719 = vadd.f32 %v6371, %v6693
      %v6720 = vadd.f32 %v6372, %v6630
      %v6721 = vadd.f32 %v6373, %v6632
      %v6722 = vadd.f32 %v6374, %v6696
      %v6727 = vrot.slane %v4061, 1
      %v6728 = vrot.slane %v4063, 1
      %v6729 = vsel %vm2790, %v6727, %v6728
      %v6730 = vrot.slane %v4062, 1
      %v6731 = vrot.slane %v4064, 1
      %v6732 = vsel %vm2790, %v6730, %v6731
      %v6735 = vpack.c.bf16 %v6729, %v5635
      %v6736 = vpack.c.bf16 %v6732, %v5638
      %s6737 = scalar_lea.vmem %s5, 1512
      %v6738 = vld [vmem:[%s6737] sm:$0xff]
      %v6739 = vld [vmem:[%s6737 + $0x8] sm:$0xf]
      %v6740 = vld [vmem:[%s6737 + $0xc] sm:$0xff]
      %v6741 = vld [vmem:[%s6737 + $0x14] sm:$0xf]
      %v6742 = vld [vmem:[%s6737 + $0x18] sm:$0xff]
      %v6743 = vld [vmem:[%s6737 + $0x20] sm:$0xf]
      %v6744 = vld [vmem:[%s6737 + $0x24] sm:$0xff]
      %v6745 = vld [vmem:[%s6737 + $0x2c] sm:$0xf]
      %v6746 = vld [vmem:[%s6737 + $0x30] sm:$0xff]
      %v6747 = vld [vmem:[%s6737 + $0x38] sm:$0xf]
      %v6748 = vld [vmem:[%s6737 + $0x3c] sm:$0xff]
      %v6749 = vld [vmem:[%s6737 + $0x44] sm:$0xf]
      %v6750 = vld [vmem:[%s6737 + $0x48] sm:$0xff]
      %v6751 = vld [vmem:[%s6737 + $0x50] sm:$0xf]
      %v6752 = vld [vmem:[%s6737 + $0x54] sm:$0xff]
      %v6753 = vld [vmem:[%s6737 + $0x5c] sm:$0xf]
      %v6754 = vld [vmem:[%s6737 + $0x60] sm:$0xff]
      %v6755 = vld [vmem:[%s6737 + $0x68] sm:$0xf]
      %v6756 = vld [vmem:[%s6737 + $0x6c] sm:$0xff]
      %v6757 = vld [vmem:[%s6737 + $0x74] sm:$0xf]
      %v6758 = vld [vmem:[%s6737 + $0x78] sm:$0xff]
      %v6759 = vld [vmem:[%s6737 + $0x80] sm:$0xf]
      %v6760 = vld [vmem:[%s6737 + $0x84] sm:$0xff]
      %v6761 = vld [vmem:[%s6737 + $0x8c] sm:$0xf]
      %v6762 = vld [vmem:[%s6737 + $0x90] sm:$0xff]
      %v6763 = vld [vmem:[%s6737 + $0x98] sm:$0xf]
      %v6764 = vld [vmem:[%s6737 + $0x9c] sm:$0xff]
      %v6765 = vld [vmem:[%s6737 + $0xa4] sm:$0xf]
      %v6766 = vld [vmem:[%s6737 + $0xa8] sm:$0xff]
      %v6767 = vld [vmem:[%s6737 + $0xb0] sm:$0xf]
      %v6768 = vld [vmem:[%s6737 + $0xb4] sm:$0xff]
      %v6769 = vld [vmem:[%s6737 + $0xbc] sm:$0xf]
      %v6770 = vld [vmem:[%s6737 + $0xc0] sm:$0xff]
      %v6771 = vld [vmem:[%s6737 + $0xc8] sm:$0xf]
      %v6772 = vld [vmem:[%s6737 + $0xcc] sm:$0xff]
      %v6773 = vld [vmem:[%s6737 + $0xd4] sm:$0xf]
      %v6810 = vunpack.c.l.b16 %v6738
      %v6811 = vunpack.c.h.b16 %v6738
      %v6812 = vunpack.c.l.b16 %v6739
      %v6813 = vunpack.c.l.b16 %v6740
      %v6814 = vunpack.c.h.b16 %v6740
      %v6815 = vunpack.c.l.b16 %v6741
      %v6816 = vunpack.c.l.b16 %v6742
      %v6817 = vunpack.c.h.b16 %v6742
      %v6818 = vunpack.c.l.b16 %v6743
      %v6819 = vunpack.c.l.b16 %v6744
      %v6820 = vunpack.c.h.b16 %v6744
      %v6821 = vunpack.c.l.b16 %v6745
      %v6822 = vunpack.c.l.b16 %v6746
      %v6823 = vunpack.c.h.b16 %v6746
      %v6824 = vunpack.c.l.b16 %v6747
      %v6825 = vunpack.c.l.b16 %v6748
      %v6826 = vunpack.c.h.b16 %v6748
      %v6827 = vunpack.c.l.b16 %v6749
      %v6828 = vunpack.c.l.b16 %v6750
      %v6829 = vunpack.c.h.b16 %v6750
      %v6830 = vunpack.c.l.b16 %v6751
      %v6831 = vunpack.c.l.b16 %v6752
      %v6832 = vunpack.c.h.b16 %v6752
      %v6833 = vunpack.c.l.b16 %v6753
      %v6834 = vunpack.c.l.b16 %v6754
      %v6835 = vunpack.c.h.b16 %v6754
      %v6836 = vunpack.c.l.b16 %v6755
      %v6837 = vunpack.c.l.b16 %v6756
      %v6838 = vunpack.c.h.b16 %v6756
      %v6839 = vunpack.c.l.b16 %v6757
      %v6840 = vunpack.c.l.b16 %v6758
      %v6841 = vunpack.c.h.b16 %v6758
      %v6842 = vunpack.c.l.b16 %v6759
      %v6843 = vunpack.c.l.b16 %v6760
      %v6844 = vunpack.c.h.b16 %v6760
      %v6845 = vunpack.c.l.b16 %v6761
      %v6846 = vunpack.c.l.b16 %v6762
      %v6847 = vunpack.c.h.b16 %v6762
      %v6848 = vunpack.c.l.b16 %v6763
      %v6849 = vunpack.c.l.b16 %v6764
      %v6850 = vunpack.c.h.b16 %v6764
      %v6851 = vunpack.c.l.b16 %v6765
      %v6852 = vunpack.c.l.b16 %v6766
      %v6853 = vunpack.c.h.b16 %v6766
      %v6854 = vunpack.c.l.b16 %v6767
      %v6855 = vunpack.c.l.b16 %v6768
      %v6856 = vunpack.c.h.b16 %v6768
      %v6857 = vunpack.c.l.b16 %v6769
      %v6858 = vunpack.c.l.b16 %v6770
      %v6859 = vunpack.c.h.b16 %v6770
      %v6860 = vunpack.c.l.b16 %v6771
      %v6861 = vunpack.c.l.b16 %v6772
      %v6862 = vunpack.c.h.b16 %v6772
      %v6863 = vunpack.c.l.b16 %v6773
      %v6864 = vpack.c.b16 %v6813, %v6810
      %v6865 = vpack.c.b16 %v6814, %v6811
      %v6866 = vpack.c.b16 %v6815, %v6812
      %v6867 = vpack.c.b16 %v6819, %v6816
      %v6868 = vpack.c.b16 %v6820, %v6817
      %v6869 = vpack.c.b16 %v6821, %v6818
      %v6870 = vpack.c.b16 %v6825, %v6822
      %v6871 = vpack.c.b16 %v6826, %v6823
      %v6872 = vpack.c.b16 %v6827, %v6824
      %v6873 = vpack.c.b16 %v6831, %v6828
      %v6874 = vpack.c.b16 %v6832, %v6829
      %v6875 = vpack.c.b16 %v6833, %v6830
      %v6876 = vpack.c.b16 %v6837, %v6834
      %v6877 = vpack.c.b16 %v6838, %v6835
      %v6878 = vpack.c.b16 %v6839, %v6836
      %v6879 = vpack.c.b16 %v6843, %v6840
      %v6880 = vpack.c.b16 %v6844, %v6841
      %v6881 = vpack.c.b16 %v6845, %v6842
      %v6882 = vpack.c.b16 %v6849, %v6846
      %v6883 = vpack.c.b16 %v6850, %v6847
      %v6884 = vpack.c.b16 %v6851, %v6848
      %v6885 = vpack.c.b16 %v6855, %v6852
      %v6886 = vpack.c.b16 %v6856, %v6853
      %v6887 = vpack.c.b16 %v6857, %v6854
      %v6888 = vpack.c.b16 %v6861, %v6858
      %v6889 = vpack.c.b16 %v6862, %v6859
      %v6890 = vpack.c.b16 %v6863, %v6860
      %v6919 = vsel %vm1215, %v6736, 0
      %6921 = vmatprep.subr.bf16.mxu0 %v6865
      %6922 = vmatpush1.bf16.msra.mxu0 %v6864
      %6923 = vmatprep.subr.bf16.mxu0 %v6868
      %6924 = vmatpush1.bf16.msra.mxu0 %v6867
      %6925 = vmatprep.subr.bf16.mxu0 %v6871
      %6926 = vmatpush1.bf16.msra.mxu0 %v6870
      %6927 = vmatprep.subr.bf16.mxu0 %v6874
      %6928 = vmatpush1.bf16.msra.mxu0 %v6873
      %6929 = vmatprep.subr.bf16.mxu0 %v6877
      %6930 = vmatpush1.bf16.msra.mxu0 %v6876
      %6931 = vmatprep.subr.bf16.mxu0 %v6880
      %6932 = vmatpush1.bf16.msra.mxu0 %v6879
      %6933 = vmatprep.subr.bf16.mxu0 %v6883
      %6934 = vmatpush1.bf16.msra.mxu0 %v6882
      %6935 = vmatprep.subr.bf16.mxu0 %v6886
      %6936 = vmatpush1.bf16.msra.mxu0 %v6885
      %6937 = vmatprep.subr.bf16.mxu0 %v6889
      %6938 = vmatpush1.bf16.msra.mxu0 %v6888
      %6939 = vmatprep.subr.bf16.mxu0 0
      %6940 = vmatpush1.bf16.msra.mxu0 0
      %6941 = vmatprep.subr.bf16.mxu0 0
      %6942 = vmatpush1.bf16.msra.mxu0 0
      %6943 = vmatprep.subr.bf16.mxu0 0
      %6944 = vmatpush1.bf16.msra.mxu0 0
      %6945 = vmatprep.subr.bf16.mxu0 0
      %6946 = vmatpush1.bf16.msra.mxu0 0
      %6947 = vmatprep.subr.bf16.mxu0 0
      %6948 = vmatpush1.bf16.msra.mxu0 0
      %6949 = vmatprep.subr.bf16.mxu0 0
      %6950 = vmatpush1.bf16.msra.mxu0 0
      %6951 = vmatprep.subr.bf16.mxu0 0
      %6952 = vmatpush1.bf16.msra.mxu0 0
      %6953 = vmatprep.mubr.bf16.mxu0 %v4398
      %6954 = vmatmul.mubr.bf16.gmra.mrb[0].mxu0 %v4207
      %v6955 = vpop.f32.mrb[0].mxu0
      %v6956 = vadd.f32 0.0, %v6955
      %v6957 = vpop.f32.mrb[0].mxu0
      %v6958 = vadd.f32 0.0, %v6957
      %v6959 = vpop.f32.mrb[0].mxu0
      %v6960 = vadd.f32 0.0, %v6959
      %v6961 = vpop.f32.mrb[0].mxu0
      %v6962 = vadd.f32 0.0, %v6961
      %6963 = vmatprep.mubr.bf16.mxu0 %v4401
      %6964 = vmatmul.mubr.bf16.gmra.mrb[0].mxu0 %v4209
      %v6965 = vpop.f32.mrb[0].mxu0
      %v6966 = vadd.f32 0.0, %v6965
      %v6967 = vpop.f32.mrb[0].mxu0
      %v6968 = vadd.f32 0.0, %v6967
      %v6969 = vpop.f32.mrb[0].mxu0
      %v6970 = vadd.f32 0.0, %v6969
      %v6971 = vpop.f32.mrb[0].mxu0
      %v6972 = vadd.f32 0.0, %v6971
      %6973 = vmatprep.mubr.bf16.mxu0 %v4404
      %6974 = vmatmul.mubr.bf16.gmra.mrb[0].mxu0 %v4211
      %v6975 = vpop.f32.mrb[0].mxu0
      %v6976 = vadd.f32 0.0, %v6975
      %v6977 = vpop.f32.mrb[0].mxu0
      %v6978 = vadd.f32 0.0, %v6977
      %v6979 = vpop.f32.mrb[0].mxu0
      %v6980 = vadd.f32 0.0, %v6979
      %v6981 = vpop.f32.mrb[0].mxu0
      %v6982 = vadd.f32 0.0, %v6981
      %6983 = vmatprep.mubr.bf16.mxu0 %v6919
      %6984 = vmatmul.mubr.bf16.gmra.mrb[0].mxu0 %v6735
      %v6985 = vpop.f32.mrb[0].mxu0
      %v6986 = vadd.f32 0.0, %v6985
      %v6987 = vpop.f32.mrb[0].mxu0
      %v6988 = vadd.f32 0.0, %v6987
      %v6989 = vpop.f32.mrb[0].mxu0
      %v6990 = vadd.f32 0.0, %v6989
      %v6991 = vpop.f32.mrb[0].mxu0
      %v6992 = vadd.f32 0.0, %v6991
      %6993 = vdwg.mxu0
      %6994 = vmatprep.subr.bf16.mxu0 0
      %6995 = vmatpush1.bf16.msra.mxu0 %v6866
      %6996 = vmatprep.subr.bf16.mxu0 0
      %6997 = vmatpush1.bf16.msra.mxu0 %v6869
      %6998 = vmatprep.subr.bf16.mxu0 0
      %6999 = vmatpush1.bf16.msra.mxu0 %v6872
      %7000 = vmatprep.subr.bf16.mxu0 0
      %7001 = vmatpush1.bf16.msra.mxu0 %v6875
      %7002 = vmatprep.subr.bf16.mxu0 0
      %7003 = vmatpush1.bf16.msra.mxu0 %v6878
      %7004 = vmatprep.subr.bf16.mxu0 0
      %7005 = vmatpush1.bf16.msra.mxu0 %v6881
      %7006 = vmatprep.subr.bf16.mxu0 0
      %7007 = vmatpush1.bf16.msra.mxu0 %v6884
      %7008 = vmatprep.subr.bf16.mxu0 0
      %7009 = vmatpush1.bf16.msra.mxu0 %v6887
      %7010 = vmatprep.subr.bf16.mxu0 0
      %7011 = vmatpush1.bf16.msra.mxu0 %v6890
      %7012 = vmatprep.subr.bf16.mxu0 0
      %7013 = vmatpush1.bf16.msra.mxu0 0
      %7014 = vmatprep.subr.bf16.mxu0 0
      %7015 = vmatpush1.bf16.msra.mxu0 0
      %7016 = vmatprep.subr.bf16.mxu0 0
      %7017 = vmatpush1.bf16.msra.mxu0 0
      %7018 = vmatprep.subr.bf16.mxu0 0
      %7019 = vmatpush1.bf16.msra.mxu0 0
      %7020 = vmatprep.subr.bf16.mxu0 0
      %7021 = vmatpush1.bf16.msra.mxu0 0
      %7022 = vmatprep.subr.bf16.mxu0 0
      %7023 = vmatpush1.bf16.msra.mxu0 0
      %7024 = vmatprep.subr.bf16.mxu0 0
      %7025 = vmatpush1.bf16.msra.mxu0 0
      %7026 = vmatprep.mubr.bf16.mxu0 %v4398
      %7027 = vmatmul.mubr.bf16.gmra.mrb[0].mxu0 %v4207
      %v7028 = vpop.f32.mrb[0].mxu0
      %v7029 = vadd.f32 0.0, %v7028
      %v7030 = vpop.f32.mrb[0].mxu0
      %v7031 = vpop.f32.mrb[0].mxu0
      %v7032 = vadd.f32 0.0, %v7031
      %v7033 = vpop.f32.mrb[0].mxu0
      %7034 = vmatprep.mubr.bf16.mxu0 %v4401
      %7035 = vmatmul.mubr.bf16.gmra.mrb[0].mxu0 %v4209
      %v7036 = vpop.f32.mrb[0].mxu0
      %v7037 = vadd.f32 0.0, %v7036
      %v7038 = vpop.f32.mrb[0].mxu0
      %v7039 = vpop.f32.mrb[0].mxu0
      %v7040 = vadd.f32 0.0, %v7039
      %v7041 = vpop.f32.mrb[0].mxu0
      %7042 = vmatprep.mubr.bf16.mxu0 %v4404
      %7043 = vmatmul.mubr.bf16.gmra.mrb[0].mxu0 %v4211
      %v7044 = vpop.f32.mrb[0].mxu0
      %v7045 = vadd.f32 0.0, %v7044
      %v7046 = vpop.f32.mrb[0].mxu0
      %v7047 = vpop.f32.mrb[0].mxu0
      %v7048 = vadd.f32 0.0, %v7047
      %v7049 = vpop.f32.mrb[0].mxu0
      %7050 = vmatprep.mubr.bf16.mxu0 %v6919
      %7051 = vmatmul.mubr.bf16.gmra.mrb[0].mxu0 %v6735
      %v7052 = vpop.f32.mrb[0].mxu0
      %v7053 = vadd.f32 0.0, %v7052
      %v7054 = vpop.f32.mrb[0].mxu0
      %v7055 = vpop.f32.mrb[0].mxu0
      %v7056 = vadd.f32 0.0, %v7055
      %v7057 = vpop.f32.mrb[0].mxu0
      %7058 = vdwg.mxu0
      %v7059 = vadd.f32 %v6699, %v6956
      %v7060 = vadd.f32 %v6700, %v6958
      %v7061 = vadd.f32 %v6701, %v7029
      %v7062 = vadd.f32 %v6702, %v6960
      %v7063 = vadd.f32 %v6703, %v6962
      %v7064 = vadd.f32 %v6704, %v7032
      %v7065 = vadd.f32 %v6705, %v6966
      %v7066 = vadd.f32 %v6706, %v6968
      %v7067 = vadd.f32 %v6707, %v7037
      %v7068 = vadd.f32 %v6708, %v6970
      %v7069 = vadd.f32 %v6709, %v6972
      %v7070 = vadd.f32 %v6710, %v7040
      %v7071 = vadd.f32 %v6711, %v6976
      %v7072 = vadd.f32 %v6712, %v6978
      %v7073 = vadd.f32 %v6713, %v7045
      %v7074 = vadd.f32 %v6714, %v6980
      %v7075 = vadd.f32 %v6715, %v6982
      %v7076 = vadd.f32 %v6716, %v7048
      %v7077 = vadd.f32 %v6717, %v6986
      %v7078 = vadd.f32 %v6718, %v6988
      %v7079 = vadd.f32 %v6719, %v7053
      %v7080 = vadd.f32 %v6720, %v6990
      %v7081 = vadd.f32 %v6721, %v6992
      %v7082 = vadd.f32 %v6722, %v7056
      %v7083 = vrot.slane %v4061, 2
      %v7084 = vrot.slane %v4063, 2
      %v7085 = vsel %vm4838, %v7083, %v7084
      %v7086 = vrot.slane %v4062, 2
      %v7087 = vrot.slane %v4064, 2
      %v7088 = vsel %vm4838, %v7086, %v7087
      %v7091 = vpack.c.bf16 %v7085, %v6006
      %v7092 = vpack.c.bf16 %v7088, %v6009
      %s7093 = scalar_lea.vmem %s5, 1728
      %v7094 = vld [vmem:[%s7093] sm:$0xff]
      %v7095 = vld [vmem:[%s7093 + $0x8] sm:$0xf]
      %v7096 = vld [vmem:[%s7093 + $0xc] sm:$0xff]
      %v7097 = vld [vmem:[%s7093 + $0x14] sm:$0xf]
      %v7098 = vld [vmem:[%s7093 + $0x18] sm:$0xff]
      %v7099 = vld [vmem:[%s7093 + $0x20] sm:$0xf]
      %v7100 = vld [vmem:[%s7093 + $0x24] sm:$0xff]
      %v7101 = vld [vmem:[%s7093 + $0x2c] sm:$0xf]
      %v7102 = vld [vmem:[%s7093 + $0x30] sm:$0xff]
      %v7103 = vld [vmem:[%s7093 + $0x38] sm:$0xf]
      %v7104 = vld [vmem:[%s7093 + $0x3c] sm:$0xff]
      %v7105 = vld [vmem:[%s7093 + $0x44] sm:$0xf]
      %v7106 = vld [vmem:[%s7093 + $0x48] sm:$0xff]
      %v7107 = vld [vmem:[%s7093 + $0x50] sm:$0xf]
      %v7108 = vld [vmem:[%s7093 + $0x54] sm:$0xff]
      %v7109 = vld [vmem:[%s7093 + $0x5c] sm:$0xf]
      %v7110 = vld [vmem:[%s7093 + $0x60] sm:$0xff]
      %v7111 = vld [vmem:[%s7093 + $0x68] sm:$0xf]
      %v7112 = vld [vmem:[%s7093 + $0x6c] sm:$0xff]
      %v7113 = vld [vmem:[%s7093 + $0x74] sm:$0xf]
      %v7114 = vld [vmem:[%s7093 + $0x78] sm:$0xff]
      %v7115 = vld [vmem:[%s7093 + $0x80] sm:$0xf]
      %v7116 = vld [vmem:[%s7093 + $0x84] sm:$0xff]
      %v7117 = vld [vmem:[%s7093 + $0x8c] sm:$0xf]
      %v7118 = vld [vmem:[%s7093 + $0x90] sm:$0xff]
      %v7119 = vld [vmem:[%s7093 + $0x98] sm:$0xf]
      %v7120 = vld [vmem:[%s7093 + $0x9c] sm:$0xff]
      %v7121 = vld [vmem:[%s7093 + $0xa4] sm:$0xf]
      %v7122 = vld [vmem:[%s7093 + $0xa8] sm:$0xff]
      %v7123 = vld [vmem:[%s7093 + $0xb0] sm:$0xf]
      %v7124 = vld [vmem:[%s7093 + $0xb4] sm:$0xff]
      %v7125 = vld [vmem:[%s7093 + $0xbc] sm:$0xf]
      %v7126 = vld [vmem:[%s7093 + $0xc0] sm:$0xff]
      %v7127 = vld [vmem:[%s7093 + $0xc8] sm:$0xf]
      %v7128 = vld [vmem:[%s7093 + $0xcc] sm:$0xff]
      %v7129 = vld [vmem:[%s7093 + $0xd4] sm:$0xf]
      %v7166 = vunpack.c.l.b16 %v7094
      %v7167 = vunpack.c.h.b16 %v7094
      %v7168 = vunpack.c.l.b16 %v7095
      %v7169 = vunpack.c.l.b16 %v7096
      %v7170 = vunpack.c.h.b16 %v7096
      %v7171 = vunpack.c.l.b16 %v7097
      %v7172 = vunpack.c.l.b16 %v7098
      %v7173 = vunpack.c.h.b16 %v7098
      %v7174 = vunpack.c.l.b16 %v7099
      %v7175 = vunpack.c.l.b16 %v7100
      %v7176 = vunpack.c.h.b16 %v7100
      %v7177 = vunpack.c.l.b16 %v7101
      %v7178 = vunpack.c.l.b16 %v7102
      %v7179 = vunpack.c.h.b16 %v7102
      %v7180 = vunpack.c.l.b16 %v7103
      %v7181 = vunpack.c.l.b16 %v7104
      %v7182 = vunpack.c.h.b16 %v7104
      %v7183 = vunpack.c.l.b16 %v7105
      %v7184 = vunpack.c.l.b16 %v7106
      %v7185 = vunpack.c.h.b16 %v7106
      %v7186 = vunpack.c.l.b16 %v7107
      %v7187 = vunpack.c.l.b16 %v7108
      %v7188 = vunpack.c.h.b16 %v7108
      %v7189 = vunpack.c.l.b16 %v7109
      %v7190 = vunpack.c.l.b16 %v7110
      %v7191 = vunpack.c.h.b16 %v7110
      %v7192 = vunpack.c.l.b16 %v7111
      %v7193 = vunpack.c.l.b16 %v7112
      %v7194 = vunpack.c.h.b16 %v7112
      %v7195 = vunpack.c.l.b16 %v7113
      %v7196 = vunpack.c.l.b16 %v7114
      %v7197 = vunpack.c.h.b16 %v7114
      %v7198 = vunpack.c.l.b16 %v7115
      %v7199 = vunpack.c.l.b16 %v7116
      %v7200 = vunpack.c.h.b16 %v7116
      %v7201 = vunpack.c.l.b16 %v7117
      %v7202 = vunpack.c.l.b16 %v7118
      %v7203 = vunpack.c.h.b16 %v7118
      %v7204 = vunpack.c.l.b16 %v7119
      %v7205 = vunpack.c.l.b16 %v7120
      %v7206 = vunpack.c.h.b16 %v7120
      %v7207 = vunpack.c.l.b16 %v7121
      %v7208 = vunpack.c.l.b16 %v7122
      %v7209 = vunpack.c.h.b16 %v7122
      %v7210 = vunpack.c.l.b16 %v7123
      %v7211 = vunpack.c.l.b16 %v7124
      %v7212 = vunpack.c.h.b16 %v7124
      %v7213 = vunpack.c.l.b16 %v7125
      %v7214 = vunpack.c.l.b16 %v7126
      %v7215 = vunpack.c.h.b16 %v7126
      %v7216 = vunpack.c.l.b16 %v7127
      %v7217 = vunpack.c.l.b16 %v7128
      %v7218 = vunpack.c.h.b16 %v7128
      %v7219 = vunpack.c.l.b16 %v7129
      %v7220 = vpack.c.b16 %v7169, %v7166
      %v7221 = vpack.c.b16 %v7170, %v7167
      %v7222 = vpack.c.b16 %v7171, %v7168
      %v7223 = vpack.c.b16 %v7175, %v7172
      %v7224 = vpack.c.b16 %v7176, %v7173
      %v7225 = vpack.c.b16 %v7177, %v7174
      %v7226 = vpack.c.b16 %v7181, %v7178
      %v7227 = vpack.c.b16 %v7182, %v7179
      %v7228 = vpack.c.b16 %v7183, %v7180
      %v7229 = vpack.c.b16 %v7187, %v7184
      %v7230 = vpack.c.b16 %v7188, %v7185
      %v7231 = vpack.c.b16 %v7189, %v7186
      %v7232 = vpack.c.b16 %v7193, %v7190
      %v7233 = vpack.c.b16 %v7194, %v7191
      %v7234 = vpack.c.b16 %v7195, %v7192
      %v7235 = vpack.c.b16 %v7199, %v7196
      %v7236 = vpack.c.b16 %v7200, %v7197
      %v7237 = vpack.c.b16 %v7201, %v7198
      %v7238 = vpack.c.b16 %v7205, %v7202
      %v7239 = vpack.c.b16 %v7206, %v7203
      %v7240 = vpack.c.b16 %v7207, %v7204
      %v7241 = vpack.c.b16 %v7211, %v7208
      %v7242 = vpack.c.b16 %v7212, %v7209
      %v7243 = vpack.c.b16 %v7213, %v7210
      %v7244 = vpack.c.b16 %v7217, %v7214
      %v7245 = vpack.c.b16 %v7218, %v7215
      %v7246 = vpack.c.b16 %v7219, %v7216
      %v7275 = vsel %vm1215, %v7092, 0
      %7277 = vmatprep.subr.bf16.mxu0 %v7221
      %7278 = vmatpush1.bf16.msra.mxu0 %v7220
      %7279 = vmatprep.subr.bf16.mxu0 %v7224
      %7280 = vmatpush1.bf16.msra.mxu0 %v7223
      %7281 = vmatprep.subr.bf16.mxu0 %v7227
      %7282 = vmatpush1.bf16.msra.mxu0 %v7226
      %7283 = vmatprep.subr.bf16.mxu0 %v7230
      %7284 = vmatpush1.bf16.msra.mxu0 %v7229
      %7285 = vmatprep.subr.bf16.mxu0 %v7233
      %7286 = vmatpush1.bf16.msra.mxu0 %v7232
      %7287 = vmatprep.subr.bf16.mxu0 %v7236
      %7288 = vmatpush1.bf16.msra.mxu0 %v7235
      %7289 = vmatprep.subr.bf16.mxu0 %v7239
      %7290 = vmatpush1.bf16.msra.mxu0 %v7238
      %7291 = vmatprep.subr.bf16.mxu0 %v7242
      %7292 = vmatpush1.bf16.msra.mxu0 %v7241
      %7293 = vmatprep.subr.bf16.mxu0 %v7245
      %7294 = vmatpush1.bf16.msra.mxu0 %v7244
      %7295 = vmatprep.subr.bf16.mxu0 0
      %7296 = vmatpush1.bf16.msra.mxu0 0
      %7297 = vmatprep.subr.bf16.mxu0 0
      %7298 = vmatpush1.bf16.msra.mxu0 0
      %7299 = vmatprep.subr.bf16.mxu0 0
      %7300 = vmatpush1.bf16.msra.mxu0 0
      %7301 = vmatprep.subr.bf16.mxu0 0
      %7302 = vmatpush1.bf16.msra.mxu0 0
      %7303 = vmatprep.subr.bf16.mxu0 0
      %7304 = vmatpush1.bf16.msra.mxu0 0
      %7305 = vmatprep.subr.bf16.mxu0 0
      %7306 = vmatpush1.bf16.msra.mxu0 0
      %7307 = vmatprep.subr.bf16.mxu0 0
      %7308 = vmatpush1.bf16.msra.mxu0 0
      %7309 = vmatprep.mubr.bf16.mxu0 %v5096
      %7310 = vmatmul.mubr.bf16.gmra.mrb[0].mxu0 %v4905
      %v7311 = vpop.f32.mrb[0].mxu0
      %v7312 = vadd.f32 0.0, %v7311
      %v7313 = vpop.f32.mrb[0].mxu0
      %v7314 = vadd.f32 0.0, %v7313
      %v7315 = vpop.f32.mrb[0].mxu0
      %v7316 = vadd.f32 0.0, %v7315
      %v7317 = vpop.f32.mrb[0].mxu0
      %v7318 = vadd.f32 0.0, %v7317
      %7319 = vmatprep.mubr.bf16.mxu0 %v5099
      %7320 = vmatmul.mubr.bf16.gmra.mrb[0].mxu0 %v4907
      %v7321 = vpop.f32.mrb[0].mxu0
      %v7322 = vadd.f32 0.0, %v7321
      %v7323 = vpop.f32.mrb[0].mxu0
      %v7324 = vadd.f32 0.0, %v7323
      %v7325 = vpop.f32.mrb[0].mxu0
      %v7326 = vadd.f32 0.0, %v7325
      %v7327 = vpop.f32.mrb[0].mxu0
      %v7328 = vadd.f32 0.0, %v7327
      %7329 = vmatprep.mubr.bf16.mxu0 %v5102
      %7330 = vmatmul.mubr.bf16.gmra.mrb[0].mxu0 %v4909
      %v7331 = vpop.f32.mrb[0].mxu0
      %v7332 = vadd.f32 0.0, %v7331
      %v7333 = vpop.f32.mrb[0].mxu0
      %v7334 = vadd.f32 0.0, %v7333
      %v7335 = vpop.f32.mrb[0].mxu0
      %v7336 = vadd.f32 0.0, %v7335
      %v7337 = vpop.f32.mrb[0].mxu0
      %v7338 = vadd.f32 0.0, %v7337
      %7339 = vmatprep.mubr.bf16.mxu0 %v7275
      %7340 = vmatmul.mubr.bf16.gmra.mrb[0].mxu0 %v7091
      %v7341 = vpop.f32.mrb[0].mxu0
      %v7342 = vadd.f32 0.0, %v7341
      %v7343 = vpop.f32.mrb[0].mxu0
      %v7344 = vadd.f32 0.0, %v7343
      %v7345 = vpop.f32.mrb[0].mxu0
      %v7346 = vadd.f32 0.0, %v7345
      %v7347 = vpop.f32.mrb[0].mxu0
      %v7348 = vadd.f32 0.0, %v7347
      %7349 = vdwg.mxu0
      %7350 = vmatprep.subr.bf16.mxu0 0
      %7351 = vmatpush1.bf16.msra.mxu0 %v7222
      %7352 = vmatprep.subr.bf16.mxu0 0
      %7353 = vmatpush1.bf16.msra.mxu0 %v7225
      %7354 = vmatprep.subr.bf16.mxu0 0
      %7355 = vmatpush1.bf16.msra.mxu0 %v7228
      %7356 = vmatprep.subr.bf16.mxu0 0
      %7357 = vmatpush1.bf16.msra.mxu0 %v7231
      %7358 = vmatprep.subr.bf16.mxu0 0
      %7359 = vmatpush1.bf16.msra.mxu0 %v7234
      %7360 = vmatprep.subr.bf16.mxu0 0
      %7361 = vmatpush1.bf16.msra.mxu0 %v7237
      %7362 = vmatprep.subr.bf16.mxu0 0
      %7363 = vmatpush1.bf16.msra.mxu0 %v7240
      %7364 = vmatprep.subr.bf16.mxu0 0
      %7365 = vmatpush1.bf16.msra.mxu0 %v7243
      %7366 = vmatprep.subr.bf16.mxu0 0
      %7367 = vmatpush1.bf16.msra.mxu0 %v7246
      %7368 = vmatprep.subr.bf16.mxu0 0
      %7369 = vmatpush1.bf16.msra.mxu0 0
      %7370 = vmatprep.subr.bf16.mxu0 0
      %7371 = vmatpush1.bf16.msra.mxu0 0
      %7372 = vmatprep.subr.bf16.mxu0 0
      %7373 = vmatpush1.bf16.msra.mxu0 0
      %7374 = vmatprep.subr.bf16.mxu0 0
      %7375 = vmatpush1.bf16.msra.mxu0 0
      %7376 = vmatprep.subr.bf16.mxu0 0
      %7377 = vmatpush1.bf16.msra.mxu0 0
      %7378 = vmatprep.subr.bf16.mxu0 0
      %7379 = vmatpush1.bf16.msra.mxu0 0
      %7380 = vmatprep.subr.bf16.mxu0 0
      %7381 = vmatpush1.bf16.msra.mxu0 0
      %7382 = vmatprep.mubr.bf16.mxu0 %v5096
      %7383 = vmatmul.mubr.bf16.gmra.mrb[0].mxu0 %v4905
      %v7384 = vpop.f32.mrb[0].mxu0
      %v7385 = vadd.f32 0.0, %v7384
      %v7386 = vpop.f32.mrb[0].mxu0
      %v7387 = vpop.f32.mrb[0].mxu0
      %v7388 = vadd.f32 0.0, %v7387
      %v7389 = vpop.f32.mrb[0].mxu0
      %7390 = vmatprep.mubr.bf16.mxu0 %v5099
      %7391 = vmatmul.mubr.bf16.gmra.mrb[0].mxu0 %v4907
      %v7392 = vpop.f32.mrb[0].mxu0
      %v7393 = vadd.f32 0.0, %v7392
      %v7394 = vpop.f32.mrb[0].mxu0
      %v7395 = vpop.f32.mrb[0].mxu0
      %v7396 = vadd.f32 0.0, %v7395
      %v7397 = vpop.f32.mrb[0].mxu0
      %7398 = vmatprep.mubr.bf16.mxu0 %v5102
      %7399 = vmatmul.mubr.bf16.gmra.mrb[0].mxu0 %v4909
      %v7400 = vpop.f32.mrb[0].mxu0
      %v7401 = vadd.f32 0.0, %v7400
      %v7402 = vpop.f32.mrb[0].mxu0
      %v7403 = vpop.f32.mrb[0].mxu0
      %v7404 = vadd.f32 0.0, %v7403
      %v7405 = vpop.f32.mrb[0].mxu0
      %7406 = vmatprep.mubr.bf16.mxu0 %v7275
      %7407 = vmatmul.mubr.bf16.gmra.mrb[0].mxu0 %v7091
      %v7408 = vpop.f32.mrb[0].mxu0
      %v7409 = vadd.f32 0.0, %v7408
      %v7410 = vpop.f32.mrb[0].mxu0
      %v7411 = vpop.f32.mrb[0].mxu0
      %v7412 = vadd.f32 0.0, %v7411
      %v7413 = vpop.f32.mrb[0].mxu0
      %7414 = vdwg.mxu0
      %v7415 = vadd.f32 %v7059, %v7312
      %v7416 = vadd.f32 %v7060, %v7314
      %v7417 = vadd.f32 %v7061, %v7385
      %v7418 = vadd.f32 %v7062, %v7316
      %v7419 = vadd.f32 %v7063, %v7318
      %v7420 = vadd.f32 %v7064, %v7388
      %v7421 = vadd.f32 %v7065, %v7322
      %v7422 = vadd.f32 %v7066, %v7324
      %v7423 = vadd.f32 %v7067, %v7393
      %v7424 = vadd.f32 %v7068, %v7326
      %v7425 = vadd.f32 %v7069, %v7328
      %v7426 = vadd.f32 %v7070, %v7396
      %v7427 = vadd.f32 %v7071, %v7332
      %v7428 = vadd.f32 %v7072, %v7334
      %v7429 = vadd.f32 %v7073, %v7401
      %v7430 = vadd.f32 %v7074, %v7336
      %v7431 = vadd.f32 %v7075, %v7338
      %v7432 = vadd.f32 %v7076, %v7404
      %v7433 = vadd.f32 %v7077, %v7342
      %v7434 = vadd.f32 %v7078, %v7344
      %v7435 = vadd.f32 %v7079, %v7409
      %v7436 = vadd.f32 %v7080, %v7346
      %v7437 = vadd.f32 %v7081, %v7348
      %v7438 = vadd.f32 %v7082, %v7412
      %v7439 = vld [vmem:[%s6] sm:$0x7]
      %v7441 = vlaneseq
      %v7442 = vshrl.u32 %v7441, 7
      %v7443 = vsub.s32 0, %v7442
      %v7444 = vrot.slane %v7439, %v7443
      %v7445 = vlaneseq
      %v7446 = vshrl.u32 %v7445, 7
      %v7447 = vsub.s32 1, %v7446
      %v7448 = vrot.slane %v7439, %v7447
      %v7449 = vlaneseq
      %v7450 = vshrl.u32 %v7449, 7
      %v7451 = vsub.s32 2, %v7450
      %v7452 = vrot.slane %v7439, %v7451
      %v7456 = vadd.f32 %v7415, %v7444
      %v7457 = vadd.f32 %v7416, %v7448
      %v7458 = vadd.f32 %v7417, %v7452
      %v7459 = vadd.f32 %v7418, %v7444
      %v7460 = vadd.f32 %v7419, %v7448
      %v7461 = vadd.f32 %v7420, %v7452
      %v7462 = vadd.f32 %v7421, %v7444
      %v7463 = vadd.f32 %v7422, %v7448
      %v7464 = vadd.f32 %v7423, %v7452
      %v7465 = vadd.f32 %v7424, %v7444
      %v7466 = vadd.f32 %v7425, %v7448
      %v7467 = vadd.f32 %v7426, %v7452
      %v7468 = vadd.f32 %v7427, %v7444
      %v7469 = vadd.f32 %v7428, %v7448
      %v7470 = vadd.f32 %v7429, %v7452
      %v7471 = vadd.f32 %v7430, %v7444
      %v7472 = vadd.f32 %v7431, %v7448
      %v7473 = vadd.f32 %v7432, %v7452
      %v7474 = vadd.f32 %v7433, %v7444
      %v7475 = vadd.f32 %v7434, %v7448
      %v7476 = vadd.f32 %v7435, %v7452
      %v7477 = vadd.f32 %v7436, %v7444
      %v7478 = vadd.f32 %v7437, %v7448
      %v7479 = vadd.f32 %v7438, %v7452
      %v7480 = vmax.f32 %v7456, 0.0
      %v7481 = vmax.f32 %v7457, 0.0
      %v7482 = vmax.f32 %v7458, 0.0
      %v7483 = vmax.f32 %v7459, 0.0
      %v7484 = vmax.f32 %v7460, 0.0
      %v7485 = vmax.f32 %v7461, 0.0
      %v7486 = vmax.f32 %v7462, 0.0
      %v7487 = vmax.f32 %v7463, 0.0
      %v7488 = vmax.f32 %v7464, 0.0
      %v7489 = vmax.f32 %v7465, 0.0
      %v7490 = vmax.f32 %v7466, 0.0
      %v7491 = vmax.f32 %v7467, 0.0
      %v7492 = vmax.f32 %v7468, 0.0
      %v7493 = vmax.f32 %v7469, 0.0
      %v7494 = vmax.f32 %v7470, 0.0
      %v7495 = vmax.f32 %v7471, 0.0
      %v7496 = vmax.f32 %v7472, 0.0
      %v7497 = vmax.f32 %v7473, 0.0
      %v7498 = vmax.f32 %v7474, 0.0
      %v7499 = vmax.f32 %v7475, 0.0
      %v7500 = vmax.f32 %v7476, 0.0
      %v7501 = vmax.f32 %v7477, 0.0
      %v7502 = vmax.f32 %v7478, 0.0
      %v7503 = vmax.f32 %v7479, 0.0
      %7504 = vst [vmem:[%s548] sm:$0xff] %v7480
      %7505 = vst [vmem:[%s548 + $0x8] sm:$0xff] %v7481
      %7506 = vst.msk [vmem:[%s548 + $0x10] sm:$0xff] %vm1740, %v7482
      %7507 = vst [vmem:[%s548 + $0x18] sm:$0xff] %v7483
      %7508 = vst [vmem:[%s548 + $0x20] sm:$0xff] %v7484
      %7509 = vst.msk [vmem:[%s548 + $0x28] sm:$0xff] %vm1740, %v7485
      %7510 = vst [vmem:[%s548 + $0x30] sm:$0xff] %v7486
      %7511 = vst [vmem:[%s548 + $0x38] sm:$0xff] %v7487
      %7512 = vst.msk [vmem:[%s548 + $0x40] sm:$0xff] %vm1740, %v7488
      %7513 = vst [vmem:[%s548 + $0x48] sm:$0xff] %v7489
      %7514 = vst [vmem:[%s548 + $0x50] sm:$0xff] %v7490
      %7515 = vst.msk [vmem:[%s548 + $0x58] sm:$0xff] %vm1740, %v7491
      %7516 = vst [vmem:[%s548 + $0x60] sm:$0xff] %v7492
      %7517 = vst [vmem:[%s548 + $0x68] sm:$0xff] %v7493
      %7518 = vst.msk [vmem:[%s548 + $0x70] sm:$0xff] %vm1740, %v7494
      %7519 = vst [vmem:[%s548 + $0x78] sm:$0xff] %v7495
      %7520 = vst [vmem:[%s548 + $0x80] sm:$0xff] %v7496
      %7521 = vst.msk [vmem:[%s548 + $0x88] sm:$0xff] %vm1740, %v7497
      %7522 = vst [vmem:[%s548 + $0x90] sm:$0xff] %v7498
      %7523 = vst [vmem:[%s548 + $0x98] sm:$0xff] %v7499
      %7524 = vst.msk [vmem:[%s548 + $0xa0] sm:$0xff] %vm1740, %v7500
      %7525 = vst [vmem:[%s548 + $0xa8] sm:$0xff] %v7501
      %7526 = vst [vmem:[%s548 + $0xb0] sm:$0xff] %v7502
      %7527 = vst.msk [vmem:[%s548 + $0xb8] sm:$0xff] %vm1740, %v7503
      %v7528 = vld [vmem:[#allocation4] sm:$0xff]
      %v7529 = vld [vmem:[#allocation4 + $0x8] sm:$0x3]
      %v7530 = vld [vmem:[#allocation4 + $0x10] sm:$0xff]
      %v7531 = vld [vmem:[#allocation4 + $0x18] sm:$0x3]
      %v7532 = vld [vmem:[#allocation4 + $0x20] sm:$0xff]
      %v7533 = vld [vmem:[#allocation4 + $0x28] sm:$0x3]
      %v7534 = vld [vmem:[#allocation4 + $0x30] sm:$0xff]
      %v7535 = vld [vmem:[#allocation4 + $0x38] sm:$0x3]
      %v7536 = vld [vmem:[#allocation4 + $0x40] sm:$0xff]
      %v7537 = vld [vmem:[#allocation4 + $0x48] sm:$0x3]
      %v7538 = vld [vmem:[#allocation4 + $0x50] sm:$0xff]
      %v7539 = vld [vmem:[#allocation4 + $0x58] sm:$0x3]
      %v7540 = vld [vmem:[#allocation4 + $0x60] sm:$0xff]
      %v7541 = vld [vmem:[#allocation4 + $0x68] sm:$0x3]
      %v7542 = vld [vmem:[#allocation4 + $0x70] sm:$0xff]
      %v7543 = vld [vmem:[#allocation4 + $0x78] sm:$0x3]
      %v7544 = vld [vmem:[#allocation4 + $0x80] sm:$0xff]
      %v7545 = vld [vmem:[#allocation4 + $0x88] sm:$0x3]
      %v7546 = vld [vmem:[#allocation4 + $0x90] sm:$0xff]
      %v7547 = vld [vmem:[#allocation4 + $0x98] sm:$0x3]
      %v7548 = vpack.c.bf16 %v7530, %v7528
      %v7549 = vpack.c.bf16 %v7534, %v7532
      %v7550 = vpack.c.bf16 %v7538, %v7536
      %v7551 = vpack.c.bf16 %v7542, %v7540
      %v7552 = vld [vmem:[%s9] sm:$0xf]
      %v7553 = vld [vmem:[%s9 + $0x4] sm:$0xf]
      %v7554 = vld [vmem:[%s9 + $0x8] sm:$0xf]
      %v7555 = vld [vmem:[%s9 + $0xc] sm:$0xf]
      %v7572 = vrot.slane %v7528, 1
      %v7573 = vrot.slane %v7529, 1
      %v7574 = vsel %vm2790, %v7572, %v7573
      %v7575 = vrot.slane %v7530, 1
      %v7576 = vrot.slane %v7531, 1
      %v7577 = vsel %vm2790, %v7575, %v7576
      %v7578 = vrot.slane %v7532, 1
      %v7579 = vrot.slane %v7533, 1
      %v7580 = vsel %vm2790, %v7578, %v7579
      %v7581 = vrot.slane %v7534, 1
      %v7582 = vrot.slane %v7535, 1
      %v7583 = vsel %vm2790, %v7581, %v7582
      %v7584 = vrot.slane %v7536, 1
      %v7585 = vrot.slane %v7537, 1
      %v7586 = vsel %vm2790, %v7584, %v7585
      %v7587 = vrot.slane %v7538, 1
      %v7588 = vrot.slane %v7539, 1
      %v7589 = vsel %vm2790, %v7587, %v7588
      %v7590 = vrot.slane %v7540, 1
      %v7591 = vrot.slane %v7541, 1
      %v7592 = vsel %vm2790, %v7590, %v7591
      %v7593 = vrot.slane %v7542, 1
      %v7594 = vrot.slane %v7543, 1
      %v7595 = vsel %vm2790, %v7593, %v7594
      %v7604 = vpack.c.bf16 %v7577, %v7574
      %v7605 = vpack.c.bf16 %v7583, %v7580
      %v7606 = vpack.c.bf16 %v7589, %v7586
      %v7607 = vpack.c.bf16 %v7595, %v7592
      %s7608 = scalar_lea.vmem %s9, 16
      %v7609 = vld [vmem:[%s7608] sm:$0xf]
      %v7610 = vld [vmem:[%s7608 + $0x4] sm:$0xf]
      %v7611 = vld [vmem:[%s7608 + $0x8] sm:$0xf]
      %v7612 = vld [vmem:[%s7608 + $0xc] sm:$0xf]
      %v7617 = vunpack.c.l.b16 %v7609
      %v7618 = vunpack.c.l.b16 %v7610
      %v7619 = vunpack.c.l.b16 %v7611
      %v7620 = vunpack.c.l.b16 %v7612
      %v7621 = vpack.c.b16 %v7618, %v7617
      %v7622 = vpack.c.b16 %v7620, %v7619
      %v7626 = vsel %vm1740, %v7604, 0
      %v7629 = vsel %vm1740, %v7605, 0
      %v7632 = vsel %vm1740, %v7606, 0
      %v7635 = vsel %vm1740, %v7607, 0
      %7637 = vmatprep.subr.bf16.mxu0 0
      %7638 = vmatpush1.bf16.msra.mxu0 %v7621
      %7639 = vmatprep.subr.bf16.mxu0 0
      %7640 = vmatpush1.bf16.msra.mxu0 %v7622
      %7641 = vmatprep.subr.bf16.mxu0 0
      %7642 = vmatpush1.bf16.msra.mxu0 0
      %7643 = vmatprep.subr.bf16.mxu0 0
      %7644 = vmatpush1.bf16.msra.mxu0 0
      %7645 = vmatprep.subr.bf16.mxu0 0
      %7646 = vmatpush1.bf16.msra.mxu0 0
      %7647 = vmatprep.subr.bf16.mxu0 0
      %7648 = vmatpush1.bf16.msra.mxu0 0
      %7649 = vmatprep.subr.bf16.mxu0 0
      %7650 = vmatpush1.bf16.msra.mxu0 0
      %7651 = vmatprep.subr.bf16.mxu0 0
      %7652 = vmatpush1.bf16.msra.mxu0 0
      %7653 = vmatprep.subr.bf16.mxu0 0
      %7654 = vmatpush1.bf16.msra.mxu0 0
      %7655 = vmatprep.subr.bf16.mxu0 0
      %7656 = vmatpush1.bf16.msra.mxu0 0
      %7657 = vmatprep.subr.bf16.mxu0 0
      %7658 = vmatpush1.bf16.msra.mxu0 0
      %7659 = vmatprep.subr.bf16.mxu0 0
      %7660 = vmatpush1.bf16.msra.mxu0 0
      %7661 = vmatprep.subr.bf16.mxu0 0
      %7662 = vmatpush1.bf16.msra.mxu0 0
      %7663 = vmatprep.subr.bf16.mxu0 0
      %7664 = vmatpush1.bf16.msra.mxu0 0
      %7665 = vmatprep.subr.bf16.mxu0 0
      %7666 = vmatpush1.bf16.msra.mxu0 0
      %7667 = vmatprep.subr.bf16.mxu0 0
      %7668 = vmatpush1.bf16.msra.mxu0 0
      %7669 = vmatprep.mubr.bf16.mxu0 0
      %7670 = vmatmul.mubr.bf16.gmra.mrb[0].mxu0 %v7626
      %v7671 = vpop.f32.mrb[0].mxu0
      %v7672 = vadd.f32 0.0, %v7671
      %v7673 = vpop.f32.mrb[0].mxu0
      %v7674 = vpop.f32.mrb[0].mxu0
      %v7675 = vadd.f32 0.0, %v7674
      %v7676 = vpop.f32.mrb[0].mxu0
      %7677 = vmatprep.mubr.bf16.mxu0 0
      %7678 = vmatmul.mubr.bf16.gmra.mrb[0].mxu0 %v7629
      %v7679 = vpop.f32.mrb[0].mxu0
      %v7680 = vadd.f32 0.0, %v7679
      %v7681 = vpop.f32.mrb[0].mxu0
      %v7682 = vpop.f32.mrb[0].mxu0
      %v7683 = vadd.f32 0.0, %v7682
      %v7684 = vpop.f32.mrb[0].mxu0
      %7685 = vmatprep.mubr.bf16.mxu0 0
      %7686 = vmatmul.mubr.bf16.gmra.mrb[0].mxu0 %v7632
      %v7687 = vpop.f32.mrb[0].mxu0
      %v7688 = vadd.f32 0.0, %v7687
      %v7689 = vpop.f32.mrb[0].mxu0
      %v7690 = vpop.f32.mrb[0].mxu0
      %v7691 = vadd.f32 0.0, %v7690
      %v7692 = vpop.f32.mrb[0].mxu0
      %7693 = vmatprep.mubr.bf16.mxu0 0
      %7694 = vmatmul.mubr.bf16.gmra.mrb[0].mxu0 %v7635
      %v7695 = vpop.f32.mrb[0].mxu0
      %v7696 = vadd.f32 0.0, %v7695
      %v7697 = vpop.f32.mrb[0].mxu0
      %v7698 = vpop.f32.mrb[0].mxu0
      %v7699 = vadd.f32 0.0, %v7698
      %v7700 = vpop.f32.mrb[0].mxu0
      %7701 = vdwg.mxu0
      %v7706 = vunpack.c.l.b16 %v7552
      %v7707 = vunpack.c.l.b16 %v7553
      %v7708 = vunpack.c.l.b16 %v7554
      %v7709 = vunpack.c.l.b16 %v7555
      %v7710 = vpack.c.b16 %v7707, %v7706
      %v7711 = vpack.c.b16 %v7709, %v7708
      %v7715 = vsel %vm1740, %v7548, 0
      %v7718 = vsel %vm1740, %v7549, 0
      %v7721 = vsel %vm1740, %v7550, 0
      %v7724 = vsel %vm1740, %v7551, 0
      %7726 = vmatprep.subr.bf16.mxu0 0
      %7727 = vmatpush1.bf16.msra.mxu0 %v7710
      %7728 = vmatprep.subr.bf16.mxu0 0
      %7729 = vmatpush1.bf16.msra.mxu0 %v7711
      %7730 = vmatprep.subr.bf16.mxu0 0
      %7731 = vmatpush1.bf16.msra.mxu0 0
      %7732 = vmatprep.subr.bf16.mxu0 0
      %7733 = vmatpush1.bf16.msra.mxu0 0
      %7734 = vmatprep.subr.bf16.mxu0 0
      %7735 = vmatpush1.bf16.msra.mxu0 0
      %7736 = vmatprep.subr.bf16.mxu0 0
      %7737 = vmatpush1.bf16.msra.mxu0 0
      %7738 = vmatprep.subr.bf16.mxu0 0
      %7739 = vmatpush1.bf16.msra.mxu0 0
      %7740 = vmatprep.subr.bf16.mxu0 0
      %7741 = vmatpush1.bf16.msra.mxu0 0
      %7742 = vmatprep.subr.bf16.mxu0 0
      %7743 = vmatpush1.bf16.msra.mxu0 0
      %7744 = vmatprep.subr.bf16.mxu0 0
      %7745 = vmatpush1.bf16.msra.mxu0 0
      %7746 = vmatprep.subr.bf16.mxu0 0
      %7747 = vmatpush1.bf16.msra.mxu0 0
      %7748 = vmatprep.subr.bf16.mxu0 0
      %7749 = vmatpush1.bf16.msra.mxu0 0
      %7750 = vmatprep.subr.bf16.mxu0 0
      %7751 = vmatpush1.bf16.msra.mxu0 0
      %7752 = vmatprep.subr.bf16.mxu0 0
      %7753 = vmatpush1.bf16.msra.mxu0 0
      %7754 = vmatprep.subr.bf16.mxu0 0
      %7755 = vmatpush1.bf16.msra.mxu0 0
      %7756 = vmatprep.subr.bf16.mxu0 0
      %7757 = vmatpush1.bf16.msra.mxu0 0
      %7758 = vmatprep.mubr.bf16.mxu0 0
      %7759 = vmatmul.mubr.bf16.gmra.mrb[0].mxu0 %v7715
      %v7760 = vpop.f32.mrb[0].mxu0
      %v7761 = vadd.f32 %v7672, %v7760
      %v7762 = vpop.f32.mrb[0].mxu0
      %v7763 = vpop.f32.mrb[0].mxu0
      %v7764 = vadd.f32 %v7675, %v7763
      %v7765 = vpop.f32.mrb[0].mxu0
      %7766 = vmatprep.mubr.bf16.mxu0 0
      %7767 = vmatmul.mubr.bf16.gmra.mrb[0].mxu0 %v7718
      %v7768 = vpop.f32.mrb[0].mxu0
      %v7769 = vadd.f32 %v7680, %v7768
      %v7770 = vpop.f32.mrb[0].mxu0
      %v7771 = vpop.f32.mrb[0].mxu0
      %v7772 = vadd.f32 %v7683, %v7771
      %v7773 = vpop.f32.mrb[0].mxu0
      %7774 = vmatprep.mubr.bf16.mxu0 0
      %7775 = vmatmul.mubr.bf16.gmra.mrb[0].mxu0 %v7721
      %v7776 = vpop.f32.mrb[0].mxu0
      %v7777 = vadd.f32 %v7688, %v7776
      %v7778 = vpop.f32.mrb[0].mxu0
      %v7779 = vpop.f32.mrb[0].mxu0
      %v7780 = vadd.f32 %v7691, %v7779
      %v7781 = vpop.f32.mrb[0].mxu0
      %7782 = vmatprep.mubr.bf16.mxu0 0
      %7783 = vmatmul.mubr.bf16.gmra.mrb[0].mxu0 %v7724
      %v7784 = vpop.f32.mrb[0].mxu0
      %v7785 = vadd.f32 %v7696, %v7784
      %v7786 = vpop.f32.mrb[0].mxu0
      %v7787 = vpop.f32.mrb[0].mxu0
      %v7788 = vadd.f32 %v7699, %v7787
      %v7789 = vpop.f32.mrb[0].mxu0
      %7790 = vdwg.mxu0
      %v7791 = vrot.slane %v7528, 2
      %v7792 = vrot.slane %v7529, 2
      %v7793 = vsel %vm4838, %v7791, %v7792
      %v7794 = vrot.slane %v7530, 2
      %v7795 = vrot.slane %v7531, 2
      %v7796 = vsel %vm4838, %v7794, %v7795
      %v7797 = vrot.slane %v7532, 2
      %v7798 = vrot.slane %v7533, 2
      %v7799 = vsel %vm4838, %v7797, %v7798
      %v7800 = vrot.slane %v7534, 2
      %v7801 = vrot.slane %v7535, 2
      %v7802 = vsel %vm4838, %v7800, %v7801
      %v7803 = vrot.slane %v7536, 2
      %v7804 = vrot.slane %v7537, 2
      %v7805 = vsel %vm4838, %v7803, %v7804
      %v7806 = vrot.slane %v7538, 2
      %v7807 = vrot.slane %v7539, 2
      %v7808 = vsel %vm4838, %v7806, %v7807
      %v7809 = vrot.slane %v7540, 2
      %v7810 = vrot.slane %v7541, 2
      %v7811 = vsel %vm4838, %v7809, %v7810
      %v7812 = vrot.slane %v7542, 2
      %v7813 = vrot.slane %v7543, 2
      %v7814 = vsel %vm4838, %v7812, %v7813
      %v7823 = vpack.c.bf16 %v7796, %v7793
      %v7824 = vpack.c.bf16 %v7802, %v7799
      %v7825 = vpack.c.bf16 %v7808, %v7805
      %v7826 = vpack.c.bf16 %v7814, %v7811
      %s7827 = scalar_lea.vmem %s9, 32
      %v7828 = vld [vmem:[%s7827] sm:$0xf]
      %v7829 = vld [vmem:[%s7827 + $0x4] sm:$0xf]
      %v7830 = vld [vmem:[%s7827 + $0x8] sm:$0xf]
      %v7831 = vld [vmem:[%s7827 + $0xc] sm:$0xf]
      %v7836 = vunpack.c.l.b16 %v7828
      %v7837 = vunpack.c.l.b16 %v7829
      %v7838 = vunpack.c.l.b16 %v7830
      %v7839 = vunpack.c.l.b16 %v7831
      %v7840 = vpack.c.b16 %v7837, %v7836
      %v7841 = vpack.c.b16 %v7839, %v7838
      %v7845 = vsel %vm1740, %v7823, 0
      %v7848 = vsel %vm1740, %v7824, 0
      %v7851 = vsel %vm1740, %v7825, 0
      %v7854 = vsel %vm1740, %v7826, 0
      %7856 = vmatprep.subr.bf16.mxu0 0
      %7857 = vmatpush1.bf16.msra.mxu0 %v7840
      %7858 = vmatprep.subr.bf16.mxu0 0
      %7859 = vmatpush1.bf16.msra.mxu0 %v7841
      %7860 = vmatprep.subr.bf16.mxu0 0
      %7861 = vmatpush1.bf16.msra.mxu0 0
      %7862 = vmatprep.subr.bf16.mxu0 0
      %7863 = vmatpush1.bf16.msra.mxu0 0
      %7864 = vmatprep.subr.bf16.mxu0 0
      %7865 = vmatpush1.bf16.msra.mxu0 0
      %7866 = vmatprep.subr.bf16.mxu0 0
      %7867 = vmatpush1.bf16.msra.mxu0 0
      %7868 = vmatprep.subr.bf16.mxu0 0
      %7869 = vmatpush1.bf16.msra.mxu0 0
      %7870 = vmatprep.subr.bf16.mxu0 0
      %7871 = vmatpush1.bf16.msra.mxu0 0
      %7872 = vmatprep.subr.bf16.mxu0 0
      %7873 = vmatpush1.bf16.msra.mxu0 0
      %7874 = vmatprep.subr.bf16.mxu0 0
      %7875 = vmatpush1.bf16.msra.mxu0 0
      %7876 = vmatprep.subr.bf16.mxu0 0
      %7877 = vmatpush1.bf16.msra.mxu0 0
      %7878 = vmatprep.subr.bf16.mxu0 0
      %7879 = vmatpush1.bf16.msra.mxu0 0
      %7880 = vmatprep.subr.bf16.mxu0 0
      %7881 = vmatpush1.bf16.msra.mxu0 0
      %7882 = vmatprep.subr.bf16.mxu0 0
      %7883 = vmatpush1.bf16.msra.mxu0 0
      %7884 = vmatprep.subr.bf16.mxu0 0
      %7885 = vmatpush1.bf16.msra.mxu0 0
      %7886 = vmatprep.subr.bf16.mxu0 0
      %7887 = vmatpush1.bf16.msra.mxu0 0
      %7888 = vmatprep.mubr.bf16.mxu0 0
      %7889 = vmatmul.mubr.bf16.gmra.mrb[0].mxu0 %v7845
      %v7890 = vpop.f32.mrb[0].mxu0
      %v7891 = vadd.f32 0.0, %v7890
      %v7892 = vpop.f32.mrb[0].mxu0
      %v7893 = vpop.f32.mrb[0].mxu0
      %v7894 = vadd.f32 0.0, %v7893
      %v7895 = vpop.f32.mrb[0].mxu0
      %7896 = vmatprep.mubr.bf16.mxu0 0
      %7897 = vmatmul.mubr.bf16.gmra.mrb[0].mxu0 %v7848
      %v7898 = vpop.f32.mrb[0].mxu0
      %v7899 = vadd.f32 0.0, %v7898
      %v7900 = vpop.f32.mrb[0].mxu0
      %v7901 = vpop.f32.mrb[0].mxu0
      %v7902 = vadd.f32 0.0, %v7901
      %v7903 = vpop.f32.mrb[0].mxu0
      %7904 = vmatprep.mubr.bf16.mxu0 0
      %7905 = vmatmul.mubr.bf16.gmra.mrb[0].mxu0 %v7851
      %v7906 = vpop.f32.mrb[0].mxu0
      %v7907 = vadd.f32 0.0, %v7906
      %v7908 = vpop.f32.mrb[0].mxu0
      %v7909 = vpop.f32.mrb[0].mxu0
      %v7910 = vadd.f32 0.0, %v7909
      %v7911 = vpop.f32.mrb[0].mxu0
      %7912 = vmatprep.mubr.bf16.mxu0 0
      %7913 = vmatmul.mubr.bf16.gmra.mrb[0].mxu0 %v7854
      %v7914 = vpop.f32.mrb[0].mxu0
      %v7915 = vadd.f32 0.0, %v7914
      %v7916 = vpop.f32.mrb[0].mxu0
      %v7917 = vpop.f32.mrb[0].mxu0
      %v7918 = vadd.f32 0.0, %v7917
      %v7919 = vpop.f32.mrb[0].mxu0
      %7920 = vdwg.mxu0
      %v7921 = vadd.f32 %v7761, %v7891
      %v7922 = vadd.f32 %v7764, %v7894
      %v7923 = vadd.f32 %v7769, %v7899
      %v7924 = vadd.f32 %v7772, %v7902
      %v7925 = vadd.f32 %v7777, %v7907
      %v7926 = vadd.f32 %v7780, %v7910
      %v7927 = vadd.f32 %v7785, %v7915
      %v7928 = vadd.f32 %v7788, %v7918
      %v7929 = vpack.c.bf16 %v7532, %v7530
      %v7930 = vpack.c.bf16 %v7536, %v7534
      %v7931 = vpack.c.bf16 %v7540, %v7538
      %v7932 = vpack.c.bf16 %v7544, %v7542
      %s7933 = scalar_lea.vmem %s9, 48
      %v7934 = vld [vmem:[%s7933] sm:$0xf]
      %v7935 = vld [vmem:[%s7933 + $0x4] sm:$0xf]
      %v7936 = vld [vmem:[%s7933 + $0x8] sm:$0xf]
      %v7937 = vld [vmem:[%s7933 + $0xc] sm:$0xf]
      %v7942 = vunpack.c.l.b16 %v7934
      %v7943 = vunpack.c.l.b16 %v7935
      %v7944 = vunpack.c.l.b16 %v7936
      %v7945 = vunpack.c.l.b16 %v7937
      %v7946 = vpack.c.b16 %v7943, %v7942
      %v7947 = vpack.c.b16 %v7945, %v7944
      %v7951 = vsel %vm1740, %v7929, 0
      %v7954 = vsel %vm1740, %v7930, 0
      %v7957 = vsel %vm1740, %v7931, 0
      %v7960 = vsel %vm1740, %v7932, 0
      %7962 = vmatprep.subr.bf16.mxu0 0
      %7963 = vmatpush1.bf16.msra.mxu0 %v7946
      %7964 = vmatprep.subr.bf16.mxu0 0
      %7965 = vmatpush1.bf16.msra.mxu0 %v7947
      %7966 = vmatprep.subr.bf16.mxu0 0
      %7967 = vmatpush1.bf16.msra.mxu0 0
      %7968 = vmatprep.subr.bf16.mxu0 0
      %7969 = vmatpush1.bf16.msra.mxu0 0
      %7970 = vmatprep.subr.bf16.mxu0 0
      %7971 = vmatpush1.bf16.msra.mxu0 0
      %7972 = vmatprep.subr.bf16.mxu0 0
      %7973 = vmatpush1.bf16.msra.mxu0 0
      %7974 = vmatprep.subr.bf16.mxu0 0
      %7975 = vmatpush1.bf16.msra.mxu0 0
      %7976 = vmatprep.subr.bf16.mxu0 0
      %7977 = vmatpush1.bf16.msra.mxu0 0
      %7978 = vmatprep.subr.bf16.mxu0 0
      %7979 = vmatpush1.bf16.msra.mxu0 0
      %7980 = vmatprep.subr.bf16.mxu0 0
      %7981 = vmatpush1.bf16.msra.mxu0 0
      %7982 = vmatprep.subr.bf16.mxu0 0
      %7983 = vmatpush1.bf16.msra.mxu0 0
      %7984 = vmatprep.subr.bf16.mxu0 0
      %7985 = vmatpush1.bf16.msra.mxu0 0
      %7986 = vmatprep.subr.bf16.mxu0 0
      %7987 = vmatpush1.bf16.msra.mxu0 0
      %7988 = vmatprep.subr.bf16.mxu0 0
      %7989 = vmatpush1.bf16.msra.mxu0 0
      %7990 = vmatprep.subr.bf16.mxu0 0
      %7991 = vmatpush1.bf16.msra.mxu0 0
      %7992 = vmatprep.subr.bf16.mxu0 0
      %7993 = vmatpush1.bf16.msra.mxu0 0
      %7994 = vmatprep.mubr.bf16.mxu0 0
      %7995 = vmatmul.mubr.bf16.gmra.mrb[0].mxu0 %v7951
      %v7996 = vpop.f32.mrb[0].mxu0
      %v7997 = vadd.f32 0.0, %v7996
      %v7998 = vpop.f32.mrb[0].mxu0
      %v7999 = vpop.f32.mrb[0].mxu0
      %v8000 = vadd.f32 0.0, %v7999
      %v8001 = vpop.f32.mrb[0].mxu0
      %8002 = vmatprep.mubr.bf16.mxu0 0
      %8003 = vmatmul.mubr.bf16.gmra.mrb[0].mxu0 %v7954
      %v8004 = vpop.f32.mrb[0].mxu0
      %v8005 = vadd.f32 0.0, %v8004
      %v8006 = vpop.f32.mrb[0].mxu0
      %v8007 = vpop.f32.mrb[0].mxu0
      %v8008 = vadd.f32 0.0, %v8007
      %v8009 = vpop.f32.mrb[0].mxu0
      %8010 = vmatprep.mubr.bf16.mxu0 0
      %8011 = vmatmul.mubr.bf16.gmra.mrb[0].mxu0 %v7957
      %v8012 = vpop.f32.mrb[0].mxu0
      %v8013 = vadd.f32 0.0, %v8012
      %v8014 = vpop.f32.mrb[0].mxu0
      %v8015 = vpop.f32.mrb[0].mxu0
      %v8016 = vadd.f32 0.0, %v8015
      %v8017 = vpop.f32.mrb[0].mxu0
      %8018 = vmatprep.mubr.bf16.mxu0 0
      %8019 = vmatmul.mubr.bf16.gmra.mrb[0].mxu0 %v7960
      %v8020 = vpop.f32.mrb[0].mxu0
      %v8021 = vadd.f32 0.0, %v8020
      %v8022 = vpop.f32.mrb[0].mxu0
      %v8023 = vpop.f32.mrb[0].mxu0
      %v8024 = vadd.f32 0.0, %v8023
      %v8025 = vpop.f32.mrb[0].mxu0
      %8026 = vdwg.mxu0
      %v8027 = vadd.f32 %v7921, %v7997
      %v8028 = vadd.f32 %v7922, %v8000
      %v8029 = vadd.f32 %v7923, %v8005
      %v8030 = vadd.f32 %v7924, %v8008
      %v8031 = vadd.f32 %v7925, %v8013
      %v8032 = vadd.f32 %v7926, %v8016
      %v8033 = vadd.f32 %v7927, %v8021
      %v8034 = vadd.f32 %v7928, %v8024
      %v8037 = vrot.slane %v7544, 1
      %v8038 = vrot.slane %v7545, 1
      %v8039 = vsel %vm2790, %v8037, %v8038
      %v8041 = vpack.c.bf16 %v7580, %v7577
      %v8042 = vpack.c.bf16 %v7586, %v7583
      %v8043 = vpack.c.bf16 %v7592, %v7589
      %v8044 = vpack.c.bf16 %v8039, %v7595
      %s8045 = scalar_lea.vmem %s9, 64
      %v8046 = vld [vmem:[%s8045] sm:$0xf]
      %v8047 = vld [vmem:[%s8045 + $0x4] sm:$0xf]
      %v8048 = vld [vmem:[%s8045 + $0x8] sm:$0xf]
      %v8049 = vld [vmem:[%s8045 + $0xc] sm:$0xf]
      %v8054 = vunpack.c.l.b16 %v8046
      %v8055 = vunpack.c.l.b16 %v8047
      %v8056 = vunpack.c.l.b16 %v8048
      %v8057 = vunpack.c.l.b16 %v8049
      %v8058 = vpack.c.b16 %v8055, %v8054
      %v8059 = vpack.c.b16 %v8057, %v8056
      %v8063 = vsel %vm1740, %v8041, 0
      %v8066 = vsel %vm1740, %v8042, 0
      %v8069 = vsel %vm1740, %v8043, 0
      %v8072 = vsel %vm1740, %v8044, 0
      %8074 = vmatprep.subr.bf16.mxu0 0
      %8075 = vmatpush1.bf16.msra.mxu0 %v8058
      %8076 = vmatprep.subr.bf16.mxu0 0
      %8077 = vmatpush1.bf16.msra.mxu0 %v8059
      %8078 = vmatprep.subr.bf16.mxu0 0
      %8079 = vmatpush1.bf16.msra.mxu0 0
      %8080 = vmatprep.subr.bf16.mxu0 0
      %8081 = vmatpush1.bf16.msra.mxu0 0
      %8082 = vmatprep.subr.bf16.mxu0 0
      %8083 = vmatpush1.bf16.msra.mxu0 0
      %8084 = vmatprep.subr.bf16.mxu0 0
      %8085 = vmatpush1.bf16.msra.mxu0 0
      %8086 = vmatprep.subr.bf16.mxu0 0
      %8087 = vmatpush1.bf16.msra.mxu0 0
      %8088 = vmatprep.subr.bf16.mxu0 0
      %8089 = vmatpush1.bf16.msra.mxu0 0
      %8090 = vmatprep.subr.bf16.mxu0 0
      %8091 = vmatpush1.bf16.msra.mxu0 0
      %8092 = vmatprep.subr.bf16.mxu0 0
      %8093 = vmatpush1.bf16.msra.mxu0 0
      %8094 = vmatprep.subr.bf16.mxu0 0
      %8095 = vmatpush1.bf16.msra.mxu0 0
      %8096 = vmatprep.subr.bf16.mxu0 0
      %8097 = vmatpush1.bf16.msra.mxu0 0
      %8098 = vmatprep.subr.bf16.mxu0 0
      %8099 = vmatpush1.bf16.msra.mxu0 0
      %8100 = vmatprep.subr.bf16.mxu0 0
      %8101 = vmatpush1.bf16.msra.mxu0 0
      %8102 = vmatprep.subr.bf16.mxu0 0
      %8103 = vmatpush1.bf16.msra.mxu0 0
      %8104 = vmatprep.subr.bf16.mxu0 0
      %8105 = vmatpush1.bf16.msra.mxu0 0
      %8106 = vmatprep.mubr.bf16.mxu0 0
      %8107 = vmatmul.mubr.bf16.gmra.mrb[0].mxu0 %v8063
      %v8108 = vpop.f32.mrb[0].mxu0
      %v8109 = vadd.f32 0.0, %v8108
      %v8110 = vpop.f32.mrb[0].mxu0
      %v8111 = vpop.f32.mrb[0].mxu0
      %v8112 = vadd.f32 0.0, %v8111
      %v8113 = vpop.f32.mrb[0].mxu0
      %8114 = vmatprep.mubr.bf16.mxu0 0
      %8115 = vmatmul.mubr.bf16.gmra.mrb[0].mxu0 %v8066
      %v8116 = vpop.f32.mrb[0].mxu0
      %v8117 = vadd.f32 0.0, %v8116
      %v8118 = vpop.f32.mrb[0].mxu0
      %v8119 = vpop.f32.mrb[0].mxu0
      %v8120 = vadd.f32 0.0, %v8119
      %v8121 = vpop.f32.mrb[0].mxu0
      %8122 = vmatprep.mubr.bf16.mxu0 0
      %8123 = vmatmul.mubr.bf16.gmra.mrb[0].mxu0 %v8069
      %v8124 = vpop.f32.mrb[0].mxu0
      %v8125 = vadd.f32 0.0, %v8124
      %v8126 = vpop.f32.mrb[0].mxu0
      %v8127 = vpop.f32.mrb[0].mxu0
      %v8128 = vadd.f32 0.0, %v8127
      %v8129 = vpop.f32.mrb[0].mxu0
      %8130 = vmatprep.mubr.bf16.mxu0 0
      %8131 = vmatmul.mubr.bf16.gmra.mrb[0].mxu0 %v8072
      %v8132 = vpop.f32.mrb[0].mxu0
      %v8133 = vadd.f32 0.0, %v8132
      %v8134 = vpop.f32.mrb[0].mxu0
      %v8135 = vpop.f32.mrb[0].mxu0
      %v8136 = vadd.f32 0.0, %v8135
      %v8137 = vpop.f32.mrb[0].mxu0
      %8138 = vdwg.mxu0
      %v8139 = vadd.f32 %v8027, %v8109
      %v8140 = vadd.f32 %v8028, %v8112
      %v8141 = vadd.f32 %v8029, %v8117
      %v8142 = vadd.f32 %v8030, %v8120
      %v8143 = vadd.f32 %v8031, %v8125
      %v8144 = vadd.f32 %v8032, %v8128
      %v8145 = vadd.f32 %v8033, %v8133
      %v8146 = vadd.f32 %v8034, %v8136
      %v8147 = vrot.slane %v7544, 2
      %v8148 = vrot.slane %v7545, 2
      %v8149 = vsel %vm4838, %v8147, %v8148
      %v8151 = vpack.c.bf16 %v7799, %v7796
      %v8152 = vpack.c.bf16 %v7805, %v7802
      %v8153 = vpack.c.bf16 %v7811, %v7808
      %v8154 = vpack.c.bf16 %v8149, %v7814
      %s8155 = scalar_lea.vmem %s9, 80
      %v8156 = vld [vmem:[%s8155] sm:$0xf]
      %v8157 = vld [vmem:[%s8155 + $0x4] sm:$0xf]
      %v8158 = vld [vmem:[%s8155 + $0x8] sm:$0xf]
      %v8159 = vld [vmem:[%s8155 + $0xc] sm:$0xf]
      %v8164 = vunpack.c.l.b16 %v8156
      %v8165 = vunpack.c.l.b16 %v8157
      %v8166 = vunpack.c.l.b16 %v8158
      %v8167 = vunpack.c.l.b16 %v8159
      %v8168 = vpack.c.b16 %v8165, %v8164
      %v8169 = vpack.c.b16 %v8167, %v8166
      %v8173 = vsel %vm1740, %v8151, 0
      %v8176 = vsel %vm1740, %v8152, 0
      %v8179 = vsel %vm1740, %v8153, 0
      %v8182 = vsel %vm1740, %v8154, 0
      %8184 = vmatprep.subr.bf16.mxu0 0
      %8185 = vmatpush1.bf16.msra.mxu0 %v8168
      %8186 = vmatprep.subr.bf16.mxu0 0
      %8187 = vmatpush1.bf16.msra.mxu0 %v8169
      %8188 = vmatprep.subr.bf16.mxu0 0
      %8189 = vmatpush1.bf16.msra.mxu0 0
      %8190 = vmatprep.subr.bf16.mxu0 0
      %8191 = vmatpush1.bf16.msra.mxu0 0
      %8192 = vmatprep.subr.bf16.mxu0 0
      %8193 = vmatpush1.bf16.msra.mxu0 0
      %8194 = vmatprep.subr.bf16.mxu0 0
      %8195 = vmatpush1.bf16.msra.mxu0 0
      %8196 = vmatprep.subr.bf16.mxu0 0
      %8197 = vmatpush1.bf16.msra.mxu0 0
      %8198 = vmatprep.subr.bf16.mxu0 0
      %8199 = vmatpush1.bf16.msra.mxu0 0
      %8200 = vmatprep.subr.bf16.mxu0 0
      %8201 = vmatpush1.bf16.msra.mxu0 0
      %8202 = vmatprep.subr.bf16.mxu0 0
      %8203 = vmatpush1.bf16.msra.mxu0 0
      %8204 = vmatprep.subr.bf16.mxu0 0
      %8205 = vmatpush1.bf16.msra.mxu0 0
      %8206 = vmatprep.subr.bf16.mxu0 0
      %8207 = vmatpush1.bf16.msra.mxu0 0
      %8208 = vmatprep.subr.bf16.mxu0 0
      %8209 = vmatpush1.bf16.msra.mxu0 0
      %8210 = vmatprep.subr.bf16.mxu0 0
      %8211 = vmatpush1.bf16.msra.mxu0 0
      %8212 = vmatprep.subr.bf16.mxu0 0
      %8213 = vmatpush1.bf16.msra.mxu0 0
      %8214 = vmatprep.subr.bf16.mxu0 0
      %8215 = vmatpush1.bf16.msra.mxu0 0
      %8216 = vmatprep.mubr.bf16.mxu0 0
      %8217 = vmatmul.mubr.bf16.gmra.mrb[0].mxu0 %v8173
      %v8218 = vpop.f32.mrb[0].mxu0
      %v8219 = vadd.f32 0.0, %v8218
      %v8220 = vpop.f32.mrb[0].mxu0
      %v8221 = vpop.f32.mrb[0].mxu0
      %v8222 = vadd.f32 0.0, %v8221
      %v8223 = vpop.f32.mrb[0].mxu0
      %8224 = vmatprep.mubr.bf16.mxu0 0
      %8225 = vmatmul.mubr.bf16.gmra.mrb[0].mxu0 %v8176
      %v8226 = vpop.f32.mrb[0].mxu0
      %v8227 = vadd.f32 0.0, %v8226
      %v8228 = vpop.f32.mrb[0].mxu0
      %v8229 = vpop.f32.mrb[0].mxu0
      %v8230 = vadd.f32 0.0, %v8229
      %v8231 = vpop.f32.mrb[0].mxu0
      %8232 = vmatprep.mubr.bf16.mxu0 0
      %8233 = vmatmul.mubr.bf16.gmra.mrb[0].mxu0 %v8179
      %v8234 = vpop.f32.mrb[0].mxu0
      %v8235 = vadd.f32 0.0, %v8234
      %v8236 = vpop.f32.mrb[0].mxu0
      %v8237 = vpop.f32.mrb[0].mxu0
      %v8238 = vadd.f32 0.0, %v8237
      %v8239 = vpop.f32.mrb[0].mxu0
      %8240 = vmatprep.mubr.bf16.mxu0 0
      %8241 = vmatmul.mubr.bf16.gmra.mrb[0].mxu0 %v8182
      %v8242 = vpop.f32.mrb[0].mxu0
      %v8243 = vadd.f32 0.0, %v8242
      %v8244 = vpop.f32.mrb[0].mxu0
      %v8245 = vpop.f32.mrb[0].mxu0
      %v8246 = vadd.f32 0.0, %v8245
      %v8247 = vpop.f32.mrb[0].mxu0
      %8248 = vdwg.mxu0
      %v8249 = vadd.f32 %v8139, %v8219
      %v8250 = vadd.f32 %v8140, %v8222
      %v8251 = vadd.f32 %v8141, %v8227
      %v8252 = vadd.f32 %v8142, %v8230
      %v8253 = vadd.f32 %v8143, %v8235
      %v8254 = vadd.f32 %v8144, %v8238
      %v8255 = vadd.f32 %v8145, %v8243
      %v8256 = vadd.f32 %v8146, %v8246
      %v8257 = vpack.c.bf16 %v7546, %v7544
      %s8258 = scalar_lea.vmem %s9, 96
      %v8259 = vld [vmem:[%s8258] sm:$0xf]
      %v8260 = vld [vmem:[%s8258 + $0x4] sm:$0xf]
      %v8261 = vld [vmem:[%s8258 + $0x8] sm:$0xf]
      %v8262 = vld [vmem:[%s8258 + $0xc] sm:$0xf]
      %v8267 = vunpack.c.l.b16 %v8259
      %v8268 = vunpack.c.l.b16 %v8260
      %v8269 = vunpack.c.l.b16 %v8261
      %v8270 = vunpack.c.l.b16 %v8262
      %v8271 = vpack.c.b16 %v8268, %v8267
      %v8272 = vpack.c.b16 %v8270, %v8269
      %v8276 = vsel %vm1740, %v8257, 0
      %8278 = vmatprep.subr.bf16.mxu0 0
      %8279 = vmatpush1.bf16.msra.mxu0 %v8271
      %8280 = vmatprep.subr.bf16.mxu0 0
      %8281 = vmatpush1.bf16.msra.mxu0 %v8272
      %8282 = vmatprep.subr.bf16.mxu0 0
      %8283 = vmatpush1.bf16.msra.mxu0 0
      %8284 = vmatprep.subr.bf16.mxu0 0
      %8285 = vmatpush1.bf16.msra.mxu0 0
      %8286 = vmatprep.subr.bf16.mxu0 0
      %8287 = vmatpush1.bf16.msra.mxu0 0
      %8288 = vmatprep.subr.bf16.mxu0 0
      %8289 = vmatpush1.bf16.msra.mxu0 0
      %8290 = vmatprep.subr.bf16.mxu0 0
      %8291 = vmatpush1.bf16.msra.mxu0 0
      %8292 = vmatprep.subr.bf16.mxu0 0
      %8293 = vmatpush1.bf16.msra.mxu0 0
      %8294 = vmatprep.subr.bf16.mxu0 0
      %8295 = vmatpush1.bf16.msra.mxu0 0
      %8296 = vmatprep.subr.bf16.mxu0 0
      %8297 = vmatpush1.bf16.msra.mxu0 0
      %8298 = vmatprep.subr.bf16.mxu0 0
      %8299 = vmatpush1.bf16.msra.mxu0 0
      %8300 = vmatprep.subr.bf16.mxu0 0
      %8301 = vmatpush1.bf16.msra.mxu0 0
      %8302 = vmatprep.subr.bf16.mxu0 0
      %8303 = vmatpush1.bf16.msra.mxu0 0
      %8304 = vmatprep.subr.bf16.mxu0 0
      %8305 = vmatpush1.bf16.msra.mxu0 0
      %8306 = vmatprep.subr.bf16.mxu0 0
      %8307 = vmatpush1.bf16.msra.mxu0 0
      %8308 = vmatprep.subr.bf16.mxu0 0
      %8309 = vmatpush1.bf16.msra.mxu0 0
      %8310 = vmatprep.mubr.bf16.mxu0 0
      %8311 = vmatmul.mubr.bf16.gmra.mrb[0].mxu0 %v7718
      %v8312 = vpop.f32.mrb[0].mxu0
      %v8313 = vadd.f32 0.0, %v8312
      %v8314 = vpop.f32.mrb[0].mxu0
      %v8315 = vpop.f32.mrb[0].mxu0
      %v8316 = vadd.f32 0.0, %v8315
      %v8317 = vpop.f32.mrb[0].mxu0
      %8318 = vmatprep.mubr.bf16.mxu0 0
      %8319 = vmatmul.mubr.bf16.gmra.mrb[0].mxu0 %v7721
      %v8320 = vpop.f32.mrb[0].mxu0
      %v8321 = vadd.f32 0.0, %v8320
      %v8322 = vpop.f32.mrb[0].mxu0
      %v8323 = vpop.f32.mrb[0].mxu0
      %v8324 = vadd.f32 0.0, %v8323
      %v8325 = vpop.f32.mrb[0].mxu0
      %8326 = vmatprep.mubr.bf16.mxu0 0
      %8327 = vmatmul.mubr.bf16.gmra.mrb[0].mxu0 %v7724
      %v8328 = vpop.f32.mrb[0].mxu0
      %v8329 = vadd.f32 0.0, %v8328
      %v8330 = vpop.f32.mrb[0].mxu0
      %v8331 = vpop.f32.mrb[0].mxu0
      %v8332 = vadd.f32 0.0, %v8331
      %v8333 = vpop.f32.mrb[0].mxu0
      %8334 = vmatprep.mubr.bf16.mxu0 0
      %8335 = vmatmul.mubr.bf16.gmra.mrb[0].mxu0 %v8276
      %v8336 = vpop.f32.mrb[0].mxu0
      %v8337 = vadd.f32 0.0, %v8336
      %v8338 = vpop.f32.mrb[0].mxu0
      %v8339 = vpop.f32.mrb[0].mxu0
      %v8340 = vadd.f32 0.0, %v8339
      %v8341 = vpop.f32.mrb[0].mxu0
      %8342 = vdwg.mxu0
      %v8343 = vadd.f32 %v8249, %v8313
      %v8344 = vadd.f32 %v8250, %v8316
      %v8345 = vadd.f32 %v8251, %v8321
      %v8346 = vadd.f32 %v8252, %v8324
      %v8347 = vadd.f32 %v8253, %v8329
      %v8348 = vadd.f32 %v8254, %v8332
      %v8349 = vadd.f32 %v8255, %v8337
      %v8350 = vadd.f32 %v8256, %v8340
      %v8353 = vrot.slane %v7546, 1
      %v8354 = vrot.slane %v7547, 1
      %v8355 = vsel %vm2790, %v8353, %v8354
      %v8357 = vpack.c.bf16 %v8355, %v8039
      %s8358 = scalar_lea.vmem %s9, 112
      %v8359 = vld [vmem:[%s8358] sm:$0xf]
      %v8360 = vld [vmem:[%s8358 + $0x4] sm:$0xf]
      %v8361 = vld [vmem:[%s8358 + $0x8] sm:$0xf]
      %v8362 = vld [vmem:[%s8358 + $0xc] sm:$0xf]
      %v8367 = vunpack.c.l.b16 %v8359
      %v8368 = vunpack.c.l.b16 %v8360
      %v8369 = vunpack.c.l.b16 %v8361
      %v8370 = vunpack.c.l.b16 %v8362
      %v8371 = vpack.c.b16 %v8368, %v8367
      %v8372 = vpack.c.b16 %v8370, %v8369
      %v8376 = vsel %vm1740, %v8357, 0
      %8378 = vmatprep.subr.bf16.mxu0 0
      %8379 = vmatpush1.bf16.msra.mxu0 %v8371
      %8380 = vmatprep.subr.bf16.mxu0 0
      %8381 = vmatpush1.bf16.msra.mxu0 %v8372
      %8382 = vmatprep.subr.bf16.mxu0 0
      %8383 = vmatpush1.bf16.msra.mxu0 0
      %8384 = vmatprep.subr.bf16.mxu0 0
      %8385 = vmatpush1.bf16.msra.mxu0 0
      %8386 = vmatprep.subr.bf16.mxu0 0
      %8387 = vmatpush1.bf16.msra.mxu0 0
      %8388 = vmatprep.subr.bf16.mxu0 0
      %8389 = vmatpush1.bf16.msra.mxu0 0
      %8390 = vmatprep.subr.bf16.mxu0 0
      %8391 = vmatpush1.bf16.msra.mxu0 0
      %8392 = vmatprep.subr.bf16.mxu0 0
      %8393 = vmatpush1.bf16.msra.mxu0 0
      %8394 = vmatprep.subr.bf16.mxu0 0
      %8395 = vmatpush1.bf16.msra.mxu0 0
      %8396 = vmatprep.subr.bf16.mxu0 0
      %8397 = vmatpush1.bf16.msra.mxu0 0
      %8398 = vmatprep.subr.bf16.mxu0 0
      %8399 = vmatpush1.bf16.msra.mxu0 0
      %8400 = vmatprep.subr.bf16.mxu0 0
      %8401 = vmatpush1.bf16.msra.mxu0 0
      %8402 = vmatprep.subr.bf16.mxu0 0
      %8403 = vmatpush1.bf16.msra.mxu0 0
      %8404 = vmatprep.subr.bf16.mxu0 0
      %8405 = vmatpush1.bf16.msra.mxu0 0
      %8406 = vmatprep.subr.bf16.mxu0 0
      %8407 = vmatpush1.bf16.msra.mxu0 0
      %8408 = vmatprep.subr.bf16.mxu0 0
      %8409 = vmatpush1.bf16.msra.mxu0 0
      %8410 = vmatprep.mubr.bf16.mxu0 0
      %8411 = vmatmul.mubr.bf16.gmra.mrb[0].mxu0 %v7629
      %v8412 = vpop.f32.mrb[0].mxu0
      %v8413 = vadd.f32 0.0, %v8412
      %v8414 = vpop.f32.mrb[0].mxu0
      %v8415 = vpop.f32.mrb[0].mxu0
      %v8416 = vadd.f32 0.0, %v8415
      %v8417 = vpop.f32.mrb[0].mxu0
      %8418 = vmatprep.mubr.bf16.mxu0 0
      %8419 = vmatmul.mubr.bf16.gmra.mrb[0].mxu0 %v7632
      %v8420 = vpop.f32.mrb[0].mxu0
      %v8421 = vadd.f32 0.0, %v8420
      %v8422 = vpop.f32.mrb[0].mxu0
      %v8423 = vpop.f32.mrb[0].mxu0
      %v8424 = vadd.f32 0.0, %v8423
      %v8425 = vpop.f32.mrb[0].mxu0
      %8426 = vmatprep.mubr.bf16.mxu0 0
      %8427 = vmatmul.mubr.bf16.gmra.mrb[0].mxu0 %v7635
      %v8428 = vpop.f32.mrb[0].mxu0
      %v8429 = vadd.f32 0.0, %v8428
      %v8430 = vpop.f32.mrb[0].mxu0
      %v8431 = vpop.f32.mrb[0].mxu0
      %v8432 = vadd.f32 0.0, %v8431
      %v8433 = vpop.f32.mrb[0].mxu0
      %8434 = vmatprep.mubr.bf16.mxu0 0
      %8435 = vmatmul.mubr.bf16.gmra.mrb[0].mxu0 %v8376
      %v8436 = vpop.f32.mrb[0].mxu0
      %v8437 = vadd.f32 0.0, %v8436
      %v8438 = vpop.f32.mrb[0].mxu0
      %v8439 = vpop.f32.mrb[0].mxu0
      %v8440 = vadd.f32 0.0, %v8439
      %v8441 = vpop.f32.mrb[0].mxu0
      %8442 = vdwg.mxu0
      %v8443 = vadd.f32 %v8343, %v8413
      %v8444 = vadd.f32 %v8344, %v8416
      %v8445 = vadd.f32 %v8345, %v8421
      %v8446 = vadd.f32 %v8346, %v8424
      %v8447 = vadd.f32 %v8347, %v8429
      %v8448 = vadd.f32 %v8348, %v8432
      %v8449 = vadd.f32 %v8349, %v8437
      %v8450 = vadd.f32 %v8350, %v8440
      %v8451 = vrot.slane %v7546, 2
      %v8452 = vrot.slane %v7547, 2
      %v8453 = vsel %vm4838, %v8451, %v8452
      %v8455 = vpack.c.bf16 %v8453, %v8149
      %s8456 = scalar_lea.vmem %s9, 128
      %v8457 = vld [vmem:[%s8456] sm:$0xf]
      %v8458 = vld [vmem:[%s8456 + $0x4] sm:$0xf]
      %v8459 = vld [vmem:[%s8456 + $0x8] sm:$0xf]
      %v8460 = vld [vmem:[%s8456 + $0xc] sm:$0xf]
      %v8465 = vunpack.c.l.b16 %v8457
      %v8466 = vunpack.c.l.b16 %v8458
      %v8467 = vunpack.c.l.b16 %v8459
      %v8468 = vunpack.c.l.b16 %v8460
      %v8469 = vpack.c.b16 %v8466, %v8465
      %v8470 = vpack.c.b16 %v8468, %v8467
      %v8474 = vsel %vm1740, %v8455, 0
      %8476 = vmatprep.subr.bf16.mxu0 0
      %8477 = vmatpush1.bf16.msra.mxu0 %v8469
      %8478 = vmatprep.subr.bf16.mxu0 0
      %8479 = vmatpush1.bf16.msra.mxu0 %v8470
      %8480 = vmatprep.subr.bf16.mxu0 0
      %8481 = vmatpush1.bf16.msra.mxu0 0
      %8482 = vmatprep.subr.bf16.mxu0 0
      %8483 = vmatpush1.bf16.msra.mxu0 0
      %8484 = vmatprep.subr.bf16.mxu0 0
      %8485 = vmatpush1.bf16.msra.mxu0 0
      %8486 = vmatprep.subr.bf16.mxu0 0
      %8487 = vmatpush1.bf16.msra.mxu0 0
      %8488 = vmatprep.subr.bf16.mxu0 0
      %8489 = vmatpush1.bf16.msra.mxu0 0
      %8490 = vmatprep.subr.bf16.mxu0 0
      %8491 = vmatpush1.bf16.msra.mxu0 0
      %8492 = vmatprep.subr.bf16.mxu0 0
      %8493 = vmatpush1.bf16.msra.mxu0 0
      %8494 = vmatprep.subr.bf16.mxu0 0
      %8495 = vmatpush1.bf16.msra.mxu0 0
      %8496 = vmatprep.subr.bf16.mxu0 0
      %8497 = vmatpush1.bf16.msra.mxu0 0
      %8498 = vmatprep.subr.bf16.mxu0 0
      %8499 = vmatpush1.bf16.msra.mxu0 0
      %8500 = vmatprep.subr.bf16.mxu0 0
      %8501 = vmatpush1.bf16.msra.mxu0 0
      %8502 = vmatprep.subr.bf16.mxu0 0
      %8503 = vmatpush1.bf16.msra.mxu0 0
      %8504 = vmatprep.subr.bf16.mxu0 0
      %8505 = vmatpush1.bf16.msra.mxu0 0
      %8506 = vmatprep.subr.bf16.mxu0 0
      %8507 = vmatpush1.bf16.msra.mxu0 0
      %8508 = vmatprep.mubr.bf16.mxu0 0
      %8509 = vmatmul.mubr.bf16.gmra.mrb[0].mxu0 %v7848
      %v8510 = vpop.f32.mrb[0].mxu0
      %v8511 = vadd.f32 0.0, %v8510
      %v8512 = vpop.f32.mrb[0].mxu0
      %v8513 = vpop.f32.mrb[0].mxu0
      %v8514 = vadd.f32 0.0, %v8513
      %v8515 = vpop.f32.mrb[0].mxu0
      %8516 = vmatprep.mubr.bf16.mxu0 0
      %8517 = vmatmul.mubr.bf16.gmra.mrb[0].mxu0 %v7851
      %v8518 = vpop.f32.mrb[0].mxu0
      %v8519 = vadd.f32 0.0, %v8518
      %v8520 = vpop.f32.mrb[0].mxu0
      %v8521 = vpop.f32.mrb[0].mxu0
      %v8522 = vadd.f32 0.0, %v8521
      %v8523 = vpop.f32.mrb[0].mxu0
      %8524 = vmatprep.mubr.bf16.mxu0 0
      %8525 = vmatmul.mubr.bf16.gmra.mrb[0].mxu0 %v7854
      %v8526 = vpop.f32.mrb[0].mxu0
      %v8527 = vadd.f32 0.0, %v8526
      %v8528 = vpop.f32.mrb[0].mxu0
      %v8529 = vpop.f32.mrb[0].mxu0
      %v8530 = vadd.f32 0.0, %v8529
      %v8531 = vpop.f32.mrb[0].mxu0
      %8532 = vmatprep.mubr.bf16.mxu0 0
      %8533 = vmatmul.mubr.bf16.gmra.mrb[0].mxu0 %v8474
      %v8534 = vpop.f32.mrb[0].mxu0
      %v8535 = vadd.f32 0.0, %v8534
      %v8536 = vpop.f32.mrb[0].mxu0
      %v8537 = vpop.f32.mrb[0].mxu0
      %v8538 = vadd.f32 0.0, %v8537
      %v8539 = vpop.f32.mrb[0].mxu0
      %8540 = vdwg.mxu0
      %v8541 = vadd.f32 %v8443, %v8511
      %v8542 = vadd.f32 %v8444, %v8514
      %v8543 = vadd.f32 %v8445, %v8519
      %v8544 = vadd.f32 %v8446, %v8522
      %v8545 = vadd.f32 %v8447, %v8527
      %v8546 = vadd.f32 %v8448, %v8530
      %v8547 = vadd.f32 %v8449, %v8535
      %v8548 = vadd.f32 %v8450, %v8538
      %v8549 = vld [vmem:[%s10] sm:$0x1]
      %v8551 = vlaneseq
      %v8552 = vshrl.u32 %v8551, 7
      %v8553 = vsub.s32 0, %v8552
      %v8554 = vrot.slane %v8549, %v8553
      %v8556 = vadd.f32 %v8541, %v8554
      %v8557 = vadd.f32 %v8542, %v8554
      %v8558 = vadd.f32 %v8543, %v8554
      %v8559 = vadd.f32 %v8544, %v8554
      %v8560 = vadd.f32 %v8545, %v8554
      %v8561 = vadd.f32 %v8546, %v8554
      %v8562 = vadd.f32 %v8547, %v8554
      %v8563 = vadd.f32 %v8548, %v8554
      %v8564 = vmax.f32 %v8556, 0.0
      %v8565 = vmax.f32 %v8557, 0.0
      %v8566 = vmax.f32 %v8558, 0.0
      %v8567 = vmax.f32 %v8559, 0.0
      %v8568 = vmax.f32 %v8560, 0.0
      %v8569 = vmax.f32 %v8561, 0.0
      %v8570 = vmax.f32 %v8562, 0.0
      %v8571 = vmax.f32 %v8563, 0.0
      %8572 = vst.msk [vmem:[%s553] sm:$0xff] %vm4016, %v8564
      %8573 = vst.msk [vmem:[%s553 + $0x8] sm:$0xff] %vm4016, %v8565
      %8574 = vst.msk [vmem:[%s553 + $0x10] sm:$0xff] %vm4016, %v8566
      %8575 = vst.msk [vmem:[%s553 + $0x18] sm:$0xff] %vm4016, %v8567
      %8576 = vst.msk [vmem:[%s553 + $0x20] sm:$0xff] %vm4016, %v8568
      %8577 = vst.msk [vmem:[%s553 + $0x28] sm:$0xff] %vm4016, %v8569
      %8578 = vst.msk [vmem:[%s553 + $0x30] sm:$0xff] %vm4016, %v8570
      %8579 = vst.msk [vmem:[%s553 + $0x38] sm:$0xff] %vm4016, %v8571
      %p8580 = scmp.lt.s32.totalorder %s28, 1
      %s8581 = scalar_select %p8580, %s28, 1
      %s8582 = smul.addr %s8581, 8
      %s8583 = smul.addr %s8582, 8
      %s8584 = scalar_lea.vmem %s13, %s8583
      %p8585 = scmp.lt.s32.totalorder %s28, 1
      %s8586 = scalar_select %p8585, %s28, 1
      %s8587 = smul.addr %s8586, 24
      %s8588 = smul.addr %s8587, 8
      %s8589 = scalar_lea.vmem %s14, %s8588
      %p8590 = scmp.lt.s32.totalorder %s28, 1
      %s8591 = scalar_select %p8590, %s28, 1
      %s8592 = smul.addr %s8591, 8
      %s8593 = smul.addr %s8592, 8
      %s8594 = scalar_lea.vmem %s15, %s8593
      %p8595 = scmp.lt.s32.totalorder %s28, 1
      %s8596 = scalar_select %p8595, %s28, 1
      %s8597 = smul.addr %s8596, 8
      %s8598 = smul.addr %s8597, 8
      %s8599 = scalar_lea.vmem %s16, %s8598
      // Predicated region
      $region73: #{inception4d_pallas.1} parent=71 // pred_check
        %p8600 = pneg %p324
      $region74: #{inception4d_pallas.1} parent=71 // pred_check_branch
        %8602 = sbr.rel (%p8600) target = $region76
      $region75: #{inception4d_pallas.1} parent=71 // pred_region
        _
      $region76: #{inception4d_pallas.1} parent=71 // pred_fallthru
        _
      // Predicated region
      $region77: #{inception4d_pallas.1} parent=71 // pred_check
        %p8603 = pneg %p350
      $region78: #{inception4d_pallas.1} parent=71 // pred_check_branch
        %8605 = sbr.rel (%p8603) target = $region80
      $region79: #{inception4d_pallas.1} parent=71 // pred_region
        _
      $region80: #{inception4d_pallas.1} parent=71 // pred_fallthru
        _
      // Predicated region
      $region81: #{inception4d_pallas.1} parent=71 // pred_check
        %p8606 = pneg %p376
      $region82: #{inception4d_pallas.1} parent=71 // pred_check_branch
        %8608 = sbr.rel (%p8606) target = $region84
      $region83: #{inception4d_pallas.1} parent=71 // pred_region
        _
      $region84: #{inception4d_pallas.1} parent=71 // pred_fallthru
        _
      // Predicated region
      $region85: #{inception4d_pallas.1} parent=71 // pred_check
        %p8609 = pneg %p402
      $region86: #{inception4d_pallas.1} parent=71 // pred_check_branch
        %8611 = sbr.rel (%p8609) target = $region88
      $region87: #{inception4d_pallas.1} parent=71 // pred_region
        _
      $region88: #{inception4d_pallas.1} parent=71 // pred_fallthru
        _
    $region72: #{inception4d_pallas.1} parent=5 // pred_fallthru
      _
    %p8612 = scmp.le.s32.totalorder 2, %s23
    // Predicated region
    $region89: #{inception4d_pallas.1} parent=5 // pred_check
      %p8613 = pneg %p8612
    $region90: #{inception4d_pallas.1} parent=5 // pred_check_branch
      %8615 = sbr.rel (%p8613) target = $region92
    $region91: #{inception4d_pallas.1} parent=5 // pred_region
      %s8616 = ssub.s32 %s23, 2
      // Predicated region
      $region93: #{inception4d_pallas.1} parent=91 // pred_check
        %p8617 = pneg %p330
      $region94: #{inception4d_pallas.1} parent=91 // pred_check_branch
        %8619 = sbr.rel (%p8617) target = $region96
      $region95: #{inception4d_pallas.1} parent=91 // pred_region
        %p8620 = scmp.lt.s32.totalorder %s29, 1
        %s8621 = scalar_select %p8620, %s29, 1
        %s8622 = smul.addr %s8621, 8
        %s8623 = smul.addr %s8622, 8
        %s8624 = scalar_lea.vmem %s13, %s8623
      $region96: #{inception4d_pallas.1} parent=91 // pred_fallthru
        _
      // Predicated region
      $region97: #{inception4d_pallas.1} parent=91 // pred_check
        %p8625 = pneg %p356
      $region98: #{inception4d_pallas.1} parent=91 // pred_check_branch
        %8627 = sbr.rel (%p8625) target = $region100
      $region99: #{inception4d_pallas.1} parent=91 // pred_region
        %p8628 = scmp.lt.s32.totalorder %s29, 1
        %s8629 = scalar_select %p8628, %s29, 1
        %s8630 = smul.addr %s8629, 24
        %s8631 = smul.addr %s8630, 8
        %s8632 = scalar_lea.vmem %s14, %s8631
      $region100: #{inception4d_pallas.1} parent=91 // pred_fallthru
        _
      // Predicated region
      $region101: #{inception4d_pallas.1} parent=91 // pred_check
        %p8633 = pneg %p382
      $region102: #{inception4d_pallas.1} parent=91 // pred_check_branch
        %8635 = sbr.rel (%p8633) target = $region104
      $region103: #{inception4d_pallas.1} parent=91 // pred_region
        %p8636 = scmp.lt.s32.totalorder %s29, 1
        %s8637 = scalar_select %p8636, %s29, 1
        %s8638 = smul.addr %s8637, 8
        %s8639 = smul.addr %s8638, 8
        %s8640 = scalar_lea.vmem %s15, %s8639
      $region104: #{inception4d_pallas.1} parent=91 // pred_fallthru
        _
      // Predicated region
      $region105: #{inception4d_pallas.1} parent=91 // pred_check
        %p8641 = pneg %p408
      $region106: #{inception4d_pallas.1} parent=91 // pred_check_branch
        %8643 = sbr.rel (%p8641) target = $region108
      $region107: #{inception4d_pallas.1} parent=91 // pred_region
        %p8644 = scmp.lt.s32.totalorder %s29, 1
        %s8645 = scalar_select %p8644, %s29, 1
        %s8646 = smul.addr %s8645, 8
        %s8647 = smul.addr %s8646, 8
        %s8648 = scalar_lea.vmem %s16, %s8647
      $region108: #{inception4d_pallas.1} parent=91 // pred_fallthru
        _
    $region92: #{inception4d_pallas.1} parent=5 // pred_fallthru
      _
  $region6: #{inception4d_pallas.1} parent=0 // loop_footer
    %s27 = sadd.s32 1, %s23
  $region7: #{inception4d_pallas.1} parent=0 // loop_footer_branch
    %22 = sbr.rel target = $region3
  $region8: #{inception4d_pallas.1} parent=0 // loop_exit
    _

</llo_original>
